<compile_context>
chip_gen: v5e
topology: v5e:2x2
jax: 0.10.0
libtpu: 0.0.40
codegen_flags: <defaults>
</compile_context>

<pallas_src>
import jax
import jax.numpy as jnp
from jax import lax
from jax.experimental import pallas as pl
from jax.experimental.pallas import tpu as pltpu

EPS = 1e-5
VMEM_LIMIT = 48 * 1024 * 1024  # safe on v5e/v6e (128 MiB) and v7x (64 MiB)


# ---------------------------------------------------------------------------
# Tile choosers (VMEM-budget driven).
# ---------------------------------------------------------------------------
def _pick_tile_h(N, H, W, C, F, itemsize, budget_bytes=12 << 20):
    """Largest row-tile TH dividing H whose VMEM footprint fits the budget."""
    def footprint(th):
        tile = th * W
        return ((th + 2) * (W + 2) * C * itemsize      # halo tile scratch
                + tile * 9 * C * itemsize              # im2col scratch
                + 2 * tile * C * 4                     # double-buffered input (f32 worst case)
                + 2 * tile * F * itemsize)             # double-buffered output
    cands = [d for d in range(1, H + 1)
             if H % d == 0 and ((d * W) % 8 == 0 or d == H)]
    th = cands[0]
    for d in cands:                                    # ascending -> keep largest that fits
        if footprint(d) <= budget_bytes:
            th = d
    if N < 2:                                          # feed both v7x TensorCores at batch 1
        smaller = [d for d in cands if H // d >= 2 and footprint(d) <= budget_bytes]
        if smaller:
            th = smaller[-1]
    return th


def _pick_tile_rows(R, target=512):
    """Row tile for the elementwise pass; >=2 blocks when possible (v7x)."""
    if R % 8 != 0:
        return R
    t = min(R, target)
    t -= t % 8
    while t > 8 and R % t != 0:
        t -= 8
    if t < 8 or R % t != 0:
        return R
    if R // t < 2 and R >= 16 and (R // 2) % 8 == 0:
        t = R // 2
    return t


# ---------------------------------------------------------------------------
# Conv kernel: [optional fused BN+ReLU prologue] -> 3x3 conv (stride 1, pad 1)
# as ONE K=9C MXU matmul per tile, plus per-tile BN partial statistics.
# ---------------------------------------------------------------------------
def _make_conv_kernel(TH, W, Cin, F, nH, fuse_bn_relu):
    def kernel(mid_ref, top_ref, bot_ref, sc_ref, sh_ref, w_ref,
               y_ref, st_ref, xt_ref, lhs_ref):
        i = pl.program_id(1)
        cdt = xt_ref.dtype

        def prologue(v):                       # v: (rows, W, Cin) any float dtype
            a = v.astype(jnp.float32)
            if fuse_bn_relu:
                a = jnp.maximum(a * sc_ref[...] + sh_ref[...], 0.0)
            return a.astype(cdt)

        # Zero left/right padding columns every step (never overwritten below).
        xt_ref[:, 0:1, :] = jnp.zeros((TH + 2, 1, Cin), cdt)
        xt_ref[:, W + 1:W + 2, :] = jnp.zeros((TH + 2, 1, Cin), cdt)

        # Assemble the halo-extended tile: 1 top halo row, TH main rows,
        # 1 bottom halo row -- with the prologue fused into the staging write.
        xt_ref[0:1, 1:W + 1, :] = prologue(top_ref[0])
        xt_ref[1:TH + 1, 1:W + 1, :] = prologue(mid_ref[0])
        xt_ref[TH + 1:TH + 2, 1:W + 1, :] = prologue(bot_ref[0])

        # In-kernel zero padding of the image's top / bottom boundary rows.
        @pl.when(i == 0)
        def _zero_top():
            xt_ref[0:1, :, :] = jnp.zeros((1, W + 2, Cin), cdt)

        @pl.when(i == nH - 1)
        def _zero_bot():
            xt_ref[TH + 1:TH + 2, :, :] = jnp.zeros((1, W + 2, Cin), cdt)

        # im2col: pack the 9 taps along the contraction dim (K = 9*Cin).
        for dy in range(3):
            for dx in range(3):
                t = dy * 3 + dx
                piece = xt_ref[dy:dy + TH, dx:dx + W, :].reshape(TH * W, Cin)
                lhs_ref[:, t * Cin:(t + 1) * Cin] = piece

        # Single MXU matmul with f32 accumulation.
        acc = jnp.dot(lhs_ref[...], w_ref[...], preferred_element_type=jnp.float32)

        y_ref[0] = acc.astype(y_ref.dtype)
        # BN partials from the f32 accumulator (not from the stored dtype).
        st_ref[0, 0, 0:1, :] = jnp.sum(acc, axis=0, keepdims=True)
        st_ref[0, 0, 1:2, :] = jnp.sum(acc * acc, axis=0, keepdims=True)

    return kernel


def _conv3x3(x4d, w9, scale_in, shift_in, *, fuse_bn_relu, mxu_dtype):
    """x4d: (N, H, W, C); w9: (9*C, F). Optional fused y*scale+shift -> ReLU
    prologue on the input. Returns y: (N, H*W, F) mxu_dtype (pre-BN) and
    stats: (N, nH, 2, F) f32 = per-tile per-channel [sum, sum_of_squares]."""
    N, H, W, C = x4d.shape
    F = w9.shape[1]
    itemsize = jnp.dtype(mxu_dtype).itemsize
    TH = _pick_tile_h(N, H, W, C, F, itemsize)
    nH = H // TH

    kernel = _make_conv_kernel(TH, W, C, F, nH, fuse_bn_relu)
    flops = 2 * N * H * W * 9 * C * F
    bytes_accessed = int(x4d.size * jnp.dtype(x4d.dtype).itemsize
                         + w9.size * itemsize
                         + N * H * W * F * itemsize + N * nH * 2 * F * 4)

    y, stats = pl.pallas_call(
        kernel,
        out_shape=(jax.ShapeDtypeStruct((N, H * W, F), mxu_dtype),
                   jax.ShapeDtypeStruct((N, nH, 2, F), jnp.float32)),
        grid=(N, nH),
        in_specs=[
            # main TH rows of this image
            pl.BlockSpec((1, TH, W, C), lambda n, i: (n, i, 0, 0)),
            # 1-row top halo (clamped; zeroed in-kernel on the first row tile)
            pl.BlockSpec((1, 1, W, C),
                         lambda n, i: (n, jnp.maximum(i * TH - 1, 0), 0, 0)),
            # 1-row bottom halo (clamped; zeroed in-kernel on the last row tile)
            pl.BlockSpec((1, 1, W, C),
                         lambda n, i: (n, jnp.minimum(i * TH + TH, H - 1), 0, 0)),
            # per-channel prologue scale / shift, resident across the grid
            pl.BlockSpec((1, C), lambda n, i: (0, 0)),
            pl.BlockSpec((1, C), lambda n, i: (0, 0)),
            # packed (9C, F) weights, resident across the grid
            pl.BlockSpec((9 * C, F), lambda n, i: (0, 0)),
        ],
        out_specs=(
            pl.BlockSpec((1, TH * W, F), lambda n, i: (n, i, 0)),
            pl.BlockSpec((1, 1, 2, F), lambda n, i: (n, i, 0, 0)),
        ),
        scratch_shapes=[pltpu.VMEM((TH + 2, W + 2, C), mxu_dtype),   # halo tile
                        pltpu.VMEM((TH * W, 9 * C), mxu_dtype)],     # im2col LHS
        compiler_params=pltpu.CompilerParams(
            dimension_semantics=("parallel", "parallel"),
            vmem_limit_bytes=VMEM_LIMIT),
        cost_estimate=pl.CostEstimate(flops=flops, transcendentals=0,
                                      bytes_accessed=bytes_accessed),
    )(x4d, x4d, x4d, scale_in, shift_in, w9)
    return y, stats


# ---------------------------------------------------------------------------
# Final elementwise pass: BN2 (folded scale/shift) + residual + ReLU,
# lane-dense (rows, W*C) so every load/store is a full-width vector op.
# ---------------------------------------------------------------------------
def _bn_add_act_kernel(y_ref, sc_ref, sh_ref, r_ref, o_ref):
    y = y_ref[...].astype(jnp.float32)
    v = y * sc_ref[...] + sh_ref[...] + r_ref[...].astype(jnp.float32)
    o_ref[...] = jnp.maximum(v, 0.0).astype(o_ref.dtype)


def _bn_add_act(y2d, scale_row, shift_row, res2d, out_dtype):
    R, L = y2d.shape
    TR = _pick_tile_rows(R)
    row_spec = pl.BlockSpec((TR, L), lambda i: (i, 0))
    vec_spec = pl.BlockSpec((1, L), lambda i: (0, 0))
    bytes_accessed = int(y2d.size * jnp.dtype(y2d.dtype).itemsize
                         + res2d.size * 4 + 2 * L * 4
                         + R * L * jnp.dtype(out_dtype).itemsize)
    # TODO(synk): on v5e a bf16 out_dtype halves the store-bound writeback when
    # the consumer tolerates it; kept f32 here for tight validation.
    return pl.pallas_call(
        _bn_add_act_kernel,
        out_shape=jax.ShapeDtypeStruct((R, L), out_dtype),
        grid=(R // TR,),
        in_specs=[row_spec, vec_spec, vec_spec, row_spec],
        out_specs=row_spec,
        compiler_params=pltpu.CompilerParams(
            dimension_semantics=("parallel",), vmem_limit_bytes=VMEM_LIMIT),
        cost_estimate=pl.CostEstimate(flops=5 * R * L, transcendentals=0,
                                      bytes_accessed=bytes_accessed),
    )(y2d, scale_row, shift_row, res2d)


# ---------------------------------------------------------------------------
# Glue: weight layout, BN finalize, forward pass.
# ---------------------------------------------------------------------------
def _prep_weight(w_oihw, mxu_dtype):
    """(Cout, Cin, 3, 3) torch OIHW -> (9*Cin, Cout), K index = (ky*3+kx)*Cin + c."""
    cout, cin = w_oihw.shape[0], w_oihw.shape[1]
    return (jnp.transpose(w_oihw, (2, 3, 1, 0))
            .reshape(9 * cin, cout).astype(mxu_dtype))


def _bn_scale_shift(stats, count, gamma, beta):
    s1 = jnp.sum(stats[:, :, 0, :], axis=(0, 1))
    s2 = jnp.sum(stats[:, :, 1, :], axis=(0, 1))
    mean = s1 / count
    # E[x^2] - E[x]^2 in f32; activations are O(1) here so cancellation is benign.
    var = jnp.maximum(s2 / count - mean * mean, 0.0)
    scale = gamma * lax.rsqrt(var + EPS)
    shift = beta - mean * scale
    return scale, shift                     # per-channel (F,), (F,) f32


def basic_block_forward(x_nchw, params, *, mxu_dtype=jnp.bfloat16):
    """BasicBlock forward (stride=1, downsample=None). NCHW in / NCHW out."""
    N, C, H, W = x_nchw.shape
    F = params["w1"].shape[0]
    assert params["w1"].shape[1] == C and F == C, "downsample=None path only"

    # One NCHW -> NHWC transpose; all later reshapes are free row-major views.
    x_nhwc = jnp.transpose(x_nchw, (0, 2, 3, 1)).astype(jnp.float32)

    w1 = _prep_weight(params["w1"], mxu_dtype)
    w2 = _prep_weight(params["w2"], mxu_dtype)
    ident_sc = jnp.ones((1, C), jnp.float32)
    ident_sh = jnp.zeros((1, C), jnp.float32)

    # conv1 (raw input, no prologue); cast to MXU dtype happens in-kernel.
    y1, st1 = _conv3x3(x_nhwc, w1, ident_sc, ident_sh,
                       fuse_bn_relu=False, mxu_dtype=mxu_dtype)
    sc1, sh1 = _bn_scale_shift(st1, N * H * W, params["gamma1"], params["beta1"])

    # conv2 with BN1+ReLU fused into its prologue; y1 re-viewed as NHWC for free.
    y2, st2 = _conv3x3(y1.reshape(N, H, W, F), w2, sc1[None, :], sh1[None, :],
                       fuse_bn_relu=True, mxu_dtype=mxu_dtype)
    sc2, sh2 = _bn_scale_shift(st2, N * H * W, params["gamma2"], params["beta2"])

    # BN2 + residual + ReLU on the lane-dense (N*H, W*F) view.
    out = _bn_add_act(y2.reshape(N * H, W * F),
                      jnp.tile(sc2, W)[None, :], jnp.tile(sh2, W)[None, :],
                      x_nhwc.reshape(N * H, W * C),
                      jnp.float32)
    return jnp.transpose(out.reshape(N, H, W, F), (0, 3, 1, 2))   # back to NCHW


# ---------------------------------------------------------------------------
# Pure-JAX reference (same math) for validation.
# ---------------------------------------------------------------------------
def basic_block_reference(x_nchw, params):
    def conv3x3(x, w):
        return lax.conv_general_dilated(
            x, w, window_strides=(1, 1), padding=((1, 1), (1, 1)),
            dimension_numbers=("NCHW", "OIHW", "NCHW"))

    def bn(x, g, b):
        mean = jnp.mean(x, axis=(0, 2, 3), keepdims=True)
        var = jnp.mean((x - mean) ** 2, axis=(0, 2, 3), keepdims=True)
        xhat = (x - mean) * lax.rsqrt(var + EPS)
        return xhat * g.reshape(1, -1, 1, 1) + b.reshape(1, -1, 1, 1)

    x = x_nchw.astype(jnp.float32)
    out = jnp.maximum(bn(conv3x3(x, params["w1"]), params["gamma1"],
                         params["beta1"]), 0.0)
    out = bn(conv3x3(out, params["w2"]), params["gamma2"], params["beta2"]) + x
    return jnp.maximum(out, 0.0)


# ---------------------------------------------------------------------------
if __name__ == "__main__":
    N, inplanes, H, W = 2, 8, 16, 16
    planes = inplanes  # downsample=None requires inplanes == planes, stride == 1

    key = jax.random.PRNGKey(0)
    k1, k2, k3, k4, k5, k6, kx = jax.random.split(key, 7)
    params = {
        "w1": jax.random.normal(k1, (planes, inplanes, 3, 3), jnp.float32) * 0.1,
        "w2": jax.random.normal(k2, (planes, planes, 3, 3), jnp.float32) * 0.1,
        "gamma1": 1.0 + 0.1 * jax.random.normal(k3, (planes,), jnp.float32),
        "beta1": 0.1 * jax.random.normal(k4, (planes,), jnp.float32),
        "gamma2": 1.0 + 0.1 * jax.random.normal(k5, (planes,), jnp.float32),
        "beta2": 0.1 * jax.random.normal(k6, (planes,), jnp.float32),
    }
    x = jax.random.normal(kx, (N, inplanes, H, W), jnp.float32)

    fwd = jax.jit(basic_block_forward, static_argnames=("mxu_dtype",))
    ref = jax.block_until_ready(basic_block_reference(x, params))

    # f32 MXU operands: tight check of the kernel structure / BN math.
    out_f32 = jax.block_until_ready(fwd(x, params, mxu_dtype=jnp.float32))
    assert out_f32.shape == (N, planes, H, W), out_f32.shape
    err_f32 = float(jnp.max(jnp.abs(out_f32 - ref)))
    assert jnp.allclose(out_f32, ref, atol=5e-3, rtol=5e-3), err_f32

    # bf16 MXU operands (v6e/v7x fast path): looser tolerance covers the
    # deliberate bf16 rounding of activations/weights (accumulation stays f32).
    out_bf16 = jax.block_until_ready(fwd(x, params, mxu_dtype=jnp.bfloat16))
    err_bf16 = float(jnp.max(jnp.abs(out_bf16 - ref)))
    assert jnp.allclose(out_bf16, ref, atol=5e-2, rtol=5e-2), err_bf16

    print("KERNEL_OK")
</pallas_src>

<mosaic_0001>
module attributes {stable_mosaic.version = 11 : i64} {
  func.func @kernel(%arg0: i32, %arg1: i32, %arg2: memref<1x16x16x8xf32, #tpu.memory_space<vmem>>, %arg3: memref<1x1x16x8xf32, #tpu.memory_space<vmem>>, %arg4: memref<1x1x16x8xf32, #tpu.memory_space<vmem>>, %arg5: memref<1x8xf32, #tpu.memory_space<vmem>>, %arg6: memref<1x8xf32, #tpu.memory_space<vmem>>, %arg7: memref<72x8xf32, #tpu.memory_space<vmem>>, %arg8: memref<1x256x8xf32, #tpu.memory_space<vmem>>, %arg9: memref<1x1x2x8xf32, #tpu.memory_space<vmem>>, %arg10: memref<18x18x8xf32, #tpu.memory_space<vmem>>, %arg11: memref<256x72xf32, #tpu.memory_space<vmem>>) attributes {dimension_semantics = [#tpu.dimension_semantics<parallel>, #tpu.dimension_semantics<parallel>], iteration_bounds = array<i64: 2, 1>, scalar_prefetch = 0 : i64, scratch_operands = 2 : i64, tpu.core_type = #tpu.core_type<tc>, window_params = [{transform_indices = @transform_0, window_bounds = array<i64: 1, 16, 16, 8>}, {transform_indices = @transform_1, window_bounds = array<i64: 1, 1, 16, 8>}, {transform_indices = @transform_2, window_bounds = array<i64: 1, 1, 16, 8>}, {pipeline_mode = #tpu.pipeline_mode<synchronous>, transform_indices = @transform_3, window_bounds = array<i64: 1, 8>}, {pipeline_mode = #tpu.pipeline_mode<synchronous>, transform_indices = @transform_4, window_bounds = array<i64: 1, 8>}, {pipeline_mode = #tpu.pipeline_mode<synchronous>, transform_indices = @transform_5, window_bounds = array<i64: 72, 8>}, {transform_indices = @transform_6, window_bounds = array<i64: 1, 256, 8>}, {transform_indices = @transform_7, window_bounds = array<i64: 1, 1, 2, 8>}]} {
    %cst = arith.constant 0.000000e+00 : f32
    %0 = vector.broadcast %cst : f32 to vector<18x1x8xf32>
    %c0 = arith.constant 0 : index
    %c0_0 = arith.constant 0 : index
    %c0_1 = arith.constant 0 : index
    %1 = vector.load %arg10[%c0, %c0_0, %c0_1] : memref<18x18x8xf32, #tpu.memory_space<vmem>>, vector<18x1x8xf32>
    tpu.vector_store %arg10[%c0, %c0_0, %c0_1], %0 {strides = array<i32>} : memref<18x18x8xf32, #tpu.memory_space<vmem>>, vector<18x1x8xf32>,
    %cst_2 = arith.constant 0.000000e+00 : f32
    %2 = vector.broadcast %cst_2 : f32 to vector<18x1x8xf32>
    %c0_3 = arith.constant 0 : index
    %c17 = arith.constant 17 : index
    %c0_4 = arith.constant 0 : index
    %3 = vector.load %arg10[%c0_3, %c17, %c0_4] : memref<18x18x8xf32, #tpu.memory_space<vmem>>, vector<18x1x8xf32>
    tpu.vector_store %arg10[%c0_3, %c17, %c0_4], %2 {strides = array<i32>} : memref<18x18x8xf32, #tpu.memory_space<vmem>>, vector<18x1x8xf32>,
    %c0_5 = arith.constant 0 : index
    %c0_6 = arith.constant 0 : index
    %c0_7 = arith.constant 0 : index
    %c0_8 = arith.constant 0 : index
    %4 = vector.load %arg3[%c0_5, %c0_6, %c0_7, %c0_8] : memref<1x1x16x8xf32, #tpu.memory_space<vmem>>, vector<1x1x16x8xf32>
    %5 = vector.shape_cast %4 : vector<1x1x16x8xf32> to vector<1x16x8xf32>
    %c0_9 = arith.constant 0 : index
    %c1 = arith.constant 1 : index
    %c0_10 = arith.constant 0 : index
    %6 = vector.load %arg10[%c0_9, %c1, %c0_10] : memref<18x18x8xf32, #tpu.memory_space<vmem>>, vector<1x16x8xf32>
    tpu.vector_store %arg10[%c0_9, %c1, %c0_10], %5 {strides = array<i32>} : memref<18x18x8xf32, #tpu.memory_space<vmem>>, vector<1x16x8xf32>,
    %c0_11 = arith.constant 0 : index
    %c0_12 = arith.constant 0 : index
    %c0_13 = arith.constant 0 : index
    %c0_14 = arith.constant 0 : index
    %7 = vector.load %arg2[%c0_11, %c0_12, %c0_13, %c0_14] : memref<1x16x16x8xf32, #tpu.memory_space<vmem>>, vector<1x16x16x8xf32>
    %8 = vector.shape_cast %7 : vector<1x16x16x8xf32> to vector<16x16x8xf32>
    %c1_15 = arith.constant 1 : index
    %c1_16 = arith.constant 1 : index
    %c0_17 = arith.constant 0 : index
    %9 = vector.load %arg10[%c1_15, %c1_16, %c0_17] : memref<18x18x8xf32, #tpu.memory_space<vmem>>, vector<16x16x8xf32>
    tpu.vector_store %arg10[%c1_15, %c1_16, %c0_17], %8 {strides = array<i32>} : memref<18x18x8xf32, #tpu.memory_space<vmem>>, vector<16x16x8xf32>,
    %c0_18 = arith.constant 0 : index
    %c0_19 = arith.constant 0 : index
    %c0_20 = arith.constant 0 : index
    %c0_21 = arith.constant 0 : index
    %10 = vector.load %arg4[%c0_18, %c0_19, %c0_20, %c0_21] : memref<1x1x16x8xf32, #tpu.memory_space<vmem>>, vector<1x1x16x8xf32>
    %11 = vector.shape_cast %10 : vector<1x1x16x8xf32> to vector<1x16x8xf32>
    %c17_22 = arith.constant 17 : index
    %c1_23 = arith.constant 1 : index
    %c0_24 = arith.constant 0 : index
    %12 = vector.load %arg10[%c17_22, %c1_23, %c0_24] : memref<18x18x8xf32, #tpu.memory_space<vmem>>, vector<1x16x8xf32>
    tpu.vector_store %arg10[%c17_22, %c1_23, %c0_24], %11 {strides = array<i32>} : memref<18x18x8xf32, #tpu.memory_space<vmem>>, vector<1x16x8xf32>,
    %c0_i32 = arith.constant 0 : i32
    %13 = arith.cmpi eq, %arg1, %c0_i32 : i32
    %14 = arith.extui %13 : i1 to i32
    %c0_i32_25 = arith.constant 0 : i32
    %15 = arith.cmpi ne, %14, %c0_i32_25 : i32
    scf.if %15 {
      %cst_82 = arith.constant 0.000000e+00 : f32
      %63 = vector.broadcast %cst_82 : f32 to vector<1x18x8xf32>
      %c0_83 = arith.constant 0 : index
      %c0_84 = arith.constant 0 : index
      %c0_85 = arith.constant 0 : index
      %64 = vector.load %arg10[%c0_83, %c0_84, %c0_85] : memref<18x18x8xf32, #tpu.memory_space<vmem>>, vector<1x18x8xf32>
      tpu.vector_store %arg10[%c0_83, %c0_84, %c0_85], %63 {strides = array<i32>} : memref<18x18x8xf32, #tpu.memory_space<vmem>>, vector<1x18x8xf32>,
    } else {
    }
    %c0_i32_26 = arith.constant 0 : i32
    %16 = arith.cmpi eq, %arg1, %c0_i32_26 : i32
    %17 = arith.extui %16 : i1 to i32
    %c0_i32_27 = arith.constant 0 : i32
    %18 = arith.cmpi ne, %17, %c0_i32_27 : i32
    scf.if %18 {
      %cst_82 = arith.constant 0.000000e+00 : f32
      %63 = vector.broadcast %cst_82 : f32 to vector<1x18x8xf32>
      %c17_83 = arith.constant 17 : index
      %c0_84 = arith.constant 0 : index
      %c0_85 = arith.constant 0 : index
      %64 = vector.load %arg10[%c17_83, %c0_84, %c0_85] : memref<18x18x8xf32, #tpu.memory_space<vmem>>, vector<1x18x8xf32>
      tpu.vector_store %arg10[%c17_83, %c0_84, %c0_85], %63 {strides = array<i32>} : memref<18x18x8xf32, #tpu.memory_space<vmem>>, vector<1x18x8xf32>,
    } else {
    }
    %c0_28 = arith.constant 0 : index
    %c0_29 = arith.constant 0 : index
    %c0_30 = arith.constant 0 : index
    %19 = vector.load %arg10[%c0_28, %c0_29, %c0_30] : memref<18x18x8xf32, #tpu.memory_space<vmem>>, vector<16x16x8xf32>
    %20 = vector.shape_cast %19 : vector<16x16x8xf32> to vector<256x8xf32>
    %c0_31 = arith.constant 0 : index
    %c0_32 = arith.constant 0 : index
    %21 = vector.load %arg11[%c0_31, %c0_32] : memref<256x72xf32, #tpu.memory_space<vmem>>, vector<256x8xf32>
    tpu.vector_store %arg11[%c0_31, %c0_32], %20 {strides = array<i32>} : memref<256x72xf32, #tpu.memory_space<vmem>>, vector<256x8xf32>,
    %c0_33 = arith.constant 0 : index
    %c1_34 = arith.constant 1 : index
    %c0_35 = arith.constant 0 : index
    %22 = vector.load %arg10[%c0_33, %c1_34, %c0_35] : memref<18x18x8xf32, #tpu.memory_space<vmem>>, vector<16x16x8xf32>
    %23 = vector.shape_cast %22 : vector<16x16x8xf32> to vector<256x8xf32>
    %c0_36 = arith.constant 0 : index
    %c8 = arith.constant 8 : index
    %24 = vector.load %arg11[%c0_36, %c8] : memref<256x72xf32, #tpu.memory_space<vmem>>, vector<256x8xf32>
    tpu.vector_store %arg11[%c0_36, %c8], %23 {strides = array<i32>} : memref<256x72xf32, #tpu.memory_space<vmem>>, vector<256x8xf32>,
    %c0_37 = arith.constant 0 : index
    %c2 = arith.constant 2 : index
    %c0_38 = arith.constant 0 : index
    %25 = vector.load %arg10[%c0_37, %c2, %c0_38] : memref<18x18x8xf32, #tpu.memory_space<vmem>>, vector<16x16x8xf32>
    %26 = vector.shape_cast %25 : vector<16x16x8xf32> to vector<256x8xf32>
    %c0_39 = arith.constant 0 : index
    %c16 = arith.constant 16 : index
    %27 = vector.load %arg11[%c0_39, %c16] : memref<256x72xf32, #tpu.memory_space<vmem>>, vector<256x8xf32>
    tpu.vector_store %arg11[%c0_39, %c16], %26 {strides = array<i32>} : memref<256x72xf32, #tpu.memory_space<vmem>>, vector<256x8xf32>,
    %c1_40 = arith.constant 1 : index
    %c0_41 = arith.constant 0 : index
    %c0_42 = arith.constant 0 : index
    %28 = vector.load %arg10[%c1_40, %c0_41, %c0_42] : memref<18x18x8xf32, #tpu.memory_space<vmem>>, vector<16x16x8xf32>
    %29 = vector.shape_cast %28 : vector<16x16x8xf32> to vector<256x8xf32>
    %c0_43 = arith.constant 0 : index
    %c24 = arith.constant 24 : index
    %30 = vector.load %arg11[%c0_43, %c24] : memref<256x72xf32, #tpu.memory_space<vmem>>, vector<256x8xf32>
    tpu.vector_store %arg11[%c0_43, %c24], %29 {strides = array<i32>} : memref<256x72xf32, #tpu.memory_space<vmem>>, vector<256x8xf32>,
    %c1_44 = arith.constant 1 : index
    %c1_45 = arith.constant 1 : index
    %c0_46 = arith.constant 0 : index
    %31 = vector.load %arg10[%c1_44, %c1_45, %c0_46] : memref<18x18x8xf32, #tpu.memory_space<vmem>>, vector<16x16x8xf32>
    %32 = vector.shape_cast %31 : vector<16x16x8xf32> to vector<256x8xf32>
    %c0_47 = arith.constant 0 : index
    %c32 = arith.constant 32 : index
    %33 = vector.load %arg11[%c0_47, %c32] : memref<256x72xf32, #tpu.memory_space<vmem>>, vector<256x8xf32>
    tpu.vector_store %arg11[%c0_47, %c32], %32 {strides = array<i32>} : memref<256x72xf32, #tpu.memory_space<vmem>>, vector<256x8xf32>,
    %c1_48 = arith.constant 1 : index
    %c2_49 = arith.constant 2 : index
    %c0_50 = arith.constant 0 : index
    %34 = vector.load %arg10[%c1_48, %c2_49, %c0_50] : memref<18x18x8xf32, #tpu.memory_space<vmem>>, vector<16x16x8xf32>
    %35 = vector.shape_cast %34 : vector<16x16x8xf32> to vector<256x8xf32>
    %c0_51 = arith.constant 0 : index
    %c40 = arith.constant 40 : index
    %36 = vector.load %arg11[%c0_51, %c40] : memref<256x72xf32, #tpu.memory_space<vmem>>, vector<256x8xf32>
    tpu.vector_store %arg11[%c0_51, %c40], %35 {strides = array<i32>} : memref<256x72xf32, #tpu.memory_space<vmem>>, vector<256x8xf32>,
    %c2_52 = arith.constant 2 : index
    %c0_53 = arith.constant 0 : index
    %c0_54 = arith.constant 0 : index
    %37 = vector.load %arg10[%c2_52, %c0_53, %c0_54] : memref<18x18x8xf32, #tpu.memory_space<vmem>>, vector<16x16x8xf32>
    %38 = vector.shape_cast %37 : vector<16x16x8xf32> to vector<256x8xf32>
    %c0_55 = arith.constant 0 : index
    %c48 = arith.constant 48 : index
    %39 = vector.load %arg11[%c0_55, %c48] : memref<256x72xf32, #tpu.memory_space<vmem>>, vector<256x8xf32>
    tpu.vector_store %arg11[%c0_55, %c48], %38 {strides = array<i32>} : memref<256x72xf32, #tpu.memory_space<vmem>>, vector<256x8xf32>,
    %c2_56 = arith.constant 2 : index
    %c1_57 = arith.constant 1 : index
    %c0_58 = arith.constant 0 : index
    %40 = vector.load %arg10[%c2_56, %c1_57, %c0_58] : memref<18x18x8xf32, #tpu.memory_space<vmem>>, vector<16x16x8xf32>
    %41 = vector.shape_cast %40 : vector<16x16x8xf32> to vector<256x8xf32>
    %c0_59 = arith.constant 0 : index
    %c56 = arith.constant 56 : index
    %42 = vector.load %arg11[%c0_59, %c56] : memref<256x72xf32, #tpu.memory_space<vmem>>, vector<256x8xf32>
    tpu.vector_store %arg11[%c0_59, %c56], %41 {strides = array<i32>} : memref<256x72xf32, #tpu.memory_space<vmem>>, vector<256x8xf32>,
    %c2_60 = arith.constant 2 : index
    %c2_61 = arith.constant 2 : index
    %c0_62 = arith.constant 0 : index
    %43 = vector.load %arg10[%c2_60, %c2_61, %c0_62] : memref<18x18x8xf32, #tpu.memory_space<vmem>>, vector<16x16x8xf32>
    %44 = vector.shape_cast %43 : vector<16x16x8xf32> to vector<256x8xf32>
    %c0_63 = arith.constant 0 : index
    %c64 = arith.constant 64 : index
    %45 = vector.load %arg11[%c0_63, %c64] : memref<256x72xf32, #tpu.memory_space<vmem>>, vector<256x8xf32>
    tpu.vector_store %arg11[%c0_63, %c64], %44 {strides = array<i32>} : memref<256x72xf32, #tpu.memory_space<vmem>>, vector<256x8xf32>,
    %c0_64 = arith.constant 0 : index
    %c0_65 = arith.constant 0 : index
    %46 = vector.load %arg11[%c0_64, %c0_65] : memref<256x72xf32, #tpu.memory_space<vmem>>, vector<256x72xf32>
    %c0_66 = arith.constant 0 : index
    %c0_67 = arith.constant 0 : index
    %47 = vector.load %arg7[%c0_66, %c0_67] : memref<72x8xf32, #tpu.memory_space<vmem>>, vector<72x8xf32>
    %cst_68 = arith.constant dense<0.000000e+00> : vector<256x8xf32>
    %48 = tpu.matmul %46, %47, %cst_68 {dimension_numbers = #tpu.dot_dimension_numbers<[1], [0], [0], [1], [0, 0, 1, 1], [], []>} : vector<256x72xf32>, vector<72x8xf32>, vector<256x8xf32> -> vector<256x8xf32>
    %c0_69 = arith.constant 0 : index
    %c0_70 = arith.constant 0 : index
    %c0_71 = arith.constant 0 : index
    %49 = vector.load %arg8[%c0_69, %c0_70, %c0_71] : memref<1x256x8xf32, #tpu.memory_space<vmem>>, vector<1x256x8xf32>
    %50 = vector.shape_cast %49 : vector<1x256x8xf32> to vector<256x8xf32>
    %51 = vector.shape_cast %48 : vector<256x8xf32> to vector<1x256x8xf32>
    tpu.vector_store %arg8[%c0_69, %c0_70, %c0_71], %51 {strides = array<i32>} : memref<1x256x8xf32, #tpu.memory_space<vmem>>, vector<1x256x8xf32>,
    %cst_72 = arith.constant dense<0.000000e+00> : vector<8xf32>
    %52 = vector.multi_reduction <add>, %48, %cst_72 [0] : vector<256x8xf32> to vector<8xf32>
    %53 = vector.shape_cast %52 : vector<8xf32> to vector<1x8xf32>
    %c0_73 = arith.constant 0 : index
    %c0_74 = arith.constant 0 : index
    %c0_75 = arith.constant 0 : index
    %c0_76 = arith.constant 0 : index
    %54 = vector.load %arg9[%c0_73, %c0_74, %c0_75, %c0_76] : memref<1x1x2x8xf32, #tpu.memory_space<vmem>>, vector<1x1x1x8xf32>
    %55 = vector.shape_cast %54 : vector<1x1x1x8xf32> to vector<1x8xf32>
    %56 = vector.shape_cast %53 : vector<1x8xf32> to vector<1x1x1x8xf32>
    tpu.vector_store %arg9[%c0_73, %c0_74, %c0_75, %c0_76], %56 {strides = array<i32>} : memref<1x1x2x8xf32, #tpu.memory_space<vmem>>, vector<1x1x1x8xf32>,
    %57 = arith.mulf %48, %48 : vector<256x8xf32>
    %cst_77 = arith.constant dense<0.000000e+00> : vector<8xf32>
    %58 = vector.multi_reduction <add>, %57, %cst_77 [0] : vector<256x8xf32> to vector<8xf32>
    %59 = vector.shape_cast %58 : vector<8xf32> to vector<1x8xf32>
    %c0_78 = arith.constant 0 : index
    %c0_79 = arith.constant 0 : index
    %c1_80 = arith.constant 1 : index
    %c0_81 = arith.constant 0 : index
    %60 = vector.load %arg9[%c0_78, %c0_79, %c1_80, %c0_81] : memref<1x1x2x8xf32, #tpu.memory_space<vmem>>, vector<1x1x1x8xf32>
    %61 = vector.shape_cast %60 : vector<1x1x1x8xf32> to vector<1x8xf32>
    %62 = vector.shape_cast %59 : vector<1x8xf32> to vector<1x1x1x8xf32>
    tpu.vector_store %arg9[%c0_78, %c0_79, %c1_80, %c0_81], %62 {strides = array<i32>} : memref<1x1x2x8xf32, #tpu.memory_space<vmem>>, vector<1x1x1x8xf32>,
    return
  }
  func.func @transform_0(%arg0: i32, %arg1: i32) -> (i32, i32, i32, i32) {
    %c0_i32 = arith.constant 0 : i32
    %c0_i32_0 = arith.constant 0 : i32
    %c0_i32_1 = arith.constant 0 : i32
    return %arg0, %arg1, %c0_i32, %c0_i32_0 : i32, i32, i32, i32
  }
  func.func @transform_1(%arg0: i32, %arg1: i32) -> (i32, i32, i32, i32) {
    %c16_i32 = arith.constant 16 : i32
    %0 = arith.muli %arg1, %c16_i32 : i32
    %c1_i32 = arith.constant 1 : i32
    %1 = arith.subi %0, %c1_i32 : i32
    %c0_i32 = arith.constant 0 : i32
    %2 = arith.maxsi %1, %c0_i32 : i32
    %c0_i32_0 = arith.constant 0 : i32
    %c0_i32_1 = arith.constant 0 : i32
    %c0_i32_2 = arith.constant 0 : i32
    return %arg0, %2, %c0_i32_0, %c0_i32_1 : i32, i32, i32, i32
  }
  func.func @transform_2(%arg0: i32, %arg1: i32) -> (i32, i32, i32, i32) {
    %c16_i32 = arith.constant 16 : i32
    %0 = arith.muli %arg1, %c16_i32 : i32
    %c16_i32_0 = arith.constant 16 : i32
    %1 = arith.addi %0, %c16_i32_0 : i32
    %c15_i32 = arith.constant 15 : i32
    %2 = arith.minsi %1, %c15_i32 : i32
    %c0_i32 = arith.constant 0 : i32
    %c0_i32_1 = arith.constant 0 : i32
    %c0_i32_2 = arith.constant 0 : i32
    return %arg0, %2, %c0_i32, %c0_i32_1 : i32, i32, i32, i32
  }
  func.func @transform_3(%arg0: i32, %arg1: i32) -> (i32, i32) {
    %c0_i32 = arith.constant 0 : i32
    %c0_i32_0 = arith.constant 0 : i32
    %c0_i32_1 = arith.constant 0 : i32
    return %c0_i32, %c0_i32_0 : i32, i32
  }
  func.func @transform_4(%arg0: i32, %arg1: i32) -> (i32, i32) {
    %c0_i32 = arith.constant 0 : i32
    %c0_i32_0 = arith.constant 0 : i32
    %c0_i32_1 = arith.constant 0 : i32
    return %c0_i32, %c0_i32_0 : i32, i32
  }
  func.func @transform_5(%arg0: i32, %arg1: i32) -> (i32, i32) {
    %c0_i32 = arith.constant 0 : i32
    %c0_i32_0 = arith.constant 0 : i32
    %c0_i32_1 = arith.constant 0 : i32
    return %c0_i32, %c0_i32_0 : i32, i32
  }
  func.func @transform_6(%arg0: i32, %arg1: i32) -> (i32, i32, i32) {
    %c0_i32 = arith.constant 0 : i32
    %c0_i32_0 = arith.constant 0 : i32
    return %arg0, %arg1, %c0_i32 : i32, i32, i32
  }
  func.func @transform_7(%arg0: i32, %arg1: i32) -> (i32, i32, i32, i32) {
    %c0_i32 = arith.constant 0 : i32
    %c0_i32_0 = arith.constant 0 : i32
    %c0_i32_1 = arith.constant 0 : i32
    return %arg0, %arg1, %c0_i32, %c0_i32_0 : i32, i32, i32, i32
  }
}

module attributes {stable_mosaic.version = 11 : i64} {
  func.func @kernel(%arg0: i32, %arg1: i32, %arg2: memref<1x16x16x8xf32, #tpu.memory_space<vmem>>, %arg3: memref<1x1x16x8xf32, #tpu.memory_space<vmem>>, %arg4: memref<1x1x16x8xf32, #tpu.memory_space<vmem>>, %arg5: memref<1x8xf32, #tpu.memory_space<vmem>>, %arg6: memref<1x8xf32, #tpu.memory_space<vmem>>, %arg7: memref<72x8xf32, #tpu.memory_space<vmem>>, %arg8: memref<1x256x8xf32, #tpu.memory_space<vmem>>, %arg9: memref<1x1x2x8xf32, #tpu.memory_space<vmem>>, %arg10: memref<18x18x8xf32, #tpu.memory_space<vmem>>, %arg11: memref<256x72xf32, #tpu.memory_space<vmem>>) attributes {dimension_semantics = [#tpu.dimension_semantics<parallel>, #tpu.dimension_semantics<parallel>], iteration_bounds = array<i64: 2, 1>, scalar_prefetch = 0 : i64, scratch_operands = 2 : i64, tpu.core_type = #tpu.core_type<tc>, window_params = [{transform_indices = @transform_0, window_bounds = array<i64: 1, 16, 16, 8>}, {transform_indices = @transform_1, window_bounds = array<i64: 1, 1, 16, 8>}, {transform_indices = @transform_2, window_bounds = array<i64: 1, 1, 16, 8>}, {pipeline_mode = #tpu.pipeline_mode<synchronous>, transform_indices = @transform_3, window_bounds = array<i64: 1, 8>}, {pipeline_mode = #tpu.pipeline_mode<synchronous>, transform_indices = @transform_4, window_bounds = array<i64: 1, 8>}, {pipeline_mode = #tpu.pipeline_mode<synchronous>, transform_indices = @transform_5, window_bounds = array<i64: 72, 8>}, {transform_indices = @transform_6, window_bounds = array<i64: 1, 256, 8>}, {transform_indices = @transform_7, window_bounds = array<i64: 1, 1, 2, 8>}]} {
    %cst = arith.constant 0.000000e+00 : f32
    %0 = vector.broadcast %cst : f32 to vector<18x1x8xf32>
    %c0 = arith.constant 0 : index
    %c0_0 = arith.constant 0 : index
    %c0_1 = arith.constant 0 : index
    %1 = vector.load %arg10[%c0, %c0_0, %c0_1] : memref<18x18x8xf32, #tpu.memory_space<vmem>>, vector<18x1x8xf32>
    tpu.vector_store %arg10[%c0, %c0_0, %c0_1], %0 {strides = array<i32>} : memref<18x18x8xf32, #tpu.memory_space<vmem>>, vector<18x1x8xf32>,
    %cst_2 = arith.constant 0.000000e+00 : f32
    %2 = vector.broadcast %cst_2 : f32 to vector<18x1x8xf32>
    %c0_3 = arith.constant 0 : index
    %c17 = arith.constant 17 : index
    %c0_4 = arith.constant 0 : index
    %3 = vector.load %arg10[%c0_3, %c17, %c0_4] : memref<18x18x8xf32, #tpu.memory_space<vmem>>, vector<18x1x8xf32>
    tpu.vector_store %arg10[%c0_3, %c17, %c0_4], %2 {strides = array<i32>} : memref<18x18x8xf32, #tpu.memory_space<vmem>>, vector<18x1x8xf32>,
    %c0_5 = arith.constant 0 : index
    %c0_6 = arith.constant 0 : index
    %c0_7 = arith.constant 0 : index
    %c0_8 = arith.constant 0 : index
    %4 = vector.load %arg3[%c0_5, %c0_6, %c0_7, %c0_8] : memref<1x1x16x8xf32, #tpu.memory_space<vmem>>, vector<1x1x16x8xf32>
    %5 = vector.shape_cast %4 : vector<1x1x16x8xf32> to vector<1x16x8xf32>
    %c0_9 = arith.constant 0 : index
    %c0_10 = arith.constant 0 : index
    %6 = vector.load %arg5[%c0_9, %c0_10] : memref<1x8xf32, #tpu.memory_space<vmem>>, vector<1x8xf32>
    %7 = vector.shape_cast %6 : vector<1x8xf32> to vector<1x1x8xf32>
    %8 = vector.broadcast %7 : vector<1x1x8xf32> to vector<1x16x8xf32>
    %9 = arith.mulf %5, %8 : vector<1x16x8xf32>
    %c0_11 = arith.constant 0 : index
    %c0_12 = arith.constant 0 : index
    %10 = vector.load %arg6[%c0_11, %c0_12] : memref<1x8xf32, #tpu.memory_space<vmem>>, vector<1x8xf32>
    %11 = vector.shape_cast %10 : vector<1x8xf32> to vector<1x1x8xf32>
    %12 = vector.broadcast %11 : vector<1x1x8xf32> to vector<1x16x8xf32>
    %13 = arith.addf %9, %12 : vector<1x16x8xf32>
    %cst_13 = arith.constant 0.000000e+00 : f32
    %14 = vector.broadcast %cst_13 : f32 to vector<1x16x8xf32>
    %15 = arith.maximumf %13, %14 : vector<1x16x8xf32>
    %c0_14 = arith.constant 0 : index
    %c1 = arith.constant 1 : index
    %c0_15 = arith.constant 0 : index
    %16 = vector.load %arg10[%c0_14, %c1, %c0_15] : memref<18x18x8xf32, #tpu.memory_space<vmem>>, vector<1x16x8xf32>
    tpu.vector_store %arg10[%c0_14, %c1, %c0_15], %15 {strides = array<i32>} : memref<18x18x8xf32, #tpu.memory_space<vmem>>, vector<1x16x8xf32>,
    %c0_16 = arith.constant 0 : index
    %c0_17 = arith.constant 0 : index
    %c0_18 = arith.constant 0 : index
    %c0_19 = arith.constant 0 : index
    %17 = vector.load %arg2[%c0_16, %c0_17, %c0_18, %c0_19] : memref<1x16x16x8xf32, #tpu.memory_space<vmem>>, vector<1x16x16x8xf32>
    %18 = vector.shape_cast %17 : vector<1x16x16x8xf32> to vector<16x16x8xf32>
    %c0_20 = arith.constant 0 : index
    %c0_21 = arith.constant 0 : index
    %19 = vector.load %arg5[%c0_20, %c0_21] : memref<1x8xf32, #tpu.memory_space<vmem>>, vector<1x8xf32>
    %20 = vector.shape_cast %19 : vector<1x8xf32> to vector<1x1x8xf32>
    %21 = vector.broadcast %20 : vector<1x1x8xf32> to vector<16x16x8xf32>
    %22 = arith.mulf %18, %21 : vector<16x16x8xf32>
    %c0_22 = arith.constant 0 : index
    %c0_23 = arith.constant 0 : index
    %23 = vector.load %arg6[%c0_22, %c0_23] : memref<1x8xf32, #tpu.memory_space<vmem>>, vector<1x8xf32>
    %24 = vector.shape_cast %23 : vector<1x8xf32> to vector<1x1x8xf32>
    %25 = vector.broadcast %24 : vector<1x1x8xf32> to vector<16x16x8xf32>
    %26 = arith.addf %22, %25 : vector<16x16x8xf32>
    %cst_24 = arith.constant 0.000000e+00 : f32
    %27 = vector.broadcast %cst_24 : f32 to vector<16x16x8xf32>
    %28 = arith.maximumf %26, %27 : vector<16x16x8xf32>
    %c1_25 = arith.constant 1 : index
    %c1_26 = arith.constant 1 : index
    %c0_27 = arith.constant 0 : index
    %29 = vector.load %arg10[%c1_25, %c1_26, %c0_27] : memref<18x18x8xf32, #tpu.memory_space<vmem>>, vector<16x16x8xf32>
    tpu.vector_store %arg10[%c1_25, %c1_26, %c0_27], %28 {strides = array<i32>} : memref<18x18x8xf32, #tpu.memory_space<vmem>>, vector<16x16x8xf32>,
    %c0_28 = arith.constant 0 : index
    %c0_29 = arith.constant 0 : index
    %c0_30 = arith.constant 0 : index
    %c0_31 = arith.constant 0 : index
    %30 = vector.load %arg4[%c0_28, %c0_29, %c0_30, %c0_31] : memref<1x1x16x8xf32, #tpu.memory_space<vmem>>, vector<1x1x16x8xf32>
    %31 = vector.shape_cast %30 : vector<1x1x16x8xf32> to vector<1x16x8xf32>
    %c0_32 = arith.constant 0 : index
    %c0_33 = arith.constant 0 : index
    %32 = vector.load %arg5[%c0_32, %c0_33] : memref<1x8xf32, #tpu.memory_space<vmem>>, vector<1x8xf32>
    %33 = vector.shape_cast %32 : vector<1x8xf32> to vector<1x1x8xf32>
    %34 = vector.broadcast %33 : vector<1x1x8xf32> to vector<1x16x8xf32>
    %35 = arith.mulf %31, %34 : vector<1x16x8xf32>
    %c0_34 = arith.constant 0 : index
    %c0_35 = arith.constant 0 : index
    %36 = vector.load %arg6[%c0_34, %c0_35] : memref<1x8xf32, #tpu.memory_space<vmem>>, vector<1x8xf32>
    %37 = vector.shape_cast %36 : vector<1x8xf32> to vector<1x1x8xf32>
    %38 = vector.broadcast %37 : vector<1x1x8xf32> to vector<1x16x8xf32>
    %39 = arith.addf %35, %38 : vector<1x16x8xf32>
    %cst_36 = arith.constant 0.000000e+00 : f32
    %40 = vector.broadcast %cst_36 : f32 to vector<1x16x8xf32>
    %41 = arith.maximumf %39, %40 : vector<1x16x8xf32>
    %c17_37 = arith.constant 17 : index
    %c1_38 = arith.constant 1 : index
    %c0_39 = arith.constant 0 : index
    %42 = vector.load %arg10[%c17_37, %c1_38, %c0_39] : memref<18x18x8xf32, #tpu.memory_space<vmem>>, vector<1x16x8xf32>
    tpu.vector_store %arg10[%c17_37, %c1_38, %c0_39], %41 {strides = array<i32>} : memref<18x18x8xf32, #tpu.memory_space<vmem>>, vector<1x16x8xf32>,
    %c0_i32 = arith.constant 0 : i32
    %43 = arith.cmpi eq, %arg1, %c0_i32 : i32
    %44 = arith.extui %43 : i1 to i32
    %c0_i32_40 = arith.constant 0 : i32
    %45 = arith.cmpi ne, %44, %c0_i32_40 : i32
    scf.if %45 {
      %cst_97 = arith.constant 0.000000e+00 : f32
      %93 = vector.broadcast %cst_97 : f32 to vector<1x18x8xf32>
      %c0_98 = arith.constant 0 : index
      %c0_99 = arith.constant 0 : index
      %c0_100 = arith.constant 0 : index
      %94 = vector.load %arg10[%c0_98, %c0_99, %c0_100] : memref<18x18x8xf32, #tpu.memory_space<vmem>>, vector<1x18x8xf32>
      tpu.vector_store %arg10[%c0_98, %c0_99, %c0_100], %93 {strides = array<i32>} : memref<18x18x8xf32, #tpu.memory_space<vmem>>, vector<1x18x8xf32>,
    } else {
    }
    %c0_i32_41 = arith.constant 0 : i32
    %46 = arith.cmpi eq, %arg1, %c0_i32_41 : i32
    %47 = arith.extui %46 : i1 to i32
    %c0_i32_42 = arith.constant 0 : i32
    %48 = arith.cmpi ne, %47, %c0_i32_42 : i32
    scf.if %48 {
      %cst_97 = arith.constant 0.000000e+00 : f32
      %93 = vector.broadcast %cst_97 : f32 to vector<1x18x8xf32>
      %c17_98 = arith.constant 17 : index
      %c0_99 = arith.constant 0 : index
      %c0_100 = arith.constant 0 : index
      %94 = vector.load %arg10[%c17_98, %c0_99, %c0_100] : memref<18x18x8xf32, #tpu.memory_space<vmem>>, vector<1x18x8xf32>
      tpu.vector_store %arg10[%c17_98, %c0_99, %c0_100], %93 {strides = array<i32>} : memref<18x18x8xf32, #tpu.memory_space<vmem>>, vector<1x18x8xf32>,
    } else {
    }
    %c0_43 = arith.constant 0 : index
    %c0_44 = arith.constant 0 : index
    %c0_45 = arith.constant 0 : index
    %49 = vector.load %arg10[%c0_43, %c0_44, %c0_45] : memref<18x18x8xf32, #tpu.memory_space<vmem>>, vector<16x16x8xf32>
    %50 = vector.shape_cast %49 : vector<16x16x8xf32> to vector<256x8xf32>
    %c0_46 = arith.constant 0 : index
    %c0_47 = arith.constant 0 : index
    %51 = vector.load %arg11[%c0_46, %c0_47] : memref<256x72xf32, #tpu.memory_space<vmem>>, vector<256x8xf32>
    tpu.vector_store %arg11[%c0_46, %c0_47], %50 {strides = array<i32>} : memref<256x72xf32, #tpu.memory_space<vmem>>, vector<256x8xf32>,
    %c0_48 = arith.constant 0 : index
    %c1_49 = arith.constant 1 : index
    %c0_50 = arith.constant 0 : index
    %52 = vector.load %arg10[%c0_48, %c1_49, %c0_50] : memref<18x18x8xf32, #tpu.memory_space<vmem>>, vector<16x16x8xf32>
    %53 = vector.shape_cast %52 : vector<16x16x8xf32> to vector<256x8xf32>
    %c0_51 = arith.constant 0 : index
    %c8 = arith.constant 8 : index
    %54 = vector.load %arg11[%c0_51, %c8] : memref<256x72xf32, #tpu.memory_space<vmem>>, vector<256x8xf32>
    tpu.vector_store %arg11[%c0_51, %c8], %53 {strides = array<i32>} : memref<256x72xf32, #tpu.memory_space<vmem>>, vector<256x8xf32>,
    %c0_52 = arith.constant 0 : index
    %c2 = arith.constant 2 : index
    %c0_53 = arith.constant 0 : index
    %55 = vector.load %arg10[%c0_52, %c2, %c0_53] : memref<18x18x8xf32, #tpu.memory_space<vmem>>, vector<16x16x8xf32>
    %56 = vector.shape_cast %55 : vector<16x16x8xf32> to vector<256x8xf32>
    %c0_54 = arith.constant 0 : index
    %c16 = arith.constant 16 : index
    %57 = vector.load %arg11[%c0_54, %c16] : memref<256x72xf32, #tpu.memory_space<vmem>>, vector<256x8xf32>
    tpu.vector_store %arg11[%c0_54, %c16], %56 {strides = array<i32>} : memref<256x72xf32, #tpu.memory_space<vmem>>, vector<256x8xf32>,
    %c1_55 = arith.constant 1 : index
    %c0_56 = arith.constant 0 : index
    %c0_57 = arith.constant 0 : index
    %58 = vector.load %arg10[%c1_55, %c0_56, %c0_57] : memref<18x18x8xf32, #tpu.memory_space<vmem>>, vector<16x16x8xf32>
    %59 = vector.shape_cast %58 : vector<16x16x8xf32> to vector<256x8xf32>
    %c0_58 = arith.constant 0 : index
    %c24 = arith.constant 24 : index
    %60 = vector.load %arg11[%c0_58, %c24] : memref<256x72xf32, #tpu.memory_space<vmem>>, vector<256x8xf32>
    tpu.vector_store %arg11[%c0_58, %c24], %59 {strides = array<i32>} : memref<256x72xf32, #tpu.memory_space<vmem>>, vector<256x8xf32>,
    %c1_59 = arith.constant 1 : index
    %c1_60 = arith.constant 1 : index
    %c0_61 = arith.constant 0 : index
    %61 = vector.load %arg10[%c1_59, %c1_60, %c0_61] : memref<18x18x8xf32, #tpu.memory_space<vmem>>, vector<16x16x8xf32>
    %62 = vector.shape_cast %61 : vector<16x16x8xf32> to vector<256x8xf32>
    %c0_62 = arith.constant 0 : index
    %c32 = arith.constant 32 : index
    %63 = vector.load %arg11[%c0_62, %c32] : memref<256x72xf32, #tpu.memory_space<vmem>>, vector<256x8xf32>
    tpu.vector_store %arg11[%c0_62, %c32], %62 {strides = array<i32>} : memref<256x72xf32, #tpu.memory_space<vmem>>, vector<256x8xf32>,
    %c1_63 = arith.constant 1 : index
    %c2_64 = arith.constant 2 : index
    %c0_65 = arith.constant 0 : index
    %64 = vector.load %arg10[%c1_63, %c2_64, %c0_65] : memref<18x18x8xf32, #tpu.memory_space<vmem>>, vector<16x16x8xf32>
    %65 = vector.shape_cast %64 : vector<16x16x8xf32> to vector<256x8xf32>
    %c0_66 = arith.constant 0 : index
    %c40 = arith.constant 40 : index
    %66 = vector.load %arg11[%c0_66, %c40] : memref<256x72xf32, #tpu.memory_space<vmem>>, vector<256x8xf32>
    tpu.vector_store %arg11[%c0_66, %c40], %65 {strides = array<i32>} : memref<256x72xf32, #tpu.memory_space<vmem>>, vector<256x8xf32>,
    %c2_67 = arith.constant 2 : index
    %c0_68 = arith.constant 0 : index
    %c0_69 = arith.constant 0 : index
    %67 = vector.load %arg10[%c2_67, %c0_68, %c0_69] : memref<18x18x8xf32, #tpu.memory_space<vmem>>, vector<16x16x8xf32>
    %68 = vector.shape_cast %67 : vector<16x16x8xf32> to vector<256x8xf32>
    %c0_70 = arith.constant 0 : index
    %c48 = arith.constant 48 : index
    %69 = vector.load %arg11[%c0_70, %c48] : memref<256x72xf32, #tpu.memory_space<vmem>>, vector<256x8xf32>
    tpu.vector_store %arg11[%c0_70, %c48], %68 {strides = array<i32>} : memref<256x72xf32, #tpu.memory_space<vmem>>, vector<256x8xf32>,
    %c2_71 = arith.constant 2 : index
    %c1_72 = arith.constant 1 : index
    %c0_73 = arith.constant 0 : index
    %70 = vector.load %arg10[%c2_71, %c1_72, %c0_73] : memref<18x18x8xf32, #tpu.memory_space<vmem>>, vector<16x16x8xf32>
    %71 = vector.shape_cast %70 : vector<16x16x8xf32> to vector<256x8xf32>
    %c0_74 = arith.constant 0 : index
    %c56 = arith.constant 56 : index
    %72 = vector.load %arg11[%c0_74, %c56] : memref<256x72xf32, #tpu.memory_space<vmem>>, vector<256x8xf32>
    tpu.vector_store %arg11[%c0_74, %c56], %71 {strides = array<i32>} : memref<256x72xf32, #tpu.memory_space<vmem>>, vector<256x8xf32>,
    %c2_75 = arith.constant 2 : index
    %c2_76 = arith.constant 2 : index
    %c0_77 = arith.constant 0 : index
    %73 = vector.load %arg10[%c2_75, %c2_76, %c0_77] : memref<18x18x8xf32, #tpu.memory_space<vmem>>, vector<16x16x8xf32>
    %74 = vector.shape_cast %73 : vector<16x16x8xf32> to vector<256x8xf32>
    %c0_78 = arith.constant 0 : index
    %c64 = arith.constant 64 : index
    %75 = vector.load %arg11[%c0_78, %c64] : memref<256x72xf32, #tpu.memory_space<vmem>>, vector<256x8xf32>
    tpu.vector_store %arg11[%c0_78, %c64], %74 {strides = array<i32>} : memref<256x72xf32, #tpu.memory_space<vmem>>, vector<256x8xf32>,
    %c0_79 = arith.constant 0 : index
    %c0_80 = arith.constant 0 : index
    %76 = vector.load %arg11[%c0_79, %c0_80] : memref<256x72xf32, #tpu.memory_space<vmem>>, vector<256x72xf32>
    %c0_81 = arith.constant 0 : index
    %c0_82 = arith.constant 0 : index
    %77 = vector.load %arg7[%c0_81, %c0_82] : memref<72x8xf32, #tpu.memory_space<vmem>>, vector<72x8xf32>
    %cst_83 = arith.constant dense<0.000000e+00> : vector<256x8xf32>
    %78 = tpu.matmul %76, %77, %cst_83 {dimension_numbers = #tpu.dot_dimension_numbers<[1], [0], [0], [1], [0, 0, 1, 1], [], []>} : vector<256x72xf32>, vector<72x8xf32>, vector<256x8xf32> -> vector<256x8xf32>
    %c0_84 = arith.constant 0 : index
    %c0_85 = arith.constant 0 : index
    %c0_86 = arith.constant 0 : index
    %79 = vector.load %arg8[%c0_84, %c0_85, %c0_86] : memref<1x256x8xf32, #tpu.memory_space<vmem>>, vector<1x256x8xf32>
    %80 = vector.shape_cast %79 : vector<1x256x8xf32> to vector<256x8xf32>
    %81 = vector.shape_cast %78 : vector<256x8xf32> to vector<1x256x8xf32>
    tpu.vector_store %arg8[%c0_84, %c0_85, %c0_86], %81 {strides = array<i32>} : memref<1x256x8xf32, #tpu.memory_space<vmem>>, vector<1x256x8xf32>,
    %cst_87 = arith.constant dense<0.000000e+00> : vector<8xf32>
    %82 = vector.multi_reduction <add>, %78, %cst_87 [0] : vector<256x8xf32> to vector<8xf32>
    %83 = vector.shape_cast %82 : vector<8xf32> to vector<1x8xf32>
    %c0_88 = arith.constant 0 : index
    %c0_89 = arith.constant 0 : index
    %c0_90 = arith.constant 0 : index
    %c0_91 = arith.constant 0 : index
    %84 = vector.load %arg9[%c0_88, %c0_89, %c0_90, %c0_91] : memref<1x1x2x8xf32, #tpu.memory_space<vmem>>, vector<1x1x1x8xf32>
    %85 = vector.shape_cast %84 : vector<1x1x1x8xf32> to vector<1x8xf32>
    %86 = vector.shape_cast %83 : vector<1x8xf32> to vector<1x1x1x8xf32>
    tpu.vector_store %arg9[%c0_88, %c0_89, %c0_90, %c0_91], %86 {strides = array<i32>} : memref<1x1x2x8xf32, #tpu.memory_space<vmem>>, vector<1x1x1x8xf32>,
    %87 = arith.mulf %78, %78 : vector<256x8xf32>
    %cst_92 = arith.constant dense<0.000000e+00> : vector<8xf32>
    %88 = vector.multi_reduction <add>, %87, %cst_92 [0] : vector<256x8xf32> to vector<8xf32>
    %89 = vector.shape_cast %88 : vector<8xf32> to vector<1x8xf32>
    %c0_93 = arith.constant 0 : index
    %c0_94 = arith.constant 0 : index
    %c1_95 = arith.constant 1 : index
    %c0_96 = arith.constant 0 : index
    %90 = vector.load %arg9[%c0_93, %c0_94, %c1_95, %c0_96] : memref<1x1x2x8xf32, #tpu.memory_space<vmem>>, vector<1x1x1x8xf32>
    %91 = vector.shape_cast %90 : vector<1x1x1x8xf32> to vector<1x8xf32>
    %92 = vector.shape_cast %89 : vector<1x8xf32> to vector<1x1x1x8xf32>
    tpu.vector_store %arg9[%c0_93, %c0_94, %c1_95, %c0_96], %92 {strides = array<i32>} : memref<1x1x2x8xf32, #tpu.memory_space<vmem>>, vector<1x1x1x8xf32>,
    return
  }
  func.func @transform_0(%arg0: i32, %arg1: i32) -> (i32, i32, i32, i32) {
    %c0_i32 = arith.constant 0 : i32
    %c0_i32_0 = arith.constant 0 : i32
    %c0_i32_1 = arith.constant 0 : i32
    return %arg0, %arg1, %c0_i32, %c0_i32_0 : i32, i32, i32, i32
  }
  func.func @transform_1(%arg0: i32, %arg1: i32) -> (i32, i32, i32, i32) {
    %c16_i32 = arith.constant 16 : i32
    %0 = arith.muli %arg1, %c16_i32 : i32
    %c1_i32 = arith.constant 1 : i32
    %1 = arith.subi %0, %c1_i32 : i32
    %c0_i32 = arith.constant 0 : i32
    %2 = arith.maxsi %1, %c0_i32 : i32
    %c0_i32_0 = arith.constant 0 : i32
    %c0_i32_1 = arith.constant 0 : i32
    %c0_i32_2 = arith.constant 0 : i32
    return %arg0, %2, %c0_i32_0, %c0_i32_1 : i32, i32, i32, i32
  }
  func.func @transform_2(%arg0: i32, %arg1: i32) -> (i32, i32, i32, i32) {
    %c16_i32 = arith.constant 16 : i32
    %0 = arith.muli %arg1, %c16_i32 : i32
    %c16_i32_0 = arith.constant 16 : i32
    %1 = arith.addi %0, %c16_i32_0 : i32
    %c15_i32 = arith.constant 15 : i32
    %2 = arith.minsi %1, %c15_i32 : i32
    %c0_i32 = arith.constant 0 : i32
    %c0_i32_1 = arith.constant 0 : i32
    %c0_i32_2 = arith.constant 0 : i32
    return %arg0, %2, %c0_i32, %c0_i32_1 : i32, i32, i32, i32
  }
  func.func @transform_3(%arg0: i32, %arg1: i32) -> (i32, i32) {
    %c0_i32 = arith.constant 0 : i32
    %c0_i32_0 = arith.constant 0 : i32
    %c0_i32_1 = arith.constant 0 : i32
    return %c0_i32, %c0_i32_0 : i32, i32
  }
  func.func @transform_4(%arg0: i32, %arg1: i32) -> (i32, i32) {
    %c0_i32 = arith.constant 0 : i32
    %c0_i32_0 = arith.constant 0 : i32
    %c0_i32_1 = arith.constant 0 : i32
    return %c0_i32, %c0_i32_0 : i32, i32
  }
  func.func @transform_5(%arg0: i32, %arg1: i32) -> (i32, i32) {
    %c0_i32 = arith.constant 0 : i32
    %c0_i32_0 = arith.constant 0 : i32
    %c0_i32_1 = arith.constant 0 : i32
    return %c0_i32, %c0_i32_0 : i32, i32
  }
  func.func @transform_6(%arg0: i32, %arg1: i32) -> (i32, i32, i32) {
    %c0_i32 = arith.constant 0 : i32
    %c0_i32_0 = arith.constant 0 : i32
    return %arg0, %arg1, %c0_i32 : i32, i32, i32
  }
  func.func @transform_7(%arg0: i32, %arg1: i32) -> (i32, i32, i32, i32) {
    %c0_i32 = arith.constant 0 : i32
    %c0_i32_0 = arith.constant 0 : i32
    %c0_i32_1 = arith.constant 0 : i32
    return %arg0, %arg1, %c0_i32, %c0_i32_0 : i32, i32, i32, i32
  }
}

module attributes {stable_mosaic.version = 11 : i64} {
  func.func @_bn_add_act_kernel(%arg0: i32, %arg1: memref<16x128xf32, #tpu.memory_space<vmem>>, %arg2: memref<1x128xf32, #tpu.memory_space<vmem>>, %arg3: memref<1x128xf32, #tpu.memory_space<vmem>>, %arg4: memref<16x128xf32, #tpu.memory_space<vmem>>, %arg5: memref<16x128xf32, #tpu.memory_space<vmem>>) attributes {dimension_semantics = [#tpu.dimension_semantics<parallel>], iteration_bounds = array<i64: 2>, scalar_prefetch = 0 : i64, scratch_operands = 0 : i64, tpu.core_type = #tpu.core_type<tc>, window_params = [{transform_indices = @transform_0, window_bounds = array<i64: 16, 128>}, {pipeline_mode = #tpu.pipeline_mode<synchronous>, transform_indices = @transform_1, window_bounds = array<i64: 1, 128>}, {pipeline_mode = #tpu.pipeline_mode<synchronous>, transform_indices = @transform_2, window_bounds = array<i64: 1, 128>}, {transform_indices = @transform_3, window_bounds = array<i64: 16, 128>}, {transform_indices = @transform_4, window_bounds = array<i64: 16, 128>}]} {
    %c0 = arith.constant 0 : index
    %c0_0 = arith.constant 0 : index
    %0 = vector.load %arg1[%c0, %c0_0] : memref<16x128xf32, #tpu.memory_space<vmem>>, vector<16x128xf32>
    %c0_1 = arith.constant 0 : index
    %c0_2 = arith.constant 0 : index
    %1 = vector.load %arg2[%c0_1, %c0_2] : memref<1x128xf32, #tpu.memory_space<vmem>>, vector<1x128xf32>
    %2 = vector.broadcast %1 : vector<1x128xf32> to vector<16x128xf32>
    %3 = arith.mulf %0, %2 : vector<16x128xf32>
    %c0_3 = arith.constant 0 : index
    %c0_4 = arith.constant 0 : index
    %4 = vector.load %arg3[%c0_3, %c0_4] : memref<1x128xf32, #tpu.memory_space<vmem>>, vector<1x128xf32>
    %5 = vector.broadcast %4 : vector<1x128xf32> to vector<16x128xf32>
    %6 = arith.addf %3, %5 : vector<16x128xf32>
    %c0_5 = arith.constant 0 : index
    %c0_6 = arith.constant 0 : index
    %7 = vector.load %arg4[%c0_5, %c0_6] : memref<16x128xf32, #tpu.memory_space<vmem>>, vector<16x128xf32>
    %8 = arith.addf %6, %7 : vector<16x128xf32>
    %cst = arith.constant 0.000000e+00 : f32
    %9 = vector.broadcast %cst : f32 to vector<16x128xf32>
    %10 = arith.maximumf %8, %9 : vector<16x128xf32>
    %c0_7 = arith.constant 0 : index
    %c0_8 = arith.constant 0 : index
    %11 = vector.load %arg5[%c0_7, %c0_8] : memref<16x128xf32, #tpu.memory_space<vmem>>, vector<16x128xf32>
    tpu.vector_store %arg5[%c0_7, %c0_8], %10 {strides = array<i32>} : memref<16x128xf32, #tpu.memory_space<vmem>>, vector<16x128xf32>,
    return
  }
  func.func @transform_0(%arg0: i32) -> (i32, i32) {
    %c0_i32 = arith.constant 0 : i32
    %c0_i32_0 = arith.constant 0 : i32
    return %arg0, %c0_i32 : i32, i32
  }
  func.func @transform_1(%arg0: i32) -> (i32, i32) {
    %c0_i32 = arith.constant 0 : i32
    %c0_i32_0 = arith.constant 0 : i32
    %c0_i32_1 = arith.constant 0 : i32
    return %c0_i32, %c0_i32_0 : i32, i32
  }
  func.func @transform_2(%arg0: i32) -> (i32, i32) {
    %c0_i32 = arith.constant 0 : i32
    %c0_i32_0 = arith.constant 0 : i32
    %c0_i32_1 = arith.constant 0 : i32
    return %c0_i32, %c0_i32_0 : i32, i32
  }
  func.func @transform_3(%arg0: i32) -> (i32, i32) {
    %c0_i32 = arith.constant 0 : i32
    %c0_i32_0 = arith.constant 0 : i32
    return %arg0, %c0_i32 : i32, i32
  }
  func.func @transform_4(%arg0: i32) -> (i32, i32) {
    %c0_i32 = arith.constant 0 : i32
    %c0_i32_0 = arith.constant 0 : i32
    return %arg0, %c0_i32 : i32, i32
  }
}

</mosaic_0001>

<llo_original>
// kernel: tile.13
$region0: #{tile.13}
  #allocation0 [shape = 's32[1]{0}', space=sflag, size = 0x4, scoped, tag = 'scoped memory for tile.13']
  %s0 = inlined_call_operand.vmem [shape: f32[8], index: 0, kind: input, shape index: {}]
  %s1 = inlined_call_operand.vmem [shape: f32[16,8], index: 1, kind: output, shape index: {}]
  // Predicated region
  $region2: #{tile.13} parent=0 // pred_check
    _
  $region3: #{tile.13} parent=0 // pred_check_branch
    %3 = sbr.rel (0) target = $region5
  $region4: #{tile.13} parent=0 // pred_region
    _
  $region5: #{tile.13} parent=0 // pred_fallthru
    _
  %v4 = vld [vmem:[%s0] ss:$0 sm:$0xff]
  %5 = vst [vmem:[%s1] sm:$0xff] %v4
  %s6 = scalar_lea.vmem %s1, 8
  %7 = vst [vmem:[%s6] sm:$0xff] %v4

// kernel: tile.14
$region0: #{tile.14}
  %s0 = inlined_call_operand.vmem [shape: f32[16,8], index: 0, kind: input, shape index: {}]
  %s1 = inlined_call_operand.vmem [shape: f32[1,128], index: 1, kind: output, shape index: {}]
  $region1: #{tile.14} parent=0
    #allocation0 [shape = 'u8[4096]{0}', space=vmem, size = 0x1000, scoped, tag = 'scoped mem for output reshape']
    %v2 = vld [vmem:[%s0] sm:$0x1]
    %vm3 = vcmask 64512
    %4 = vst.msk [vmem:[#allocation0] sm:$0x1] %vm3, %v2
    %s5 = scalar_lea.vmem %s0, 15
    %v6 = vld [vmem:[%s5] sm:$0x1]
    %7 = vrot.lane.b32.xlu0 %v6, 120
    %v8 = vpop.permute.xlu0 %7
    %vm9 = vcmask 1048512
    %10 = vst.msk [vmem:[#allocation0] sm:$0x1] %vm9, %v8
    %s11 = scalar_lea.vmem %s0, 14
    %v12 = vld [vmem:[%s11] sm:$0x1]
    %13 = vrot.lane.b32.xlu0 %v12, 112
    %v14 = vpop.permute.xlu0 %13
    %vm15 = vcmask 982912
    %16 = vst.msk [vmem:[#allocation0] sm:$0x1] %vm15, %v14
    %s17 = scalar_lea.vmem %s0, 13
    %v18 = vld [vmem:[%s17] sm:$0x1]
    %19 = vrot.lane.b32.xlu0 %v18, 104
    %v20 = vpop.permute.xlu0 %19
    %vm21 = vcmask 917312
    %22 = vst.msk [vmem:[#allocation0] sm:$0x1] %vm21, %v20
    %s23 = scalar_lea.vmem %s0, 12
    %v24 = vld [vmem:[%s23] sm:$0x1]
    %25 = vrot.lane.b32.xlu0 %v24, 96
    %v26 = vpop.permute.xlu0 %25
    %vm27 = vcmask 851712
    %28 = vst.msk [vmem:[#allocation0] sm:$0x1] %vm27, %v26
    %s29 = scalar_lea.vmem %s0, 11
    %v30 = vld [vmem:[%s29] sm:$0x1]
    %31 = vrot.lane.b32.xlu0 %v30, 88
    %v32 = vpop.permute.xlu0 %31
    %vm33 = vcmask 786112
    %34 = vst.msk [vmem:[#allocation0] sm:$0x1] %vm33, %v32
    %s35 = scalar_lea.vmem %s0, 10
    %v36 = vld [vmem:[%s35] sm:$0x1]
    %37 = vrot.lane.b32.xlu0 %v36, 80
    %v38 = vpop.permute.xlu0 %37
    %vm39 = vcmask 720512
    %40 = vst.msk [vmem:[#allocation0] sm:$0x1] %vm39, %v38
    %s41 = scalar_lea.vmem %s0, 9
    %v42 = vld [vmem:[%s41] sm:$0x1]
    %43 = vrot.lane.b32.xlu0 %v42, 72
    %v44 = vpop.permute.xlu0 %43
    %vm45 = vcmask 654912
    %46 = vst.msk [vmem:[#allocation0] sm:$0x1] %vm45, %v44
    %s47 = scalar_lea.vmem %s0, 8
    %v48 = vld [vmem:[%s47] sm:$0x1]
    %49 = vrot.lane.b32.xlu0 %v48, 64
    %v50 = vpop.permute.xlu0 %49
    %vm51 = vcmask 589312
    %52 = vst.msk [vmem:[#allocation0] sm:$0x1] %vm51, %v50
    %s53 = scalar_lea.vmem %s0, 7
    %v54 = vld [vmem:[%s53] sm:$0x1]
    %55 = vrot.lane.b32.xlu0 %v54, 56
    %v56 = vpop.permute.xlu0 %55
    %vm57 = vcmask 523712
    %58 = vst.msk [vmem:[#allocation0] sm:$0x1] %vm57, %v56
    %s59 = scalar_lea.vmem %s0, 6
    %v60 = vld [vmem:[%s59] sm:$0x1]
    %61 = vrot.lane.b32.xlu0 %v60, 48
    %v62 = vpop.permute.xlu0 %61
    %vm63 = vcmask 458112
    %64 = vst.msk [vmem:[#allocation0] sm:$0x1] %vm63, %v62
    %s65 = scalar_lea.vmem %s0, 5
    %v66 = vld [vmem:[%s65] sm:$0x1]
    %67 = vrot.lane.b32.xlu0 %v66, 40
    %v68 = vpop.permute.xlu0 %67
    %vm69 = vcmask 392512
    %70 = vst.msk [vmem:[#allocation0] sm:$0x1] %vm69, %v68
    %s71 = scalar_lea.vmem %s0, 4
    %v72 = vld [vmem:[%s71] sm:$0x1]
    %73 = vrot.lane.b32.xlu0 %v72, 32
    %v74 = vpop.permute.xlu0 %73
    %vm75 = vcmask 326912
    %76 = vst.msk [vmem:[#allocation0] sm:$0x1] %vm75, %v74
    %s77 = scalar_lea.vmem %s0, 3
    %v78 = vld [vmem:[%s77] sm:$0x1]
    %79 = vrot.lane.b32.xlu0 %v78, 24
    %v80 = vpop.permute.xlu0 %79
    %vm81 = vcmask 261312
    %82 = vst.msk [vmem:[#allocation0] sm:$0x1] %vm81, %v80
    %s83 = scalar_lea.vmem %s0, 2
    %v84 = vld [vmem:[%s83] sm:$0x1]
    %85 = vrot.lane.b32.xlu0 %v84, 16
    %v86 = vpop.permute.xlu0 %85
    %vm87 = vcmask 195712
    %88 = vst.msk [vmem:[#allocation0] sm:$0x1] %vm87, %v86
    %s89 = scalar_lea.vmem %s0, 1
    %v90 = vld [vmem:[%s89] sm:$0x1]
    %91 = vrot.lane.b32.xlu0 %v90, 8
    %v92 = vpop.permute.xlu0 %91
    %vm93 = vcmask 130112
    %94 = vst.msk [vmem:[#allocation0] sm:$0x1] %vm93, %v92
    %s96 = ssub.s32 2, 1
    %v97 = vld [vmem:[#allocation0] sm:%s96]
    %s99 = ssub.s32 2, 1
    %100 = vst [vmem:[%s1] sm:%s99] %v97

// kernel: basic_block_forward.5
$region0: #{basic_block_forward.5}
  #allocation0 [shape = 'u32[]', space=smem, size = 0x4, offset = 0x4, fixed_abs, tag = 'smem constant byte address 0x4 - core index']
  #allocation1 [shape = 'u32[72,128]{1,0:T(1,128)}', space=vmem, size = 0x9000, scoped, tag = 'internal scratch']
  %s0 = inlined_call_operand.vmem [shape: f32[32,128], index: 0, kind: input, shape index: {}]
  %s1 = inlined_call_operand.vmem [shape: f32[1,128], index: 1, kind: input, shape index: {}]
  %s2 = inlined_call_operand.vmem [shape: f32[1,128], index: 2, kind: input, shape index: {}]
  %s3 = inlined_call_operand.vmem [shape: f32[32,128], index: 3, kind: input, shape index: {}]
  %s4 = inlined_call_operand.vmem [shape: f32[32,128], index: 4, kind: output, shape index: {}]
  %s5 = sld [smem:[#allocation0]]
  $region49: #{basic_block_forward.5} parent=0
    _
  %s7 = ssub.s32 1, %s5
  %s8 = scalar_select 0, %s7, %s5
  loop: start=0, step=1, limit=4
  $region2: #{basic_block_forward.5} parent=0 // loop_pre_header
    _
  $region3: #{basic_block_forward.5} parent=0 // loop_header
    %s10 = sphi 0, %s14
    %p11 = scmp.ge.s32.totalorder %s10, 4
    %s20 = sphi 0, %s22
    %s23 = sphi 0, %s20
    %s24 = sphi 0, %s23
    %s40 = sphi 0, %s24
    %s44 = sphi 0, %s44
    %s46 = sphi 0, %s44
    %s47 = sphi 0, %s46
    %s61 = sphi 0, %s47
    %s65 = sphi 0, %s65
    %s67 = sphi 0, %s65
    %s68 = sphi 0, %s67
    %s82 = sphi 0, %s68
    %s88 = sphi 0, %s90
    %s91 = sphi 0, %s88
    %s92 = sphi 0, %s91
    %s108 = sphi 0, %s92
    %s114 = sphi 0, %s116
    %s117 = sphi 0, %s114
    %s118 = sphi 0, %s117
    %s134 = sphi 0, %s118
  $region4: #{basic_block_forward.5} parent=0 // loop_header_branch
    %13 = sbr.rel (%p11) target = $region8
  $region5: #{basic_block_forward.5} parent=0 // loop_body
    %s15 = ssub.s32 %s10, 1
    %s16 = ssub.s32 %s10, 2
    %s17 = sadd.s32 %s10, 1
    %s18 = ssub.s32 %s10, %s17
    %p19 = scmp.eq.s32.totalorder %s18, 0
    %s21 = sadd.s32 %s20, 1
    %s22 = scalar_select %p19, %s20, %s21
    %p25 = pneg %p19
    %p26 = scmp.eq.s32.totalorder %s10, 1
    %p27 = por %p25, %p26
    %p28 = scmp.ne.s32.totalorder %s20, %s23
    %p29 = scmp.eq.s32.totalorder %s10, 0
    %p30 = por %p28, %p29
    %p31 = scmp.ne.s32.totalorder %s20, %s23
    %p32 = scmp.eq.s32.totalorder %s15, 1
    %p33 = por %p31, %p32
    %p34 = scmp.ne.s32.totalorder %s23, %s24
    %p35 = scmp.eq.s32.totalorder %s15, 0
    %p36 = por %p34, %p35
    %p37 = scmp.ne.s32.totalorder %s23, %s24
    %p38 = scmp.eq.s32.totalorder %s16, 1
    %p39 = por %p37, %p38
    %p41 = scmp.ne.s32.totalorder %s24, %s40
    %p42 = scmp.eq.s32.totalorder %s16, 0
    %p43 = por %p41, %p42
    %s45 = sadd.s32 %s44, 1
    %p48 = scmp.eq.s32.totalorder %s10, 1
    %p49 = scmp.ne.s32.totalorder %s44, %s46
    %p50 = scmp.eq.s32.totalorder %s10, 0
    %p51 = por %p49, %p50
    %p52 = scmp.ne.s32.totalorder %s44, %s46
    %p53 = scmp.eq.s32.totalorder %s15, 1
    %p54 = por %p52, %p53
    %p55 = scmp.ne.s32.totalorder %s46, %s47
    %p56 = scmp.eq.s32.totalorder %s15, 0
    %p57 = por %p55, %p56
    %p58 = scmp.ne.s32.totalorder %s46, %s47
    %p59 = scmp.eq.s32.totalorder %s16, 1
    %p60 = por %p58, %p59
    %p62 = scmp.ne.s32.totalorder %s47, %s61
    %p63 = scmp.eq.s32.totalorder %s16, 0
    %p64 = por %p62, %p63
    %s66 = sadd.s32 %s65, 1
    %p69 = scmp.eq.s32.totalorder %s10, 1
    %p70 = scmp.ne.s32.totalorder %s65, %s67
    %p71 = scmp.eq.s32.totalorder %s10, 0
    %p72 = por %p70, %p71
    %p73 = scmp.ne.s32.totalorder %s65, %s67
    %p74 = scmp.eq.s32.totalorder %s15, 1
    %p75 = por %p73, %p74
    %p76 = scmp.ne.s32.totalorder %s67, %s68
    %p77 = scmp.eq.s32.totalorder %s15, 0
    %p78 = por %p76, %p77
    %p79 = scmp.ne.s32.totalorder %s67, %s68
    %p80 = scmp.eq.s32.totalorder %s16, 1
    %p81 = por %p79, %p80
    %p83 = scmp.ne.s32.totalorder %s68, %s82
    %p84 = scmp.eq.s32.totalorder %s16, 0
    %p85 = por %p83, %p84
    %s86 = ssub.s32 %s10, %s17
    %p87 = scmp.eq.s32.totalorder %s86, 0
    %s89 = sadd.s32 %s88, 1
    %s90 = scalar_select %p87, %s88, %s89
    %p93 = pneg %p87
    %p94 = scmp.eq.s32.totalorder %s10, 1
    %p95 = por %p93, %p94
    %p96 = scmp.ne.s32.totalorder %s88, %s91
    %p97 = scmp.eq.s32.totalorder %s10, 0
    %p98 = por %p96, %p97
    %p99 = scmp.ne.s32.totalorder %s88, %s91
    %p100 = scmp.eq.s32.totalorder %s15, 1
    %p101 = por %p99, %p100
    %p102 = scmp.ne.s32.totalorder %s91, %s92
    %p103 = scmp.eq.s32.totalorder %s15, 0
    %p104 = por %p102, %p103
    %p105 = scmp.ne.s32.totalorder %s91, %s92
    %p106 = scmp.eq.s32.totalorder %s16, 1
    %p107 = por %p105, %p106
    %p109 = scmp.ne.s32.totalorder %s92, %s108
    %p110 = scmp.eq.s32.totalorder %s16, 0
    %p111 = por %p109, %p110
    %s112 = ssub.s32 %s10, %s17
    %p113 = scmp.eq.s32.totalorder %s112, 0
    %s115 = sadd.s32 %s114, 1
    %s116 = scalar_select %p113, %s114, %s115
    %p119 = pneg %p113
    %p120 = scmp.eq.s32.totalorder %s10, 1
    %p121 = por %p119, %p120
    %p122 = scmp.ne.s32.totalorder %s114, %s117
    %p123 = scmp.eq.s32.totalorder %s10, 0
    %p124 = por %p122, %p123
    %p125 = scmp.ne.s32.totalorder %s114, %s117
    %p126 = scmp.eq.s32.totalorder %s15, 1
    %p127 = por %p125, %p126
    %p128 = scmp.ne.s32.totalorder %s117, %s118
    %p129 = scmp.eq.s32.totalorder %s15, 0
    %p130 = por %p128, %p129
    %p131 = scmp.ne.s32.totalorder %s117, %s118
    %p132 = scmp.eq.s32.totalorder %s16, 1
    %p133 = por %p131, %p132
    %p135 = scmp.ne.s32.totalorder %s118, %s134
    %p136 = scmp.eq.s32.totalorder %s16, 0
    %p137 = por %p135, %p136
    %p138 = scmp.le.s32.totalorder 1, %s10
    %p139 = scmp.lt.s32.totalorder %s10, 3
    %p140 = pnand %p138, %p139
    %p141 = pneg %p140
    // Predicated region
    $region9: #{basic_block_forward.5} parent=5 // pred_check
      _
    $region10: #{basic_block_forward.5} parent=5 // pred_check_branch
      %143 = sbr.rel (%p140) target = $region12
    $region11: #{basic_block_forward.5} parent=5 // pred_region
      %s144 = ssub.s32 %s10, 1
      // Predicated region
      $region13: #{basic_block_forward.5} parent=11 // pred_check
        %p145 = pneg %p57
      $region14: #{basic_block_forward.5} parent=11 // pred_check_branch
        %147 = sbr.rel (%p145) target = $region16
      $region15: #{basic_block_forward.5} parent=11 // pred_region
        _
      $region16: #{basic_block_forward.5} parent=11 // pred_fallthru
        _
      // Predicated region
      $region17: #{basic_block_forward.5} parent=11 // pred_check
        %p148 = pneg %p78
      $region18: #{basic_block_forward.5} parent=11 // pred_check_branch
        %150 = sbr.rel (%p148) target = $region20
      $region19: #{basic_block_forward.5} parent=11 // pred_region
        _
      $region20: #{basic_block_forward.5} parent=11 // pred_fallthru
        _
    $region12: #{basic_block_forward.5} parent=5 // pred_fallthru
      _
    %p151 = scmp.lt.s32.totalorder %s10, 2
    // Predicated region
    $region21: #{basic_block_forward.5} parent=5 // pred_check
      %p152 = pneg %p151
    $region22: #{basic_block_forward.5} parent=5 // pred_check_branch
      %154 = sbr.rel (%p152) target = $region24
    $region23: #{basic_block_forward.5} parent=5 // pred_region
      // Predicated region
      $region25: #{basic_block_forward.5} parent=23 // pred_check
        %p155 = pneg %p30
      $region26: #{basic_block_forward.5} parent=23 // pred_check_branch
        %157 = sbr.rel (%p155) target = $region28
      $region27: #{basic_block_forward.5} parent=23 // pred_region
        %s158 = smul.u32 2, %s10
        %p159 = scmp.lt.s32.totalorder %s158, 3
        %s160 = scalar_select %p159, %s158, 3
        %s161 = smul.addr %s160, 8
        %s162 = scalar_lea.vmem %s0, %s161
        %s163 = smul.u32 2, %s10
      $region28: #{basic_block_forward.5} parent=23 // pred_fallthru
        _
      // Predicated region
      $region29: #{basic_block_forward.5} parent=23 // pred_check
        %p164 = pneg %p98
      $region30: #{basic_block_forward.5} parent=23 // pred_check_branch
        %166 = sbr.rel (%p164) target = $region32
      $region31: #{basic_block_forward.5} parent=23 // pred_region
        %s167 = smul.u32 2, %s10
        %p168 = scmp.lt.s32.totalorder %s167, 3
        %s169 = scalar_select %p168, %s167, 3
        %s170 = smul.addr %s169, 8
        %s171 = scalar_lea.vmem %s3, %s170
        %s172 = smul.u32 2, %s10
      $region32: #{basic_block_forward.5} parent=23 // pred_fallthru
        _
    $region24: #{basic_block_forward.5} parent=5 // pred_fallthru
      _
    %p173 = scmp.le.s32.totalorder 1, %s10
    %p174 = scmp.lt.s32.totalorder %s10, 3
    %p175 = pnand %p173, %p174
    %p176 = pneg %p175
    // Predicated region
    $region33: #{basic_block_forward.5} parent=5 // pred_check
      _
    $region34: #{basic_block_forward.5} parent=5 // pred_check_branch
      %178 = sbr.rel (%p175) target = $region36
    $region35: #{basic_block_forward.5} parent=5 // pred_region
      %s179 = ssub.s32 %s10, 1
      %s180 = smul.u32 2, %s15
      %p181 = scmp.lt.s32.totalorder %s180, 3
      %s182 = scalar_select %p181, %s180, 3
      %s183 = smul.addr %s182, 8
      %s184 = scalar_lea.vmem %s0, %s183
      %p185 = pneg %p36
      %p186 = pneg %p33
      %p187 = pneg %p57
      %p188 = pneg %p54
      %p189 = pneg %p78
      %p190 = pneg %p75
      %s191 = smul.u32 2, %s15
      %p192 = scmp.lt.s32.totalorder %s191, 3
      %s193 = scalar_select %p192, %s191, 3
      %s194 = smul.addr %s193, 8
      %s195 = scalar_lea.vmem %s3, %s194
      %p196 = pneg %p104
      %p197 = pneg %p101
      %p198 = pneg %p130
      %p199 = pneg %p127
      %s200 = smul.u32 2, %s15
      %p201 = scmp.lt.s32.totalorder %s200, 3
      %s202 = scalar_select %p201, %s200, 3
      %s203 = smul.addr %s202, 8
      %s204 = scalar_lea.vmem %s4, %s203
      %s205 = smul.u32 2, %s15
      %p206 = scmp.lt.s32.totalorder %s205, 3
      %s207 = scalar_select %p206, %s205, 3
      %s208 = smul.addr %s207, 8
      %s209 = scalar_lea.vmem %s0, %s208
      %s210 = smul.u32 2, %s15
      %s211 = smul.u32 2, %s15
      %p212 = scmp.lt.s32.totalorder %s211, 3
      %s213 = scalar_select %p212, %s211, 3
      %s214 = smul.addr %s213, 8
      %s215 = scalar_lea.vmem %s3, %s214
      %s216 = smul.u32 2, %s15
      %s217 = smul.u32 2, %s15
      %p218 = scmp.lt.s32.totalorder %s217, 3
      %s219 = scalar_select %p218, %s217, 3
      %s220 = smul.addr %s219, 8
      %s221 = scalar_lea.vmem %s4, %s220
      %s222 = smul.u32 2, %s15
      %v223 = vld [vmem:[%s209] sm:$0xff]
      %v224 = vld [vmem:[%s209 + $0x8] sm:$0xff]
      %v225 = vld [vmem:[%s1] sm:$0x1]
      %v227 = vperm.slane %v225, 0
      %v229 = vmul.f32 %v223, %v227
      %v230 = vmul.f32 %v224, %v227
      %v231 = vld [vmem:[%s2] sm:$0x1]
      %v233 = vperm.slane %v231, 0
      %v235 = vadd.f32 %v229, %v233
      %v236 = vadd.f32 %v230, %v233
      %v237 = vld [vmem:[%s215] sm:$0xff]
      %v238 = vld [vmem:[%s215 + $0x8] sm:$0xff]
      %v239 = vadd.f32 %v235, %v237
      %v240 = vadd.f32 %v236, %v238
      %v241 = vmax.f32 %v239, 0.0
      %v242 = vmax.f32 %v240, 0.0
      %243 = vst [vmem:[%s221] sm:$0xff] %v241
      %244 = vst [vmem:[%s221 + $0x8] sm:$0xff] %v242
      %s245 = smul.u32 2, %s15
      %p246 = scmp.lt.s32.totalorder %s245, 3
      %s247 = scalar_select %p246, %s245, 3
      %s248 = smul.addr %s247, 8
      %s249 = scalar_lea.vmem %s4, %s248
      // Predicated region
      $region37: #{basic_block_forward.5} parent=35 // pred_check
        %p250 = pneg %p127
      $region38: #{basic_block_forward.5} parent=35 // pred_check_branch
        %252 = sbr.rel (%p250) target = $region40
      $region39: #{basic_block_forward.5} parent=35 // pred_region
        %s253 = smul.u32 2, %s15
      $region40: #{basic_block_forward.5} parent=35 // pred_fallthru
        _
    $region36: #{basic_block_forward.5} parent=5 // pred_fallthru
      _
    %p254 = scmp.le.s32.totalorder 2, %s10
    // Predicated region
    $region41: #{basic_block_forward.5} parent=5 // pred_check
      %p255 = pneg %p254
    $region42: #{basic_block_forward.5} parent=5 // pred_check_branch
      %257 = sbr.rel (%p255) target = $region44
    $region43: #{basic_block_forward.5} parent=5 // pred_region
      %s258 = ssub.s32 %s10, 2
      // Predicated region
      $region45: #{basic_block_forward.5} parent=43 // pred_check
        %p259 = pneg %p133
      $region46: #{basic_block_forward.5} parent=43 // pred_check_branch
        %261 = sbr.rel (%p259) target = $region48
      $region47: #{basic_block_forward.5} parent=43 // pred_region
        %s262 = smul.u32 2, %s16
        %p263 = scmp.lt.s32.totalorder %s262, 3
        %s264 = scalar_select %p263, %s262, 3
        %s265 = smul.addr %s264, 8
        %s266 = scalar_lea.vmem %s4, %s265
      $region48: #{basic_block_forward.5} parent=43 // pred_fallthru
        _
    $region44: #{basic_block_forward.5} parent=5 // pred_fallthru
      _
  $region6: #{basic_block_forward.5} parent=0 // loop_footer
    %s14 = sadd.s32 1, %s10
  $region7: #{basic_block_forward.5} parent=0 // loop_footer_branch
    %9 = sbr.rel target = $region3
  $region8: #{basic_block_forward.5} parent=0 // loop_exit
    _

// kernel: basic_block_forward.3
$region0: #{basic_block_forward.3}
  #allocation0 [shape = 'u32[]', space=smem, size = 0x4, offset = 0x4, fixed_abs, tag = 'smem constant byte address 0x4 - core index']
  #allocation1 [shape = 'u32[72,128]{1,0:T(1,128)}', space=vmem, size = 0x9000, scoped, tag = 'internal scratch']
  #allocation2 [shape = 'f32[18,18,8]{2,1,0:T(8,128)}', space=vmem, size = 0x36000, scoped, tag = 'scratch operand']
  #allocation3 [shape = 'f32[256,72]{1,0:T(8,128)}', space=vmem, size = 0x20000, scoped, tag = 'scratch operand']
  %s0 = inlined_call_operand.vmem [shape: f32[2,16,16,8], index: 0, kind: input, shape index: {}, may-alias: {0,1,2}]
  %s1 = inlined_call_operand.vmem [shape: f32[2,16,16,8], index: 1, kind: input, shape index: {}, may-alias: {0,1,2}]
  %s2 = inlined_call_operand.vmem [shape: f32[2,16,16,8], index: 2, kind: input, shape index: {}, may-alias: {0,1,2}]
  %s3 = inlined_call_operand.vmem [shape: f32[1,8], index: 3, kind: input, shape index: {}]
  %s4 = inlined_call_operand.vmem [shape: f32[1,8], index: 4, kind: input, shape index: {}]
  %s5 = inlined_call_operand.vmem [shape: f32[72,8], index: 5, kind: input, shape index: {}]
  %s6 = inlined_call_operand.vmem [shape: f32[2,256,8], index: 6, kind: output, shape index: {0}]
  %s7 = inlined_call_operand.vmem [shape: f32[2,1,2,8], index: 7, kind: output, shape index: {1}]
  %8 = xla_tuple %s6, %s7
  %s9 = sld [smem:[#allocation0]]
  $region69: #{basic_block_forward.3} parent=0
    _
  %s11 = ssub.s32 1, %s9
  %s12 = scalar_select 0, %s11, %s9
  loop: start=0, step=1, limit=4
  $region2: #{basic_block_forward.3} parent=0 // loop_pre_header
    _
  $region3: #{basic_block_forward.3} parent=0 // loop_header
    %s14 = sphi 0, %s18
    %p15 = scmp.ge.s32.totalorder %s14, 4
    %s21 = sphi 0, %s33
    %s22 = sphi 0, %s29
    %s23 = sphi 0, %s21
    %s24 = sphi 0, %s22
    %s25 = sphi 0, %s23
    %s26 = sphi 0, %s24
    %s38 = sphi 0, %s40
    %s41 = sphi 0, %s38
    %s42 = sphi 0, %s41
    %s58 = sphi 0, %s42
    %s74 = sphi 0, %s76
    %s77 = sphi 0, %s74
    %s78 = sphi 0, %s77
    %s94 = sphi 0, %s78
    %s110 = sphi 0, %s112
    %s113 = sphi 0, %s110
    %s114 = sphi 0, %s113
    %s130 = sphi 0, %s114
    %s134 = sphi 0, %s134
    %s136 = sphi 0, %s134
    %s137 = sphi 0, %s136
    %s151 = sphi 0, %s137
    %s155 = sphi 0, %s155
    %s157 = sphi 0, %s155
    %s158 = sphi 0, %s157
    %s172 = sphi 0, %s158
    %s176 = sphi 0, %s176
    %s178 = sphi 0, %s176
    %s179 = sphi 0, %s178
    %s193 = sphi 0, %s179
    %s201 = sphi 0, %s203
    %s204 = sphi 0, %s201
    %s205 = sphi 0, %s204
    %s221 = sphi 0, %s205
    %s229 = sphi 0, %s231
    %s232 = sphi 0, %s229
    %s233 = sphi 0, %s232
    %s249 = sphi 0, %s233
  $region4: #{basic_block_forward.3} parent=0 // loop_header_branch
    %17 = sbr.rel (%p15) target = $region8
  $region5: #{basic_block_forward.3} parent=0 // loop_body
    %s19 = ssub.s32 %s14, 1
    %s20 = ssub.s32 %s14, 2
    %s27 = sadd.s32 1, %s22
    %p28 = scmp.ge.s32.totalorder %s27, 1
    %s29 = scalar_select %p28, 0, %s27
    %s30 = sadd.s32 1, %s21
    %s31 = scalar_select %p28, %s30, %s21
    %p32 = scmp.ge.s32.totalorder %s31, 2
    %s33 = scalar_select %p32, 0, %s31
    %s34 = ssub.s32 %s21, %s33
    %s35 = ssub.s32 %s22, %s29
    %s36 = sor.u32 %s34, %s35
    %p37 = scmp.eq.s32.totalorder %s36, 0
    %s39 = sadd.s32 %s38, 1
    %s40 = scalar_select %p37, %s38, %s39
    %p43 = pneg %p37
    %p44 = scmp.eq.s32.totalorder %s14, 1
    %p45 = por %p43, %p44
    %p46 = scmp.ne.s32.totalorder %s38, %s41
    %p47 = scmp.eq.s32.totalorder %s14, 0
    %p48 = por %p46, %p47
    %p49 = scmp.ne.s32.totalorder %s38, %s41
    %p50 = scmp.eq.s32.totalorder %s19, 1
    %p51 = por %p49, %p50
    %p52 = scmp.ne.s32.totalorder %s41, %s42
    %p53 = scmp.eq.s32.totalorder %s19, 0
    %p54 = por %p52, %p53
    %p55 = scmp.ne.s32.totalorder %s41, %s42
    %p56 = scmp.eq.s32.totalorder %s20, 1
    %p57 = por %p55, %p56
    %p59 = scmp.ne.s32.totalorder %s42, %s58
    %p60 = scmp.eq.s32.totalorder %s20, 0
    %p61 = por %p59, %p60
    %s62 = smul.u32 %s22, 16
    %s63 = ssub.s32 %s62, 1
    %p64 = scmp.gt.s32.totalorder %s63, 0
    %s65 = scalar_select %p64, %s63, 0
    %s66 = smul.u32 %s29, 16
    %s67 = ssub.s32 %s66, 1
    %p68 = scmp.gt.s32.totalorder %s67, 0
    %s69 = scalar_select %p68, %s67, 0
    %s70 = ssub.s32 %s21, %s33
    %s71 = ssub.s32 %s65, %s69
    %s72 = sor.u32 %s70, %s71
    %p73 = scmp.eq.s32.totalorder %s72, 0
    %s75 = sadd.s32 %s74, 1
    %s76 = scalar_select %p73, %s74, %s75
    %p79 = pneg %p73
    %p80 = scmp.eq.s32.totalorder %s14, 1
    %p81 = por %p79, %p80
    %p82 = scmp.ne.s32.totalorder %s74, %s77
    %p83 = scmp.eq.s32.totalorder %s14, 0
    %p84 = por %p82, %p83
    %p85 = scmp.ne.s32.totalorder %s74, %s77
    %p86 = scmp.eq.s32.totalorder %s19, 1
    %p87 = por %p85, %p86
    %p88 = scmp.ne.s32.totalorder %s77, %s78
    %p89 = scmp.eq.s32.totalorder %s19, 0
    %p90 = por %p88, %p89
    %p91 = scmp.ne.s32.totalorder %s77, %s78
    %p92 = scmp.eq.s32.totalorder %s20, 1
    %p93 = por %p91, %p92
    %p95 = scmp.ne.s32.totalorder %s78, %s94
    %p96 = scmp.eq.s32.totalorder %s20, 0
    %p97 = por %p95, %p96
    %s98 = smul.u32 %s22, 16
    %s99 = sadd.s32 %s98, 16
    %p100 = scmp.lt.s32.totalorder %s99, 15
    %s101 = scalar_select %p100, %s99, 15
    %s102 = smul.u32 %s29, 16
    %s103 = sadd.s32 %s102, 16
    %p104 = scmp.lt.s32.totalorder %s103, 15
    %s105 = scalar_select %p104, %s103, 15
    %s106 = ssub.s32 %s21, %s33
    %s107 = ssub.s32 %s101, %s105
    %s108 = sor.u32 %s106, %s107
    %p109 = scmp.eq.s32.totalorder %s108, 0
    %s111 = sadd.s32 %s110, 1
    %s112 = scalar_select %p109, %s110, %s111
    %p115 = pneg %p109
    %p116 = scmp.eq.s32.totalorder %s14, 1
    %p117 = por %p115, %p116
    %p118 = scmp.ne.s32.totalorder %s110, %s113
    %p119 = scmp.eq.s32.totalorder %s14, 0
    %p120 = por %p118, %p119
    %p121 = scmp.ne.s32.totalorder %s110, %s113
    %p122 = scmp.eq.s32.totalorder %s19, 1
    %p123 = por %p121, %p122
    %p124 = scmp.ne.s32.totalorder %s113, %s114
    %p125 = scmp.eq.s32.totalorder %s19, 0
    %p126 = por %p124, %p125
    %p127 = scmp.ne.s32.totalorder %s113, %s114
    %p128 = scmp.eq.s32.totalorder %s20, 1
    %p129 = por %p127, %p128
    %p131 = scmp.ne.s32.totalorder %s114, %s130
    %p132 = scmp.eq.s32.totalorder %s20, 0
    %p133 = por %p131, %p132
    %s135 = sadd.s32 %s134, 1
    %p138 = scmp.eq.s32.totalorder %s14, 1
    %p139 = scmp.ne.s32.totalorder %s134, %s136
    %p140 = scmp.eq.s32.totalorder %s14, 0
    %p141 = por %p139, %p140
    %p142 = scmp.ne.s32.totalorder %s134, %s136
    %p143 = scmp.eq.s32.totalorder %s19, 1
    %p144 = por %p142, %p143
    %p145 = scmp.ne.s32.totalorder %s136, %s137
    %p146 = scmp.eq.s32.totalorder %s19, 0
    %p147 = por %p145, %p146
    %p148 = scmp.ne.s32.totalorder %s136, %s137
    %p149 = scmp.eq.s32.totalorder %s20, 1
    %p150 = por %p148, %p149
    %p152 = scmp.ne.s32.totalorder %s137, %s151
    %p153 = scmp.eq.s32.totalorder %s20, 0
    %p154 = por %p152, %p153
    %s156 = sadd.s32 %s155, 1
    %p159 = scmp.eq.s32.totalorder %s14, 1
    %p160 = scmp.ne.s32.totalorder %s155, %s157
    %p161 = scmp.eq.s32.totalorder %s14, 0
    %p162 = por %p160, %p161
    %p163 = scmp.ne.s32.totalorder %s155, %s157
    %p164 = scmp.eq.s32.totalorder %s19, 1
    %p165 = por %p163, %p164
    %p166 = scmp.ne.s32.totalorder %s157, %s158
    %p167 = scmp.eq.s32.totalorder %s19, 0
    %p168 = por %p166, %p167
    %p169 = scmp.ne.s32.totalorder %s157, %s158
    %p170 = scmp.eq.s32.totalorder %s20, 1
    %p171 = por %p169, %p170
    %p173 = scmp.ne.s32.totalorder %s158, %s172
    %p174 = scmp.eq.s32.totalorder %s20, 0
    %p175 = por %p173, %p174
    %s177 = sadd.s32 %s176, 1
    %p180 = scmp.eq.s32.totalorder %s14, 1
    %p181 = scmp.ne.s32.totalorder %s176, %s178
    %p182 = scmp.eq.s32.totalorder %s14, 0
    %p183 = por %p181, %p182
    %p184 = scmp.ne.s32.totalorder %s176, %s178
    %p185 = scmp.eq.s32.totalorder %s19, 1
    %p186 = por %p184, %p185
    %p187 = scmp.ne.s32.totalorder %s178, %s179
    %p188 = scmp.eq.s32.totalorder %s19, 0
    %p189 = por %p187, %p188
    %p190 = scmp.ne.s32.totalorder %s178, %s179
    %p191 = scmp.eq.s32.totalorder %s20, 1
    %p192 = por %p190, %p191
    %p194 = scmp.ne.s32.totalorder %s179, %s193
    %p195 = scmp.eq.s32.totalorder %s20, 0
    %p196 = por %p194, %p195
    %s197 = ssub.s32 %s21, %s33
    %s198 = ssub.s32 %s22, %s29
    %s199 = sor.u32 %s197, %s198
    %p200 = scmp.eq.s32.totalorder %s199, 0
    %s202 = sadd.s32 %s201, 1
    %s203 = scalar_select %p200, %s201, %s202
    %p206 = pneg %p200
    %p207 = scmp.eq.s32.totalorder %s14, 1
    %p208 = por %p206, %p207
    %p209 = scmp.ne.s32.totalorder %s201, %s204
    %p210 = scmp.eq.s32.totalorder %s14, 0
    %p211 = por %p209, %p210
    %p212 = scmp.ne.s32.totalorder %s201, %s204
    %p213 = scmp.eq.s32.totalorder %s19, 1
    %p214 = por %p212, %p213
    %p215 = scmp.ne.s32.totalorder %s204, %s205
    %p216 = scmp.eq.s32.totalorder %s19, 0
    %p217 = por %p215, %p216
    %p218 = scmp.ne.s32.totalorder %s204, %s205
    %p219 = scmp.eq.s32.totalorder %s20, 1
    %p220 = por %p218, %p219
    %p222 = scmp.ne.s32.totalorder %s205, %s221
    %p223 = scmp.eq.s32.totalorder %s20, 0
    %p224 = por %p222, %p223
    %s225 = ssub.s32 %s21, %s33
    %s226 = ssub.s32 %s22, %s29
    %s227 = sor.u32 %s225, %s226
    %p228 = scmp.eq.s32.totalorder %s227, 0
    %s230 = sadd.s32 %s229, 1
    %s231 = scalar_select %p228, %s229, %s230
    %p234 = pneg %p228
    %p235 = scmp.eq.s32.totalorder %s14, 1
    %p236 = por %p234, %p235
    %p237 = scmp.ne.s32.totalorder %s229, %s232
    %p238 = scmp.eq.s32.totalorder %s14, 0
    %p239 = por %p237, %p238
    %p240 = scmp.ne.s32.totalorder %s229, %s232
    %p241 = scmp.eq.s32.totalorder %s19, 1
    %p242 = por %p240, %p241
    %p243 = scmp.ne.s32.totalorder %s232, %s233
    %p244 = scmp.eq.s32.totalorder %s19, 0
    %p245 = por %p243, %p244
    %p246 = scmp.ne.s32.totalorder %s232, %s233
    %p247 = scmp.eq.s32.totalorder %s20, 1
    %p248 = por %p246, %p247
    %p250 = scmp.ne.s32.totalorder %s233, %s249
    %p251 = scmp.eq.s32.totalorder %s20, 0
    %p252 = por %p250, %p251
    %p253 = scmp.le.s32.totalorder 1, %s14
    %p254 = scmp.lt.s32.totalorder %s14, 3
    %p255 = pnand %p253, %p254
    %p256 = pneg %p255
    // Predicated region
    $region9: #{basic_block_forward.3} parent=5 // pred_check
      _
    $region10: #{basic_block_forward.3} parent=5 // pred_check_branch
      %258 = sbr.rel (%p255) target = $region12
    $region11: #{basic_block_forward.3} parent=5 // pred_region
      %s259 = ssub.s32 %s14, 1
      // Predicated region
      $region13: #{basic_block_forward.3} parent=11 // pred_check
        %p260 = pneg %p147
      $region14: #{basic_block_forward.3} parent=11 // pred_check_branch
        %262 = sbr.rel (%p260) target = $region16
      $region15: #{basic_block_forward.3} parent=11 // pred_region
        _
      $region16: #{basic_block_forward.3} parent=11 // pred_fallthru
        _
      // Predicated region
      $region17: #{basic_block_forward.3} parent=11 // pred_check
        %p263 = pneg %p168
      $region18: #{basic_block_forward.3} parent=11 // pred_check_branch
        %265 = sbr.rel (%p263) target = $region20
      $region19: #{basic_block_forward.3} parent=11 // pred_region
        _
      $region20: #{basic_block_forward.3} parent=11 // pred_fallthru
        _
      // Predicated region
      $region21: #{basic_block_forward.3} parent=11 // pred_check
        %p266 = pneg %p189
      $region22: #{basic_block_forward.3} parent=11 // pred_check_branch
        %268 = sbr.rel (%p266) target = $region24
      $region23: #{basic_block_forward.3} parent=11 // pred_region
        _
      $region24: #{basic_block_forward.3} parent=11 // pred_fallthru
        _
    $region12: #{basic_block_forward.3} parent=5 // pred_fallthru
      _
    %p269 = scmp.lt.s32.totalorder %s14, 2
    // Predicated region
    $region25: #{basic_block_forward.3} parent=5 // pred_check
      %p270 = pneg %p269
    $region26: #{basic_block_forward.3} parent=5 // pred_check_branch
      %272 = sbr.rel (%p270) target = $region28
    $region27: #{basic_block_forward.3} parent=5 // pred_region
      // Predicated region
      $region29: #{basic_block_forward.3} parent=27 // pred_check
        %p273 = pneg %p48
      $region30: #{basic_block_forward.3} parent=27 // pred_check_branch
        %275 = sbr.rel (%p273) target = $region32
      $region31: #{basic_block_forward.3} parent=27 // pred_region
        %s276 = smul.u32 16, %s22
        %p277 = scmp.lt.s32.totalorder %s21, 1
        %s278 = scalar_select %p277, %s21, 1
        %p279 = scmp.lt.s32.totalorder %s276, 15
        %s280 = scalar_select %p279, %s276, 15
        %s281 = smul.addr %s280, 2
        %s282 = smul.addr %s278, 32
        %s283 = sadd.s32 %s281, %s282
        %s284 = smul.addr %s283, 8
        %s285 = scalar_lea.vmem %s0, %s284
        %s286 = smul.u32 16, %s22
      $region32: #{basic_block_forward.3} parent=27 // pred_fallthru
        _
      // Predicated region
      $region33: #{basic_block_forward.3} parent=27 // pred_check
        %p287 = pneg %p84
      $region34: #{basic_block_forward.3} parent=27 // pred_check_branch
        %289 = sbr.rel (%p287) target = $region36
      $region35: #{basic_block_forward.3} parent=27 // pred_region
        %s290 = smul.u32 %s22, 16
        %s291 = ssub.s32 %s290, 1
        %p292 = scmp.gt.s32.totalorder %s291, 0
        %s293 = scalar_select %p292, %s291, 0
        %p294 = scmp.lt.s32.totalorder %s21, 1
        %s295 = scalar_select %p294, %s21, 1
        %p296 = scmp.lt.s32.totalorder %s293, 15
        %s297 = scalar_select %p296, %s293, 15
        %s298 = smul.addr %s297, 2
        %s299 = smul.addr %s295, 32
        %s300 = sadd.s32 %s298, %s299
        %s301 = smul.addr %s300, 8
        %s302 = scalar_lea.vmem %s1, %s301
        %s303 = smul.u32 %s22, 16
        %s304 = ssub.s32 %s303, 1
        %p305 = scmp.gt.s32.totalorder %s304, 0
        %s306 = scalar_select %p305, %s304, 0
      $region36: #{basic_block_forward.3} parent=27 // pred_fallthru
        _
      // Predicated region
      $region37: #{basic_block_forward.3} parent=27 // pred_check
        %p307 = pneg %p120
      $region38: #{basic_block_forward.3} parent=27 // pred_check_branch
        %309 = sbr.rel (%p307) target = $region40
      $region39: #{basic_block_forward.3} parent=27 // pred_region
        %s310 = smul.u32 %s22, 16
        %s311 = sadd.s32 %s310, 16
        %p312 = scmp.lt.s32.totalorder %s311, 15
        %s313 = scalar_select %p312, %s311, 15
        %p314 = scmp.lt.s32.totalorder %s21, 1
        %s315 = scalar_select %p314, %s21, 1
        %p316 = scmp.lt.s32.totalorder %s313, 15
        %s317 = scalar_select %p316, %s313, 15
        %s318 = smul.addr %s317, 2
        %s319 = smul.addr %s315, 32
        %s320 = sadd.s32 %s318, %s319
        %s321 = smul.addr %s320, 8
        %s322 = scalar_lea.vmem %s2, %s321
        %s323 = smul.u32 %s22, 16
        %s324 = sadd.s32 %s323, 16
        %p325 = scmp.lt.s32.totalorder %s324, 15
        %s326 = scalar_select %p325, %s324, 15
      $region40: #{basic_block_forward.3} parent=27 // pred_fallthru
        _
    $region28: #{basic_block_forward.3} parent=5 // pred_fallthru
      _
    %p327 = scmp.le.s32.totalorder 1, %s14
    %p328 = scmp.lt.s32.totalorder %s14, 3
    %p329 = pnand %p327, %p328
    %p330 = pneg %p329
    // Predicated region
    $region41: #{basic_block_forward.3} parent=5 // pred_check
      _
    $region42: #{basic_block_forward.3} parent=5 // pred_check_branch
      %332 = sbr.rel (%p329) target = $region44
    $region43: #{basic_block_forward.3} parent=5 // pred_region
      %s333 = ssub.s32 %s14, 1
      %s334 = smul.u32 16, %s24
      %p335 = scmp.lt.s32.totalorder %s23, 1
      %s336 = scalar_select %p335, %s23, 1
      %p337 = scmp.lt.s32.totalorder %s334, 15
      %s338 = scalar_select %p337, %s334, 15
      %s339 = smul.addr %s338, 2
      %s340 = smul.addr %s336, 32
      %s341 = sadd.s32 %s339, %s340
      %s342 = smul.addr %s341, 8
      %s343 = scalar_lea.vmem %s0, %s342
      %p344 = pneg %p54
      %p345 = pneg %p51
      %s346 = smul.u32 %s24, 16
      %s347 = ssub.s32 %s346, 1
      %p348 = scmp.gt.s32.totalorder %s347, 0
      %s349 = scalar_select %p348, %s347, 0
      %p350 = scmp.lt.s32.totalorder %s23, 1
      %s351 = scalar_select %p350, %s23, 1
      %p352 = scmp.lt.s32.totalorder %s349, 15
      %s353 = scalar_select %p352, %s349, 15
      %s354 = smul.addr %s353, 2
      %s355 = smul.addr %s351, 32
      %s356 = sadd.s32 %s354, %s355
      %s357 = smul.addr %s356, 8
      %s358 = scalar_lea.vmem %s1, %s357
      %p359 = pneg %p90
      %p360 = pneg %p87
      %s361 = smul.u32 %s24, 16
      %s362 = sadd.s32 %s361, 16
      %p363 = scmp.lt.s32.totalorder %s362, 15
      %s364 = scalar_select %p363, %s362, 15
      %p365 = scmp.lt.s32.totalorder %s23, 1
      %s366 = scalar_select %p365, %s23, 1
      %p367 = scmp.lt.s32.totalorder %s364, 15
      %s368 = scalar_select %p367, %s364, 15
      %s369 = smul.addr %s368, 2
      %s370 = smul.addr %s366, 32
      %s371 = sadd.s32 %s369, %s370
      %s372 = smul.addr %s371, 8
      %s373 = scalar_lea.vmem %s2, %s372
      %p374 = pneg %p126
      %p375 = pneg %p123
      %p376 = pneg %p147
      %p377 = pneg %p144
      %p378 = pneg %p168
      %p379 = pneg %p165
      %p380 = pneg %p189
      %p381 = pneg %p186
      %p382 = pneg %p217
      %p383 = pneg %p214
      %s384 = smul.u32 32, %s24
      %p385 = scmp.lt.s32.totalorder %s23, 1
      %s386 = scalar_select %p385, %s23, 1
      %p387 = scmp.lt.s32.totalorder %s384, 31
      %s388 = scalar_select %p387, %s384, 31
      %s389 = smul.addr %s386, 32
      %s390 = sadd.s32 %s388, %s389
      %s391 = smul.addr %s390, 8
      %s392 = scalar_lea.vmem %s6, %s391
      %p393 = pneg %p245
      %p394 = pneg %p242
      %p395 = scmp.lt.s32.totalorder %s23, 1
      %s396 = scalar_select %p395, %s23, 1
      %p397 = scmp.lt.s32.totalorder %s24, 0
      %s398 = scalar_select %p397, %s24, 0
      %s399 = sadd.s32 %s398, %s396
      %s400 = smul.addr %s399, 2
      %s401 = scalar_lea.vmem %s7, %s400
      %s402 = smul.u32 16, %s24
      %p403 = scmp.lt.s32.totalorder %s23, 1
      %s404 = scalar_select %p403, %s23, 1
      %p405 = scmp.lt.s32.totalorder %s402, 15
      %s406 = scalar_select %p405, %s402, 15
      %s407 = smul.addr %s406, 2
      %s408 = smul.addr %s404, 32
      %s409 = sadd.s32 %s407, %s408
      %s410 = smul.addr %s409, 8
      %s411 = scalar_lea.vmem %s0, %s410
      %s412 = smul.u32 16, %s24
      %s413 = smul.u32 %s24, 16
      %s414 = ssub.s32 %s413, 1
      %p415 = scmp.gt.s32.totalorder %s414, 0
      %s416 = scalar_select %p415, %s414, 0
      %p417 = scmp.lt.s32.totalorder %s23, 1
      %s418 = scalar_select %p417, %s23, 1
      %p419 = scmp.lt.s32.totalorder %s416, 15
      %s420 = scalar_select %p419, %s416, 15
      %s421 = smul.addr %s420, 2
      %s422 = smul.addr %s418, 32
      %s423 = sadd.s32 %s421, %s422
      %s424 = smul.addr %s423, 8
      %s425 = scalar_lea.vmem %s1, %s424
      %s426 = smul.u32 %s24, 16
      %s427 = ssub.s32 %s426, 1
      %p428 = scmp.gt.s32.totalorder %s427, 0
      %s429 = scalar_select %p428, %s427, 0
      %s430 = smul.u32 %s24, 16
      %s431 = sadd.s32 %s430, 16
      %p432 = scmp.lt.s32.totalorder %s431, 15
      %s433 = scalar_select %p432, %s431, 15
      %p434 = scmp.lt.s32.totalorder %s23, 1
      %s435 = scalar_select %p434, %s23, 1
      %p436 = scmp.lt.s32.totalorder %s433, 15
      %s437 = scalar_select %p436, %s433, 15
      %s438 = smul.addr %s437, 2
      %s439 = smul.addr %s435, 32
      %s440 = sadd.s32 %s438, %s439
      %s441 = smul.addr %s440, 8
      %s442 = scalar_lea.vmem %s2, %s441
      %s443 = smul.u32 %s24, 16
      %s444 = sadd.s32 %s443, 16
      %p445 = scmp.lt.s32.totalorder %s444, 15
      %s446 = scalar_select %p445, %s444, 15
      %s447 = smul.u32 32, %s24
      %p448 = scmp.lt.s32.totalorder %s23, 1
      %s449 = scalar_select %p448, %s23, 1
      %p450 = scmp.lt.s32.totalorder %s447, 31
      %s451 = scalar_select %p450, %s447, 31
      %s452 = smul.addr %s449, 32
      %s453 = sadd.s32 %s451, %s452
      %s454 = smul.addr %s453, 8
      %s455 = scalar_lea.vmem %s6, %s454
      %s456 = smul.u32 32, %s24
      %p457 = scmp.lt.s32.totalorder %s23, 1
      %s458 = scalar_select %p457, %s23, 1
      %p459 = scmp.lt.s32.totalorder %s24, 0
      %s460 = scalar_select %p459, %s24, 0
      %s461 = sadd.s32 %s460, %s458
      %s462 = smul.addr %s461, 2
      %s463 = scalar_lea.vmem %s7, %s462
      %vm464 = vcmask 57344
      %465 = vst.msk [vmem:[#allocation2] sm:$0x1] %vm464, 0.0
      %466 = vst.msk [vmem:[#allocation2 + $0x18] sm:$0x1] %vm464, 0.0
      %467 = vst.msk [vmem:[#allocation2 + $0x30] sm:$0x1] %vm464, 0.0
      %468 = vst.msk [vmem:[#allocation2 + $0x48] sm:$0x1] %vm464, 0.0
      %469 = vst.msk [vmem:[#allocation2 + $0x60] sm:$0x1] %vm464, 0.0
      %470 = vst.msk [vmem:[#allocation2 + $0x78] sm:$0x1] %vm464, 0.0
      %471 = vst.msk [vmem:[#allocation2 + $0x90] sm:$0x1] %vm464, 0.0
      %472 = vst.msk [vmem:[#allocation2 + $0xa8] sm:$0x1] %vm464, 0.0
      %473 = vst.msk [vmem:[#allocation2 + $0xc0] sm:$0x1] %vm464, 0.0
      %474 = vst.msk [vmem:[#allocation2 + $0xd8] sm:$0x1] %vm464, 0.0
      %475 = vst.msk [vmem:[#allocation2 + $0xf0] sm:$0x1] %vm464, 0.0
      %476 = vst.msk [vmem:[#allocation2 + $0x108] sm:$0x1] %vm464, 0.0
      %477 = vst.msk [vmem:[#allocation2 + $0x120] sm:$0x1] %vm464, 0.0
      %478 = vst.msk [vmem:[#allocation2 + $0x138] sm:$0x1] %vm464, 0.0
      %479 = vst.msk [vmem:[#allocation2 + $0x150] sm:$0x1] %vm464, 0.0
      %480 = vst.msk [vmem:[#allocation2 + $0x168] sm:$0x1] %vm464, 0.0
      %481 = vst.msk [vmem:[#allocation2 + $0x180] sm:$0x1] %vm464, 0.0
      %482 = vst.msk [vmem:[#allocation2 + $0x198] sm:$0x1] %vm464, 0.0
      %483 = vst.msk [vmem:[#allocation2 + $0x11] sm:$0x1] %vm464, 0.0
      %484 = vst.msk [vmem:[#allocation2 + $0x29] sm:$0x1] %vm464, 0.0
      %485 = vst.msk [vmem:[#allocation2 + $0x41] sm:$0x1] %vm464, 0.0
      %486 = vst.msk [vmem:[#allocation2 + $0x59] sm:$0x1] %vm464, 0.0
      %487 = vst.msk [vmem:[#allocation2 + $0x71] sm:$0x1] %vm464, 0.0
      %488 = vst.msk [vmem:[#allocation2 + $0x89] sm:$0x1] %vm464, 0.0
      %489 = vst.msk [vmem:[#allocation2 + $0xa1] sm:$0x1] %vm464, 0.0
      %490 = vst.msk [vmem:[#allocation2 + $0xb9] sm:$0x1] %vm464, 0.0
      %491 = vst.msk [vmem:[#allocation2 + $0xd1] sm:$0x1] %vm464, 0.0
      %492 = vst.msk [vmem:[#allocation2 + $0xe9] sm:$0x1] %vm464, 0.0
      %493 = vst.msk [vmem:[#allocation2 + $0x101] sm:$0x1] %vm464, 0.0
      %494 = vst.msk [vmem:[#allocation2 + $0x119] sm:$0x1] %vm464, 0.0
      %495 = vst.msk [vmem:[#allocation2 + $0x131] sm:$0x1] %vm464, 0.0
      %496 = vst.msk [vmem:[#allocation2 + $0x149] sm:$0x1] %vm464, 0.0
      %497 = vst.msk [vmem:[#allocation2 + $0x161] sm:$0x1] %vm464, 0.0
      %498 = vst.msk [vmem:[#allocation2 + $0x179] sm:$0x1] %vm464, 0.0
      %499 = vst.msk [vmem:[#allocation2 + $0x191] sm:$0x1] %vm464, 0.0
      %500 = vst.msk [vmem:[#allocation2 + $0x1a9] sm:$0x1] %vm464, 0.0
      %v501 = vld [vmem:[%s425] sm:$0xff]
      %v502 = vld [vmem:[%s425 + $0x8] sm:$0xff]
      %vm503 = vcmask 64512
      %504 = vst.msk [vmem:[#allocation2 + $0x1] sm:$0xff] %vm503, %v501
      %505 = vst.msk [vmem:[#allocation2 + $0x9] sm:$0xff] %vm503, %v502
      %v506 = vld [vmem:[%s411] sm:$0xff]
      %v507 = vld [vmem:[%s411 + $0x8] sm:$0xff]
      %v508 = vld [vmem:[%s411 + $0x10] sm:$0xff]
      %v509 = vld [vmem:[%s411 + $0x18] sm:$0xff]
      %v510 = vld [vmem:[%s411 + $0x20] sm:$0xff]
      %v511 = vld [vmem:[%s411 + $0x28] sm:$0xff]
      %v512 = vld [vmem:[%s411 + $0x30] sm:$0xff]
      %v513 = vld [vmem:[%s411 + $0x38] sm:$0xff]
      %v514 = vld [vmem:[%s411 + $0x40] sm:$0xff]
      %v515 = vld [vmem:[%s411 + $0x48] sm:$0xff]
      %v516 = vld [vmem:[%s411 + $0x50] sm:$0xff]
      %v517 = vld [vmem:[%s411 + $0x58] sm:$0xff]
      %v518 = vld [vmem:[%s411 + $0x60] sm:$0xff]
      %v519 = vld [vmem:[%s411 + $0x68] sm:$0xff]
      %v520 = vld [vmem:[%s411 + $0x70] sm:$0xff]
      %v521 = vld [vmem:[%s411 + $0x78] sm:$0xff]
      %v522 = vld [vmem:[%s411 + $0x80] sm:$0xff]
      %v523 = vld [vmem:[%s411 + $0x88] sm:$0xff]
      %v524 = vld [vmem:[%s411 + $0x90] sm:$0xff]
      %v525 = vld [vmem:[%s411 + $0x98] sm:$0xff]
      %v526 = vld [vmem:[%s411 + $0xa0] sm:$0xff]
      %v527 = vld [vmem:[%s411 + $0xa8] sm:$0xff]
      %v528 = vld [vmem:[%s411 + $0xb0] sm:$0xff]
      %v529 = vld [vmem:[%s411 + $0xb8] sm:$0xff]
      %v530 = vld [vmem:[%s411 + $0xc0] sm:$0xff]
      %v531 = vld [vmem:[%s411 + $0xc8] sm:$0xff]
      %v532 = vld [vmem:[%s411 + $0xd0] sm:$0xff]
      %v533 = vld [vmem:[%s411 + $0xd8] sm:$0xff]
      %v534 = vld [vmem:[%s411 + $0xe0] sm:$0xff]
      %v535 = vld [vmem:[%s411 + $0xe8] sm:$0xff]
      %v536 = vld [vmem:[%s411 + $0xf0] sm:$0xff]
      %v537 = vld [vmem:[%s411 + $0xf8] sm:$0xff]
      %s538 = scalar_lea.vmem [#allocation2], 24
      %539 = vst.msk [vmem:[%s538 + $0x1] sm:$0xff] %vm503, %v506
      %540 = vst.msk [vmem:[%s538 + $0x9] sm:$0xff] %vm503, %v507
      %541 = vst.msk [vmem:[%s538 + $0x19] sm:$0xff] %vm503, %v508
      %542 = vst.msk [vmem:[%s538 + $0x21] sm:$0xff] %vm503, %v509
      %543 = vst.msk [vmem:[%s538 + $0x31] sm:$0xff] %vm503, %v510
      %544 = vst.msk [vmem:[%s538 + $0x39] sm:$0xff] %vm503, %v511
      %545 = vst.msk [vmem:[%s538 + $0x49] sm:$0xff] %vm503, %v512
      %546 = vst.msk [vmem:[%s538 + $0x51] sm:$0xff] %vm503, %v513
      %547 = vst.msk [vmem:[%s538 + $0x61] sm:$0xff] %vm503, %v514
      %548 = vst.msk [vmem:[%s538 + $0x69] sm:$0xff] %vm503, %v515
      %549 = vst.msk [vmem:[%s538 + $0x79] sm:$0xff] %vm503, %v516
      %550 = vst.msk [vmem:[%s538 + $0x81] sm:$0xff] %vm503, %v517
      %551 = vst.msk [vmem:[%s538 + $0x91] sm:$0xff] %vm503, %v518
      %552 = vst.msk [vmem:[%s538 + $0x99] sm:$0xff] %vm503, %v519
      %553 = vst.msk [vmem:[%s538 + $0xa9] sm:$0xff] %vm503, %v520
      %554 = vst.msk [vmem:[%s538 + $0xb1] sm:$0xff] %vm503, %v521
      %555 = vst.msk [vmem:[%s538 + $0xc1] sm:$0xff] %vm503, %v522
      %556 = vst.msk [vmem:[%s538 + $0xc9] sm:$0xff] %vm503, %v523
      %557 = vst.msk [vmem:[%s538 + $0xd9] sm:$0xff] %vm503, %v524
      %558 = vst.msk [vmem:[%s538 + $0xe1] sm:$0xff] %vm503, %v525
      %559 = vst.msk [vmem:[%s538 + $0xf1] sm:$0xff] %vm503, %v526
      %560 = vst.msk [vmem:[%s538 + $0xf9] sm:$0xff] %vm503, %v527
      %561 = vst.msk [vmem:[%s538 + $0x109] sm:$0xff] %vm503, %v528
      %562 = vst.msk [vmem:[%s538 + $0x111] sm:$0xff] %vm503, %v529
      %563 = vst.msk [vmem:[%s538 + $0x121] sm:$0xff] %vm503, %v530
      %564 = vst.msk [vmem:[%s538 + $0x129] sm:$0xff] %vm503, %v531
      %565 = vst.msk [vmem:[%s538 + $0x139] sm:$0xff] %vm503, %v532
      %566 = vst.msk [vmem:[%s538 + $0x141] sm:$0xff] %vm503, %v533
      %567 = vst.msk [vmem:[%s538 + $0x151] sm:$0xff] %vm503, %v534
      %568 = vst.msk [vmem:[%s538 + $0x159] sm:$0xff] %vm503, %v535
      %569 = vst.msk [vmem:[%s538 + $0x169] sm:$0xff] %vm503, %v536
      %570 = vst.msk [vmem:[%s538 + $0x171] sm:$0xff] %vm503, %v537
      %v571 = vld [vmem:[%s442] sm:$0xff]
      %v572 = vld [vmem:[%s442 + $0x8] sm:$0xff]
      %s573 = scalar_lea.vmem [#allocation2], 408
      %574 = vst.msk [vmem:[%s573 + $0x1] sm:$0xff] %vm503, %v571
      %575 = vst.msk [vmem:[%s573 + $0x9] sm:$0xff] %vm503, %v572
      %p576 = scmp.eq.s32.totalorder %s24, 0
      // Predicated region
      $region45: #{basic_block_forward.3} parent=43 // pred_check
        %p577 = pneg %p576
      $region46: #{basic_block_forward.3} parent=43 // pred_check_branch
        %579 = sbr.rel (%p577) target = $region48
      $region47: #{basic_block_forward.3} parent=43 // pred_region
        %580 = vst.msk [vmem:[#allocation2] sm:$0xff] %vm503, 0.0
        %581 = vst.msk [vmem:[#allocation2 + $0x8] sm:$0xff] %vm503, 0.0
        %vm582 = vcmask 58368
        %583 = vst.msk [vmem:[#allocation2 + $0x10] sm:$0x3] %vm582, 0.0
        %584 = vst.msk [vmem:[%s573] sm:$0xff] %vm503, 0.0
        %585 = vst.msk [vmem:[%s573 + $0x8] sm:$0xff] %vm503, 0.0
        %586 = vst.msk [vmem:[%s573 + $0x10] sm:$0x3] %vm582, 0.0
      $region48: #{basic_block_forward.3} parent=43 // pred_fallthru
        _
      %v587 = vld [vmem:[#allocation2] sm:$0xff]
      %v588 = vld [vmem:[#allocation2 + $0x8] sm:$0xff]
      %v589 = vld [vmem:[#allocation2 + $0x18] sm:$0xff]
      %v590 = vld [vmem:[#allocation2 + $0x20] sm:$0xff]
      %v591 = vld [vmem:[#allocation2 + $0x30] sm:$0xff]
      %v592 = vld [vmem:[#allocation2 + $0x38] sm:$0xff]
      %v593 = vld [vmem:[#allocation2 + $0x48] sm:$0xff]
      %v594 = vld [vmem:[#allocation2 + $0x50] sm:$0xff]
      %v595 = vld [vmem:[#allocation2 + $0x60] sm:$0xff]
      %v596 = vld [vmem:[#allocation2 + $0x68] sm:$0xff]
      %v597 = vld [vmem:[#allocation2 + $0x78] sm:$0xff]
      %v598 = vld [vmem:[#allocation2 + $0x80] sm:$0xff]
      %v599 = vld [vmem:[#allocation2 + $0x90] sm:$0xff]
      %v600 = vld [vmem:[#allocation2 + $0x98] sm:$0xff]
      %v601 = vld [vmem:[#allocation2 + $0xa8] sm:$0xff]
      %v602 = vld [vmem:[#allocation2 + $0xb0] sm:$0xff]
      %v603 = vld [vmem:[#allocation2 + $0xc0] sm:$0xff]
      %v604 = vld [vmem:[#allocation2 + $0xc8] sm:$0xff]
      %v605 = vld [vmem:[#allocation2 + $0xd8] sm:$0xff]
      %v606 = vld [vmem:[#allocation2 + $0xe0] sm:$0xff]
      %v607 = vld [vmem:[#allocation2 + $0xf0] sm:$0xff]
      %v608 = vld [vmem:[#allocation2 + $0xf8] sm:$0xff]
      %v609 = vld [vmem:[#allocation2 + $0x108] sm:$0xff]
      %v610 = vld [vmem:[#allocation2 + $0x110] sm:$0xff]
      %v611 = vld [vmem:[#allocation2 + $0x120] sm:$0xff]
      %v612 = vld [vmem:[#allocation2 + $0x128] sm:$0xff]
      %v613 = vld [vmem:[#allocation2 + $0x138] sm:$0xff]
      %v614 = vld [vmem:[#allocation2 + $0x140] sm:$0xff]
      %v615 = vld [vmem:[#allocation2 + $0x150] sm:$0xff]
      %v616 = vld [vmem:[#allocation2 + $0x158] sm:$0xff]
      %v617 = vld [vmem:[#allocation2 + $0x168] sm:$0xff]
      %v618 = vld [vmem:[#allocation2 + $0x170] sm:$0xff]
      %619 = vst.msk [vmem:[#allocation3] sm:$0xff] %vm503, %v587
      %620 = vst.msk [vmem:[#allocation3 + $0x8] sm:$0xff] %vm503, %v588
      %621 = vst.msk [vmem:[#allocation3 + $0x10] sm:$0xff] %vm503, %v589
      %622 = vst.msk [vmem:[#allocation3 + $0x18] sm:$0xff] %vm503, %v590
      %623 = vst.msk [vmem:[#allocation3 + $0x20] sm:$0xff] %vm503, %v591
      %624 = vst.msk [vmem:[#allocation3 + $0x28] sm:$0xff] %vm503, %v592
      %625 = vst.msk [vmem:[#allocation3 + $0x30] sm:$0xff] %vm503, %v593
      %626 = vst.msk [vmem:[#allocation3 + $0x38] sm:$0xff] %vm503, %v594
      %627 = vst.msk [vmem:[#allocation3 + $0x40] sm:$0xff] %vm503, %v595
      %628 = vst.msk [vmem:[#allocation3 + $0x48] sm:$0xff] %vm503, %v596
      %629 = vst.msk [vmem:[#allocation3 + $0x50] sm:$0xff] %vm503, %v597
      %630 = vst.msk [vmem:[#allocation3 + $0x58] sm:$0xff] %vm503, %v598
      %631 = vst.msk [vmem:[#allocation3 + $0x60] sm:$0xff] %vm503, %v599
      %632 = vst.msk [vmem:[#allocation3 + $0x68] sm:$0xff] %vm503, %v600
      %633 = vst.msk [vmem:[#allocation3 + $0x70] sm:$0xff] %vm503, %v601
      %634 = vst.msk [vmem:[#allocation3 + $0x78] sm:$0xff] %vm503, %v602
      %635 = vst.msk [vmem:[#allocation3 + $0x80] sm:$0xff] %vm503, %v603
      %636 = vst.msk [vmem:[#allocation3 + $0x88] sm:$0xff] %vm503, %v604
      %637 = vst.msk [vmem:[#allocation3 + $0x90] sm:$0xff] %vm503, %v605
      %638 = vst.msk [vmem:[#allocation3 + $0x98] sm:$0xff] %vm503, %v606
      %639 = vst.msk [vmem:[#allocation3 + $0xa0] sm:$0xff] %vm503, %v607
      %640 = vst.msk [vmem:[#allocation3 + $0xa8] sm:$0xff] %vm503, %v608
      %641 = vst.msk [vmem:[#allocation3 + $0xb0] sm:$0xff] %vm503, %v609
      %642 = vst.msk [vmem:[#allocation3 + $0xb8] sm:$0xff] %vm503, %v610
      %643 = vst.msk [vmem:[#allocation3 + $0xc0] sm:$0xff] %vm503, %v611
      %644 = vst.msk [vmem:[#allocation3 + $0xc8] sm:$0xff] %vm503, %v612
      %645 = vst.msk [vmem:[#allocation3 + $0xd0] sm:$0xff] %vm503, %v613
      %646 = vst.msk [vmem:[#allocation3 + $0xd8] sm:$0xff] %vm503, %v614
      %647 = vst.msk [vmem:[#allocation3 + $0xe0] sm:$0xff] %vm503, %v615
      %648 = vst.msk [vmem:[#allocation3 + $0xe8] sm:$0xff] %vm503, %v616
      %649 = vst.msk [vmem:[#allocation3 + $0xf0] sm:$0xff] %vm503, %v617
      %650 = vst.msk [vmem:[#allocation3 + $0xf8] sm:$0xff] %vm503, %v618
      %v651 = vld [vmem:[#allocation2 + $0x1] sm:$0xff]
      %v652 = vld [vmem:[#allocation2 + $0x9] sm:$0xff]
      %v653 = vld [vmem:[#allocation2 + $0x19] sm:$0xff]
      %v654 = vld [vmem:[#allocation2 + $0x21] sm:$0xff]
      %v655 = vld [vmem:[#allocation2 + $0x31] sm:$0xff]
      %v656 = vld [vmem:[#allocation2 + $0x39] sm:$0xff]
      %v657 = vld [vmem:[#allocation2 + $0x49] sm:$0xff]
      %v658 = vld [vmem:[#allocation2 + $0x51] sm:$0xff]
      %v659 = vld [vmem:[#allocation2 + $0x61] sm:$0xff]
      %v660 = vld [vmem:[#allocation2 + $0x69] sm:$0xff]
      %v661 = vld [vmem:[#allocation2 + $0x79] sm:$0xff]
      %v662 = vld [vmem:[#allocation2 + $0x81] sm:$0xff]
      %v663 = vld [vmem:[#allocation2 + $0x91] sm:$0xff]
      %v664 = vld [vmem:[#allocation2 + $0x99] sm:$0xff]
      %v665 = vld [vmem:[#allocation2 + $0xa9] sm:$0xff]
      %v666 = vld [vmem:[#allocation2 + $0xb1] sm:$0xff]
      %v667 = vld [vmem:[#allocation2 + $0xc1] sm:$0xff]
      %v668 = vld [vmem:[#allocation2 + $0xc9] sm:$0xff]
      %v669 = vld [vmem:[#allocation2 + $0xd9] sm:$0xff]
      %v670 = vld [vmem:[#allocation2 + $0xe1] sm:$0xff]
      %v671 = vld [vmem:[#allocation2 + $0xf1] sm:$0xff]
      %v672 = vld [vmem:[#allocation2 + $0xf9] sm:$0xff]
      %v673 = vld [vmem:[#allocation2 + $0x109] sm:$0xff]
      %v674 = vld [vmem:[#allocation2 + $0x111] sm:$0xff]
      %v675 = vld [vmem:[#allocation2 + $0x121] sm:$0xff]
      %v676 = vld [vmem:[#allocation2 + $0x129] sm:$0xff]
      %v677 = vld [vmem:[#allocation2 + $0x139] sm:$0xff]
      %v678 = vld [vmem:[#allocation2 + $0x141] sm:$0xff]
      %v679 = vld [vmem:[#allocation2 + $0x151] sm:$0xff]
      %v680 = vld [vmem:[#allocation2 + $0x159] sm:$0xff]
      %v681 = vld [vmem:[#allocation2 + $0x169] sm:$0xff]
      %v682 = vld [vmem:[#allocation2 + $0x171] sm:$0xff]
      %715 = vrot.lane.b32.xlu0 %v651, 8
      %v716 = vpop.permute.xlu0 %715
      %717 = vrot.lane.b32.xlu0 %v652, 8
      %v718 = vpop.permute.xlu0 %717
      %719 = vrot.lane.b32.xlu0 %v653, 8
      %v720 = vpop.permute.xlu0 %719
      %721 = vrot.lane.b32.xlu0 %v654, 8
      %v722 = vpop.permute.xlu0 %721
      %723 = vrot.lane.b32.xlu0 %v655, 8
      %v724 = vpop.permute.xlu0 %723
      %725 = vrot.lane.b32.xlu0 %v656, 8
      %v726 = vpop.permute.xlu0 %725
      %727 = vrot.lane.b32.xlu0 %v657, 8
      %v728 = vpop.permute.xlu0 %727
      %729 = vrot.lane.b32.xlu0 %v658, 8
      %v730 = vpop.permute.xlu0 %729
      %731 = vrot.lane.b32.xlu0 %v659, 8
      %v732 = vpop.permute.xlu0 %731
      %733 = vrot.lane.b32.xlu0 %v660, 8
      %v734 = vpop.permute.xlu0 %733
      %735 = vrot.lane.b32.xlu0 %v661, 8
      %v736 = vpop.permute.xlu0 %735
      %737 = vrot.lane.b32.xlu0 %v662, 8
      %v738 = vpop.permute.xlu0 %737
      %739 = vrot.lane.b32.xlu0 %v663, 8
      %v740 = vpop.permute.xlu0 %739
      %741 = vrot.lane.b32.xlu0 %v664, 8
      %v742 = vpop.permute.xlu0 %741
      %743 = vrot.lane.b32.xlu0 %v665, 8
      %v744 = vpop.permute.xlu0 %743
      %745 = vrot.lane.b32.xlu0 %v666, 8
      %v746 = vpop.permute.xlu0 %745
      %747 = vrot.lane.b32.xlu0 %v667, 8
      %v748 = vpop.permute.xlu0 %747
      %749 = vrot.lane.b32.xlu0 %v668, 8
      %v750 = vpop.permute.xlu0 %749
      %751 = vrot.lane.b32.xlu0 %v669, 8
      %v752 = vpop.permute.xlu0 %751
      %753 = vrot.lane.b32.xlu0 %v670, 8
      %v754 = vpop.permute.xlu0 %753
      %755 = vrot.lane.b32.xlu0 %v671, 8
      %v756 = vpop.permute.xlu0 %755
      %757 = vrot.lane.b32.xlu0 %v672, 8
      %v758 = vpop.permute.xlu0 %757
      %759 = vrot.lane.b32.xlu0 %v673, 8
      %v760 = vpop.permute.xlu0 %759
      %761 = vrot.lane.b32.xlu0 %v674, 8
      %v762 = vpop.permute.xlu0 %761
      %763 = vrot.lane.b32.xlu0 %v675, 8
      %v764 = vpop.permute.xlu0 %763
      %765 = vrot.lane.b32.xlu0 %v676, 8
      %v766 = vpop.permute.xlu0 %765
      %767 = vrot.lane.b32.xlu0 %v677, 8
      %v768 = vpop.permute.xlu0 %767
      %769 = vrot.lane.b32.xlu0 %v678, 8
      %v770 = vpop.permute.xlu0 %769
      %771 = vrot.lane.b32.xlu0 %v679, 8
      %v772 = vpop.permute.xlu0 %771
      %773 = vrot.lane.b32.xlu0 %v680, 8
      %v774 = vpop.permute.xlu0 %773
      %775 = vrot.lane.b32.xlu0 %v681, 8
      %v776 = vpop.permute.xlu0 %775
      %777 = vrot.lane.b32.xlu0 %v682, 8
      %v778 = vpop.permute.xlu0 %777
      %vm811 = vcmask 130112
      %812 = vst.msk [vmem:[#allocation3] sm:$0xff] %vm811, %v716
      %813 = vst.msk [vmem:[#allocation3 + $0x8] sm:$0xff] %vm811, %v718
      %814 = vst.msk [vmem:[#allocation3 + $0x10] sm:$0xff] %vm811, %v720
      %815 = vst.msk [vmem:[#allocation3 + $0x18] sm:$0xff] %vm811, %v722
      %816 = vst.msk [vmem:[#allocation3 + $0x20] sm:$0xff] %vm811, %v724
      %817 = vst.msk [vmem:[#allocation3 + $0x28] sm:$0xff] %vm811, %v726
      %818 = vst.msk [vmem:[#allocation3 + $0x30] sm:$0xff] %vm811, %v728
      %819 = vst.msk [vmem:[#allocation3 + $0x38] sm:$0xff] %vm811, %v730
      %820 = vst.msk [vmem:[#allocation3 + $0x40] sm:$0xff] %vm811, %v732
      %821 = vst.msk [vmem:[#allocation3 + $0x48] sm:$0xff] %vm811, %v734
      %822 = vst.msk [vmem:[#allocation3 + $0x50] sm:$0xff] %vm811, %v736
      %823 = vst.msk [vmem:[#allocation3 + $0x58] sm:$0xff] %vm811, %v738
      %824 = vst.msk [vmem:[#allocation3 + $0x60] sm:$0xff] %vm811, %v740
      %825 = vst.msk [vmem:[#allocation3 + $0x68] sm:$0xff] %vm811, %v742
      %826 = vst.msk [vmem:[#allocation3 + $0x70] sm:$0xff] %vm811, %v744
      %827 = vst.msk [vmem:[#allocation3 + $0x78] sm:$0xff] %vm811, %v746
      %828 = vst.msk [vmem:[#allocation3 + $0x80] sm:$0xff] %vm811, %v748
      %829 = vst.msk [vmem:[#allocation3 + $0x88] sm:$0xff] %vm811, %v750
      %830 = vst.msk [vmem:[#allocation3 + $0x90] sm:$0xff] %vm811, %v752
      %831 = vst.msk [vmem:[#allocation3 + $0x98] sm:$0xff] %vm811, %v754
      %832 = vst.msk [vmem:[#allocation3 + $0xa0] sm:$0xff] %vm811, %v756
      %833 = vst.msk [vmem:[#allocation3 + $0xa8] sm:$0xff] %vm811, %v758
      %834 = vst.msk [vmem:[#allocation3 + $0xb0] sm:$0xff] %vm811, %v760
      %835 = vst.msk [vmem:[#allocation3 + $0xb8] sm:$0xff] %vm811, %v762
      %836 = vst.msk [vmem:[#allocation3 + $0xc0] sm:$0xff] %vm811, %v764
      %837 = vst.msk [vmem:[#allocation3 + $0xc8] sm:$0xff] %vm811, %v766
      %838 = vst.msk [vmem:[#allocation3 + $0xd0] sm:$0xff] %vm811, %v768
      %839 = vst.msk [vmem:[#allocation3 + $0xd8] sm:$0xff] %vm811, %v770
      %840 = vst.msk [vmem:[#allocation3 + $0xe0] sm:$0xff] %vm811, %v772
      %841 = vst.msk [vmem:[#allocation3 + $0xe8] sm:$0xff] %vm811, %v774
      %842 = vst.msk [vmem:[#allocation3 + $0xf0] sm:$0xff] %vm811, %v776
      %843 = vst.msk [vmem:[#allocation3 + $0xf8] sm:$0xff] %vm811, %v778
      %v844 = vld [vmem:[#allocation2 + $0x2] sm:$0xff]
      %v845 = vld [vmem:[#allocation2 + $0xa] sm:$0xff]
      %v846 = vld [vmem:[#allocation2 + $0x1a] sm:$0xff]
      %v847 = vld [vmem:[#allocation2 + $0x22] sm:$0xff]
      %v848 = vld [vmem:[#allocation2 + $0x32] sm:$0xff]
      %v849 = vld [vmem:[#allocation2 + $0x3a] sm:$0xff]
      %v850 = vld [vmem:[#allocation2 + $0x4a] sm:$0xff]
      %v851 = vld [vmem:[#allocation2 + $0x52] sm:$0xff]
      %v852 = vld [vmem:[#allocation2 + $0x62] sm:$0xff]
      %v853 = vld [vmem:[#allocation2 + $0x6a] sm:$0xff]
      %v854 = vld [vmem:[#allocation2 + $0x7a] sm:$0xff]
      %v855 = vld [vmem:[#allocation2 + $0x82] sm:$0xff]
      %v856 = vld [vmem:[#allocation2 + $0x92] sm:$0xff]
      %v857 = vld [vmem:[#allocation2 + $0x9a] sm:$0xff]
      %v858 = vld [vmem:[#allocation2 + $0xaa] sm:$0xff]
      %v859 = vld [vmem:[#allocation2 + $0xb2] sm:$0xff]
      %v860 = vld [vmem:[#allocation2 + $0xc2] sm:$0xff]
      %v861 = vld [vmem:[#allocation2 + $0xca] sm:$0xff]
      %v862 = vld [vmem:[#allocation2 + $0xda] sm:$0xff]
      %v863 = vld [vmem:[#allocation2 + $0xe2] sm:$0xff]
      %v864 = vld [vmem:[#allocation2 + $0xf2] sm:$0xff]
      %v865 = vld [vmem:[#allocation2 + $0xfa] sm:$0xff]
      %v866 = vld [vmem:[#allocation2 + $0x10a] sm:$0xff]
      %v867 = vld [vmem:[#allocation2 + $0x112] sm:$0xff]
      %v868 = vld [vmem:[#allocation2 + $0x122] sm:$0xff]
      %v869 = vld [vmem:[#allocation2 + $0x12a] sm:$0xff]
      %v870 = vld [vmem:[#allocation2 + $0x13a] sm:$0xff]
      %v871 = vld [vmem:[#allocation2 + $0x142] sm:$0xff]
      %v872 = vld [vmem:[#allocation2 + $0x152] sm:$0xff]
      %v873 = vld [vmem:[#allocation2 + $0x15a] sm:$0xff]
      %v874 = vld [vmem:[#allocation2 + $0x16a] sm:$0xff]
      %v875 = vld [vmem:[#allocation2 + $0x172] sm:$0xff]
      %908 = vrot.lane.b32.xlu0 %v844, 16
      %v909 = vpop.permute.xlu0 %908
      %910 = vrot.lane.b32.xlu0 %v845, 16
      %v911 = vpop.permute.xlu0 %910
      %912 = vrot.lane.b32.xlu0 %v846, 16
      %v913 = vpop.permute.xlu0 %912
      %914 = vrot.lane.b32.xlu0 %v847, 16
      %v915 = vpop.permute.xlu0 %914
      %916 = vrot.lane.b32.xlu0 %v848, 16
      %v917 = vpop.permute.xlu0 %916
      %918 = vrot.lane.b32.xlu0 %v849, 16
      %v919 = vpop.permute.xlu0 %918
      %920 = vrot.lane.b32.xlu0 %v850, 16
      %v921 = vpop.permute.xlu0 %920
      %922 = vrot.lane.b32.xlu0 %v851, 16
      %v923 = vpop.permute.xlu0 %922
      %924 = vrot.lane.b32.xlu0 %v852, 16
      %v925 = vpop.permute.xlu0 %924
      %926 = vrot.lane.b32.xlu0 %v853, 16
      %v927 = vpop.permute.xlu0 %926
      %928 = vrot.lane.b32.xlu0 %v854, 16
      %v929 = vpop.permute.xlu0 %928
      %930 = vrot.lane.b32.xlu0 %v855, 16
      %v931 = vpop.permute.xlu0 %930
      %932 = vrot.lane.b32.xlu0 %v856, 16
      %v933 = vpop.permute.xlu0 %932
      %934 = vrot.lane.b32.xlu0 %v857, 16
      %v935 = vpop.permute.xlu0 %934
      %936 = vrot.lane.b32.xlu0 %v858, 16
      %v937 = vpop.permute.xlu0 %936
      %938 = vrot.lane.b32.xlu0 %v859, 16
      %v939 = vpop.permute.xlu0 %938
      %940 = vrot.lane.b32.xlu0 %v860, 16
      %v941 = vpop.permute.xlu0 %940
      %942 = vrot.lane.b32.xlu0 %v861, 16
      %v943 = vpop.permute.xlu0 %942
      %944 = vrot.lane.b32.xlu0 %v862, 16
      %v945 = vpop.permute.xlu0 %944
      %946 = vrot.lane.b32.xlu0 %v863, 16
      %v947 = vpop.permute.xlu0 %946
      %948 = vrot.lane.b32.xlu0 %v864, 16
      %v949 = vpop.permute.xlu0 %948
      %950 = vrot.lane.b32.xlu0 %v865, 16
      %v951 = vpop.permute.xlu0 %950
      %952 = vrot.lane.b32.xlu0 %v866, 16
      %v953 = vpop.permute.xlu0 %952
      %954 = vrot.lane.b32.xlu0 %v867, 16
      %v955 = vpop.permute.xlu0 %954
      %956 = vrot.lane.b32.xlu0 %v868, 16
      %v957 = vpop.permute.xlu0 %956
      %958 = vrot.lane.b32.xlu0 %v869, 16
      %v959 = vpop.permute.xlu0 %958
      %960 = vrot.lane.b32.xlu0 %v870, 16
      %v961 = vpop.permute.xlu0 %960
      %962 = vrot.lane.b32.xlu0 %v871, 16
      %v963 = vpop.permute.xlu0 %962
      %964 = vrot.lane.b32.xlu0 %v872, 16
      %v965 = vpop.permute.xlu0 %964
      %966 = vrot.lane.b32.xlu0 %v873, 16
      %v967 = vpop.permute.xlu0 %966
      %968 = vrot.lane.b32.xlu0 %v874, 16
      %v969 = vpop.permute.xlu0 %968
      %970 = vrot.lane.b32.xlu0 %v875, 16
      %v971 = vpop.permute.xlu0 %970
      %vm1004 = vcmask 195712
      %1005 = vst.msk [vmem:[#allocation3] sm:$0xff] %vm1004, %v909
      %1006 = vst.msk [vmem:[#allocation3 + $0x8] sm:$0xff] %vm1004, %v911
      %1007 = vst.msk [vmem:[#allocation3 + $0x10] sm:$0xff] %vm1004, %v913
      %1008 = vst.msk [vmem:[#allocation3 + $0x18] sm:$0xff] %vm1004, %v915
      %1009 = vst.msk [vmem:[#allocation3 + $0x20] sm:$0xff] %vm1004, %v917
      %1010 = vst.msk [vmem:[#allocation3 + $0x28] sm:$0xff] %vm1004, %v919
      %1011 = vst.msk [vmem:[#allocation3 + $0x30] sm:$0xff] %vm1004, %v921
      %1012 = vst.msk [vmem:[#allocation3 + $0x38] sm:$0xff] %vm1004, %v923
      %1013 = vst.msk [vmem:[#allocation3 + $0x40] sm:$0xff] %vm1004, %v925
      %1014 = vst.msk [vmem:[#allocation3 + $0x48] sm:$0xff] %vm1004, %v927
      %1015 = vst.msk [vmem:[#allocation3 + $0x50] sm:$0xff] %vm1004, %v929
      %1016 = vst.msk [vmem:[#allocation3 + $0x58] sm:$0xff] %vm1004, %v931
      %1017 = vst.msk [vmem:[#allocation3 + $0x60] sm:$0xff] %vm1004, %v933
      %1018 = vst.msk [vmem:[#allocation3 + $0x68] sm:$0xff] %vm1004, %v935
      %1019 = vst.msk [vmem:[#allocation3 + $0x70] sm:$0xff] %vm1004, %v937
      %1020 = vst.msk [vmem:[#allocation3 + $0x78] sm:$0xff] %vm1004, %v939
      %1021 = vst.msk [vmem:[#allocation3 + $0x80] sm:$0xff] %vm1004, %v941
      %1022 = vst.msk [vmem:[#allocation3 + $0x88] sm:$0xff] %vm1004, %v943
      %1023 = vst.msk [vmem:[#allocation3 + $0x90] sm:$0xff] %vm1004, %v945
      %1024 = vst.msk [vmem:[#allocation3 + $0x98] sm:$0xff] %vm1004, %v947
      %1025 = vst.msk [vmem:[#allocation3 + $0xa0] sm:$0xff] %vm1004, %v949
      %1026 = vst.msk [vmem:[#allocation3 + $0xa8] sm:$0xff] %vm1004, %v951
      %1027 = vst.msk [vmem:[#allocation3 + $0xb0] sm:$0xff] %vm1004, %v953
      %1028 = vst.msk [vmem:[#allocation3 + $0xb8] sm:$0xff] %vm1004, %v955
      %1029 = vst.msk [vmem:[#allocation3 + $0xc0] sm:$0xff] %vm1004, %v957
      %1030 = vst.msk [vmem:[#allocation3 + $0xc8] sm:$0xff] %vm1004, %v959
      %1031 = vst.msk [vmem:[#allocation3 + $0xd0] sm:$0xff] %vm1004, %v961
      %1032 = vst.msk [vmem:[#allocation3 + $0xd8] sm:$0xff] %vm1004, %v963
      %1033 = vst.msk [vmem:[#allocation3 + $0xe0] sm:$0xff] %vm1004, %v965
      %1034 = vst.msk [vmem:[#allocation3 + $0xe8] sm:$0xff] %vm1004, %v967
      %1035 = vst.msk [vmem:[#allocation3 + $0xf0] sm:$0xff] %vm1004, %v969
      %1036 = vst.msk [vmem:[#allocation3 + $0xf8] sm:$0xff] %vm1004, %v971
      %v1037 = vld [vmem:[%s538] sm:$0xff]
      %v1038 = vld [vmem:[%s538 + $0x8] sm:$0xff]
      %v1039 = vld [vmem:[%s538 + $0x18] sm:$0xff]
      %v1040 = vld [vmem:[%s538 + $0x20] sm:$0xff]
      %v1041 = vld [vmem:[%s538 + $0x30] sm:$0xff]
      %v1042 = vld [vmem:[%s538 + $0x38] sm:$0xff]
      %v1043 = vld [vmem:[%s538 + $0x48] sm:$0xff]
      %v1044 = vld [vmem:[%s538 + $0x50] sm:$0xff]
      %v1045 = vld [vmem:[%s538 + $0x60] sm:$0xff]
      %v1046 = vld [vmem:[%s538 + $0x68] sm:$0xff]
      %v1047 = vld [vmem:[%s538 + $0x78] sm:$0xff]
      %v1048 = vld [vmem:[%s538 + $0x80] sm:$0xff]
      %v1049 = vld [vmem:[%s538 + $0x90] sm:$0xff]
      %v1050 = vld [vmem:[%s538 + $0x98] sm:$0xff]
      %v1051 = vld [vmem:[%s538 + $0xa8] sm:$0xff]
      %v1052 = vld [vmem:[%s538 + $0xb0] sm:$0xff]
      %v1053 = vld [vmem:[%s538 + $0xc0] sm:$0xff]
      %v1054 = vld [vmem:[%s538 + $0xc8] sm:$0xff]
      %v1055 = vld [vmem:[%s538 + $0xd8] sm:$0xff]
      %v1056 = vld [vmem:[%s538 + $0xe0] sm:$0xff]
      %v1057 = vld [vmem:[%s538 + $0xf0] sm:$0xff]
      %v1058 = vld [vmem:[%s538 + $0xf8] sm:$0xff]
      %v1059 = vld [vmem:[%s538 + $0x108] sm:$0xff]
      %v1060 = vld [vmem:[%s538 + $0x110] sm:$0xff]
      %v1061 = vld [vmem:[%s538 + $0x120] sm:$0xff]
      %v1062 = vld [vmem:[%s538 + $0x128] sm:$0xff]
      %v1063 = vld [vmem:[%s538 + $0x138] sm:$0xff]
      %v1064 = vld [vmem:[%s538 + $0x140] sm:$0xff]
      %v1065 = vld [vmem:[%s538 + $0x150] sm:$0xff]
      %v1066 = vld [vmem:[%s538 + $0x158] sm:$0xff]
      %v1067 = vld [vmem:[%s538 + $0x168] sm:$0xff]
      %v1068 = vld [vmem:[%s538 + $0x170] sm:$0xff]
      %1101 = vrot.lane.b32.xlu0 %v1037, 24
      %v1102 = vpop.permute.xlu0 %1101
      %1103 = vrot.lane.b32.xlu0 %v1038, 24
      %v1104 = vpop.permute.xlu0 %1103
      %1105 = vrot.lane.b32.xlu0 %v1039, 24
      %v1106 = vpop.permute.xlu0 %1105
      %1107 = vrot.lane.b32.xlu0 %v1040, 24
      %v1108 = vpop.permute.xlu0 %1107
      %1109 = vrot.lane.b32.xlu0 %v1041, 24
      %v1110 = vpop.permute.xlu0 %1109
      %1111 = vrot.lane.b32.xlu0 %v1042, 24
      %v1112 = vpop.permute.xlu0 %1111
      %1113 = vrot.lane.b32.xlu0 %v1043, 24
      %v1114 = vpop.permute.xlu0 %1113
      %1115 = vrot.lane.b32.xlu0 %v1044, 24
      %v1116 = vpop.permute.xlu0 %1115
      %1117 = vrot.lane.b32.xlu0 %v1045, 24
      %v1118 = vpop.permute.xlu0 %1117
      %1119 = vrot.lane.b32.xlu0 %v1046, 24
      %v1120 = vpop.permute.xlu0 %1119
      %1121 = vrot.lane.b32.xlu0 %v1047, 24
      %v1122 = vpop.permute.xlu0 %1121
      %1123 = vrot.lane.b32.xlu0 %v1048, 24
      %v1124 = vpop.permute.xlu0 %1123
      %1125 = vrot.lane.b32.xlu0 %v1049, 24
      %v1126 = vpop.permute.xlu0 %1125
      %1127 = vrot.lane.b32.xlu0 %v1050, 24
      %v1128 = vpop.permute.xlu0 %1127
      %1129 = vrot.lane.b32.xlu0 %v1051, 24
      %v1130 = vpop.permute.xlu0 %1129
      %1131 = vrot.lane.b32.xlu0 %v1052, 24
      %v1132 = vpop.permute.xlu0 %1131
      %1133 = vrot.lane.b32.xlu0 %v1053, 24
      %v1134 = vpop.permute.xlu0 %1133
      %1135 = vrot.lane.b32.xlu0 %v1054, 24
      %v1136 = vpop.permute.xlu0 %1135
      %1137 = vrot.lane.b32.xlu0 %v1055, 24
      %v1138 = vpop.permute.xlu0 %1137
      %1139 = vrot.lane.b32.xlu0 %v1056, 24
      %v1140 = vpop.permute.xlu0 %1139
      %1141 = vrot.lane.b32.xlu0 %v1057, 24
      %v1142 = vpop.permute.xlu0 %1141
      %1143 = vrot.lane.b32.xlu0 %v1058, 24
      %v1144 = vpop.permute.xlu0 %1143
      %1145 = vrot.lane.b32.xlu0 %v1059, 24
      %v1146 = vpop.permute.xlu0 %1145
      %1147 = vrot.lane.b32.xlu0 %v1060, 24
      %v1148 = vpop.permute.xlu0 %1147
      %1149 = vrot.lane.b32.xlu0 %v1061, 24
      %v1150 = vpop.permute.xlu0 %1149
      %1151 = vrot.lane.b32.xlu0 %v1062, 24
      %v1152 = vpop.permute.xlu0 %1151
      %1153 = vrot.lane.b32.xlu0 %v1063, 24
      %v1154 = vpop.permute.xlu0 %1153
      %1155 = vrot.lane.b32.xlu0 %v1064, 24
      %v1156 = vpop.permute.xlu0 %1155
      %1157 = vrot.lane.b32.xlu0 %v1065, 24
      %v1158 = vpop.permute.xlu0 %1157
      %1159 = vrot.lane.b32.xlu0 %v1066, 24
      %v1160 = vpop.permute.xlu0 %1159
      %1161 = vrot.lane.b32.xlu0 %v1067, 24
      %v1162 = vpop.permute.xlu0 %1161
      %1163 = vrot.lane.b32.xlu0 %v1068, 24
      %v1164 = vpop.permute.xlu0 %1163
      %vm1197 = vcmask 261312
      %1198 = vst.msk [vmem:[#allocation3] sm:$0xff] %vm1197, %v1102
      %1199 = vst.msk [vmem:[#allocation3 + $0x8] sm:$0xff] %vm1197, %v1104
      %1200 = vst.msk [vmem:[#allocation3 + $0x10] sm:$0xff] %vm1197, %v1106
      %1201 = vst.msk [vmem:[#allocation3 + $0x18] sm:$0xff] %vm1197, %v1108
      %1202 = vst.msk [vmem:[#allocation3 + $0x20] sm:$0xff] %vm1197, %v1110
      %1203 = vst.msk [vmem:[#allocation3 + $0x28] sm:$0xff] %vm1197, %v1112
      %1204 = vst.msk [vmem:[#allocation3 + $0x30] sm:$0xff] %vm1197, %v1114
      %1205 = vst.msk [vmem:[#allocation3 + $0x38] sm:$0xff] %vm1197, %v1116
      %1206 = vst.msk [vmem:[#allocation3 + $0x40] sm:$0xff] %vm1197, %v1118
      %1207 = vst.msk [vmem:[#allocation3 + $0x48] sm:$0xff] %vm1197, %v1120
      %1208 = vst.msk [vmem:[#allocation3 + $0x50] sm:$0xff] %vm1197, %v1122
      %1209 = vst.msk [vmem:[#allocation3 + $0x58] sm:$0xff] %vm1197, %v1124
      %1210 = vst.msk [vmem:[#allocation3 + $0x60] sm:$0xff] %vm1197, %v1126
      %1211 = vst.msk [vmem:[#allocation3 + $0x68] sm:$0xff] %vm1197, %v1128
      %1212 = vst.msk [vmem:[#allocation3 + $0x70] sm:$0xff] %vm1197, %v1130
      %1213 = vst.msk [vmem:[#allocation3 + $0x78] sm:$0xff] %vm1197, %v1132
      %1214 = vst.msk [vmem:[#allocation3 + $0x80] sm:$0xff] %vm1197, %v1134
      %1215 = vst.msk [vmem:[#allocation3 + $0x88] sm:$0xff] %vm1197, %v1136
      %1216 = vst.msk [vmem:[#allocation3 + $0x90] sm:$0xff] %vm1197, %v1138
      %1217 = vst.msk [vmem:[#allocation3 + $0x98] sm:$0xff] %vm1197, %v1140
      %1218 = vst.msk [vmem:[#allocation3 + $0xa0] sm:$0xff] %vm1197, %v1142
      %1219 = vst.msk [vmem:[#allocation3 + $0xa8] sm:$0xff] %vm1197, %v1144
      %1220 = vst.msk [vmem:[#allocation3 + $0xb0] sm:$0xff] %vm1197, %v1146
      %1221 = vst.msk [vmem:[#allocation3 + $0xb8] sm:$0xff] %vm1197, %v1148
      %1222 = vst.msk [vmem:[#allocation3 + $0xc0] sm:$0xff] %vm1197, %v1150
      %1223 = vst.msk [vmem:[#allocation3 + $0xc8] sm:$0xff] %vm1197, %v1152
      %1224 = vst.msk [vmem:[#allocation3 + $0xd0] sm:$0xff] %vm1197, %v1154
      %1225 = vst.msk [vmem:[#allocation3 + $0xd8] sm:$0xff] %vm1197, %v1156
      %1226 = vst.msk [vmem:[#allocation3 + $0xe0] sm:$0xff] %vm1197, %v1158
      %1227 = vst.msk [vmem:[#allocation3 + $0xe8] sm:$0xff] %vm1197, %v1160
      %1228 = vst.msk [vmem:[#allocation3 + $0xf0] sm:$0xff] %vm1197, %v1162
      %1229 = vst.msk [vmem:[#allocation3 + $0xf8] sm:$0xff] %vm1197, %v1164
      %v1230 = vld [vmem:[%s538 + $0x1] sm:$0xff]
      %v1231 = vld [vmem:[%s538 + $0x9] sm:$0xff]
      %v1232 = vld [vmem:[%s538 + $0x19] sm:$0xff]
      %v1233 = vld [vmem:[%s538 + $0x21] sm:$0xff]
      %v1234 = vld [vmem:[%s538 + $0x31] sm:$0xff]
      %v1235 = vld [vmem:[%s538 + $0x39] sm:$0xff]
      %v1236 = vld [vmem:[%s538 + $0x49] sm:$0xff]
      %v1237 = vld [vmem:[%s538 + $0x51] sm:$0xff]
      %v1238 = vld [vmem:[%s538 + $0x61] sm:$0xff]
      %v1239 = vld [vmem:[%s538 + $0x69] sm:$0xff]
      %v1240 = vld [vmem:[%s538 + $0x79] sm:$0xff]
      %v1241 = vld [vmem:[%s538 + $0x81] sm:$0xff]
      %v1242 = vld [vmem:[%s538 + $0x91] sm:$0xff]
      %v1243 = vld [vmem:[%s538 + $0x99] sm:$0xff]
      %v1244 = vld [vmem:[%s538 + $0xa9] sm:$0xff]
      %v1245 = vld [vmem:[%s538 + $0xb1] sm:$0xff]
      %v1246 = vld [vmem:[%s538 + $0xc1] sm:$0xff]
      %v1247 = vld [vmem:[%s538 + $0xc9] sm:$0xff]
      %v1248 = vld [vmem:[%s538 + $0xd9] sm:$0xff]
      %v1249 = vld [vmem:[%s538 + $0xe1] sm:$0xff]
      %v1250 = vld [vmem:[%s538 + $0xf1] sm:$0xff]
      %v1251 = vld [vmem:[%s538 + $0xf9] sm:$0xff]
      %v1252 = vld [vmem:[%s538 + $0x109] sm:$0xff]
      %v1253 = vld [vmem:[%s538 + $0x111] sm:$0xff]
      %v1254 = vld [vmem:[%s538 + $0x121] sm:$0xff]
      %v1255 = vld [vmem:[%s538 + $0x129] sm:$0xff]
      %v1256 = vld [vmem:[%s538 + $0x139] sm:$0xff]
      %v1257 = vld [vmem:[%s538 + $0x141] sm:$0xff]
      %v1258 = vld [vmem:[%s538 + $0x151] sm:$0xff]
      %v1259 = vld [vmem:[%s538 + $0x159] sm:$0xff]
      %v1260 = vld [vmem:[%s538 + $0x169] sm:$0xff]
      %v1261 = vld [vmem:[%s538 + $0x171] sm:$0xff]
      %1294 = vrot.lane.b32.xlu0 %v1230, 32
      %v1295 = vpop.permute.xlu0 %1294
      %1296 = vrot.lane.b32.xlu0 %v1231, 32
      %v1297 = vpop.permute.xlu0 %1296
      %1298 = vrot.lane.b32.xlu0 %v1232, 32
      %v1299 = vpop.permute.xlu0 %1298
      %1300 = vrot.lane.b32.xlu0 %v1233, 32
      %v1301 = vpop.permute.xlu0 %1300
      %1302 = vrot.lane.b32.xlu0 %v1234, 32
      %v1303 = vpop.permute.xlu0 %1302
      %1304 = vrot.lane.b32.xlu0 %v1235, 32
      %v1305 = vpop.permute.xlu0 %1304
      %1306 = vrot.lane.b32.xlu0 %v1236, 32
      %v1307 = vpop.permute.xlu0 %1306
      %1308 = vrot.lane.b32.xlu0 %v1237, 32
      %v1309 = vpop.permute.xlu0 %1308
      %1310 = vrot.lane.b32.xlu0 %v1238, 32
      %v1311 = vpop.permute.xlu0 %1310
      %1312 = vrot.lane.b32.xlu0 %v1239, 32
      %v1313 = vpop.permute.xlu0 %1312
      %1314 = vrot.lane.b32.xlu0 %v1240, 32
      %v1315 = vpop.permute.xlu0 %1314
      %1316 = vrot.lane.b32.xlu0 %v1241, 32
      %v1317 = vpop.permute.xlu0 %1316
      %1318 = vrot.lane.b32.xlu0 %v1242, 32
      %v1319 = vpop.permute.xlu0 %1318
      %1320 = vrot.lane.b32.xlu0 %v1243, 32
      %v1321 = vpop.permute.xlu0 %1320
      %1322 = vrot.lane.b32.xlu0 %v1244, 32
      %v1323 = vpop.permute.xlu0 %1322
      %1324 = vrot.lane.b32.xlu0 %v1245, 32
      %v1325 = vpop.permute.xlu0 %1324
      %1326 = vrot.lane.b32.xlu0 %v1246, 32
      %v1327 = vpop.permute.xlu0 %1326
      %1328 = vrot.lane.b32.xlu0 %v1247, 32
      %v1329 = vpop.permute.xlu0 %1328
      %1330 = vrot.lane.b32.xlu0 %v1248, 32
      %v1331 = vpop.permute.xlu0 %1330
      %1332 = vrot.lane.b32.xlu0 %v1249, 32
      %v1333 = vpop.permute.xlu0 %1332
      %1334 = vrot.lane.b32.xlu0 %v1250, 32
      %v1335 = vpop.permute.xlu0 %1334
      %1336 = vrot.lane.b32.xlu0 %v1251, 32
      %v1337 = vpop.permute.xlu0 %1336
      %1338 = vrot.lane.b32.xlu0 %v1252, 32
      %v1339 = vpop.permute.xlu0 %1338
      %1340 = vrot.lane.b32.xlu0 %v1253, 32
      %v1341 = vpop.permute.xlu0 %1340
      %1342 = vrot.lane.b32.xlu0 %v1254, 32
      %v1343 = vpop.permute.xlu0 %1342
      %1344 = vrot.lane.b32.xlu0 %v1255, 32
      %v1345 = vpop.permute.xlu0 %1344
      %1346 = vrot.lane.b32.xlu0 %v1256, 32
      %v1347 = vpop.permute.xlu0 %1346
      %1348 = vrot.lane.b32.xlu0 %v1257, 32
      %v1349 = vpop.permute.xlu0 %1348
      %1350 = vrot.lane.b32.xlu0 %v1258, 32
      %v1351 = vpop.permute.xlu0 %1350
      %1352 = vrot.lane.b32.xlu0 %v1259, 32
      %v1353 = vpop.permute.xlu0 %1352
      %1354 = vrot.lane.b32.xlu0 %v1260, 32
      %v1355 = vpop.permute.xlu0 %1354
      %1356 = vrot.lane.b32.xlu0 %v1261, 32
      %v1357 = vpop.permute.xlu0 %1356
      %vm1390 = vcmask 326912
      %1391 = vst.msk [vmem:[#allocation3] sm:$0xff] %vm1390, %v1295
      %1392 = vst.msk [vmem:[#allocation3 + $0x8] sm:$0xff] %vm1390, %v1297
      %1393 = vst.msk [vmem:[#allocation3 + $0x10] sm:$0xff] %vm1390, %v1299
      %1394 = vst.msk [vmem:[#allocation3 + $0x18] sm:$0xff] %vm1390, %v1301
      %1395 = vst.msk [vmem:[#allocation3 + $0x20] sm:$0xff] %vm1390, %v1303
      %1396 = vst.msk [vmem:[#allocation3 + $0x28] sm:$0xff] %vm1390, %v1305
      %1397 = vst.msk [vmem:[#allocation3 + $0x30] sm:$0xff] %vm1390, %v1307
      %1398 = vst.msk [vmem:[#allocation3 + $0x38] sm:$0xff] %vm1390, %v1309
      %1399 = vst.msk [vmem:[#allocation3 + $0x40] sm:$0xff] %vm1390, %v1311
      %1400 = vst.msk [vmem:[#allocation3 + $0x48] sm:$0xff] %vm1390, %v1313
      %1401 = vst.msk [vmem:[#allocation3 + $0x50] sm:$0xff] %vm1390, %v1315
      %1402 = vst.msk [vmem:[#allocation3 + $0x58] sm:$0xff] %vm1390, %v1317
      %1403 = vst.msk [vmem:[#allocation3 + $0x60] sm:$0xff] %vm1390, %v1319
      %1404 = vst.msk [vmem:[#allocation3 + $0x68] sm:$0xff] %vm1390, %v1321
      %1405 = vst.msk [vmem:[#allocation3 + $0x70] sm:$0xff] %vm1390, %v1323
      %1406 = vst.msk [vmem:[#allocation3 + $0x78] sm:$0xff] %vm1390, %v1325
      %1407 = vst.msk [vmem:[#allocation3 + $0x80] sm:$0xff] %vm1390, %v1327
      %1408 = vst.msk [vmem:[#allocation3 + $0x88] sm:$0xff] %vm1390, %v1329
      %1409 = vst.msk [vmem:[#allocation3 + $0x90] sm:$0xff] %vm1390, %v1331
      %1410 = vst.msk [vmem:[#allocation3 + $0x98] sm:$0xff] %vm1390, %v1333
      %1411 = vst.msk [vmem:[#allocation3 + $0xa0] sm:$0xff] %vm1390, %v1335
      %1412 = vst.msk [vmem:[#allocation3 + $0xa8] sm:$0xff] %vm1390, %v1337
      %1413 = vst.msk [vmem:[#allocation3 + $0xb0] sm:$0xff] %vm1390, %v1339
      %1414 = vst.msk [vmem:[#allocation3 + $0xb8] sm:$0xff] %vm1390, %v1341
      %1415 = vst.msk [vmem:[#allocation3 + $0xc0] sm:$0xff] %vm1390, %v1343
      %1416 = vst.msk [vmem:[#allocation3 + $0xc8] sm:$0xff] %vm1390, %v1345
      %1417 = vst.msk [vmem:[#allocation3 + $0xd0] sm:$0xff] %vm1390, %v1347
      %1418 = vst.msk [vmem:[#allocation3 + $0xd8] sm:$0xff] %vm1390, %v1349
      %1419 = vst.msk [vmem:[#allocation3 + $0xe0] sm:$0xff] %vm1390, %v1351
      %1420 = vst.msk [vmem:[#allocation3 + $0xe8] sm:$0xff] %vm1390, %v1353
      %1421 = vst.msk [vmem:[#allocation3 + $0xf0] sm:$0xff] %vm1390, %v1355
      %1422 = vst.msk [vmem:[#allocation3 + $0xf8] sm:$0xff] %vm1390, %v1357
      %v1423 = vld [vmem:[%s538 + $0x2] sm:$0xff]
      %v1424 = vld [vmem:[%s538 + $0xa] sm:$0xff]
      %v1425 = vld [vmem:[%s538 + $0x1a] sm:$0xff]
      %v1426 = vld [vmem:[%s538 + $0x22] sm:$0xff]
      %v1427 = vld [vmem:[%s538 + $0x32] sm:$0xff]
      %v1428 = vld [vmem:[%s538 + $0x3a] sm:$0xff]
      %v1429 = vld [vmem:[%s538 + $0x4a] sm:$0xff]
      %v1430 = vld [vmem:[%s538 + $0x52] sm:$0xff]
      %v1431 = vld [vmem:[%s538 + $0x62] sm:$0xff]
      %v1432 = vld [vmem:[%s538 + $0x6a] sm:$0xff]
      %v1433 = vld [vmem:[%s538 + $0x7a] sm:$0xff]
      %v1434 = vld [vmem:[%s538 + $0x82] sm:$0xff]
      %v1435 = vld [vmem:[%s538 + $0x92] sm:$0xff]
      %v1436 = vld [vmem:[%s538 + $0x9a] sm:$0xff]
      %v1437 = vld [vmem:[%s538 + $0xaa] sm:$0xff]
      %v1438 = vld [vmem:[%s538 + $0xb2] sm:$0xff]
      %v1439 = vld [vmem:[%s538 + $0xc2] sm:$0xff]
      %v1440 = vld [vmem:[%s538 + $0xca] sm:$0xff]
      %v1441 = vld [vmem:[%s538 + $0xda] sm:$0xff]
      %v1442 = vld [vmem:[%s538 + $0xe2] sm:$0xff]
      %v1443 = vld [vmem:[%s538 + $0xf2] sm:$0xff]
      %v1444 = vld [vmem:[%s538 + $0xfa] sm:$0xff]
      %v1445 = vld [vmem:[%s538 + $0x10a] sm:$0xff]
      %v1446 = vld [vmem:[%s538 + $0x112] sm:$0xff]
      %v1447 = vld [vmem:[%s538 + $0x122] sm:$0xff]
      %v1448 = vld [vmem:[%s538 + $0x12a] sm:$0xff]
      %v1449 = vld [vmem:[%s538 + $0x13a] sm:$0xff]
      %v1450 = vld [vmem:[%s538 + $0x142] sm:$0xff]
      %v1451 = vld [vmem:[%s538 + $0x152] sm:$0xff]
      %v1452 = vld [vmem:[%s538 + $0x15a] sm:$0xff]
      %v1453 = vld [vmem:[%s538 + $0x16a] sm:$0xff]
      %v1454 = vld [vmem:[%s538 + $0x172] sm:$0xff]
      %1487 = vrot.lane.b32.xlu0 %v1423, 40
      %v1488 = vpop.permute.xlu0 %1487
      %1489 = vrot.lane.b32.xlu0 %v1424, 40
      %v1490 = vpop.permute.xlu0 %1489
      %1491 = vrot.lane.b32.xlu0 %v1425, 40
      %v1492 = vpop.permute.xlu0 %1491
      %1493 = vrot.lane.b32.xlu0 %v1426, 40
      %v1494 = vpop.permute.xlu0 %1493
      %1495 = vrot.lane.b32.xlu0 %v1427, 40
      %v1496 = vpop.permute.xlu0 %1495
      %1497 = vrot.lane.b32.xlu0 %v1428, 40
      %v1498 = vpop.permute.xlu0 %1497
      %1499 = vrot.lane.b32.xlu0 %v1429, 40
      %v1500 = vpop.permute.xlu0 %1499
      %1501 = vrot.lane.b32.xlu0 %v1430, 40
      %v1502 = vpop.permute.xlu0 %1501
      %1503 = vrot.lane.b32.xlu0 %v1431, 40
      %v1504 = vpop.permute.xlu0 %1503
      %1505 = vrot.lane.b32.xlu0 %v1432, 40
      %v1506 = vpop.permute.xlu0 %1505
      %1507 = vrot.lane.b32.xlu0 %v1433, 40
      %v1508 = vpop.permute.xlu0 %1507
      %1509 = vrot.lane.b32.xlu0 %v1434, 40
      %v1510 = vpop.permute.xlu0 %1509
      %1511 = vrot.lane.b32.xlu0 %v1435, 40
      %v1512 = vpop.permute.xlu0 %1511
      %1513 = vrot.lane.b32.xlu0 %v1436, 40
      %v1514 = vpop.permute.xlu0 %1513
      %1515 = vrot.lane.b32.xlu0 %v1437, 40
      %v1516 = vpop.permute.xlu0 %1515
      %1517 = vrot.lane.b32.xlu0 %v1438, 40
      %v1518 = vpop.permute.xlu0 %1517
      %1519 = vrot.lane.b32.xlu0 %v1439, 40
      %v1520 = vpop.permute.xlu0 %1519
      %1521 = vrot.lane.b32.xlu0 %v1440, 40
      %v1522 = vpop.permute.xlu0 %1521
      %1523 = vrot.lane.b32.xlu0 %v1441, 40
      %v1524 = vpop.permute.xlu0 %1523
      %1525 = vrot.lane.b32.xlu0 %v1442, 40
      %v1526 = vpop.permute.xlu0 %1525
      %1527 = vrot.lane.b32.xlu0 %v1443, 40
      %v1528 = vpop.permute.xlu0 %1527
      %1529 = vrot.lane.b32.xlu0 %v1444, 40
      %v1530 = vpop.permute.xlu0 %1529
      %1531 = vrot.lane.b32.xlu0 %v1445, 40
      %v1532 = vpop.permute.xlu0 %1531
      %1533 = vrot.lane.b32.xlu0 %v1446, 40
      %v1534 = vpop.permute.xlu0 %1533
      %1535 = vrot.lane.b32.xlu0 %v1447, 40
      %v1536 = vpop.permute.xlu0 %1535
      %1537 = vrot.lane.b32.xlu0 %v1448, 40
      %v1538 = vpop.permute.xlu0 %1537
      %1539 = vrot.lane.b32.xlu0 %v1449, 40
      %v1540 = vpop.permute.xlu0 %1539
      %1541 = vrot.lane.b32.xlu0 %v1450, 40
      %v1542 = vpop.permute.xlu0 %1541
      %1543 = vrot.lane.b32.xlu0 %v1451, 40
      %v1544 = vpop.permute.xlu0 %1543
      %1545 = vrot.lane.b32.xlu0 %v1452, 40
      %v1546 = vpop.permute.xlu0 %1545
      %1547 = vrot.lane.b32.xlu0 %v1453, 40
      %v1548 = vpop.permute.xlu0 %1547
      %1549 = vrot.lane.b32.xlu0 %v1454, 40
      %v1550 = vpop.permute.xlu0 %1549
      %vm1583 = vcmask 392512
      %1584 = vst.msk [vmem:[#allocation3] sm:$0xff] %vm1583, %v1488
      %1585 = vst.msk [vmem:[#allocation3 + $0x8] sm:$0xff] %vm1583, %v1490
      %1586 = vst.msk [vmem:[#allocation3 + $0x10] sm:$0xff] %vm1583, %v1492
      %1587 = vst.msk [vmem:[#allocation3 + $0x18] sm:$0xff] %vm1583, %v1494
      %1588 = vst.msk [vmem:[#allocation3 + $0x20] sm:$0xff] %vm1583, %v1496
      %1589 = vst.msk [vmem:[#allocation3 + $0x28] sm:$0xff] %vm1583, %v1498
      %1590 = vst.msk [vmem:[#allocation3 + $0x30] sm:$0xff] %vm1583, %v1500
      %1591 = vst.msk [vmem:[#allocation3 + $0x38] sm:$0xff] %vm1583, %v1502
      %1592 = vst.msk [vmem:[#allocation3 + $0x40] sm:$0xff] %vm1583, %v1504
      %1593 = vst.msk [vmem:[#allocation3 + $0x48] sm:$0xff] %vm1583, %v1506
      %1594 = vst.msk [vmem:[#allocation3 + $0x50] sm:$0xff] %vm1583, %v1508
      %1595 = vst.msk [vmem:[#allocation3 + $0x58] sm:$0xff] %vm1583, %v1510
      %1596 = vst.msk [vmem:[#allocation3 + $0x60] sm:$0xff] %vm1583, %v1512
      %1597 = vst.msk [vmem:[#allocation3 + $0x68] sm:$0xff] %vm1583, %v1514
      %1598 = vst.msk [vmem:[#allocation3 + $0x70] sm:$0xff] %vm1583, %v1516
      %1599 = vst.msk [vmem:[#allocation3 + $0x78] sm:$0xff] %vm1583, %v1518
      %1600 = vst.msk [vmem:[#allocation3 + $0x80] sm:$0xff] %vm1583, %v1520
      %1601 = vst.msk [vmem:[#allocation3 + $0x88] sm:$0xff] %vm1583, %v1522
      %1602 = vst.msk [vmem:[#allocation3 + $0x90] sm:$0xff] %vm1583, %v1524
      %1603 = vst.msk [vmem:[#allocation3 + $0x98] sm:$0xff] %vm1583, %v1526
      %1604 = vst.msk [vmem:[#allocation3 + $0xa0] sm:$0xff] %vm1583, %v1528
      %1605 = vst.msk [vmem:[#allocation3 + $0xa8] sm:$0xff] %vm1583, %v1530
      %1606 = vst.msk [vmem:[#allocation3 + $0xb0] sm:$0xff] %vm1583, %v1532
      %1607 = vst.msk [vmem:[#allocation3 + $0xb8] sm:$0xff] %vm1583, %v1534
      %1608 = vst.msk [vmem:[#allocation3 + $0xc0] sm:$0xff] %vm1583, %v1536
      %1609 = vst.msk [vmem:[#allocation3 + $0xc8] sm:$0xff] %vm1583, %v1538
      %1610 = vst.msk [vmem:[#allocation3 + $0xd0] sm:$0xff] %vm1583, %v1540
      %1611 = vst.msk [vmem:[#allocation3 + $0xd8] sm:$0xff] %vm1583, %v1542
      %1612 = vst.msk [vmem:[#allocation3 + $0xe0] sm:$0xff] %vm1583, %v1544
      %1613 = vst.msk [vmem:[#allocation3 + $0xe8] sm:$0xff] %vm1583, %v1546
      %1614 = vst.msk [vmem:[#allocation3 + $0xf0] sm:$0xff] %vm1583, %v1548
      %1615 = vst.msk [vmem:[#allocation3 + $0xf8] sm:$0xff] %vm1583, %v1550
      %s1616 = scalar_lea.vmem [#allocation2], 48
      %v1617 = vld [vmem:[%s1616] sm:$0xff]
      %v1618 = vld [vmem:[%s1616 + $0x8] sm:$0xff]
      %v1619 = vld [vmem:[%s1616 + $0x18] sm:$0xff]
      %v1620 = vld [vmem:[%s1616 + $0x20] sm:$0xff]
      %v1621 = vld [vmem:[%s1616 + $0x30] sm:$0xff]
      %v1622 = vld [vmem:[%s1616 + $0x38] sm:$0xff]
      %v1623 = vld [vmem:[%s1616 + $0x48] sm:$0xff]
      %v1624 = vld [vmem:[%s1616 + $0x50] sm:$0xff]
      %v1625 = vld [vmem:[%s1616 + $0x60] sm:$0xff]
      %v1626 = vld [vmem:[%s1616 + $0x68] sm:$0xff]
      %v1627 = vld [vmem:[%s1616 + $0x78] sm:$0xff]
      %v1628 = vld [vmem:[%s1616 + $0x80] sm:$0xff]
      %v1629 = vld [vmem:[%s1616 + $0x90] sm:$0xff]
      %v1630 = vld [vmem:[%s1616 + $0x98] sm:$0xff]
      %v1631 = vld [vmem:[%s1616 + $0xa8] sm:$0xff]
      %v1632 = vld [vmem:[%s1616 + $0xb0] sm:$0xff]
      %v1633 = vld [vmem:[%s1616 + $0xc0] sm:$0xff]
      %v1634 = vld [vmem:[%s1616 + $0xc8] sm:$0xff]
      %v1635 = vld [vmem:[%s1616 + $0xd8] sm:$0xff]
      %v1636 = vld [vmem:[%s1616 + $0xe0] sm:$0xff]
      %v1637 = vld [vmem:[%s1616 + $0xf0] sm:$0xff]
      %v1638 = vld [vmem:[%s1616 + $0xf8] sm:$0xff]
      %v1639 = vld [vmem:[%s1616 + $0x108] sm:$0xff]
      %v1640 = vld [vmem:[%s1616 + $0x110] sm:$0xff]
      %v1641 = vld [vmem:[%s1616 + $0x120] sm:$0xff]
      %v1642 = vld [vmem:[%s1616 + $0x128] sm:$0xff]
      %v1643 = vld [vmem:[%s1616 + $0x138] sm:$0xff]
      %v1644 = vld [vmem:[%s1616 + $0x140] sm:$0xff]
      %v1645 = vld [vmem:[%s1616 + $0x150] sm:$0xff]
      %v1646 = vld [vmem:[%s1616 + $0x158] sm:$0xff]
      %v1647 = vld [vmem:[%s1616 + $0x168] sm:$0xff]
      %v1648 = vld [vmem:[%s1616 + $0x170] sm:$0xff]
      %1681 = vrot.lane.b32.xlu0 %v1617, 48
      %v1682 = vpop.permute.xlu0 %1681
      %1683 = vrot.lane.b32.xlu0 %v1618, 48
      %v1684 = vpop.permute.xlu0 %1683
      %1685 = vrot.lane.b32.xlu0 %v1619, 48
      %v1686 = vpop.permute.xlu0 %1685
      %1687 = vrot.lane.b32.xlu0 %v1620, 48
      %v1688 = vpop.permute.xlu0 %1687
      %1689 = vrot.lane.b32.xlu0 %v1621, 48
      %v1690 = vpop.permute.xlu0 %1689
      %1691 = vrot.lane.b32.xlu0 %v1622, 48
      %v1692 = vpop.permute.xlu0 %1691
      %1693 = vrot.lane.b32.xlu0 %v1623, 48
      %v1694 = vpop.permute.xlu0 %1693
      %1695 = vrot.lane.b32.xlu0 %v1624, 48
      %v1696 = vpop.permute.xlu0 %1695
      %1697 = vrot.lane.b32.xlu0 %v1625, 48
      %v1698 = vpop.permute.xlu0 %1697
      %1699 = vrot.lane.b32.xlu0 %v1626, 48
      %v1700 = vpop.permute.xlu0 %1699
      %1701 = vrot.lane.b32.xlu0 %v1627, 48
      %v1702 = vpop.permute.xlu0 %1701
      %1703 = vrot.lane.b32.xlu0 %v1628, 48
      %v1704 = vpop.permute.xlu0 %1703
      %1705 = vrot.lane.b32.xlu0 %v1629, 48
      %v1706 = vpop.permute.xlu0 %1705
      %1707 = vrot.lane.b32.xlu0 %v1630, 48
      %v1708 = vpop.permute.xlu0 %1707
      %1709 = vrot.lane.b32.xlu0 %v1631, 48
      %v1710 = vpop.permute.xlu0 %1709
      %1711 = vrot.lane.b32.xlu0 %v1632, 48
      %v1712 = vpop.permute.xlu0 %1711
      %1713 = vrot.lane.b32.xlu0 %v1633, 48
      %v1714 = vpop.permute.xlu0 %1713
      %1715 = vrot.lane.b32.xlu0 %v1634, 48
      %v1716 = vpop.permute.xlu0 %1715
      %1717 = vrot.lane.b32.xlu0 %v1635, 48
      %v1718 = vpop.permute.xlu0 %1717
      %1719 = vrot.lane.b32.xlu0 %v1636, 48
      %v1720 = vpop.permute.xlu0 %1719
      %1721 = vrot.lane.b32.xlu0 %v1637, 48
      %v1722 = vpop.permute.xlu0 %1721
      %1723 = vrot.lane.b32.xlu0 %v1638, 48
      %v1724 = vpop.permute.xlu0 %1723
      %1725 = vrot.lane.b32.xlu0 %v1639, 48
      %v1726 = vpop.permute.xlu0 %1725
      %1727 = vrot.lane.b32.xlu0 %v1640, 48
      %v1728 = vpop.permute.xlu0 %1727
      %1729 = vrot.lane.b32.xlu0 %v1641, 48
      %v1730 = vpop.permute.xlu0 %1729
      %1731 = vrot.lane.b32.xlu0 %v1642, 48
      %v1732 = vpop.permute.xlu0 %1731
      %1733 = vrot.lane.b32.xlu0 %v1643, 48
      %v1734 = vpop.permute.xlu0 %1733
      %1735 = vrot.lane.b32.xlu0 %v1644, 48
      %v1736 = vpop.permute.xlu0 %1735
      %1737 = vrot.lane.b32.xlu0 %v1645, 48
      %v1738 = vpop.permute.xlu0 %1737
      %1739 = vrot.lane.b32.xlu0 %v1646, 48
      %v1740 = vpop.permute.xlu0 %1739
      %1741 = vrot.lane.b32.xlu0 %v1647, 48
      %v1742 = vpop.permute.xlu0 %1741
      %1743 = vrot.lane.b32.xlu0 %v1648, 48
      %v1744 = vpop.permute.xlu0 %1743
      %vm1777 = vcmask 458112
      %1778 = vst.msk [vmem:[#allocation3] sm:$0xff] %vm1777, %v1682
      %1779 = vst.msk [vmem:[#allocation3 + $0x8] sm:$0xff] %vm1777, %v1684
      %1780 = vst.msk [vmem:[#allocation3 + $0x10] sm:$0xff] %vm1777, %v1686
      %1781 = vst.msk [vmem:[#allocation3 + $0x18] sm:$0xff] %vm1777, %v1688
      %1782 = vst.msk [vmem:[#allocation3 + $0x20] sm:$0xff] %vm1777, %v1690
      %1783 = vst.msk [vmem:[#allocation3 + $0x28] sm:$0xff] %vm1777, %v1692
      %1784 = vst.msk [vmem:[#allocation3 + $0x30] sm:$0xff] %vm1777, %v1694
      %1785 = vst.msk [vmem:[#allocation3 + $0x38] sm:$0xff] %vm1777, %v1696
      %1786 = vst.msk [vmem:[#allocation3 + $0x40] sm:$0xff] %vm1777, %v1698
      %1787 = vst.msk [vmem:[#allocation3 + $0x48] sm:$0xff] %vm1777, %v1700
      %1788 = vst.msk [vmem:[#allocation3 + $0x50] sm:$0xff] %vm1777, %v1702
      %1789 = vst.msk [vmem:[#allocation3 + $0x58] sm:$0xff] %vm1777, %v1704
      %1790 = vst.msk [vmem:[#allocation3 + $0x60] sm:$0xff] %vm1777, %v1706
      %1791 = vst.msk [vmem:[#allocation3 + $0x68] sm:$0xff] %vm1777, %v1708
      %1792 = vst.msk [vmem:[#allocation3 + $0x70] sm:$0xff] %vm1777, %v1710
      %1793 = vst.msk [vmem:[#allocation3 + $0x78] sm:$0xff] %vm1777, %v1712
      %1794 = vst.msk [vmem:[#allocation3 + $0x80] sm:$0xff] %vm1777, %v1714
      %1795 = vst.msk [vmem:[#allocation3 + $0x88] sm:$0xff] %vm1777, %v1716
      %1796 = vst.msk [vmem:[#allocation3 + $0x90] sm:$0xff] %vm1777, %v1718
      %1797 = vst.msk [vmem:[#allocation3 + $0x98] sm:$0xff] %vm1777, %v1720
      %1798 = vst.msk [vmem:[#allocation3 + $0xa0] sm:$0xff] %vm1777, %v1722
      %1799 = vst.msk [vmem:[#allocation3 + $0xa8] sm:$0xff] %vm1777, %v1724
      %1800 = vst.msk [vmem:[#allocation3 + $0xb0] sm:$0xff] %vm1777, %v1726
      %1801 = vst.msk [vmem:[#allocation3 + $0xb8] sm:$0xff] %vm1777, %v1728
      %1802 = vst.msk [vmem:[#allocation3 + $0xc0] sm:$0xff] %vm1777, %v1730
      %1803 = vst.msk [vmem:[#allocation3 + $0xc8] sm:$0xff] %vm1777, %v1732
      %1804 = vst.msk [vmem:[#allocation3 + $0xd0] sm:$0xff] %vm1777, %v1734
      %1805 = vst.msk [vmem:[#allocation3 + $0xd8] sm:$0xff] %vm1777, %v1736
      %1806 = vst.msk [vmem:[#allocation3 + $0xe0] sm:$0xff] %vm1777, %v1738
      %1807 = vst.msk [vmem:[#allocation3 + $0xe8] sm:$0xff] %vm1777, %v1740
      %1808 = vst.msk [vmem:[#allocation3 + $0xf0] sm:$0xff] %vm1777, %v1742
      %1809 = vst.msk [vmem:[#allocation3 + $0xf8] sm:$0xff] %vm1777, %v1744
      %v1810 = vld [vmem:[%s1616 + $0x1] sm:$0xff]
      %v1811 = vld [vmem:[%s1616 + $0x9] sm:$0xff]
      %v1812 = vld [vmem:[%s1616 + $0x19] sm:$0xff]
      %v1813 = vld [vmem:[%s1616 + $0x21] sm:$0xff]
      %v1814 = vld [vmem:[%s1616 + $0x31] sm:$0xff]
      %v1815 = vld [vmem:[%s1616 + $0x39] sm:$0xff]
      %v1816 = vld [vmem:[%s1616 + $0x49] sm:$0xff]
      %v1817 = vld [vmem:[%s1616 + $0x51] sm:$0xff]
      %v1818 = vld [vmem:[%s1616 + $0x61] sm:$0xff]
      %v1819 = vld [vmem:[%s1616 + $0x69] sm:$0xff]
      %v1820 = vld [vmem:[%s1616 + $0x79] sm:$0xff]
      %v1821 = vld [vmem:[%s1616 + $0x81] sm:$0xff]
      %v1822 = vld [vmem:[%s1616 + $0x91] sm:$0xff]
      %v1823 = vld [vmem:[%s1616 + $0x99] sm:$0xff]
      %v1824 = vld [vmem:[%s1616 + $0xa9] sm:$0xff]
      %v1825 = vld [vmem:[%s1616 + $0xb1] sm:$0xff]
      %v1826 = vld [vmem:[%s1616 + $0xc1] sm:$0xff]
      %v1827 = vld [vmem:[%s1616 + $0xc9] sm:$0xff]
      %v1828 = vld [vmem:[%s1616 + $0xd9] sm:$0xff]
      %v1829 = vld [vmem:[%s1616 + $0xe1] sm:$0xff]
      %v1830 = vld [vmem:[%s1616 + $0xf1] sm:$0xff]
      %v1831 = vld [vmem:[%s1616 + $0xf9] sm:$0xff]
      %v1832 = vld [vmem:[%s1616 + $0x109] sm:$0xff]
      %v1833 = vld [vmem:[%s1616 + $0x111] sm:$0xff]
      %v1834 = vld [vmem:[%s1616 + $0x121] sm:$0xff]
      %v1835 = vld [vmem:[%s1616 + $0x129] sm:$0xff]
      %v1836 = vld [vmem:[%s1616 + $0x139] sm:$0xff]
      %v1837 = vld [vmem:[%s1616 + $0x141] sm:$0xff]
      %v1838 = vld [vmem:[%s1616 + $0x151] sm:$0xff]
      %v1839 = vld [vmem:[%s1616 + $0x159] sm:$0xff]
      %v1840 = vld [vmem:[%s1616 + $0x169] sm:$0xff]
      %v1841 = vld [vmem:[%s1616 + $0x171] sm:$0xff]
      %1874 = vrot.lane.b32.xlu0 %v1810, 56
      %v1875 = vpop.permute.xlu0 %1874
      %1876 = vrot.lane.b32.xlu0 %v1811, 56
      %v1877 = vpop.permute.xlu0 %1876
      %1878 = vrot.lane.b32.xlu0 %v1812, 56
      %v1879 = vpop.permute.xlu0 %1878
      %1880 = vrot.lane.b32.xlu0 %v1813, 56
      %v1881 = vpop.permute.xlu0 %1880
      %1882 = vrot.lane.b32.xlu0 %v1814, 56
      %v1883 = vpop.permute.xlu0 %1882
      %1884 = vrot.lane.b32.xlu0 %v1815, 56
      %v1885 = vpop.permute.xlu0 %1884
      %1886 = vrot.lane.b32.xlu0 %v1816, 56
      %v1887 = vpop.permute.xlu0 %1886
      %1888 = vrot.lane.b32.xlu0 %v1817, 56
      %v1889 = vpop.permute.xlu0 %1888
      %1890 = vrot.lane.b32.xlu0 %v1818, 56
      %v1891 = vpop.permute.xlu0 %1890
      %1892 = vrot.lane.b32.xlu0 %v1819, 56
      %v1893 = vpop.permute.xlu0 %1892
      %1894 = vrot.lane.b32.xlu0 %v1820, 56
      %v1895 = vpop.permute.xlu0 %1894
      %1896 = vrot.lane.b32.xlu0 %v1821, 56
      %v1897 = vpop.permute.xlu0 %1896
      %1898 = vrot.lane.b32.xlu0 %v1822, 56
      %v1899 = vpop.permute.xlu0 %1898
      %1900 = vrot.lane.b32.xlu0 %v1823, 56
      %v1901 = vpop.permute.xlu0 %1900
      %1902 = vrot.lane.b32.xlu0 %v1824, 56
      %v1903 = vpop.permute.xlu0 %1902
      %1904 = vrot.lane.b32.xlu0 %v1825, 56
      %v1905 = vpop.permute.xlu0 %1904
      %1906 = vrot.lane.b32.xlu0 %v1826, 56
      %v1907 = vpop.permute.xlu0 %1906
      %1908 = vrot.lane.b32.xlu0 %v1827, 56
      %v1909 = vpop.permute.xlu0 %1908
      %1910 = vrot.lane.b32.xlu0 %v1828, 56
      %v1911 = vpop.permute.xlu0 %1910
      %1912 = vrot.lane.b32.xlu0 %v1829, 56
      %v1913 = vpop.permute.xlu0 %1912
      %1914 = vrot.lane.b32.xlu0 %v1830, 56
      %v1915 = vpop.permute.xlu0 %1914
      %1916 = vrot.lane.b32.xlu0 %v1831, 56
      %v1917 = vpop.permute.xlu0 %1916
      %1918 = vrot.lane.b32.xlu0 %v1832, 56
      %v1919 = vpop.permute.xlu0 %1918
      %1920 = vrot.lane.b32.xlu0 %v1833, 56
      %v1921 = vpop.permute.xlu0 %1920
      %1922 = vrot.lane.b32.xlu0 %v1834, 56
      %v1923 = vpop.permute.xlu0 %1922
      %1924 = vrot.lane.b32.xlu0 %v1835, 56
      %v1925 = vpop.permute.xlu0 %1924
      %1926 = vrot.lane.b32.xlu0 %v1836, 56
      %v1927 = vpop.permute.xlu0 %1926
      %1928 = vrot.lane.b32.xlu0 %v1837, 56
      %v1929 = vpop.permute.xlu0 %1928
      %1930 = vrot.lane.b32.xlu0 %v1838, 56
      %v1931 = vpop.permute.xlu0 %1930
      %1932 = vrot.lane.b32.xlu0 %v1839, 56
      %v1933 = vpop.permute.xlu0 %1932
      %1934 = vrot.lane.b32.xlu0 %v1840, 56
      %v1935 = vpop.permute.xlu0 %1934
      %1936 = vrot.lane.b32.xlu0 %v1841, 56
      %v1937 = vpop.permute.xlu0 %1936
      %vm1970 = vcmask 523712
      %1971 = vst.msk [vmem:[#allocation3] sm:$0xff] %vm1970, %v1875
      %1972 = vst.msk [vmem:[#allocation3 + $0x8] sm:$0xff] %vm1970, %v1877
      %1973 = vst.msk [vmem:[#allocation3 + $0x10] sm:$0xff] %vm1970, %v1879
      %1974 = vst.msk [vmem:[#allocation3 + $0x18] sm:$0xff] %vm1970, %v1881
      %1975 = vst.msk [vmem:[#allocation3 + $0x20] sm:$0xff] %vm1970, %v1883
      %1976 = vst.msk [vmem:[#allocation3 + $0x28] sm:$0xff] %vm1970, %v1885
      %1977 = vst.msk [vmem:[#allocation3 + $0x30] sm:$0xff] %vm1970, %v1887
      %1978 = vst.msk [vmem:[#allocation3 + $0x38] sm:$0xff] %vm1970, %v1889
      %1979 = vst.msk [vmem:[#allocation3 + $0x40] sm:$0xff] %vm1970, %v1891
      %1980 = vst.msk [vmem:[#allocation3 + $0x48] sm:$0xff] %vm1970, %v1893
      %1981 = vst.msk [vmem:[#allocation3 + $0x50] sm:$0xff] %vm1970, %v1895
      %1982 = vst.msk [vmem:[#allocation3 + $0x58] sm:$0xff] %vm1970, %v1897
      %1983 = vst.msk [vmem:[#allocation3 + $0x60] sm:$0xff] %vm1970, %v1899
      %1984 = vst.msk [vmem:[#allocation3 + $0x68] sm:$0xff] %vm1970, %v1901
      %1985 = vst.msk [vmem:[#allocation3 + $0x70] sm:$0xff] %vm1970, %v1903
      %1986 = vst.msk [vmem:[#allocation3 + $0x78] sm:$0xff] %vm1970, %v1905
      %1987 = vst.msk [vmem:[#allocation3 + $0x80] sm:$0xff] %vm1970, %v1907
      %1988 = vst.msk [vmem:[#allocation3 + $0x88] sm:$0xff] %vm1970, %v1909
      %1989 = vst.msk [vmem:[#allocation3 + $0x90] sm:$0xff] %vm1970, %v1911
      %1990 = vst.msk [vmem:[#allocation3 + $0x98] sm:$0xff] %vm1970, %v1913
      %1991 = vst.msk [vmem:[#allocation3 + $0xa0] sm:$0xff] %vm1970, %v1915
      %1992 = vst.msk [vmem:[#allocation3 + $0xa8] sm:$0xff] %vm1970, %v1917
      %1993 = vst.msk [vmem:[#allocation3 + $0xb0] sm:$0xff] %vm1970, %v1919
      %1994 = vst.msk [vmem:[#allocation3 + $0xb8] sm:$0xff] %vm1970, %v1921
      %1995 = vst.msk [vmem:[#allocation3 + $0xc0] sm:$0xff] %vm1970, %v1923
      %1996 = vst.msk [vmem:[#allocation3 + $0xc8] sm:$0xff] %vm1970, %v1925
      %1997 = vst.msk [vmem:[#allocation3 + $0xd0] sm:$0xff] %vm1970, %v1927
      %1998 = vst.msk [vmem:[#allocation3 + $0xd8] sm:$0xff] %vm1970, %v1929
      %1999 = vst.msk [vmem:[#allocation3 + $0xe0] sm:$0xff] %vm1970, %v1931
      %2000 = vst.msk [vmem:[#allocation3 + $0xe8] sm:$0xff] %vm1970, %v1933
      %2001 = vst.msk [vmem:[#allocation3 + $0xf0] sm:$0xff] %vm1970, %v1935
      %2002 = vst.msk [vmem:[#allocation3 + $0xf8] sm:$0xff] %vm1970, %v1937
      %v2003 = vld [vmem:[%s1616 + $0x2] sm:$0xff]
      %v2004 = vld [vmem:[%s1616 + $0xa] sm:$0xff]
      %v2005 = vld [vmem:[%s1616 + $0x1a] sm:$0xff]
      %v2006 = vld [vmem:[%s1616 + $0x22] sm:$0xff]
      %v2007 = vld [vmem:[%s1616 + $0x32] sm:$0xff]
      %v2008 = vld [vmem:[%s1616 + $0x3a] sm:$0xff]
      %v2009 = vld [vmem:[%s1616 + $0x4a] sm:$0xff]
      %v2010 = vld [vmem:[%s1616 + $0x52] sm:$0xff]
      %v2011 = vld [vmem:[%s1616 + $0x62] sm:$0xff]
      %v2012 = vld [vmem:[%s1616 + $0x6a] sm:$0xff]
      %v2013 = vld [vmem:[%s1616 + $0x7a] sm:$0xff]
      %v2014 = vld [vmem:[%s1616 + $0x82] sm:$0xff]
      %v2015 = vld [vmem:[%s1616 + $0x92] sm:$0xff]
      %v2016 = vld [vmem:[%s1616 + $0x9a] sm:$0xff]
      %v2017 = vld [vmem:[%s1616 + $0xaa] sm:$0xff]
      %v2018 = vld [vmem:[%s1616 + $0xb2] sm:$0xff]
      %v2019 = vld [vmem:[%s1616 + $0xc2] sm:$0xff]
      %v2020 = vld [vmem:[%s1616 + $0xca] sm:$0xff]
      %v2021 = vld [vmem:[%s1616 + $0xda] sm:$0xff]
      %v2022 = vld [vmem:[%s1616 + $0xe2] sm:$0xff]
      %v2023 = vld [vmem:[%s1616 + $0xf2] sm:$0xff]
      %v2024 = vld [vmem:[%s1616 + $0xfa] sm:$0xff]
      %v2025 = vld [vmem:[%s1616 + $0x10a] sm:$0xff]
      %v2026 = vld [vmem:[%s1616 + $0x112] sm:$0xff]
      %v2027 = vld [vmem:[%s1616 + $0x122] sm:$0xff]
      %v2028 = vld [vmem:[%s1616 + $0x12a] sm:$0xff]
      %v2029 = vld [vmem:[%s1616 + $0x13a] sm:$0xff]
      %v2030 = vld [vmem:[%s1616 + $0x142] sm:$0xff]
      %v2031 = vld [vmem:[%s1616 + $0x152] sm:$0xff]
      %v2032 = vld [vmem:[%s1616 + $0x15a] sm:$0xff]
      %v2033 = vld [vmem:[%s1616 + $0x16a] sm:$0xff]
      %v2034 = vld [vmem:[%s1616 + $0x172] sm:$0xff]
      %2067 = vrot.lane.b32.xlu0 %v2003, 64
      %v2068 = vpop.permute.xlu0 %2067
      %2069 = vrot.lane.b32.xlu0 %v2004, 64
      %v2070 = vpop.permute.xlu0 %2069
      %2071 = vrot.lane.b32.xlu0 %v2005, 64
      %v2072 = vpop.permute.xlu0 %2071
      %2073 = vrot.lane.b32.xlu0 %v2006, 64
      %v2074 = vpop.permute.xlu0 %2073
      %2075 = vrot.lane.b32.xlu0 %v2007, 64
      %v2076 = vpop.permute.xlu0 %2075
      %2077 = vrot.lane.b32.xlu0 %v2008, 64
      %v2078 = vpop.permute.xlu0 %2077
      %2079 = vrot.lane.b32.xlu0 %v2009, 64
      %v2080 = vpop.permute.xlu0 %2079
      %2081 = vrot.lane.b32.xlu0 %v2010, 64
      %v2082 = vpop.permute.xlu0 %2081
      %2083 = vrot.lane.b32.xlu0 %v2011, 64
      %v2084 = vpop.permute.xlu0 %2083
      %2085 = vrot.lane.b32.xlu0 %v2012, 64
      %v2086 = vpop.permute.xlu0 %2085
      %2087 = vrot.lane.b32.xlu0 %v2013, 64
      %v2088 = vpop.permute.xlu0 %2087
      %2089 = vrot.lane.b32.xlu0 %v2014, 64
      %v2090 = vpop.permute.xlu0 %2089
      %2091 = vrot.lane.b32.xlu0 %v2015, 64
      %v2092 = vpop.permute.xlu0 %2091
      %2093 = vrot.lane.b32.xlu0 %v2016, 64
      %v2094 = vpop.permute.xlu0 %2093
      %2095 = vrot.lane.b32.xlu0 %v2017, 64
      %v2096 = vpop.permute.xlu0 %2095
      %2097 = vrot.lane.b32.xlu0 %v2018, 64
      %v2098 = vpop.permute.xlu0 %2097
      %2099 = vrot.lane.b32.xlu0 %v2019, 64
      %v2100 = vpop.permute.xlu0 %2099
      %2101 = vrot.lane.b32.xlu0 %v2020, 64
      %v2102 = vpop.permute.xlu0 %2101
      %2103 = vrot.lane.b32.xlu0 %v2021, 64
      %v2104 = vpop.permute.xlu0 %2103
      %2105 = vrot.lane.b32.xlu0 %v2022, 64
      %v2106 = vpop.permute.xlu0 %2105
      %2107 = vrot.lane.b32.xlu0 %v2023, 64
      %v2108 = vpop.permute.xlu0 %2107
      %2109 = vrot.lane.b32.xlu0 %v2024, 64
      %v2110 = vpop.permute.xlu0 %2109
      %2111 = vrot.lane.b32.xlu0 %v2025, 64
      %v2112 = vpop.permute.xlu0 %2111
      %2113 = vrot.lane.b32.xlu0 %v2026, 64
      %v2114 = vpop.permute.xlu0 %2113
      %2115 = vrot.lane.b32.xlu0 %v2027, 64
      %v2116 = vpop.permute.xlu0 %2115
      %2117 = vrot.lane.b32.xlu0 %v2028, 64
      %v2118 = vpop.permute.xlu0 %2117
      %2119 = vrot.lane.b32.xlu0 %v2029, 64
      %v2120 = vpop.permute.xlu0 %2119
      %2121 = vrot.lane.b32.xlu0 %v2030, 64
      %v2122 = vpop.permute.xlu0 %2121
      %2123 = vrot.lane.b32.xlu0 %v2031, 64
      %v2124 = vpop.permute.xlu0 %2123
      %2125 = vrot.lane.b32.xlu0 %v2032, 64
      %v2126 = vpop.permute.xlu0 %2125
      %2127 = vrot.lane.b32.xlu0 %v2033, 64
      %v2128 = vpop.permute.xlu0 %2127
      %2129 = vrot.lane.b32.xlu0 %v2034, 64
      %v2130 = vpop.permute.xlu0 %2129
      %vm2163 = vcmask 589312
      %2164 = vst.msk [vmem:[#allocation3] sm:$0xff] %vm2163, %v2068
      %2165 = vst.msk [vmem:[#allocation3 + $0x8] sm:$0xff] %vm2163, %v2070
      %2166 = vst.msk [vmem:[#allocation3 + $0x10] sm:$0xff] %vm2163, %v2072
      %2167 = vst.msk [vmem:[#allocation3 + $0x18] sm:$0xff] %vm2163, %v2074
      %2168 = vst.msk [vmem:[#allocation3 + $0x20] sm:$0xff] %vm2163, %v2076
      %2169 = vst.msk [vmem:[#allocation3 + $0x28] sm:$0xff] %vm2163, %v2078
      %2170 = vst.msk [vmem:[#allocation3 + $0x30] sm:$0xff] %vm2163, %v2080
      %2171 = vst.msk [vmem:[#allocation3 + $0x38] sm:$0xff] %vm2163, %v2082
      %2172 = vst.msk [vmem:[#allocation3 + $0x40] sm:$0xff] %vm2163, %v2084
      %2173 = vst.msk [vmem:[#allocation3 + $0x48] sm:$0xff] %vm2163, %v2086
      %2174 = vst.msk [vmem:[#allocation3 + $0x50] sm:$0xff] %vm2163, %v2088
      %2175 = vst.msk [vmem:[#allocation3 + $0x58] sm:$0xff] %vm2163, %v2090
      %2176 = vst.msk [vmem:[#allocation3 + $0x60] sm:$0xff] %vm2163, %v2092
      %2177 = vst.msk [vmem:[#allocation3 + $0x68] sm:$0xff] %vm2163, %v2094
      %2178 = vst.msk [vmem:[#allocation3 + $0x70] sm:$0xff] %vm2163, %v2096
      %2179 = vst.msk [vmem:[#allocation3 + $0x78] sm:$0xff] %vm2163, %v2098
      %2180 = vst.msk [vmem:[#allocation3 + $0x80] sm:$0xff] %vm2163, %v2100
      %2181 = vst.msk [vmem:[#allocation3 + $0x88] sm:$0xff] %vm2163, %v2102
      %2182 = vst.msk [vmem:[#allocation3 + $0x90] sm:$0xff] %vm2163, %v2104
      %2183 = vst.msk [vmem:[#allocation3 + $0x98] sm:$0xff] %vm2163, %v2106
      %2184 = vst.msk [vmem:[#allocation3 + $0xa0] sm:$0xff] %vm2163, %v2108
      %2185 = vst.msk [vmem:[#allocation3 + $0xa8] sm:$0xff] %vm2163, %v2110
      %2186 = vst.msk [vmem:[#allocation3 + $0xb0] sm:$0xff] %vm2163, %v2112
      %2187 = vst.msk [vmem:[#allocation3 + $0xb8] sm:$0xff] %vm2163, %v2114
      %2188 = vst.msk [vmem:[#allocation3 + $0xc0] sm:$0xff] %vm2163, %v2116
      %2189 = vst.msk [vmem:[#allocation3 + $0xc8] sm:$0xff] %vm2163, %v2118
      %2190 = vst.msk [vmem:[#allocation3 + $0xd0] sm:$0xff] %vm2163, %v2120
      %2191 = vst.msk [vmem:[#allocation3 + $0xd8] sm:$0xff] %vm2163, %v2122
      %2192 = vst.msk [vmem:[#allocation3 + $0xe0] sm:$0xff] %vm2163, %v2124
      %2193 = vst.msk [vmem:[#allocation3 + $0xe8] sm:$0xff] %vm2163, %v2126
      %2194 = vst.msk [vmem:[#allocation3 + $0xf0] sm:$0xff] %vm2163, %v2128
      %2195 = vst.msk [vmem:[#allocation3 + $0xf8] sm:$0xff] %vm2163, %v2130
      %v2196 = vld [vmem:[#allocation3] sm:$0xff]
      %v2197 = vld [vmem:[#allocation3 + $0x8] sm:$0xff]
      %v2198 = vld [vmem:[#allocation3 + $0x10] sm:$0xff]
      %v2199 = vld [vmem:[#allocation3 + $0x18] sm:$0xff]
      %v2200 = vld [vmem:[#allocation3 + $0x20] sm:$0xff]
      %v2201 = vld [vmem:[#allocation3 + $0x28] sm:$0xff]
      %v2202 = vld [vmem:[#allocation3 + $0x30] sm:$0xff]
      %v2203 = vld [vmem:[#allocation3 + $0x38] sm:$0xff]
      %v2204 = vld [vmem:[#allocation3 + $0x40] sm:$0xff]
      %v2205 = vld [vmem:[#allocation3 + $0x48] sm:$0xff]
      %v2206 = vld [vmem:[#allocation3 + $0x50] sm:$0xff]
      %v2207 = vld [vmem:[#allocation3 + $0x58] sm:$0xff]
      %v2208 = vld [vmem:[#allocation3 + $0x60] sm:$0xff]
      %v2209 = vld [vmem:[#allocation3 + $0x68] sm:$0xff]
      %v2210 = vld [vmem:[#allocation3 + $0x70] sm:$0xff]
      %v2211 = vld [vmem:[#allocation3 + $0x78] sm:$0xff]
      %v2212 = vld [vmem:[#allocation3 + $0x80] sm:$0xff]
      %v2213 = vld [vmem:[#allocation3 + $0x88] sm:$0xff]
      %v2214 = vld [vmem:[#allocation3 + $0x90] sm:$0xff]
      %v2215 = vld [vmem:[#allocation3 + $0x98] sm:$0xff]
      %v2216 = vld [vmem:[#allocation3 + $0xa0] sm:$0xff]
      %v2217 = vld [vmem:[#allocation3 + $0xa8] sm:$0xff]
      %v2218 = vld [vmem:[#allocation3 + $0xb0] sm:$0xff]
      %v2219 = vld [vmem:[#allocation3 + $0xb8] sm:$0xff]
      %v2220 = vld [vmem:[#allocation3 + $0xc0] sm:$0xff]
      %v2221 = vld [vmem:[#allocation3 + $0xc8] sm:$0xff]
      %v2222 = vld [vmem:[#allocation3 + $0xd0] sm:$0xff]
      %v2223 = vld [vmem:[#allocation3 + $0xd8] sm:$0xff]
      %v2224 = vld [vmem:[#allocation3 + $0xe0] sm:$0xff]
      %v2225 = vld [vmem:[#allocation3 + $0xe8] sm:$0xff]
      %v2226 = vld [vmem:[#allocation3 + $0xf0] sm:$0xff]
      %v2227 = vld [vmem:[#allocation3 + $0xf8] sm:$0xff]
      %v2228 = vld [vmem:[%s5] sm:$0xff]
      %v2229 = vld [vmem:[%s5 + $0x8] sm:$0xff]
      %v2230 = vld [vmem:[%s5 + $0x10] sm:$0xff]
      %v2231 = vld [vmem:[%s5 + $0x18] sm:$0xff]
      %v2232 = vld [vmem:[%s5 + $0x20] sm:$0xff]
      %v2233 = vld [vmem:[%s5 + $0x28] sm:$0xff]
      %v2234 = vld [vmem:[%s5 + $0x30] sm:$0xff]
      %v2235 = vld [vmem:[%s5 + $0x38] sm:$0xff]
      %v2236 = vld [vmem:[%s5 + $0x40] sm:$0xff]
      %vm2237 = vcmask 588800
      %v2239 = vsel %vm2237, %v2196, 0
      %v2242 = vsel %vm2237, %v2197, 0
      %v2245 = vsel %vm2237, %v2198, 0
      %v2248 = vsel %vm2237, %v2199, 0
      %v2251 = vsel %vm2237, %v2200, 0
      %v2254 = vsel %vm2237, %v2201, 0
      %v2257 = vsel %vm2237, %v2202, 0
      %v2260 = vsel %vm2237, %v2203, 0
      %v2263 = vsel %vm2237, %v2204, 0
      %v2266 = vsel %vm2237, %v2205, 0
      %v2269 = vsel %vm2237, %v2206, 0
      %v2272 = vsel %vm2237, %v2207, 0
      %v2275 = vsel %vm2237, %v2208, 0
      %v2278 = vsel %vm2237, %v2209, 0
      %v2281 = vsel %vm2237, %v2210, 0
      %v2284 = vsel %vm2237, %v2211, 0
      %v2287 = vsel %vm2237, %v2212, 0
      %v2290 = vsel %vm2237, %v2213, 0
      %v2293 = vsel %vm2237, %v2214, 0
      %v2296 = vsel %vm2237, %v2215, 0
      %v2299 = vsel %vm2237, %v2216, 0
      %v2302 = vsel %vm2237, %v2217, 0
      %v2305 = vsel %vm2237, %v2218, 0
      %v2308 = vsel %vm2237, %v2219, 0
      %v2311 = vsel %vm2237, %v2220, 0
      %v2314 = vsel %vm2237, %v2221, 0
      %v2317 = vsel %vm2237, %v2222, 0
      %v2320 = vsel %vm2237, %v2223, 0
      %v2323 = vsel %vm2237, %v2224, 0
      %v2326 = vsel %vm2237, %v2225, 0
      %v2329 = vsel %vm2237, %v2226, 0
      %v2332 = vsel %vm2237, %v2227, 0
      %2334 = vmatpush.msra.mxu0 0.0
      %2335 = vmatpush.msra.mxu0 0.0
      %2336 = vmatpush.msra.mxu0 0.0
      %2337 = vmatpush.msra.mxu0 0.0
      %2338 = vmatpush.msra.mxu0 0.0
      %2339 = vmatpush.msra.mxu0 0.0
      %2340 = vmatpush.msra.mxu0 0.0
      %2341 = vmatpush.msra.mxu0 %v2236
      %2342 = vmatpush.msra.mxu0 %v2235
      %2343 = vmatpush.msra.mxu0 %v2234
      %2344 = vmatpush.msra.mxu0 %v2233
      %2345 = vmatpush.msra.mxu0 %v2232
      %2346 = vmatpush.msra.mxu0 %v2231
      %2347 = vmatpush.msra.mxu0 %v2230
      %2348 = vmatpush.msra.mxu0 %v2229
      %2349 = vmatpush.msra.mxu0 %v2228
      %2350 = vmatmul.f32.gmra.mxu0 %v2239
      %v2351 = vpop.f32.mrf.mxu0
      %v2352 = vadd.f32 0.0, %v2351
      %2353 = vmatmul.f32.gmra.mxu0 %v2242
      %v2354 = vpop.f32.mrf.mxu0
      %v2355 = vadd.f32 0.0, %v2354
      %2356 = vmatmul.f32.gmra.mxu0 %v2245
      %v2357 = vpop.f32.mrf.mxu0
      %v2358 = vadd.f32 0.0, %v2357
      %2359 = vmatmul.f32.gmra.mxu0 %v2248
      %v2360 = vpop.f32.mrf.mxu0
      %v2361 = vadd.f32 0.0, %v2360
      %2362 = vmatmul.f32.gmra.mxu0 %v2251
      %v2363 = vpop.f32.mrf.mxu0
      %v2364 = vadd.f32 0.0, %v2363
      %2365 = vmatmul.f32.gmra.mxu0 %v2254
      %v2366 = vpop.f32.mrf.mxu0
      %v2367 = vadd.f32 0.0, %v2366
      %2368 = vmatmul.f32.gmra.mxu0 %v2257
      %v2369 = vpop.f32.mrf.mxu0
      %v2370 = vadd.f32 0.0, %v2369
      %2371 = vmatmul.f32.gmra.mxu0 %v2260
      %v2372 = vpop.f32.mrf.mxu0
      %v2373 = vadd.f32 0.0, %v2372
      %2374 = vmatmul.f32.gmra.mxu0 %v2263
      %v2375 = vpop.f32.mrf.mxu0
      %v2376 = vadd.f32 0.0, %v2375
      %2377 = vmatmul.f32.gmra.mxu0 %v2266
      %v2378 = vpop.f32.mrf.mxu0
      %v2379 = vadd.f32 0.0, %v2378
      %2380 = vmatmul.f32.gmra.mxu0 %v2269
      %v2381 = vpop.f32.mrf.mxu0
      %v2382 = vadd.f32 0.0, %v2381
      %2383 = vmatmul.f32.gmra.mxu0 %v2272
      %v2384 = vpop.f32.mrf.mxu0
      %v2385 = vadd.f32 0.0, %v2384
      %2386 = vmatmul.f32.gmra.mxu0 %v2275
      %v2387 = vpop.f32.mrf.mxu0
      %v2388 = vadd.f32 0.0, %v2387
      %2389 = vmatmul.f32.gmra.mxu0 %v2278
      %v2390 = vpop.f32.mrf.mxu0
      %v2391 = vadd.f32 0.0, %v2390
      %2392 = vmatmul.f32.gmra.mxu0 %v2281
      %v2393 = vpop.f32.mrf.mxu0
      %v2394 = vadd.f32 0.0, %v2393
      %2395 = vmatmul.f32.gmra.mxu0 %v2284
      %v2396 = vpop.f32.mrf.mxu0
      %v2397 = vadd.f32 0.0, %v2396
      %2398 = vmatmul.f32.gmra.mxu0 %v2287
      %v2399 = vpop.f32.mrf.mxu0
      %v2400 = vadd.f32 0.0, %v2399
      %2401 = vmatmul.f32.gmra.mxu0 %v2290
      %v2402 = vpop.f32.mrf.mxu0
      %v2403 = vadd.f32 0.0, %v2402
      %2404 = vmatmul.f32.gmra.mxu0 %v2293
      %v2405 = vpop.f32.mrf.mxu0
      %v2406 = vadd.f32 0.0, %v2405
      %2407 = vmatmul.f32.gmra.mxu0 %v2296
      %v2408 = vpop.f32.mrf.mxu0
      %v2409 = vadd.f32 0.0, %v2408
      %2410 = vmatmul.f32.gmra.mxu0 %v2299
      %v2411 = vpop.f32.mrf.mxu0
      %v2412 = vadd.f32 0.0, %v2411
      %2413 = vmatmul.f32.gmra.mxu0 %v2302
      %v2414 = vpop.f32.mrf.mxu0
      %v2415 = vadd.f32 0.0, %v2414
      %2416 = vmatmul.f32.gmra.mxu0 %v2305
      %v2417 = vpop.f32.mrf.mxu0
      %v2418 = vadd.f32 0.0, %v2417
      %2419 = vmatmul.f32.gmra.mxu0 %v2308
      %v2420 = vpop.f32.mrf.mxu0
      %v2421 = vadd.f32 0.0, %v2420
      %2422 = vmatmul.f32.gmra.mxu0 %v2311
      %v2423 = vpop.f32.mrf.mxu0
      %v2424 = vadd.f32 0.0, %v2423
      %2425 = vmatmul.f32.gmra.mxu0 %v2314
      %v2426 = vpop.f32.mrf.mxu0
      %v2427 = vadd.f32 0.0, %v2426
      %2428 = vmatmul.f32.gmra.mxu0 %v2317
      %v2429 = vpop.f32.mrf.mxu0
      %v2430 = vadd.f32 0.0, %v2429
      %2431 = vmatmul.f32.gmra.mxu0 %v2320
      %v2432 = vpop.f32.mrf.mxu0
      %v2433 = vadd.f32 0.0, %v2432
      %2434 = vmatmul.f32.gmra.mxu0 %v2323
      %v2435 = vpop.f32.mrf.mxu0
      %v2436 = vadd.f32 0.0, %v2435
      %2437 = vmatmul.f32.gmra.mxu0 %v2326
      %v2438 = vpop.f32.mrf.mxu0
      %v2439 = vadd.f32 0.0, %v2438
      %2440 = vmatmul.f32.gmra.mxu0 %v2329
      %v2441 = vpop.f32.mrf.mxu0
      %v2442 = vadd.f32 0.0, %v2441
      %2443 = vmatmul.f32.gmra.mxu0 %v2332
      %v2444 = vpop.f32.mrf.mxu0
      %v2445 = vadd.f32 0.0, %v2444
      %2446 = vdwg.mxu0
      %2447 = vst.msk [vmem:[%s455] sm:$0xff] %vm503, %v2352
      %2448 = vst.msk [vmem:[%s455 + $0x8] sm:$0xff] %vm503, %v2355
      %2449 = vst.msk [vmem:[%s455 + $0x10] sm:$0xff] %vm503, %v2358
      %2450 = vst.msk [vmem:[%s455 + $0x18] sm:$0xff] %vm503, %v2361
      %2451 = vst.msk [vmem:[%s455 + $0x20] sm:$0xff] %vm503, %v2364
      %2452 = vst.msk [vmem:[%s455 + $0x28] sm:$0xff] %vm503, %v2367
      %2453 = vst.msk [vmem:[%s455 + $0x30] sm:$0xff] %vm503, %v2370
      %2454 = vst.msk [vmem:[%s455 + $0x38] sm:$0xff] %vm503, %v2373
      %2455 = vst.msk [vmem:[%s455 + $0x40] sm:$0xff] %vm503, %v2376
      %2456 = vst.msk [vmem:[%s455 + $0x48] sm:$0xff] %vm503, %v2379
      %2457 = vst.msk [vmem:[%s455 + $0x50] sm:$0xff] %vm503, %v2382
      %2458 = vst.msk [vmem:[%s455 + $0x58] sm:$0xff] %vm503, %v2385
      %2459 = vst.msk [vmem:[%s455 + $0x60] sm:$0xff] %vm503, %v2388
      %2460 = vst.msk [vmem:[%s455 + $0x68] sm:$0xff] %vm503, %v2391
      %2461 = vst.msk [vmem:[%s455 + $0x70] sm:$0xff] %vm503, %v2394
      %2462 = vst.msk [vmem:[%s455 + $0x78] sm:$0xff] %vm503, %v2397
      %2463 = vst.msk [vmem:[%s455 + $0x80] sm:$0xff] %vm503, %v2400
      %2464 = vst.msk [vmem:[%s455 + $0x88] sm:$0xff] %vm503, %v2403
      %2465 = vst.msk [vmem:[%s455 + $0x90] sm:$0xff] %vm503, %v2406
      %2466 = vst.msk [vmem:[%s455 + $0x98] sm:$0xff] %vm503, %v2409
      %2467 = vst.msk [vmem:[%s455 + $0xa0] sm:$0xff] %vm503, %v2412
      %2468 = vst.msk [vmem:[%s455 + $0xa8] sm:$0xff] %vm503, %v2415
      %2469 = vst.msk [vmem:[%s455 + $0xb0] sm:$0xff] %vm503, %v2418
      %2470 = vst.msk [vmem:[%s455 + $0xb8] sm:$0xff] %vm503, %v2421
      %2471 = vst.msk [vmem:[%s455 + $0xc0] sm:$0xff] %vm503, %v2424
      %2472 = vst.msk [vmem:[%s455 + $0xc8] sm:$0xff] %vm503, %v2427
      %2473 = vst.msk [vmem:[%s455 + $0xd0] sm:$0xff] %vm503, %v2430
      %2474 = vst.msk [vmem:[%s455 + $0xd8] sm:$0xff] %vm503, %v2433
      %2475 = vst.msk [vmem:[%s455 + $0xe0] sm:$0xff] %vm503, %v2436
      %2476 = vst.msk [vmem:[%s455 + $0xe8] sm:$0xff] %vm503, %v2439
      %2477 = vst.msk [vmem:[%s455 + $0xf0] sm:$0xff] %vm503, %v2442
      %2478 = vst.msk [vmem:[%s455 + $0xf8] sm:$0xff] %vm503, %v2445
      %v2479 = vsel %vm503, %v2352, 0.0
      %v2480 = vsel %vm503, %v2355, 0.0
      %v2481 = vadd.f32 %v2479, %v2480
      %v2482 = vsel %vm503, %v2358, 0.0
      %v2483 = vadd.f32 %v2481, %v2482
      %v2484 = vsel %vm503, %v2361, 0.0
      %v2485 = vadd.f32 %v2483, %v2484
      %v2486 = vsel %vm503, %v2364, 0.0
      %v2487 = vadd.f32 %v2485, %v2486
      %v2488 = vsel %vm503, %v2367, 0.0
      %v2489 = vadd.f32 %v2487, %v2488
      %v2490 = vsel %vm503, %v2370, 0.0
      %v2491 = vadd.f32 %v2489, %v2490
      %v2492 = vsel %vm503, %v2373, 0.0
      %v2493 = vadd.f32 %v2491, %v2492
      %v2494 = vsel %vm503, %v2376, 0.0
      %v2495 = vadd.f32 %v2493, %v2494
      %v2496 = vsel %vm503, %v2379, 0.0
      %v2497 = vadd.f32 %v2495, %v2496
      %v2498 = vsel %vm503, %v2382, 0.0
      %v2499 = vadd.f32 %v2497, %v2498
      %v2500 = vsel %vm503, %v2385, 0.0
      %v2501 = vadd.f32 %v2499, %v2500
      %v2502 = vsel %vm503, %v2388, 0.0
      %v2503 = vadd.f32 %v2501, %v2502
      %v2504 = vsel %vm503, %v2391, 0.0
      %v2505 = vadd.f32 %v2503, %v2504
      %v2506 = vsel %vm503, %v2394, 0.0
      %v2507 = vadd.f32 %v2505, %v2506
      %v2508 = vsel %vm503, %v2397, 0.0
      %v2509 = vadd.f32 %v2507, %v2508
      %v2510 = vsel %vm503, %v2400, 0.0
      %v2511 = vadd.f32 %v2509, %v2510
      %v2512 = vsel %vm503, %v2403, 0.0
      %v2513 = vadd.f32 %v2511, %v2512
      %v2514 = vsel %vm503, %v2406, 0.0
      %v2515 = vadd.f32 %v2513, %v2514
      %v2516 = vsel %vm503, %v2409, 0.0
      %v2517 = vadd.f32 %v2515, %v2516
      %v2518 = vsel %vm503, %v2412, 0.0
      %v2519 = vadd.f32 %v2517, %v2518
      %v2520 = vsel %vm503, %v2415, 0.0
      %v2521 = vadd.f32 %v2519, %v2520
      %v2522 = vsel %vm503, %v2418, 0.0
      %v2523 = vadd.f32 %v2521, %v2522
      %v2524 = vsel %vm503, %v2421, 0.0
      %v2525 = vadd.f32 %v2523, %v2524
      %v2526 = vsel %vm503, %v2424, 0.0
      %v2527 = vadd.f32 %v2525, %v2526
      %v2528 = vsel %vm503, %v2427, 0.0
      %v2529 = vadd.f32 %v2527, %v2528
      %v2530 = vsel %vm503, %v2430, 0.0
      %v2531 = vadd.f32 %v2529, %v2530
      %v2532 = vsel %vm503, %v2433, 0.0
      %v2533 = vadd.f32 %v2531, %v2532
      %v2534 = vsel %vm503, %v2436, 0.0
      %v2535 = vadd.f32 %v2533, %v2534
      %v2536 = vsel %vm503, %v2439, 0.0
      %v2537 = vadd.f32 %v2535, %v2536
      %v2538 = vsel %vm503, %v2442, 0.0
      %v2539 = vadd.f32 %v2537, %v2538
      %v2540 = vsel %vm503, %v2445, 0.0
      %v2541 = vadd.f32 %v2539, %v2540
      %v2542 = vrot.slane %v2541, 4
      %v2543 = vadd.f32 %v2541, %v2542
      %v2544 = vrot.slane %v2543, 2
      %v2545 = vadd.f32 %v2543, %v2544
      %v2546 = vrot.slane %v2545, 1
      %v2547 = vadd.f32 %v2545, %v2546
      %2548 = vst.msk [vmem:[%s463] sm:$0x1] %vm464, %v2547
      %v2549 = vmul.f32 %v2352, %v2352
      %v2550 = vmul.f32 %v2355, %v2355
      %v2551 = vmul.f32 %v2358, %v2358
      %v2552 = vmul.f32 %v2361, %v2361
      %v2553 = vmul.f32 %v2364, %v2364
      %v2554 = vmul.f32 %v2367, %v2367
      %v2555 = vmul.f32 %v2370, %v2370
      %v2556 = vmul.f32 %v2373, %v2373
      %v2557 = vmul.f32 %v2376, %v2376
      %v2558 = vmul.f32 %v2379, %v2379
      %v2559 = vmul.f32 %v2382, %v2382
      %v2560 = vmul.f32 %v2385, %v2385
      %v2561 = vmul.f32 %v2388, %v2388
      %v2562 = vmul.f32 %v2391, %v2391
      %v2563 = vmul.f32 %v2394, %v2394
      %v2564 = vmul.f32 %v2397, %v2397
      %v2565 = vmul.f32 %v2400, %v2400
      %v2566 = vmul.f32 %v2403, %v2403
      %v2567 = vmul.f32 %v2406, %v2406
      %v2568 = vmul.f32 %v2409, %v2409
      %v2569 = vmul.f32 %v2412, %v2412
      %v2570 = vmul.f32 %v2415, %v2415
      %v2571 = vmul.f32 %v2418, %v2418
      %v2572 = vmul.f32 %v2421, %v2421
      %v2573 = vmul.f32 %v2424, %v2424
      %v2574 = vmul.f32 %v2427, %v2427
      %v2575 = vmul.f32 %v2430, %v2430
      %v2576 = vmul.f32 %v2433, %v2433
      %v2577 = vmul.f32 %v2436, %v2436
      %v2578 = vmul.f32 %v2439, %v2439
      %v2579 = vmul.f32 %v2442, %v2442
      %v2580 = vmul.f32 %v2445, %v2445
      %v2581 = vsel %vm503, %v2549, 0.0
      %v2582 = vsel %vm503, %v2550, 0.0
      %v2583 = vadd.f32 %v2581, %v2582
      %v2584 = vsel %vm503, %v2551, 0.0
      %v2585 = vadd.f32 %v2583, %v2584
      %v2586 = vsel %vm503, %v2552, 0.0
      %v2587 = vadd.f32 %v2585, %v2586
      %v2588 = vsel %vm503, %v2553, 0.0
      %v2589 = vadd.f32 %v2587, %v2588
      %v2590 = vsel %vm503, %v2554, 0.0
      %v2591 = vadd.f32 %v2589, %v2590
      %v2592 = vsel %vm503, %v2555, 0.0
      %v2593 = vadd.f32 %v2591, %v2592
      %v2594 = vsel %vm503, %v2556, 0.0
      %v2595 = vadd.f32 %v2593, %v2594
      %v2596 = vsel %vm503, %v2557, 0.0
      %v2597 = vadd.f32 %v2595, %v2596
      %v2598 = vsel %vm503, %v2558, 0.0
      %v2599 = vadd.f32 %v2597, %v2598
      %v2600 = vsel %vm503, %v2559, 0.0
      %v2601 = vadd.f32 %v2599, %v2600
      %v2602 = vsel %vm503, %v2560, 0.0
      %v2603 = vadd.f32 %v2601, %v2602
      %v2604 = vsel %vm503, %v2561, 0.0
      %v2605 = vadd.f32 %v2603, %v2604
      %v2606 = vsel %vm503, %v2562, 0.0
      %v2607 = vadd.f32 %v2605, %v2606
      %v2608 = vsel %vm503, %v2563, 0.0
      %v2609 = vadd.f32 %v2607, %v2608
      %v2610 = vsel %vm503, %v2564, 0.0
      %v2611 = vadd.f32 %v2609, %v2610
      %v2612 = vsel %vm503, %v2565, 0.0
      %v2613 = vadd.f32 %v2611, %v2612
      %v2614 = vsel %vm503, %v2566, 0.0
      %v2615 = vadd.f32 %v2613, %v2614
      %v2616 = vsel %vm503, %v2567, 0.0
      %v2617 = vadd.f32 %v2615, %v2616
      %v2618 = vsel %vm503, %v2568, 0.0
      %v2619 = vadd.f32 %v2617, %v2618
      %v2620 = vsel %vm503, %v2569, 0.0
      %v2621 = vadd.f32 %v2619, %v2620
      %v2622 = vsel %vm503, %v2570, 0.0
      %v2623 = vadd.f32 %v2621, %v2622
      %v2624 = vsel %vm503, %v2571, 0.0
      %v2625 = vadd.f32 %v2623, %v2624
      %v2626 = vsel %vm503, %v2572, 0.0
      %v2627 = vadd.f32 %v2625, %v2626
      %v2628 = vsel %vm503, %v2573, 0.0
      %v2629 = vadd.f32 %v2627, %v2628
      %v2630 = vsel %vm503, %v2574, 0.0
      %v2631 = vadd.f32 %v2629, %v2630
      %v2632 = vsel %vm503, %v2575, 0.0
      %v2633 = vadd.f32 %v2631, %v2632
      %v2634 = vsel %vm503, %v2576, 0.0
      %v2635 = vadd.f32 %v2633, %v2634
      %v2636 = vsel %vm503, %v2577, 0.0
      %v2637 = vadd.f32 %v2635, %v2636
      %v2638 = vsel %vm503, %v2578, 0.0
      %v2639 = vadd.f32 %v2637, %v2638
      %v2640 = vsel %vm503, %v2579, 0.0
      %v2641 = vadd.f32 %v2639, %v2640
      %v2642 = vsel %vm503, %v2580, 0.0
      %v2643 = vadd.f32 %v2641, %v2642
      %v2644 = vrot.slane %v2643, 4
      %v2645 = vadd.f32 %v2643, %v2644
      %v2646 = vrot.slane %v2645, 2
      %v2647 = vadd.f32 %v2645, %v2646
      %v2648 = vrot.slane %v2647, 1
      %v2649 = vadd.f32 %v2647, %v2648
      %2650 = vst.msk [vmem:[%s463 + $0x1] sm:$0x1] %vm464, %v2649
      %s2651 = smul.u32 32, %s24
      %p2652 = scmp.lt.s32.totalorder %s23, 1
      %s2653 = scalar_select %p2652, %s23, 1
      %p2654 = scmp.lt.s32.totalorder %s2651, 31
      %s2655 = scalar_select %p2654, %s2651, 31
      %s2656 = smul.addr %s2653, 32
      %s2657 = sadd.s32 %s2655, %s2656
      %s2658 = smul.addr %s2657, 8
      %s2659 = scalar_lea.vmem %s6, %s2658
      %p2660 = scmp.lt.s32.totalorder %s23, 1
      %s2661 = scalar_select %p2660, %s23, 1
      %p2662 = scmp.lt.s32.totalorder %s24, 0
      %s2663 = scalar_select %p2662, %s24, 0
      %s2664 = sadd.s32 %s2663, %s2661
      %s2665 = smul.addr %s2664, 2
      %s2666 = scalar_lea.vmem %s7, %s2665
      // Predicated region
      $region49: #{basic_block_forward.3} parent=43 // pred_check
        %p2667 = pneg %p214
      $region50: #{basic_block_forward.3} parent=43 // pred_check_branch
        %2669 = sbr.rel (%p2667) target = $region52
      $region51: #{basic_block_forward.3} parent=43 // pred_region
        %s2670 = smul.u32 32, %s24
      $region52: #{basic_block_forward.3} parent=43 // pred_fallthru
        _
      // Predicated region
      $region53: #{basic_block_forward.3} parent=43 // pred_check
        %p2671 = pneg %p242
      $region54: #{basic_block_forward.3} parent=43 // pred_check_branch
        %2673 = sbr.rel (%p2671) target = $region56
      $region55: #{basic_block_forward.3} parent=43 // pred_region
        _
      $region56: #{basic_block_forward.3} parent=43 // pred_fallthru
        _
    $region44: #{basic_block_forward.3} parent=5 // pred_fallthru
      _
    %p2674 = scmp.le.s32.totalorder 2, %s14
    // Predicated region
    $region57: #{basic_block_forward.3} parent=5 // pred_check
      %p2675 = pneg %p2674
    $region58: #{basic_block_forward.3} parent=5 // pred_check_branch
      %2677 = sbr.rel (%p2675) target = $region60
    $region59: #{basic_block_forward.3} parent=5 // pred_region
      %s2678 = ssub.s32 %s14, 2
      // Predicated region
      $region61: #{basic_block_forward.3} parent=59 // pred_check
        %p2679 = pneg %p220
      $region62: #{basic_block_forward.3} parent=59 // pred_check_branch
        %2681 = sbr.rel (%p2679) target = $region64
      $region63: #{basic_block_forward.3} parent=59 // pred_region
        %s2682 = smul.u32 32, %s26
        %p2683 = scmp.lt.s32.totalorder %s25, 1
        %s2684 = scalar_select %p2683, %s25, 1
        %p2685 = scmp.lt.s32.totalorder %s2682, 31
        %s2686 = scalar_select %p2685, %s2682, 31
        %s2687 = smul.addr %s2684, 32
        %s2688 = sadd.s32 %s2686, %s2687
        %s2689 = smul.addr %s2688, 8
        %s2690 = scalar_lea.vmem %s6, %s2689
      $region64: #{basic_block_forward.3} parent=59 // pred_fallthru
        _
      // Predicated region
      $region65: #{basic_block_forward.3} parent=59 // pred_check
        %p2691 = pneg %p248
      $region66: #{basic_block_forward.3} parent=59 // pred_check_branch
        %2693 = sbr.rel (%p2691) target = $region68
      $region67: #{basic_block_forward.3} parent=59 // pred_region
        %p2694 = scmp.lt.s32.totalorder %s25, 1
        %s2695 = scalar_select %p2694, %s25, 1
        %p2696 = scmp.lt.s32.totalorder %s26, 0
        %s2697 = scalar_select %p2696, %s26, 0
        %s2698 = sadd.s32 %s2697, %s2695
        %s2699 = smul.addr %s2698, 2
        %s2700 = scalar_lea.vmem %s7, %s2699
      $region68: #{basic_block_forward.3} parent=59 // pred_fallthru
        _
    $region60: #{basic_block_forward.3} parent=5 // pred_fallthru
      _
  $region6: #{basic_block_forward.3} parent=0 // loop_footer
    %s18 = sadd.s32 1, %s14
  $region7: #{basic_block_forward.3} parent=0 // loop_footer_branch
    %13 = sbr.rel target = $region3
  $region8: #{basic_block_forward.3} parent=0 // loop_exit
    _

// kernel: basic_block_forward.4
$region0: #{basic_block_forward.4}
  #allocation0 [shape = 'u32[]', space=smem, size = 0x4, offset = 0x4, fixed_abs, tag = 'smem constant byte address 0x4 - core index']
  #allocation1 [shape = 'u32[72,128]{1,0:T(1,128)}', space=vmem, size = 0x9000, scoped, tag = 'internal scratch']
  #allocation2 [shape = 'f32[18,18,8]{2,1,0:T(8,128)}', space=vmem, size = 0x36000, scoped, tag = 'scratch operand']
  #allocation3 [shape = 'f32[256,72]{1,0:T(8,128)}', space=vmem, size = 0x20000, scoped, tag = 'scratch operand']
  %s0 = inlined_call_operand.vmem [shape: f32[2,16,16,8], index: 0, kind: input, shape index: {}, may-alias: {0,1,2}]
  %s1 = inlined_call_operand.vmem [shape: f32[2,16,16,8], index: 1, kind: input, shape index: {}, may-alias: {0,1,2}]
  %s2 = inlined_call_operand.vmem [shape: f32[2,16,16,8], index: 2, kind: input, shape index: {}, may-alias: {0,1,2}]
  %s3 = inlined_call_operand.vmem [shape: f32[1,8], index: 3, kind: input, shape index: {}]
  %s4 = inlined_call_operand.vmem [shape: f32[1,8], index: 4, kind: input, shape index: {}]
  %s5 = inlined_call_operand.vmem [shape: f32[72,8], index: 5, kind: input, shape index: {}]
  %s6 = inlined_call_operand.vmem [shape: f32[2,256,8], index: 6, kind: output, shape index: {0}]
  %s7 = inlined_call_operand.vmem [shape: f32[2,1,2,8], index: 7, kind: output, shape index: {1}]
  %8 = xla_tuple %s6, %s7
  %s9 = sld [smem:[#allocation0]]
  $region69: #{basic_block_forward.4} parent=0
    _
  %s11 = ssub.s32 1, %s9
  %s12 = scalar_select 0, %s11, %s9
  loop: start=0, step=1, limit=4
  $region2: #{basic_block_forward.4} parent=0 // loop_pre_header
    _
  $region3: #{basic_block_forward.4} parent=0 // loop_header
    %s14 = sphi 0, %s18
    %p15 = scmp.ge.s32.totalorder %s14, 4
    %s21 = sphi 0, %s33
    %s22 = sphi 0, %s29
    %s23 = sphi 0, %s21
    %s24 = sphi 0, %s22
    %s25 = sphi 0, %s23
    %s26 = sphi 0, %s24
    %s38 = sphi 0, %s40
    %s41 = sphi 0, %s38
    %s42 = sphi 0, %s41
    %s58 = sphi 0, %s42
    %s74 = sphi 0, %s76
    %s77 = sphi 0, %s74
    %s78 = sphi 0, %s77
    %s94 = sphi 0, %s78
    %s110 = sphi 0, %s112
    %s113 = sphi 0, %s110
    %s114 = sphi 0, %s113
    %s130 = sphi 0, %s114
    %s134 = sphi 0, %s134
    %s136 = sphi 0, %s134
    %s137 = sphi 0, %s136
    %s151 = sphi 0, %s137
    %s155 = sphi 0, %s155
    %s157 = sphi 0, %s155
    %s158 = sphi 0, %s157
    %s172 = sphi 0, %s158
    %s176 = sphi 0, %s176
    %s178 = sphi 0, %s176
    %s179 = sphi 0, %s178
    %s193 = sphi 0, %s179
    %s201 = sphi 0, %s203
    %s204 = sphi 0, %s201
    %s205 = sphi 0, %s204
    %s221 = sphi 0, %s205
    %s229 = sphi 0, %s231
    %s232 = sphi 0, %s229
    %s233 = sphi 0, %s232
    %s249 = sphi 0, %s233
  $region4: #{basic_block_forward.4} parent=0 // loop_header_branch
    %17 = sbr.rel (%p15) target = $region8
  $region5: #{basic_block_forward.4} parent=0 // loop_body
    %s19 = ssub.s32 %s14, 1
    %s20 = ssub.s32 %s14, 2
    %s27 = sadd.s32 1, %s22
    %p28 = scmp.ge.s32.totalorder %s27, 1
    %s29 = scalar_select %p28, 0, %s27
    %s30 = sadd.s32 1, %s21
    %s31 = scalar_select %p28, %s30, %s21
    %p32 = scmp.ge.s32.totalorder %s31, 2
    %s33 = scalar_select %p32, 0, %s31
    %s34 = ssub.s32 %s21, %s33
    %s35 = ssub.s32 %s22, %s29
    %s36 = sor.u32 %s34, %s35
    %p37 = scmp.eq.s32.totalorder %s36, 0
    %s39 = sadd.s32 %s38, 1
    %s40 = scalar_select %p37, %s38, %s39
    %p43 = pneg %p37
    %p44 = scmp.eq.s32.totalorder %s14, 1
    %p45 = por %p43, %p44
    %p46 = scmp.ne.s32.totalorder %s38, %s41
    %p47 = scmp.eq.s32.totalorder %s14, 0
    %p48 = por %p46, %p47
    %p49 = scmp.ne.s32.totalorder %s38, %s41
    %p50 = scmp.eq.s32.totalorder %s19, 1
    %p51 = por %p49, %p50
    %p52 = scmp.ne.s32.totalorder %s41, %s42
    %p53 = scmp.eq.s32.totalorder %s19, 0
    %p54 = por %p52, %p53
    %p55 = scmp.ne.s32.totalorder %s41, %s42
    %p56 = scmp.eq.s32.totalorder %s20, 1
    %p57 = por %p55, %p56
    %p59 = scmp.ne.s32.totalorder %s42, %s58
    %p60 = scmp.eq.s32.totalorder %s20, 0
    %p61 = por %p59, %p60
    %s62 = smul.u32 %s22, 16
    %s63 = ssub.s32 %s62, 1
    %p64 = scmp.gt.s32.totalorder %s63, 0
    %s65 = scalar_select %p64, %s63, 0
    %s66 = smul.u32 %s29, 16
    %s67 = ssub.s32 %s66, 1
    %p68 = scmp.gt.s32.totalorder %s67, 0
    %s69 = scalar_select %p68, %s67, 0
    %s70 = ssub.s32 %s21, %s33
    %s71 = ssub.s32 %s65, %s69
    %s72 = sor.u32 %s70, %s71
    %p73 = scmp.eq.s32.totalorder %s72, 0
    %s75 = sadd.s32 %s74, 1
    %s76 = scalar_select %p73, %s74, %s75
    %p79 = pneg %p73
    %p80 = scmp.eq.s32.totalorder %s14, 1
    %p81 = por %p79, %p80
    %p82 = scmp.ne.s32.totalorder %s74, %s77
    %p83 = scmp.eq.s32.totalorder %s14, 0
    %p84 = por %p82, %p83
    %p85 = scmp.ne.s32.totalorder %s74, %s77
    %p86 = scmp.eq.s32.totalorder %s19, 1
    %p87 = por %p85, %p86
    %p88 = scmp.ne.s32.totalorder %s77, %s78
    %p89 = scmp.eq.s32.totalorder %s19, 0
    %p90 = por %p88, %p89
    %p91 = scmp.ne.s32.totalorder %s77, %s78
    %p92 = scmp.eq.s32.totalorder %s20, 1
    %p93 = por %p91, %p92
    %p95 = scmp.ne.s32.totalorder %s78, %s94
    %p96 = scmp.eq.s32.totalorder %s20, 0
    %p97 = por %p95, %p96
    %s98 = smul.u32 %s22, 16
    %s99 = sadd.s32 %s98, 16
    %p100 = scmp.lt.s32.totalorder %s99, 15
    %s101 = scalar_select %p100, %s99, 15
    %s102 = smul.u32 %s29, 16
    %s103 = sadd.s32 %s102, 16
    %p104 = scmp.lt.s32.totalorder %s103, 15
    %s105 = scalar_select %p104, %s103, 15
    %s106 = ssub.s32 %s21, %s33
    %s107 = ssub.s32 %s101, %s105
    %s108 = sor.u32 %s106, %s107
    %p109 = scmp.eq.s32.totalorder %s108, 0
    %s111 = sadd.s32 %s110, 1
    %s112 = scalar_select %p109, %s110, %s111
    %p115 = pneg %p109
    %p116 = scmp.eq.s32.totalorder %s14, 1
    %p117 = por %p115, %p116
    %p118 = scmp.ne.s32.totalorder %s110, %s113
    %p119 = scmp.eq.s32.totalorder %s14, 0
    %p120 = por %p118, %p119
    %p121 = scmp.ne.s32.totalorder %s110, %s113
    %p122 = scmp.eq.s32.totalorder %s19, 1
    %p123 = por %p121, %p122
    %p124 = scmp.ne.s32.totalorder %s113, %s114
    %p125 = scmp.eq.s32.totalorder %s19, 0
    %p126 = por %p124, %p125
    %p127 = scmp.ne.s32.totalorder %s113, %s114
    %p128 = scmp.eq.s32.totalorder %s20, 1
    %p129 = por %p127, %p128
    %p131 = scmp.ne.s32.totalorder %s114, %s130
    %p132 = scmp.eq.s32.totalorder %s20, 0
    %p133 = por %p131, %p132
    %s135 = sadd.s32 %s134, 1
    %p138 = scmp.eq.s32.totalorder %s14, 1
    %p139 = scmp.ne.s32.totalorder %s134, %s136
    %p140 = scmp.eq.s32.totalorder %s14, 0
    %p141 = por %p139, %p140
    %p142 = scmp.ne.s32.totalorder %s134, %s136
    %p143 = scmp.eq.s32.totalorder %s19, 1
    %p144 = por %p142, %p143
    %p145 = scmp.ne.s32.totalorder %s136, %s137
    %p146 = scmp.eq.s32.totalorder %s19, 0
    %p147 = por %p145, %p146
    %p148 = scmp.ne.s32.totalorder %s136, %s137
    %p149 = scmp.eq.s32.totalorder %s20, 1
    %p150 = por %p148, %p149
    %p152 = scmp.ne.s32.totalorder %s137, %s151
    %p153 = scmp.eq.s32.totalorder %s20, 0
    %p154 = por %p152, %p153
    %s156 = sadd.s32 %s155, 1
    %p159 = scmp.eq.s32.totalorder %s14, 1
    %p160 = scmp.ne.s32.totalorder %s155, %s157
    %p161 = scmp.eq.s32.totalorder %s14, 0
    %p162 = por %p160, %p161
    %p163 = scmp.ne.s32.totalorder %s155, %s157
    %p164 = scmp.eq.s32.totalorder %s19, 1
    %p165 = por %p163, %p164
    %p166 = scmp.ne.s32.totalorder %s157, %s158
    %p167 = scmp.eq.s32.totalorder %s19, 0
    %p168 = por %p166, %p167
    %p169 = scmp.ne.s32.totalorder %s157, %s158
    %p170 = scmp.eq.s32.totalorder %s20, 1
    %p171 = por %p169, %p170
    %p173 = scmp.ne.s32.totalorder %s158, %s172
    %p174 = scmp.eq.s32.totalorder %s20, 0
    %p175 = por %p173, %p174
    %s177 = sadd.s32 %s176, 1
    %p180 = scmp.eq.s32.totalorder %s14, 1
    %p181 = scmp.ne.s32.totalorder %s176, %s178
    %p182 = scmp.eq.s32.totalorder %s14, 0
    %p183 = por %p181, %p182
    %p184 = scmp.ne.s32.totalorder %s176, %s178
    %p185 = scmp.eq.s32.totalorder %s19, 1
    %p186 = por %p184, %p185
    %p187 = scmp.ne.s32.totalorder %s178, %s179
    %p188 = scmp.eq.s32.totalorder %s19, 0
    %p189 = por %p187, %p188
    %p190 = scmp.ne.s32.totalorder %s178, %s179
    %p191 = scmp.eq.s32.totalorder %s20, 1
    %p192 = por %p190, %p191
    %p194 = scmp.ne.s32.totalorder %s179, %s193
    %p195 = scmp.eq.s32.totalorder %s20, 0
    %p196 = por %p194, %p195
    %s197 = ssub.s32 %s21, %s33
    %s198 = ssub.s32 %s22, %s29
    %s199 = sor.u32 %s197, %s198
    %p200 = scmp.eq.s32.totalorder %s199, 0
    %s202 = sadd.s32 %s201, 1
    %s203 = scalar_select %p200, %s201, %s202
    %p206 = pneg %p200
    %p207 = scmp.eq.s32.totalorder %s14, 1
    %p208 = por %p206, %p207
    %p209 = scmp.ne.s32.totalorder %s201, %s204
    %p210 = scmp.eq.s32.totalorder %s14, 0
    %p211 = por %p209, %p210
    %p212 = scmp.ne.s32.totalorder %s201, %s204
    %p213 = scmp.eq.s32.totalorder %s19, 1
    %p214 = por %p212, %p213
    %p215 = scmp.ne.s32.totalorder %s204, %s205
    %p216 = scmp.eq.s32.totalorder %s19, 0
    %p217 = por %p215, %p216
    %p218 = scmp.ne.s32.totalorder %s204, %s205
    %p219 = scmp.eq.s32.totalorder %s20, 1
    %p220 = por %p218, %p219
    %p222 = scmp.ne.s32.totalorder %s205, %s221
    %p223 = scmp.eq.s32.totalorder %s20, 0
    %p224 = por %p222, %p223
    %s225 = ssub.s32 %s21, %s33
    %s226 = ssub.s32 %s22, %s29
    %s227 = sor.u32 %s225, %s226
    %p228 = scmp.eq.s32.totalorder %s227, 0
    %s230 = sadd.s32 %s229, 1
    %s231 = scalar_select %p228, %s229, %s230
    %p234 = pneg %p228
    %p235 = scmp.eq.s32.totalorder %s14, 1
    %p236 = por %p234, %p235
    %p237 = scmp.ne.s32.totalorder %s229, %s232
    %p238 = scmp.eq.s32.totalorder %s14, 0
    %p239 = por %p237, %p238
    %p240 = scmp.ne.s32.totalorder %s229, %s232
    %p241 = scmp.eq.s32.totalorder %s19, 1
    %p242 = por %p240, %p241
    %p243 = scmp.ne.s32.totalorder %s232, %s233
    %p244 = scmp.eq.s32.totalorder %s19, 0
    %p245 = por %p243, %p244
    %p246 = scmp.ne.s32.totalorder %s232, %s233
    %p247 = scmp.eq.s32.totalorder %s20, 1
    %p248 = por %p246, %p247
    %p250 = scmp.ne.s32.totalorder %s233, %s249
    %p251 = scmp.eq.s32.totalorder %s20, 0
    %p252 = por %p250, %p251
    %p253 = scmp.le.s32.totalorder 1, %s14
    %p254 = scmp.lt.s32.totalorder %s14, 3
    %p255 = pnand %p253, %p254
    %p256 = pneg %p255
    // Predicated region
    $region9: #{basic_block_forward.4} parent=5 // pred_check
      _
    $region10: #{basic_block_forward.4} parent=5 // pred_check_branch
      %258 = sbr.rel (%p255) target = $region12
    $region11: #{basic_block_forward.4} parent=5 // pred_region
      %s259 = ssub.s32 %s14, 1
      // Predicated region
      $region13: #{basic_block_forward.4} parent=11 // pred_check
        %p260 = pneg %p147
      $region14: #{basic_block_forward.4} parent=11 // pred_check_branch
        %262 = sbr.rel (%p260) target = $region16
      $region15: #{basic_block_forward.4} parent=11 // pred_region
        _
      $region16: #{basic_block_forward.4} parent=11 // pred_fallthru
        _
      // Predicated region
      $region17: #{basic_block_forward.4} parent=11 // pred_check
        %p263 = pneg %p168
      $region18: #{basic_block_forward.4} parent=11 // pred_check_branch
        %265 = sbr.rel (%p263) target = $region20
      $region19: #{basic_block_forward.4} parent=11 // pred_region
        _
      $region20: #{basic_block_forward.4} parent=11 // pred_fallthru
        _
      // Predicated region
      $region21: #{basic_block_forward.4} parent=11 // pred_check
        %p266 = pneg %p189
      $region22: #{basic_block_forward.4} parent=11 // pred_check_branch
        %268 = sbr.rel (%p266) target = $region24
      $region23: #{basic_block_forward.4} parent=11 // pred_region
        _
      $region24: #{basic_block_forward.4} parent=11 // pred_fallthru
        _
    $region12: #{basic_block_forward.4} parent=5 // pred_fallthru
      _
    %p269 = scmp.lt.s32.totalorder %s14, 2
    // Predicated region
    $region25: #{basic_block_forward.4} parent=5 // pred_check
      %p270 = pneg %p269
    $region26: #{basic_block_forward.4} parent=5 // pred_check_branch
      %272 = sbr.rel (%p270) target = $region28
    $region27: #{basic_block_forward.4} parent=5 // pred_region
      // Predicated region
      $region29: #{basic_block_forward.4} parent=27 // pred_check
        %p273 = pneg %p48
      $region30: #{basic_block_forward.4} parent=27 // pred_check_branch
        %275 = sbr.rel (%p273) target = $region32
      $region31: #{basic_block_forward.4} parent=27 // pred_region
        %s276 = smul.u32 16, %s22
        %p277 = scmp.lt.s32.totalorder %s21, 1
        %s278 = scalar_select %p277, %s21, 1
        %p279 = scmp.lt.s32.totalorder %s276, 15
        %s280 = scalar_select %p279, %s276, 15
        %s281 = smul.addr %s280, 2
        %s282 = smul.addr %s278, 32
        %s283 = sadd.s32 %s281, %s282
        %s284 = smul.addr %s283, 8
        %s285 = scalar_lea.vmem %s0, %s284
        %s286 = smul.u32 16, %s22
      $region32: #{basic_block_forward.4} parent=27 // pred_fallthru
        _
      // Predicated region
      $region33: #{basic_block_forward.4} parent=27 // pred_check
        %p287 = pneg %p84
      $region34: #{basic_block_forward.4} parent=27 // pred_check_branch
        %289 = sbr.rel (%p287) target = $region36
      $region35: #{basic_block_forward.4} parent=27 // pred_region
        %s290 = smul.u32 %s22, 16
        %s291 = ssub.s32 %s290, 1
        %p292 = scmp.gt.s32.totalorder %s291, 0
        %s293 = scalar_select %p292, %s291, 0
        %p294 = scmp.lt.s32.totalorder %s21, 1
        %s295 = scalar_select %p294, %s21, 1
        %p296 = scmp.lt.s32.totalorder %s293, 15
        %s297 = scalar_select %p296, %s293, 15
        %s298 = smul.addr %s297, 2
        %s299 = smul.addr %s295, 32
        %s300 = sadd.s32 %s298, %s299
        %s301 = smul.addr %s300, 8
        %s302 = scalar_lea.vmem %s1, %s301
        %s303 = smul.u32 %s22, 16
        %s304 = ssub.s32 %s303, 1
        %p305 = scmp.gt.s32.totalorder %s304, 0
        %s306 = scalar_select %p305, %s304, 0
      $region36: #{basic_block_forward.4} parent=27 // pred_fallthru
        _
      // Predicated region
      $region37: #{basic_block_forward.4} parent=27 // pred_check
        %p307 = pneg %p120
      $region38: #{basic_block_forward.4} parent=27 // pred_check_branch
        %309 = sbr.rel (%p307) target = $region40
      $region39: #{basic_block_forward.4} parent=27 // pred_region
        %s310 = smul.u32 %s22, 16
        %s311 = sadd.s32 %s310, 16
        %p312 = scmp.lt.s32.totalorder %s311, 15
        %s313 = scalar_select %p312, %s311, 15
        %p314 = scmp.lt.s32.totalorder %s21, 1
        %s315 = scalar_select %p314, %s21, 1
        %p316 = scmp.lt.s32.totalorder %s313, 15
        %s317 = scalar_select %p316, %s313, 15
        %s318 = smul.addr %s317, 2
        %s319 = smul.addr %s315, 32
        %s320 = sadd.s32 %s318, %s319
        %s321 = smul.addr %s320, 8
        %s322 = scalar_lea.vmem %s2, %s321
        %s323 = smul.u32 %s22, 16
        %s324 = sadd.s32 %s323, 16
        %p325 = scmp.lt.s32.totalorder %s324, 15
        %s326 = scalar_select %p325, %s324, 15
      $region40: #{basic_block_forward.4} parent=27 // pred_fallthru
        _
    $region28: #{basic_block_forward.4} parent=5 // pred_fallthru
      _
    %p327 = scmp.le.s32.totalorder 1, %s14
    %p328 = scmp.lt.s32.totalorder %s14, 3
    %p329 = pnand %p327, %p328
    %p330 = pneg %p329
    // Predicated region
    $region41: #{basic_block_forward.4} parent=5 // pred_check
      _
    $region42: #{basic_block_forward.4} parent=5 // pred_check_branch
      %332 = sbr.rel (%p329) target = $region44
    $region43: #{basic_block_forward.4} parent=5 // pred_region
      %s333 = ssub.s32 %s14, 1
      %s334 = smul.u32 16, %s24
      %p335 = scmp.lt.s32.totalorder %s23, 1
      %s336 = scalar_select %p335, %s23, 1
      %p337 = scmp.lt.s32.totalorder %s334, 15
      %s338 = scalar_select %p337, %s334, 15
      %s339 = smul.addr %s338, 2
      %s340 = smul.addr %s336, 32
      %s341 = sadd.s32 %s339, %s340
      %s342 = smul.addr %s341, 8
      %s343 = scalar_lea.vmem %s0, %s342
      %p344 = pneg %p54
      %p345 = pneg %p51
      %s346 = smul.u32 %s24, 16
      %s347 = ssub.s32 %s346, 1
      %p348 = scmp.gt.s32.totalorder %s347, 0
      %s349 = scalar_select %p348, %s347, 0
      %p350 = scmp.lt.s32.totalorder %s23, 1
      %s351 = scalar_select %p350, %s23, 1
      %p352 = scmp.lt.s32.totalorder %s349, 15
      %s353 = scalar_select %p352, %s349, 15
      %s354 = smul.addr %s353, 2
      %s355 = smul.addr %s351, 32
      %s356 = sadd.s32 %s354, %s355
      %s357 = smul.addr %s356, 8
      %s358 = scalar_lea.vmem %s1, %s357
      %p359 = pneg %p90
      %p360 = pneg %p87
      %s361 = smul.u32 %s24, 16
      %s362 = sadd.s32 %s361, 16
      %p363 = scmp.lt.s32.totalorder %s362, 15
      %s364 = scalar_select %p363, %s362, 15
      %p365 = scmp.lt.s32.totalorder %s23, 1
      %s366 = scalar_select %p365, %s23, 1
      %p367 = scmp.lt.s32.totalorder %s364, 15
      %s368 = scalar_select %p367, %s364, 15
      %s369 = smul.addr %s368, 2
      %s370 = smul.addr %s366, 32
      %s371 = sadd.s32 %s369, %s370
      %s372 = smul.addr %s371, 8
      %s373 = scalar_lea.vmem %s2, %s372
      %p374 = pneg %p126
      %p375 = pneg %p123
      %p376 = pneg %p147
      %p377 = pneg %p144
      %p378 = pneg %p168
      %p379 = pneg %p165
      %p380 = pneg %p189
      %p381 = pneg %p186
      %p382 = pneg %p217
      %p383 = pneg %p214
      %s384 = smul.u32 32, %s24
      %p385 = scmp.lt.s32.totalorder %s23, 1
      %s386 = scalar_select %p385, %s23, 1
      %p387 = scmp.lt.s32.totalorder %s384, 31
      %s388 = scalar_select %p387, %s384, 31
      %s389 = smul.addr %s386, 32
      %s390 = sadd.s32 %s388, %s389
      %s391 = smul.addr %s390, 8
      %s392 = scalar_lea.vmem %s6, %s391
      %p393 = pneg %p245
      %p394 = pneg %p242
      %p395 = scmp.lt.s32.totalorder %s23, 1
      %s396 = scalar_select %p395, %s23, 1
      %p397 = scmp.lt.s32.totalorder %s24, 0
      %s398 = scalar_select %p397, %s24, 0
      %s399 = sadd.s32 %s398, %s396
      %s400 = smul.addr %s399, 2
      %s401 = scalar_lea.vmem %s7, %s400
      %s402 = smul.u32 16, %s24
      %p403 = scmp.lt.s32.totalorder %s23, 1
      %s404 = scalar_select %p403, %s23, 1
      %p405 = scmp.lt.s32.totalorder %s402, 15
      %s406 = scalar_select %p405, %s402, 15
      %s407 = smul.addr %s406, 2
      %s408 = smul.addr %s404, 32
      %s409 = sadd.s32 %s407, %s408
      %s410 = smul.addr %s409, 8
      %s411 = scalar_lea.vmem %s0, %s410
      %s412 = smul.u32 16, %s24
      %s413 = smul.u32 %s24, 16
      %s414 = ssub.s32 %s413, 1
      %p415 = scmp.gt.s32.totalorder %s414, 0
      %s416 = scalar_select %p415, %s414, 0
      %p417 = scmp.lt.s32.totalorder %s23, 1
      %s418 = scalar_select %p417, %s23, 1
      %p419 = scmp.lt.s32.totalorder %s416, 15
      %s420 = scalar_select %p419, %s416, 15
      %s421 = smul.addr %s420, 2
      %s422 = smul.addr %s418, 32
      %s423 = sadd.s32 %s421, %s422
      %s424 = smul.addr %s423, 8
      %s425 = scalar_lea.vmem %s1, %s424
      %s426 = smul.u32 %s24, 16
      %s427 = ssub.s32 %s426, 1
      %p428 = scmp.gt.s32.totalorder %s427, 0
      %s429 = scalar_select %p428, %s427, 0
      %s430 = smul.u32 %s24, 16
      %s431 = sadd.s32 %s430, 16
      %p432 = scmp.lt.s32.totalorder %s431, 15
      %s433 = scalar_select %p432, %s431, 15
      %p434 = scmp.lt.s32.totalorder %s23, 1
      %s435 = scalar_select %p434, %s23, 1
      %p436 = scmp.lt.s32.totalorder %s433, 15
      %s437 = scalar_select %p436, %s433, 15
      %s438 = smul.addr %s437, 2
      %s439 = smul.addr %s435, 32
      %s440 = sadd.s32 %s438, %s439
      %s441 = smul.addr %s440, 8
      %s442 = scalar_lea.vmem %s2, %s441
      %s443 = smul.u32 %s24, 16
      %s444 = sadd.s32 %s443, 16
      %p445 = scmp.lt.s32.totalorder %s444, 15
      %s446 = scalar_select %p445, %s444, 15
      %s447 = smul.u32 32, %s24
      %p448 = scmp.lt.s32.totalorder %s23, 1
      %s449 = scalar_select %p448, %s23, 1
      %p450 = scmp.lt.s32.totalorder %s447, 31
      %s451 = scalar_select %p450, %s447, 31
      %s452 = smul.addr %s449, 32
      %s453 = sadd.s32 %s451, %s452
      %s454 = smul.addr %s453, 8
      %s455 = scalar_lea.vmem %s6, %s454
      %s456 = smul.u32 32, %s24
      %p457 = scmp.lt.s32.totalorder %s23, 1
      %s458 = scalar_select %p457, %s23, 1
      %p459 = scmp.lt.s32.totalorder %s24, 0
      %s460 = scalar_select %p459, %s24, 0
      %s461 = sadd.s32 %s460, %s458
      %s462 = smul.addr %s461, 2
      %s463 = scalar_lea.vmem %s7, %s462
      %vm464 = vcmask 57344
      %465 = vst.msk [vmem:[#allocation2] sm:$0x1] %vm464, 0.0
      %466 = vst.msk [vmem:[#allocation2 + $0x18] sm:$0x1] %vm464, 0.0
      %467 = vst.msk [vmem:[#allocation2 + $0x30] sm:$0x1] %vm464, 0.0
      %468 = vst.msk [vmem:[#allocation2 + $0x48] sm:$0x1] %vm464, 0.0
      %469 = vst.msk [vmem:[#allocation2 + $0x60] sm:$0x1] %vm464, 0.0
      %470 = vst.msk [vmem:[#allocation2 + $0x78] sm:$0x1] %vm464, 0.0
      %471 = vst.msk [vmem:[#allocation2 + $0x90] sm:$0x1] %vm464, 0.0
      %472 = vst.msk [vmem:[#allocation2 + $0xa8] sm:$0x1] %vm464, 0.0
      %473 = vst.msk [vmem:[#allocation2 + $0xc0] sm:$0x1] %vm464, 0.0
      %474 = vst.msk [vmem:[#allocation2 + $0xd8] sm:$0x1] %vm464, 0.0
      %475 = vst.msk [vmem:[#allocation2 + $0xf0] sm:$0x1] %vm464, 0.0
      %476 = vst.msk [vmem:[#allocation2 + $0x108] sm:$0x1] %vm464, 0.0
      %477 = vst.msk [vmem:[#allocation2 + $0x120] sm:$0x1] %vm464, 0.0
      %478 = vst.msk [vmem:[#allocation2 + $0x138] sm:$0x1] %vm464, 0.0
      %479 = vst.msk [vmem:[#allocation2 + $0x150] sm:$0x1] %vm464, 0.0
      %480 = vst.msk [vmem:[#allocation2 + $0x168] sm:$0x1] %vm464, 0.0
      %481 = vst.msk [vmem:[#allocation2 + $0x180] sm:$0x1] %vm464, 0.0
      %482 = vst.msk [vmem:[#allocation2 + $0x198] sm:$0x1] %vm464, 0.0
      %483 = vst.msk [vmem:[#allocation2 + $0x11] sm:$0x1] %vm464, 0.0
      %484 = vst.msk [vmem:[#allocation2 + $0x29] sm:$0x1] %vm464, 0.0
      %485 = vst.msk [vmem:[#allocation2 + $0x41] sm:$0x1] %vm464, 0.0
      %486 = vst.msk [vmem:[#allocation2 + $0x59] sm:$0x1] %vm464, 0.0
      %487 = vst.msk [vmem:[#allocation2 + $0x71] sm:$0x1] %vm464, 0.0
      %488 = vst.msk [vmem:[#allocation2 + $0x89] sm:$0x1] %vm464, 0.0
      %489 = vst.msk [vmem:[#allocation2 + $0xa1] sm:$0x1] %vm464, 0.0
      %490 = vst.msk [vmem:[#allocation2 + $0xb9] sm:$0x1] %vm464, 0.0
      %491 = vst.msk [vmem:[#allocation2 + $0xd1] sm:$0x1] %vm464, 0.0
      %492 = vst.msk [vmem:[#allocation2 + $0xe9] sm:$0x1] %vm464, 0.0
      %493 = vst.msk [vmem:[#allocation2 + $0x101] sm:$0x1] %vm464, 0.0
      %494 = vst.msk [vmem:[#allocation2 + $0x119] sm:$0x1] %vm464, 0.0
      %495 = vst.msk [vmem:[#allocation2 + $0x131] sm:$0x1] %vm464, 0.0
      %496 = vst.msk [vmem:[#allocation2 + $0x149] sm:$0x1] %vm464, 0.0
      %497 = vst.msk [vmem:[#allocation2 + $0x161] sm:$0x1] %vm464, 0.0
      %498 = vst.msk [vmem:[#allocation2 + $0x179] sm:$0x1] %vm464, 0.0
      %499 = vst.msk [vmem:[#allocation2 + $0x191] sm:$0x1] %vm464, 0.0
      %500 = vst.msk [vmem:[#allocation2 + $0x1a9] sm:$0x1] %vm464, 0.0
      %v501 = vld [vmem:[%s425] sm:$0xff]
      %v502 = vld [vmem:[%s425 + $0x8] sm:$0xff]
      %v503 = vld [vmem:[%s3] sm:$0x1]
      %v505 = vperm.slane %v503, 0
      %v507 = vmul.f32 %v501, %v505
      %v508 = vmul.f32 %v502, %v505
      %v509 = vld [vmem:[%s4] sm:$0x1]
      %v511 = vperm.slane %v509, 0
      %v513 = vadd.f32 %v507, %v511
      %v514 = vadd.f32 %v508, %v511
      %v515 = vmax.f32 %v513, 0.0
      %v516 = vmax.f32 %v514, 0.0
      %vm517 = vcmask 64512
      %518 = vst.msk [vmem:[#allocation2 + $0x1] sm:$0xff] %vm517, %v515
      %519 = vst.msk [vmem:[#allocation2 + $0x9] sm:$0xff] %vm517, %v516
      %v520 = vld [vmem:[%s411] sm:$0xff]
      %v521 = vld [vmem:[%s411 + $0x8] sm:$0xff]
      %v522 = vld [vmem:[%s411 + $0x10] sm:$0xff]
      %v523 = vld [vmem:[%s411 + $0x18] sm:$0xff]
      %v524 = vld [vmem:[%s411 + $0x20] sm:$0xff]
      %v525 = vld [vmem:[%s411 + $0x28] sm:$0xff]
      %v526 = vld [vmem:[%s411 + $0x30] sm:$0xff]
      %v527 = vld [vmem:[%s411 + $0x38] sm:$0xff]
      %v528 = vld [vmem:[%s411 + $0x40] sm:$0xff]
      %v529 = vld [vmem:[%s411 + $0x48] sm:$0xff]
      %v530 = vld [vmem:[%s411 + $0x50] sm:$0xff]
      %v531 = vld [vmem:[%s411 + $0x58] sm:$0xff]
      %v532 = vld [vmem:[%s411 + $0x60] sm:$0xff]
      %v533 = vld [vmem:[%s411 + $0x68] sm:$0xff]
      %v534 = vld [vmem:[%s411 + $0x70] sm:$0xff]
      %v535 = vld [vmem:[%s411 + $0x78] sm:$0xff]
      %v536 = vld [vmem:[%s411 + $0x80] sm:$0xff]
      %v537 = vld [vmem:[%s411 + $0x88] sm:$0xff]
      %v538 = vld [vmem:[%s411 + $0x90] sm:$0xff]
      %v539 = vld [vmem:[%s411 + $0x98] sm:$0xff]
      %v540 = vld [vmem:[%s411 + $0xa0] sm:$0xff]
      %v541 = vld [vmem:[%s411 + $0xa8] sm:$0xff]
      %v542 = vld [vmem:[%s411 + $0xb0] sm:$0xff]
      %v543 = vld [vmem:[%s411 + $0xb8] sm:$0xff]
      %v544 = vld [vmem:[%s411 + $0xc0] sm:$0xff]
      %v545 = vld [vmem:[%s411 + $0xc8] sm:$0xff]
      %v546 = vld [vmem:[%s411 + $0xd0] sm:$0xff]
      %v547 = vld [vmem:[%s411 + $0xd8] sm:$0xff]
      %v548 = vld [vmem:[%s411 + $0xe0] sm:$0xff]
      %v549 = vld [vmem:[%s411 + $0xe8] sm:$0xff]
      %v550 = vld [vmem:[%s411 + $0xf0] sm:$0xff]
      %v551 = vld [vmem:[%s411 + $0xf8] sm:$0xff]
      %v552 = vld [vmem:[%s3] sm:$0x1]
      %v554 = vperm.slane %v552, 0
      %v556 = vmul.f32 %v520, %v554
      %v557 = vmul.f32 %v521, %v554
      %v558 = vmul.f32 %v522, %v554
      %v559 = vmul.f32 %v523, %v554
      %v560 = vmul.f32 %v524, %v554
      %v561 = vmul.f32 %v525, %v554
      %v562 = vmul.f32 %v526, %v554
      %v563 = vmul.f32 %v527, %v554
      %v564 = vmul.f32 %v528, %v554
      %v565 = vmul.f32 %v529, %v554
      %v566 = vmul.f32 %v530, %v554
      %v567 = vmul.f32 %v531, %v554
      %v568 = vmul.f32 %v532, %v554
      %v569 = vmul.f32 %v533, %v554
      %v570 = vmul.f32 %v534, %v554
      %v571 = vmul.f32 %v535, %v554
      %v572 = vmul.f32 %v536, %v554
      %v573 = vmul.f32 %v537, %v554
      %v574 = vmul.f32 %v538, %v554
      %v575 = vmul.f32 %v539, %v554
      %v576 = vmul.f32 %v540, %v554
      %v577 = vmul.f32 %v541, %v554
      %v578 = vmul.f32 %v542, %v554
      %v579 = vmul.f32 %v543, %v554
      %v580 = vmul.f32 %v544, %v554
      %v581 = vmul.f32 %v545, %v554
      %v582 = vmul.f32 %v546, %v554
      %v583 = vmul.f32 %v547, %v554
      %v584 = vmul.f32 %v548, %v554
      %v585 = vmul.f32 %v549, %v554
      %v586 = vmul.f32 %v550, %v554
      %v587 = vmul.f32 %v551, %v554
      %v588 = vld [vmem:[%s4] sm:$0x1]
      %v590 = vperm.slane %v588, 0
      %v592 = vadd.f32 %v556, %v590
      %v593 = vadd.f32 %v557, %v590
      %v594 = vadd.f32 %v558, %v590
      %v595 = vadd.f32 %v559, %v590
      %v596 = vadd.f32 %v560, %v590
      %v597 = vadd.f32 %v561, %v590
      %v598 = vadd.f32 %v562, %v590
      %v599 = vadd.f32 %v563, %v590
      %v600 = vadd.f32 %v564, %v590
      %v601 = vadd.f32 %v565, %v590
      %v602 = vadd.f32 %v566, %v590
      %v603 = vadd.f32 %v567, %v590
      %v604 = vadd.f32 %v568, %v590
      %v605 = vadd.f32 %v569, %v590
      %v606 = vadd.f32 %v570, %v590
      %v607 = vadd.f32 %v571, %v590
      %v608 = vadd.f32 %v572, %v590
      %v609 = vadd.f32 %v573, %v590
      %v610 = vadd.f32 %v574, %v590
      %v611 = vadd.f32 %v575, %v590
      %v612 = vadd.f32 %v576, %v590
      %v613 = vadd.f32 %v577, %v590
      %v614 = vadd.f32 %v578, %v590
      %v615 = vadd.f32 %v579, %v590
      %v616 = vadd.f32 %v580, %v590
      %v617 = vadd.f32 %v581, %v590
      %v618 = vadd.f32 %v582, %v590
      %v619 = vadd.f32 %v583, %v590
      %v620 = vadd.f32 %v584, %v590
      %v621 = vadd.f32 %v585, %v590
      %v622 = vadd.f32 %v586, %v590
      %v623 = vadd.f32 %v587, %v590
      %v624 = vmax.f32 %v592, 0.0
      %v625 = vmax.f32 %v593, 0.0
      %v626 = vmax.f32 %v594, 0.0
      %v627 = vmax.f32 %v595, 0.0
      %v628 = vmax.f32 %v596, 0.0
      %v629 = vmax.f32 %v597, 0.0
      %v630 = vmax.f32 %v598, 0.0
      %v631 = vmax.f32 %v599, 0.0
      %v632 = vmax.f32 %v600, 0.0
      %v633 = vmax.f32 %v601, 0.0
      %v634 = vmax.f32 %v602, 0.0
      %v635 = vmax.f32 %v603, 0.0
      %v636 = vmax.f32 %v604, 0.0
      %v637 = vmax.f32 %v605, 0.0
      %v638 = vmax.f32 %v606, 0.0
      %v639 = vmax.f32 %v607, 0.0
      %v640 = vmax.f32 %v608, 0.0
      %v641 = vmax.f32 %v609, 0.0
      %v642 = vmax.f32 %v610, 0.0
      %v643 = vmax.f32 %v611, 0.0
      %v644 = vmax.f32 %v612, 0.0
      %v645 = vmax.f32 %v613, 0.0
      %v646 = vmax.f32 %v614, 0.0
      %v647 = vmax.f32 %v615, 0.0
      %v648 = vmax.f32 %v616, 0.0
      %v649 = vmax.f32 %v617, 0.0
      %v650 = vmax.f32 %v618, 0.0
      %v651 = vmax.f32 %v619, 0.0
      %v652 = vmax.f32 %v620, 0.0
      %v653 = vmax.f32 %v621, 0.0
      %v654 = vmax.f32 %v622, 0.0
      %v655 = vmax.f32 %v623, 0.0
      %s656 = scalar_lea.vmem [#allocation2], 24
      %657 = vst.msk [vmem:[%s656 + $0x1] sm:$0xff] %vm517, %v624
      %658 = vst.msk [vmem:[%s656 + $0x9] sm:$0xff] %vm517, %v625
      %659 = vst.msk [vmem:[%s656 + $0x19] sm:$0xff] %vm517, %v626
      %660 = vst.msk [vmem:[%s656 + $0x21] sm:$0xff] %vm517, %v627
      %661 = vst.msk [vmem:[%s656 + $0x31] sm:$0xff] %vm517, %v628
      %662 = vst.msk [vmem:[%s656 + $0x39] sm:$0xff] %vm517, %v629
      %663 = vst.msk [vmem:[%s656 + $0x49] sm:$0xff] %vm517, %v630
      %664 = vst.msk [vmem:[%s656 + $0x51] sm:$0xff] %vm517, %v631
      %665 = vst.msk [vmem:[%s656 + $0x61] sm:$0xff] %vm517, %v632
      %666 = vst.msk [vmem:[%s656 + $0x69] sm:$0xff] %vm517, %v633
      %667 = vst.msk [vmem:[%s656 + $0x79] sm:$0xff] %vm517, %v634
      %668 = vst.msk [vmem:[%s656 + $0x81] sm:$0xff] %vm517, %v635
      %669 = vst.msk [vmem:[%s656 + $0x91] sm:$0xff] %vm517, %v636
      %670 = vst.msk [vmem:[%s656 + $0x99] sm:$0xff] %vm517, %v637
      %671 = vst.msk [vmem:[%s656 + $0xa9] sm:$0xff] %vm517, %v638
      %672 = vst.msk [vmem:[%s656 + $0xb1] sm:$0xff] %vm517, %v639
      %673 = vst.msk [vmem:[%s656 + $0xc1] sm:$0xff] %vm517, %v640
      %674 = vst.msk [vmem:[%s656 + $0xc9] sm:$0xff] %vm517, %v641
      %675 = vst.msk [vmem:[%s656 + $0xd9] sm:$0xff] %vm517, %v642
      %676 = vst.msk [vmem:[%s656 + $0xe1] sm:$0xff] %vm517, %v643
      %677 = vst.msk [vmem:[%s656 + $0xf1] sm:$0xff] %vm517, %v644
      %678 = vst.msk [vmem:[%s656 + $0xf9] sm:$0xff] %vm517, %v645
      %679 = vst.msk [vmem:[%s656 + $0x109] sm:$0xff] %vm517, %v646
      %680 = vst.msk [vmem:[%s656 + $0x111] sm:$0xff] %vm517, %v647
      %681 = vst.msk [vmem:[%s656 + $0x121] sm:$0xff] %vm517, %v648
      %682 = vst.msk [vmem:[%s656 + $0x129] sm:$0xff] %vm517, %v649
      %683 = vst.msk [vmem:[%s656 + $0x139] sm:$0xff] %vm517, %v650
      %684 = vst.msk [vmem:[%s656 + $0x141] sm:$0xff] %vm517, %v651
      %685 = vst.msk [vmem:[%s656 + $0x151] sm:$0xff] %vm517, %v652
      %686 = vst.msk [vmem:[%s656 + $0x159] sm:$0xff] %vm517, %v653
      %687 = vst.msk [vmem:[%s656 + $0x169] sm:$0xff] %vm517, %v654
      %688 = vst.msk [vmem:[%s656 + $0x171] sm:$0xff] %vm517, %v655
      %v689 = vld [vmem:[%s442] sm:$0xff]
      %v690 = vld [vmem:[%s442 + $0x8] sm:$0xff]
      %v691 = vld [vmem:[%s3] sm:$0x1]
      %v693 = vperm.slane %v691, 0
      %v695 = vmul.f32 %v689, %v693
      %v696 = vmul.f32 %v690, %v693
      %v697 = vld [vmem:[%s4] sm:$0x1]
      %v699 = vperm.slane %v697, 0
      %v701 = vadd.f32 %v695, %v699
      %v702 = vadd.f32 %v696, %v699
      %v703 = vmax.f32 %v701, 0.0
      %v704 = vmax.f32 %v702, 0.0
      %s705 = scalar_lea.vmem [#allocation2], 408
      %706 = vst.msk [vmem:[%s705 + $0x1] sm:$0xff] %vm517, %v703
      %707 = vst.msk [vmem:[%s705 + $0x9] sm:$0xff] %vm517, %v704
      %p708 = scmp.eq.s32.totalorder %s24, 0
      // Predicated region
      $region45: #{basic_block_forward.4} parent=43 // pred_check
        %p709 = pneg %p708
      $region46: #{basic_block_forward.4} parent=43 // pred_check_branch
        %711 = sbr.rel (%p709) target = $region48
      $region47: #{basic_block_forward.4} parent=43 // pred_region
        %712 = vst.msk [vmem:[#allocation2] sm:$0xff] %vm517, 0.0
        %713 = vst.msk [vmem:[#allocation2 + $0x8] sm:$0xff] %vm517, 0.0
        %vm714 = vcmask 58368
        %715 = vst.msk [vmem:[#allocation2 + $0x10] sm:$0x3] %vm714, 0.0
        %716 = vst.msk [vmem:[%s705] sm:$0xff] %vm517, 0.0
        %717 = vst.msk [vmem:[%s705 + $0x8] sm:$0xff] %vm517, 0.0
        %718 = vst.msk [vmem:[%s705 + $0x10] sm:$0x3] %vm714, 0.0
      $region48: #{basic_block_forward.4} parent=43 // pred_fallthru
        _
      %v719 = vld [vmem:[#allocation2] sm:$0xff]
      %v720 = vld [vmem:[#allocation2 + $0x8] sm:$0xff]
      %v721 = vld [vmem:[#allocation2 + $0x18] sm:$0xff]
      %v722 = vld [vmem:[#allocation2 + $0x20] sm:$0xff]
      %v723 = vld [vmem:[#allocation2 + $0x30] sm:$0xff]
      %v724 = vld [vmem:[#allocation2 + $0x38] sm:$0xff]
      %v725 = vld [vmem:[#allocation2 + $0x48] sm:$0xff]
      %v726 = vld [vmem:[#allocation2 + $0x50] sm:$0xff]
      %v727 = vld [vmem:[#allocation2 + $0x60] sm:$0xff]
      %v728 = vld [vmem:[#allocation2 + $0x68] sm:$0xff]
      %v729 = vld [vmem:[#allocation2 + $0x78] sm:$0xff]
      %v730 = vld [vmem:[#allocation2 + $0x80] sm:$0xff]
      %v731 = vld [vmem:[#allocation2 + $0x90] sm:$0xff]
      %v732 = vld [vmem:[#allocation2 + $0x98] sm:$0xff]
      %v733 = vld [vmem:[#allocation2 + $0xa8] sm:$0xff]
      %v734 = vld [vmem:[#allocation2 + $0xb0] sm:$0xff]
      %v735 = vld [vmem:[#allocation2 + $0xc0] sm:$0xff]
      %v736 = vld [vmem:[#allocation2 + $0xc8] sm:$0xff]
      %v737 = vld [vmem:[#allocation2 + $0xd8] sm:$0xff]
      %v738 = vld [vmem:[#allocation2 + $0xe0] sm:$0xff]
      %v739 = vld [vmem:[#allocation2 + $0xf0] sm:$0xff]
      %v740 = vld [vmem:[#allocation2 + $0xf8] sm:$0xff]
      %v741 = vld [vmem:[#allocation2 + $0x108] sm:$0xff]
      %v742 = vld [vmem:[#allocation2 + $0x110] sm:$0xff]
      %v743 = vld [vmem:[#allocation2 + $0x120] sm:$0xff]
      %v744 = vld [vmem:[#allocation2 + $0x128] sm:$0xff]
      %v745 = vld [vmem:[#allocation2 + $0x138] sm:$0xff]
      %v746 = vld [vmem:[#allocation2 + $0x140] sm:$0xff]
      %v747 = vld [vmem:[#allocation2 + $0x150] sm:$0xff]
      %v748 = vld [vmem:[#allocation2 + $0x158] sm:$0xff]
      %v749 = vld [vmem:[#allocation2 + $0x168] sm:$0xff]
      %v750 = vld [vmem:[#allocation2 + $0x170] sm:$0xff]
      %751 = vst.msk [vmem:[#allocation3] sm:$0xff] %vm517, %v719
      %752 = vst.msk [vmem:[#allocation3 + $0x8] sm:$0xff] %vm517, %v720
      %753 = vst.msk [vmem:[#allocation3 + $0x10] sm:$0xff] %vm517, %v721
      %754 = vst.msk [vmem:[#allocation3 + $0x18] sm:$0xff] %vm517, %v722
      %755 = vst.msk [vmem:[#allocation3 + $0x20] sm:$0xff] %vm517, %v723
      %756 = vst.msk [vmem:[#allocation3 + $0x28] sm:$0xff] %vm517, %v724
      %757 = vst.msk [vmem:[#allocation3 + $0x30] sm:$0xff] %vm517, %v725
      %758 = vst.msk [vmem:[#allocation3 + $0x38] sm:$0xff] %vm517, %v726
      %759 = vst.msk [vmem:[#allocation3 + $0x40] sm:$0xff] %vm517, %v727
      %760 = vst.msk [vmem:[#allocation3 + $0x48] sm:$0xff] %vm517, %v728
      %761 = vst.msk [vmem:[#allocation3 + $0x50] sm:$0xff] %vm517, %v729
      %762 = vst.msk [vmem:[#allocation3 + $0x58] sm:$0xff] %vm517, %v730
      %763 = vst.msk [vmem:[#allocation3 + $0x60] sm:$0xff] %vm517, %v731
      %764 = vst.msk [vmem:[#allocation3 + $0x68] sm:$0xff] %vm517, %v732
      %765 = vst.msk [vmem:[#allocation3 + $0x70] sm:$0xff] %vm517, %v733
      %766 = vst.msk [vmem:[#allocation3 + $0x78] sm:$0xff] %vm517, %v734
      %767 = vst.msk [vmem:[#allocation3 + $0x80] sm:$0xff] %vm517, %v735
      %768 = vst.msk [vmem:[#allocation3 + $0x88] sm:$0xff] %vm517, %v736
      %769 = vst.msk [vmem:[#allocation3 + $0x90] sm:$0xff] %vm517, %v737
      %770 = vst.msk [vmem:[#allocation3 + $0x98] sm:$0xff] %vm517, %v738
      %771 = vst.msk [vmem:[#allocation3 + $0xa0] sm:$0xff] %vm517, %v739
      %772 = vst.msk [vmem:[#allocation3 + $0xa8] sm:$0xff] %vm517, %v740
      %773 = vst.msk [vmem:[#allocation3 + $0xb0] sm:$0xff] %vm517, %v741
      %774 = vst.msk [vmem:[#allocation3 + $0xb8] sm:$0xff] %vm517, %v742
      %775 = vst.msk [vmem:[#allocation3 + $0xc0] sm:$0xff] %vm517, %v743
      %776 = vst.msk [vmem:[#allocation3 + $0xc8] sm:$0xff] %vm517, %v744
      %777 = vst.msk [vmem:[#allocation3 + $0xd0] sm:$0xff] %vm517, %v745
      %778 = vst.msk [vmem:[#allocation3 + $0xd8] sm:$0xff] %vm517, %v746
      %779 = vst.msk [vmem:[#allocation3 + $0xe0] sm:$0xff] %vm517, %v747
      %780 = vst.msk [vmem:[#allocation3 + $0xe8] sm:$0xff] %vm517, %v748
      %781 = vst.msk [vmem:[#allocation3 + $0xf0] sm:$0xff] %vm517, %v749
      %782 = vst.msk [vmem:[#allocation3 + $0xf8] sm:$0xff] %vm517, %v750
      %v783 = vld [vmem:[#allocation2 + $0x1] sm:$0xff]
      %v784 = vld [vmem:[#allocation2 + $0x9] sm:$0xff]
      %v785 = vld [vmem:[#allocation2 + $0x19] sm:$0xff]
      %v786 = vld [vmem:[#allocation2 + $0x21] sm:$0xff]
      %v787 = vld [vmem:[#allocation2 + $0x31] sm:$0xff]
      %v788 = vld [vmem:[#allocation2 + $0x39] sm:$0xff]
      %v789 = vld [vmem:[#allocation2 + $0x49] sm:$0xff]
      %v790 = vld [vmem:[#allocation2 + $0x51] sm:$0xff]
      %v791 = vld [vmem:[#allocation2 + $0x61] sm:$0xff]
      %v792 = vld [vmem:[#allocation2 + $0x69] sm:$0xff]
      %v793 = vld [vmem:[#allocation2 + $0x79] sm:$0xff]
      %v794 = vld [vmem:[#allocation2 + $0x81] sm:$0xff]
      %v795 = vld [vmem:[#allocation2 + $0x91] sm:$0xff]
      %v796 = vld [vmem:[#allocation2 + $0x99] sm:$0xff]
      %v797 = vld [vmem:[#allocation2 + $0xa9] sm:$0xff]
      %v798 = vld [vmem:[#allocation2 + $0xb1] sm:$0xff]
      %v799 = vld [vmem:[#allocation2 + $0xc1] sm:$0xff]
      %v800 = vld [vmem:[#allocation2 + $0xc9] sm:$0xff]
      %v801 = vld [vmem:[#allocation2 + $0xd9] sm:$0xff]
      %v802 = vld [vmem:[#allocation2 + $0xe1] sm:$0xff]
      %v803 = vld [vmem:[#allocation2 + $0xf1] sm:$0xff]
      %v804 = vld [vmem:[#allocation2 + $0xf9] sm:$0xff]
      %v805 = vld [vmem:[#allocation2 + $0x109] sm:$0xff]
      %v806 = vld [vmem:[#allocation2 + $0x111] sm:$0xff]
      %v807 = vld [vmem:[#allocation2 + $0x121] sm:$0xff]
      %v808 = vld [vmem:[#allocation2 + $0x129] sm:$0xff]
      %v809 = vld [vmem:[#allocation2 + $0x139] sm:$0xff]
      %v810 = vld [vmem:[#allocation2 + $0x141] sm:$0xff]
      %v811 = vld [vmem:[#allocation2 + $0x151] sm:$0xff]
      %v812 = vld [vmem:[#allocation2 + $0x159] sm:$0xff]
      %v813 = vld [vmem:[#allocation2 + $0x169] sm:$0xff]
      %v814 = vld [vmem:[#allocation2 + $0x171] sm:$0xff]
      %847 = vrot.lane.b32.xlu0 %v783, 8
      %v848 = vpop.permute.xlu0 %847
      %849 = vrot.lane.b32.xlu0 %v784, 8
      %v850 = vpop.permute.xlu0 %849
      %851 = vrot.lane.b32.xlu0 %v785, 8
      %v852 = vpop.permute.xlu0 %851
      %853 = vrot.lane.b32.xlu0 %v786, 8
      %v854 = vpop.permute.xlu0 %853
      %855 = vrot.lane.b32.xlu0 %v787, 8
      %v856 = vpop.permute.xlu0 %855
      %857 = vrot.lane.b32.xlu0 %v788, 8
      %v858 = vpop.permute.xlu0 %857
      %859 = vrot.lane.b32.xlu0 %v789, 8
      %v860 = vpop.permute.xlu0 %859
      %861 = vrot.lane.b32.xlu0 %v790, 8
      %v862 = vpop.permute.xlu0 %861
      %863 = vrot.lane.b32.xlu0 %v791, 8
      %v864 = vpop.permute.xlu0 %863
      %865 = vrot.lane.b32.xlu0 %v792, 8
      %v866 = vpop.permute.xlu0 %865
      %867 = vrot.lane.b32.xlu0 %v793, 8
      %v868 = vpop.permute.xlu0 %867
      %869 = vrot.lane.b32.xlu0 %v794, 8
      %v870 = vpop.permute.xlu0 %869
      %871 = vrot.lane.b32.xlu0 %v795, 8
      %v872 = vpop.permute.xlu0 %871
      %873 = vrot.lane.b32.xlu0 %v796, 8
      %v874 = vpop.permute.xlu0 %873
      %875 = vrot.lane.b32.xlu0 %v797, 8
      %v876 = vpop.permute.xlu0 %875
      %877 = vrot.lane.b32.xlu0 %v798, 8
      %v878 = vpop.permute.xlu0 %877
      %879 = vrot.lane.b32.xlu0 %v799, 8
      %v880 = vpop.permute.xlu0 %879
      %881 = vrot.lane.b32.xlu0 %v800, 8
      %v882 = vpop.permute.xlu0 %881
      %883 = vrot.lane.b32.xlu0 %v801, 8
      %v884 = vpop.permute.xlu0 %883
      %885 = vrot.lane.b32.xlu0 %v802, 8
      %v886 = vpop.permute.xlu0 %885
      %887 = vrot.lane.b32.xlu0 %v803, 8
      %v888 = vpop.permute.xlu0 %887
      %889 = vrot.lane.b32.xlu0 %v804, 8
      %v890 = vpop.permute.xlu0 %889
      %891 = vrot.lane.b32.xlu0 %v805, 8
      %v892 = vpop.permute.xlu0 %891
      %893 = vrot.lane.b32.xlu0 %v806, 8
      %v894 = vpop.permute.xlu0 %893
      %895 = vrot.lane.b32.xlu0 %v807, 8
      %v896 = vpop.permute.xlu0 %895
      %897 = vrot.lane.b32.xlu0 %v808, 8
      %v898 = vpop.permute.xlu0 %897
      %899 = vrot.lane.b32.xlu0 %v809, 8
      %v900 = vpop.permute.xlu0 %899
      %901 = vrot.lane.b32.xlu0 %v810, 8
      %v902 = vpop.permute.xlu0 %901
      %903 = vrot.lane.b32.xlu0 %v811, 8
      %v904 = vpop.permute.xlu0 %903
      %905 = vrot.lane.b32.xlu0 %v812, 8
      %v906 = vpop.permute.xlu0 %905
      %907 = vrot.lane.b32.xlu0 %v813, 8
      %v908 = vpop.permute.xlu0 %907
      %909 = vrot.lane.b32.xlu0 %v814, 8
      %v910 = vpop.permute.xlu0 %909
      %vm943 = vcmask 130112
      %944 = vst.msk [vmem:[#allocation3] sm:$0xff] %vm943, %v848
      %945 = vst.msk [vmem:[#allocation3 + $0x8] sm:$0xff] %vm943, %v850
      %946 = vst.msk [vmem:[#allocation3 + $0x10] sm:$0xff] %vm943, %v852
      %947 = vst.msk [vmem:[#allocation3 + $0x18] sm:$0xff] %vm943, %v854
      %948 = vst.msk [vmem:[#allocation3 + $0x20] sm:$0xff] %vm943, %v856
      %949 = vst.msk [vmem:[#allocation3 + $0x28] sm:$0xff] %vm943, %v858
      %950 = vst.msk [vmem:[#allocation3 + $0x30] sm:$0xff] %vm943, %v860
      %951 = vst.msk [vmem:[#allocation3 + $0x38] sm:$0xff] %vm943, %v862
      %952 = vst.msk [vmem:[#allocation3 + $0x40] sm:$0xff] %vm943, %v864
      %953 = vst.msk [vmem:[#allocation3 + $0x48] sm:$0xff] %vm943, %v866
      %954 = vst.msk [vmem:[#allocation3 + $0x50] sm:$0xff] %vm943, %v868
      %955 = vst.msk [vmem:[#allocation3 + $0x58] sm:$0xff] %vm943, %v870
      %956 = vst.msk [vmem:[#allocation3 + $0x60] sm:$0xff] %vm943, %v872
      %957 = vst.msk [vmem:[#allocation3 + $0x68] sm:$0xff] %vm943, %v874
      %958 = vst.msk [vmem:[#allocation3 + $0x70] sm:$0xff] %vm943, %v876
      %959 = vst.msk [vmem:[#allocation3 + $0x78] sm:$0xff] %vm943, %v878
      %960 = vst.msk [vmem:[#allocation3 + $0x80] sm:$0xff] %vm943, %v880
      %961 = vst.msk [vmem:[#allocation3 + $0x88] sm:$0xff] %vm943, %v882
      %962 = vst.msk [vmem:[#allocation3 + $0x90] sm:$0xff] %vm943, %v884
      %963 = vst.msk [vmem:[#allocation3 + $0x98] sm:$0xff] %vm943, %v886
      %964 = vst.msk [vmem:[#allocation3 + $0xa0] sm:$0xff] %vm943, %v888
      %965 = vst.msk [vmem:[#allocation3 + $0xa8] sm:$0xff] %vm943, %v890
      %966 = vst.msk [vmem:[#allocation3 + $0xb0] sm:$0xff] %vm943, %v892
      %967 = vst.msk [vmem:[#allocation3 + $0xb8] sm:$0xff] %vm943, %v894
      %968 = vst.msk [vmem:[#allocation3 + $0xc0] sm:$0xff] %vm943, %v896
      %969 = vst.msk [vmem:[#allocation3 + $0xc8] sm:$0xff] %vm943, %v898
      %970 = vst.msk [vmem:[#allocation3 + $0xd0] sm:$0xff] %vm943, %v900
      %971 = vst.msk [vmem:[#allocation3 + $0xd8] sm:$0xff] %vm943, %v902
      %972 = vst.msk [vmem:[#allocation3 + $0xe0] sm:$0xff] %vm943, %v904
      %973 = vst.msk [vmem:[#allocation3 + $0xe8] sm:$0xff] %vm943, %v906
      %974 = vst.msk [vmem:[#allocation3 + $0xf0] sm:$0xff] %vm943, %v908
      %975 = vst.msk [vmem:[#allocation3 + $0xf8] sm:$0xff] %vm943, %v910
      %v976 = vld [vmem:[#allocation2 + $0x2] sm:$0xff]
      %v977 = vld [vmem:[#allocation2 + $0xa] sm:$0xff]
      %v978 = vld [vmem:[#allocation2 + $0x1a] sm:$0xff]
      %v979 = vld [vmem:[#allocation2 + $0x22] sm:$0xff]
      %v980 = vld [vmem:[#allocation2 + $0x32] sm:$0xff]
      %v981 = vld [vmem:[#allocation2 + $0x3a] sm:$0xff]
      %v982 = vld [vmem:[#allocation2 + $0x4a] sm:$0xff]
      %v983 = vld [vmem:[#allocation2 + $0x52] sm:$0xff]
      %v984 = vld [vmem:[#allocation2 + $0x62] sm:$0xff]
      %v985 = vld [vmem:[#allocation2 + $0x6a] sm:$0xff]
      %v986 = vld [vmem:[#allocation2 + $0x7a] sm:$0xff]
      %v987 = vld [vmem:[#allocation2 + $0x82] sm:$0xff]
      %v988 = vld [vmem:[#allocation2 + $0x92] sm:$0xff]
      %v989 = vld [vmem:[#allocation2 + $0x9a] sm:$0xff]
      %v990 = vld [vmem:[#allocation2 + $0xaa] sm:$0xff]
      %v991 = vld [vmem:[#allocation2 + $0xb2] sm:$0xff]
      %v992 = vld [vmem:[#allocation2 + $0xc2] sm:$0xff]
      %v993 = vld [vmem:[#allocation2 + $0xca] sm:$0xff]
      %v994 = vld [vmem:[#allocation2 + $0xda] sm:$0xff]
      %v995 = vld [vmem:[#allocation2 + $0xe2] sm:$0xff]
      %v996 = vld [vmem:[#allocation2 + $0xf2] sm:$0xff]
      %v997 = vld [vmem:[#allocation2 + $0xfa] sm:$0xff]
      %v998 = vld [vmem:[#allocation2 + $0x10a] sm:$0xff]
      %v999 = vld [vmem:[#allocation2 + $0x112] sm:$0xff]
      %v1000 = vld [vmem:[#allocation2 + $0x122] sm:$0xff]
      %v1001 = vld [vmem:[#allocation2 + $0x12a] sm:$0xff]
      %v1002 = vld [vmem:[#allocation2 + $0x13a] sm:$0xff]
      %v1003 = vld [vmem:[#allocation2 + $0x142] sm:$0xff]
      %v1004 = vld [vmem:[#allocation2 + $0x152] sm:$0xff]
      %v1005 = vld [vmem:[#allocation2 + $0x15a] sm:$0xff]
      %v1006 = vld [vmem:[#allocation2 + $0x16a] sm:$0xff]
      %v1007 = vld [vmem:[#allocation2 + $0x172] sm:$0xff]
      %1040 = vrot.lane.b32.xlu0 %v976, 16
      %v1041 = vpop.permute.xlu0 %1040
      %1042 = vrot.lane.b32.xlu0 %v977, 16
      %v1043 = vpop.permute.xlu0 %1042
      %1044 = vrot.lane.b32.xlu0 %v978, 16
      %v1045 = vpop.permute.xlu0 %1044
      %1046 = vrot.lane.b32.xlu0 %v979, 16
      %v1047 = vpop.permute.xlu0 %1046
      %1048 = vrot.lane.b32.xlu0 %v980, 16
      %v1049 = vpop.permute.xlu0 %1048
      %1050 = vrot.lane.b32.xlu0 %v981, 16
      %v1051 = vpop.permute.xlu0 %1050
      %1052 = vrot.lane.b32.xlu0 %v982, 16
      %v1053 = vpop.permute.xlu0 %1052
      %1054 = vrot.lane.b32.xlu0 %v983, 16
      %v1055 = vpop.permute.xlu0 %1054
      %1056 = vrot.lane.b32.xlu0 %v984, 16
      %v1057 = vpop.permute.xlu0 %1056
      %1058 = vrot.lane.b32.xlu0 %v985, 16
      %v1059 = vpop.permute.xlu0 %1058
      %1060 = vrot.lane.b32.xlu0 %v986, 16
      %v1061 = vpop.permute.xlu0 %1060
      %1062 = vrot.lane.b32.xlu0 %v987, 16
      %v1063 = vpop.permute.xlu0 %1062
      %1064 = vrot.lane.b32.xlu0 %v988, 16
      %v1065 = vpop.permute.xlu0 %1064
      %1066 = vrot.lane.b32.xlu0 %v989, 16
      %v1067 = vpop.permute.xlu0 %1066
      %1068 = vrot.lane.b32.xlu0 %v990, 16
      %v1069 = vpop.permute.xlu0 %1068
      %1070 = vrot.lane.b32.xlu0 %v991, 16
      %v1071 = vpop.permute.xlu0 %1070
      %1072 = vrot.lane.b32.xlu0 %v992, 16
      %v1073 = vpop.permute.xlu0 %1072
      %1074 = vrot.lane.b32.xlu0 %v993, 16
      %v1075 = vpop.permute.xlu0 %1074
      %1076 = vrot.lane.b32.xlu0 %v994, 16
      %v1077 = vpop.permute.xlu0 %1076
      %1078 = vrot.lane.b32.xlu0 %v995, 16
      %v1079 = vpop.permute.xlu0 %1078
      %1080 = vrot.lane.b32.xlu0 %v996, 16
      %v1081 = vpop.permute.xlu0 %1080
      %1082 = vrot.lane.b32.xlu0 %v997, 16
      %v1083 = vpop.permute.xlu0 %1082
      %1084 = vrot.lane.b32.xlu0 %v998, 16
      %v1085 = vpop.permute.xlu0 %1084
      %1086 = vrot.lane.b32.xlu0 %v999, 16
      %v1087 = vpop.permute.xlu0 %1086
      %1088 = vrot.lane.b32.xlu0 %v1000, 16
      %v1089 = vpop.permute.xlu0 %1088
      %1090 = vrot.lane.b32.xlu0 %v1001, 16
      %v1091 = vpop.permute.xlu0 %1090
      %1092 = vrot.lane.b32.xlu0 %v1002, 16
      %v1093 = vpop.permute.xlu0 %1092
      %1094 = vrot.lane.b32.xlu0 %v1003, 16
      %v1095 = vpop.permute.xlu0 %1094
      %1096 = vrot.lane.b32.xlu0 %v1004, 16
      %v1097 = vpop.permute.xlu0 %1096
      %1098 = vrot.lane.b32.xlu0 %v1005, 16
      %v1099 = vpop.permute.xlu0 %1098
      %1100 = vrot.lane.b32.xlu0 %v1006, 16
      %v1101 = vpop.permute.xlu0 %1100
      %1102 = vrot.lane.b32.xlu0 %v1007, 16
      %v1103 = vpop.permute.xlu0 %1102
      %vm1136 = vcmask 195712
      %1137 = vst.msk [vmem:[#allocation3] sm:$0xff] %vm1136, %v1041
      %1138 = vst.msk [vmem:[#allocation3 + $0x8] sm:$0xff] %vm1136, %v1043
      %1139 = vst.msk [vmem:[#allocation3 + $0x10] sm:$0xff] %vm1136, %v1045
      %1140 = vst.msk [vmem:[#allocation3 + $0x18] sm:$0xff] %vm1136, %v1047
      %1141 = vst.msk [vmem:[#allocation3 + $0x20] sm:$0xff] %vm1136, %v1049
      %1142 = vst.msk [vmem:[#allocation3 + $0x28] sm:$0xff] %vm1136, %v1051
      %1143 = vst.msk [vmem:[#allocation3 + $0x30] sm:$0xff] %vm1136, %v1053
      %1144 = vst.msk [vmem:[#allocation3 + $0x38] sm:$0xff] %vm1136, %v1055
      %1145 = vst.msk [vmem:[#allocation3 + $0x40] sm:$0xff] %vm1136, %v1057
      %1146 = vst.msk [vmem:[#allocation3 + $0x48] sm:$0xff] %vm1136, %v1059
      %1147 = vst.msk [vmem:[#allocation3 + $0x50] sm:$0xff] %vm1136, %v1061
      %1148 = vst.msk [vmem:[#allocation3 + $0x58] sm:$0xff] %vm1136, %v1063
      %1149 = vst.msk [vmem:[#allocation3 + $0x60] sm:$0xff] %vm1136, %v1065
      %1150 = vst.msk [vmem:[#allocation3 + $0x68] sm:$0xff] %vm1136, %v1067
      %1151 = vst.msk [vmem:[#allocation3 + $0x70] sm:$0xff] %vm1136, %v1069
      %1152 = vst.msk [vmem:[#allocation3 + $0x78] sm:$0xff] %vm1136, %v1071
      %1153 = vst.msk [vmem:[#allocation3 + $0x80] sm:$0xff] %vm1136, %v1073
      %1154 = vst.msk [vmem:[#allocation3 + $0x88] sm:$0xff] %vm1136, %v1075
      %1155 = vst.msk [vmem:[#allocation3 + $0x90] sm:$0xff] %vm1136, %v1077
      %1156 = vst.msk [vmem:[#allocation3 + $0x98] sm:$0xff] %vm1136, %v1079
      %1157 = vst.msk [vmem:[#allocation3 + $0xa0] sm:$0xff] %vm1136, %v1081
      %1158 = vst.msk [vmem:[#allocation3 + $0xa8] sm:$0xff] %vm1136, %v1083
      %1159 = vst.msk [vmem:[#allocation3 + $0xb0] sm:$0xff] %vm1136, %v1085
      %1160 = vst.msk [vmem:[#allocation3 + $0xb8] sm:$0xff] %vm1136, %v1087
      %1161 = vst.msk [vmem:[#allocation3 + $0xc0] sm:$0xff] %vm1136, %v1089
      %1162 = vst.msk [vmem:[#allocation3 + $0xc8] sm:$0xff] %vm1136, %v1091
      %1163 = vst.msk [vmem:[#allocation3 + $0xd0] sm:$0xff] %vm1136, %v1093
      %1164 = vst.msk [vmem:[#allocation3 + $0xd8] sm:$0xff] %vm1136, %v1095
      %1165 = vst.msk [vmem:[#allocation3 + $0xe0] sm:$0xff] %vm1136, %v1097
      %1166 = vst.msk [vmem:[#allocation3 + $0xe8] sm:$0xff] %vm1136, %v1099
      %1167 = vst.msk [vmem:[#allocation3 + $0xf0] sm:$0xff] %vm1136, %v1101
      %1168 = vst.msk [vmem:[#allocation3 + $0xf8] sm:$0xff] %vm1136, %v1103
      %v1169 = vld [vmem:[%s656] sm:$0xff]
      %v1170 = vld [vmem:[%s656 + $0x8] sm:$0xff]
      %v1171 = vld [vmem:[%s656 + $0x18] sm:$0xff]
      %v1172 = vld [vmem:[%s656 + $0x20] sm:$0xff]
      %v1173 = vld [vmem:[%s656 + $0x30] sm:$0xff]
      %v1174 = vld [vmem:[%s656 + $0x38] sm:$0xff]
      %v1175 = vld [vmem:[%s656 + $0x48] sm:$0xff]
      %v1176 = vld [vmem:[%s656 + $0x50] sm:$0xff]
      %v1177 = vld [vmem:[%s656 + $0x60] sm:$0xff]
      %v1178 = vld [vmem:[%s656 + $0x68] sm:$0xff]
      %v1179 = vld [vmem:[%s656 + $0x78] sm:$0xff]
      %v1180 = vld [vmem:[%s656 + $0x80] sm:$0xff]
      %v1181 = vld [vmem:[%s656 + $0x90] sm:$0xff]
      %v1182 = vld [vmem:[%s656 + $0x98] sm:$0xff]
      %v1183 = vld [vmem:[%s656 + $0xa8] sm:$0xff]
      %v1184 = vld [vmem:[%s656 + $0xb0] sm:$0xff]
      %v1185 = vld [vmem:[%s656 + $0xc0] sm:$0xff]
      %v1186 = vld [vmem:[%s656 + $0xc8] sm:$0xff]
      %v1187 = vld [vmem:[%s656 + $0xd8] sm:$0xff]
      %v1188 = vld [vmem:[%s656 + $0xe0] sm:$0xff]
      %v1189 = vld [vmem:[%s656 + $0xf0] sm:$0xff]
      %v1190 = vld [vmem:[%s656 + $0xf8] sm:$0xff]
      %v1191 = vld [vmem:[%s656 + $0x108] sm:$0xff]
      %v1192 = vld [vmem:[%s656 + $0x110] sm:$0xff]
      %v1193 = vld [vmem:[%s656 + $0x120] sm:$0xff]
      %v1194 = vld [vmem:[%s656 + $0x128] sm:$0xff]
      %v1195 = vld [vmem:[%s656 + $0x138] sm:$0xff]
      %v1196 = vld [vmem:[%s656 + $0x140] sm:$0xff]
      %v1197 = vld [vmem:[%s656 + $0x150] sm:$0xff]
      %v1198 = vld [vmem:[%s656 + $0x158] sm:$0xff]
      %v1199 = vld [vmem:[%s656 + $0x168] sm:$0xff]
      %v1200 = vld [vmem:[%s656 + $0x170] sm:$0xff]
      %1233 = vrot.lane.b32.xlu0 %v1169, 24
      %v1234 = vpop.permute.xlu0 %1233
      %1235 = vrot.lane.b32.xlu0 %v1170, 24
      %v1236 = vpop.permute.xlu0 %1235
      %1237 = vrot.lane.b32.xlu0 %v1171, 24
      %v1238 = vpop.permute.xlu0 %1237
      %1239 = vrot.lane.b32.xlu0 %v1172, 24
      %v1240 = vpop.permute.xlu0 %1239
      %1241 = vrot.lane.b32.xlu0 %v1173, 24
      %v1242 = vpop.permute.xlu0 %1241
      %1243 = vrot.lane.b32.xlu0 %v1174, 24
      %v1244 = vpop.permute.xlu0 %1243
      %1245 = vrot.lane.b32.xlu0 %v1175, 24
      %v1246 = vpop.permute.xlu0 %1245
      %1247 = vrot.lane.b32.xlu0 %v1176, 24
      %v1248 = vpop.permute.xlu0 %1247
      %1249 = vrot.lane.b32.xlu0 %v1177, 24
      %v1250 = vpop.permute.xlu0 %1249
      %1251 = vrot.lane.b32.xlu0 %v1178, 24
      %v1252 = vpop.permute.xlu0 %1251
      %1253 = vrot.lane.b32.xlu0 %v1179, 24
      %v1254 = vpop.permute.xlu0 %1253
      %1255 = vrot.lane.b32.xlu0 %v1180, 24
      %v1256 = vpop.permute.xlu0 %1255
      %1257 = vrot.lane.b32.xlu0 %v1181, 24
      %v1258 = vpop.permute.xlu0 %1257
      %1259 = vrot.lane.b32.xlu0 %v1182, 24
      %v1260 = vpop.permute.xlu0 %1259
      %1261 = vrot.lane.b32.xlu0 %v1183, 24
      %v1262 = vpop.permute.xlu0 %1261
      %1263 = vrot.lane.b32.xlu0 %v1184, 24
      %v1264 = vpop.permute.xlu0 %1263
      %1265 = vrot.lane.b32.xlu0 %v1185, 24
      %v1266 = vpop.permute.xlu0 %1265
      %1267 = vrot.lane.b32.xlu0 %v1186, 24
      %v1268 = vpop.permute.xlu0 %1267
      %1269 = vrot.lane.b32.xlu0 %v1187, 24
      %v1270 = vpop.permute.xlu0 %1269
      %1271 = vrot.lane.b32.xlu0 %v1188, 24
      %v1272 = vpop.permute.xlu0 %1271
      %1273 = vrot.lane.b32.xlu0 %v1189, 24
      %v1274 = vpop.permute.xlu0 %1273
      %1275 = vrot.lane.b32.xlu0 %v1190, 24
      %v1276 = vpop.permute.xlu0 %1275
      %1277 = vrot.lane.b32.xlu0 %v1191, 24
      %v1278 = vpop.permute.xlu0 %1277
      %1279 = vrot.lane.b32.xlu0 %v1192, 24
      %v1280 = vpop.permute.xlu0 %1279
      %1281 = vrot.lane.b32.xlu0 %v1193, 24
      %v1282 = vpop.permute.xlu0 %1281
      %1283 = vrot.lane.b32.xlu0 %v1194, 24
      %v1284 = vpop.permute.xlu0 %1283
      %1285 = vrot.lane.b32.xlu0 %v1195, 24
      %v1286 = vpop.permute.xlu0 %1285
      %1287 = vrot.lane.b32.xlu0 %v1196, 24
      %v1288 = vpop.permute.xlu0 %1287
      %1289 = vrot.lane.b32.xlu0 %v1197, 24
      %v1290 = vpop.permute.xlu0 %1289
      %1291 = vrot.lane.b32.xlu0 %v1198, 24
      %v1292 = vpop.permute.xlu0 %1291
      %1293 = vrot.lane.b32.xlu0 %v1199, 24
      %v1294 = vpop.permute.xlu0 %1293
      %1295 = vrot.lane.b32.xlu0 %v1200, 24
      %v1296 = vpop.permute.xlu0 %1295
      %vm1329 = vcmask 261312
      %1330 = vst.msk [vmem:[#allocation3] sm:$0xff] %vm1329, %v1234
      %1331 = vst.msk [vmem:[#allocation3 + $0x8] sm:$0xff] %vm1329, %v1236
      %1332 = vst.msk [vmem:[#allocation3 + $0x10] sm:$0xff] %vm1329, %v1238
      %1333 = vst.msk [vmem:[#allocation3 + $0x18] sm:$0xff] %vm1329, %v1240
      %1334 = vst.msk [vmem:[#allocation3 + $0x20] sm:$0xff] %vm1329, %v1242
      %1335 = vst.msk [vmem:[#allocation3 + $0x28] sm:$0xff] %vm1329, %v1244
      %1336 = vst.msk [vmem:[#allocation3 + $0x30] sm:$0xff] %vm1329, %v1246
      %1337 = vst.msk [vmem:[#allocation3 + $0x38] sm:$0xff] %vm1329, %v1248
      %1338 = vst.msk [vmem:[#allocation3 + $0x40] sm:$0xff] %vm1329, %v1250
      %1339 = vst.msk [vmem:[#allocation3 + $0x48] sm:$0xff] %vm1329, %v1252
      %1340 = vst.msk [vmem:[#allocation3 + $0x50] sm:$0xff] %vm1329, %v1254
      %1341 = vst.msk [vmem:[#allocation3 + $0x58] sm:$0xff] %vm1329, %v1256
      %1342 = vst.msk [vmem:[#allocation3 + $0x60] sm:$0xff] %vm1329, %v1258
      %1343 = vst.msk [vmem:[#allocation3 + $0x68] sm:$0xff] %vm1329, %v1260
      %1344 = vst.msk [vmem:[#allocation3 + $0x70] sm:$0xff] %vm1329, %v1262
      %1345 = vst.msk [vmem:[#allocation3 + $0x78] sm:$0xff] %vm1329, %v1264
      %1346 = vst.msk [vmem:[#allocation3 + $0x80] sm:$0xff] %vm1329, %v1266
      %1347 = vst.msk [vmem:[#allocation3 + $0x88] sm:$0xff] %vm1329, %v1268
      %1348 = vst.msk [vmem:[#allocation3 + $0x90] sm:$0xff] %vm1329, %v1270
      %1349 = vst.msk [vmem:[#allocation3 + $0x98] sm:$0xff] %vm1329, %v1272
      %1350 = vst.msk [vmem:[#allocation3 + $0xa0] sm:$0xff] %vm1329, %v1274
      %1351 = vst.msk [vmem:[#allocation3 + $0xa8] sm:$0xff] %vm1329, %v1276
      %1352 = vst.msk [vmem:[#allocation3 + $0xb0] sm:$0xff] %vm1329, %v1278
      %1353 = vst.msk [vmem:[#allocation3 + $0xb8] sm:$0xff] %vm1329, %v1280
      %1354 = vst.msk [vmem:[#allocation3 + $0xc0] sm:$0xff] %vm1329, %v1282
      %1355 = vst.msk [vmem:[#allocation3 + $0xc8] sm:$0xff] %vm1329, %v1284
      %1356 = vst.msk [vmem:[#allocation3 + $0xd0] sm:$0xff] %vm1329, %v1286
      %1357 = vst.msk [vmem:[#allocation3 + $0xd8] sm:$0xff] %vm1329, %v1288
      %1358 = vst.msk [vmem:[#allocation3 + $0xe0] sm:$0xff] %vm1329, %v1290
      %1359 = vst.msk [vmem:[#allocation3 + $0xe8] sm:$0xff] %vm1329, %v1292
      %1360 = vst.msk [vmem:[#allocation3 + $0xf0] sm:$0xff] %vm1329, %v1294
      %1361 = vst.msk [vmem:[#allocation3 + $0xf8] sm:$0xff] %vm1329, %v1296
      %v1362 = vld [vmem:[%s656 + $0x1] sm:$0xff]
      %v1363 = vld [vmem:[%s656 + $0x9] sm:$0xff]
      %v1364 = vld [vmem:[%s656 + $0x19] sm:$0xff]
      %v1365 = vld [vmem:[%s656 + $0x21] sm:$0xff]
      %v1366 = vld [vmem:[%s656 + $0x31] sm:$0xff]
      %v1367 = vld [vmem:[%s656 + $0x39] sm:$0xff]
      %v1368 = vld [vmem:[%s656 + $0x49] sm:$0xff]
      %v1369 = vld [vmem:[%s656 + $0x51] sm:$0xff]
      %v1370 = vld [vmem:[%s656 + $0x61] sm:$0xff]
      %v1371 = vld [vmem:[%s656 + $0x69] sm:$0xff]
      %v1372 = vld [vmem:[%s656 + $0x79] sm:$0xff]
      %v1373 = vld [vmem:[%s656 + $0x81] sm:$0xff]
      %v1374 = vld [vmem:[%s656 + $0x91] sm:$0xff]
      %v1375 = vld [vmem:[%s656 + $0x99] sm:$0xff]
      %v1376 = vld [vmem:[%s656 + $0xa9] sm:$0xff]
      %v1377 = vld [vmem:[%s656 + $0xb1] sm:$0xff]
      %v1378 = vld [vmem:[%s656 + $0xc1] sm:$0xff]
      %v1379 = vld [vmem:[%s656 + $0xc9] sm:$0xff]
      %v1380 = vld [vmem:[%s656 + $0xd9] sm:$0xff]
      %v1381 = vld [vmem:[%s656 + $0xe1] sm:$0xff]
      %v1382 = vld [vmem:[%s656 + $0xf1] sm:$0xff]
      %v1383 = vld [vmem:[%s656 + $0xf9] sm:$0xff]
      %v1384 = vld [vmem:[%s656 + $0x109] sm:$0xff]
      %v1385 = vld [vmem:[%s656 + $0x111] sm:$0xff]
      %v1386 = vld [vmem:[%s656 + $0x121] sm:$0xff]
      %v1387 = vld [vmem:[%s656 + $0x129] sm:$0xff]
      %v1388 = vld [vmem:[%s656 + $0x139] sm:$0xff]
      %v1389 = vld [vmem:[%s656 + $0x141] sm:$0xff]
      %v1390 = vld [vmem:[%s656 + $0x151] sm:$0xff]
      %v1391 = vld [vmem:[%s656 + $0x159] sm:$0xff]
      %v1392 = vld [vmem:[%s656 + $0x169] sm:$0xff]
      %v1393 = vld [vmem:[%s656 + $0x171] sm:$0xff]
      %1426 = vrot.lane.b32.xlu0 %v1362, 32
      %v1427 = vpop.permute.xlu0 %1426
      %1428 = vrot.lane.b32.xlu0 %v1363, 32
      %v1429 = vpop.permute.xlu0 %1428
      %1430 = vrot.lane.b32.xlu0 %v1364, 32
      %v1431 = vpop.permute.xlu0 %1430
      %1432 = vrot.lane.b32.xlu0 %v1365, 32
      %v1433 = vpop.permute.xlu0 %1432
      %1434 = vrot.lane.b32.xlu0 %v1366, 32
      %v1435 = vpop.permute.xlu0 %1434
      %1436 = vrot.lane.b32.xlu0 %v1367, 32
      %v1437 = vpop.permute.xlu0 %1436
      %1438 = vrot.lane.b32.xlu0 %v1368, 32
      %v1439 = vpop.permute.xlu0 %1438
      %1440 = vrot.lane.b32.xlu0 %v1369, 32
      %v1441 = vpop.permute.xlu0 %1440
      %1442 = vrot.lane.b32.xlu0 %v1370, 32
      %v1443 = vpop.permute.xlu0 %1442
      %1444 = vrot.lane.b32.xlu0 %v1371, 32
      %v1445 = vpop.permute.xlu0 %1444
      %1446 = vrot.lane.b32.xlu0 %v1372, 32
      %v1447 = vpop.permute.xlu0 %1446
      %1448 = vrot.lane.b32.xlu0 %v1373, 32
      %v1449 = vpop.permute.xlu0 %1448
      %1450 = vrot.lane.b32.xlu0 %v1374, 32
      %v1451 = vpop.permute.xlu0 %1450
      %1452 = vrot.lane.b32.xlu0 %v1375, 32
      %v1453 = vpop.permute.xlu0 %1452
      %1454 = vrot.lane.b32.xlu0 %v1376, 32
      %v1455 = vpop.permute.xlu0 %1454
      %1456 = vrot.lane.b32.xlu0 %v1377, 32
      %v1457 = vpop.permute.xlu0 %1456
      %1458 = vrot.lane.b32.xlu0 %v1378, 32
      %v1459 = vpop.permute.xlu0 %1458
      %1460 = vrot.lane.b32.xlu0 %v1379, 32
      %v1461 = vpop.permute.xlu0 %1460
      %1462 = vrot.lane.b32.xlu0 %v1380, 32
      %v1463 = vpop.permute.xlu0 %1462
      %1464 = vrot.lane.b32.xlu0 %v1381, 32
      %v1465 = vpop.permute.xlu0 %1464
      %1466 = vrot.lane.b32.xlu0 %v1382, 32
      %v1467 = vpop.permute.xlu0 %1466
      %1468 = vrot.lane.b32.xlu0 %v1383, 32
      %v1469 = vpop.permute.xlu0 %1468
      %1470 = vrot.lane.b32.xlu0 %v1384, 32
      %v1471 = vpop.permute.xlu0 %1470
      %1472 = vrot.lane.b32.xlu0 %v1385, 32
      %v1473 = vpop.permute.xlu0 %1472
      %1474 = vrot.lane.b32.xlu0 %v1386, 32
      %v1475 = vpop.permute.xlu0 %1474
      %1476 = vrot.lane.b32.xlu0 %v1387, 32
      %v1477 = vpop.permute.xlu0 %1476
      %1478 = vrot.lane.b32.xlu0 %v1388, 32
      %v1479 = vpop.permute.xlu0 %1478
      %1480 = vrot.lane.b32.xlu0 %v1389, 32
      %v1481 = vpop.permute.xlu0 %1480
      %1482 = vrot.lane.b32.xlu0 %v1390, 32
      %v1483 = vpop.permute.xlu0 %1482
      %1484 = vrot.lane.b32.xlu0 %v1391, 32
      %v1485 = vpop.permute.xlu0 %1484
      %1486 = vrot.lane.b32.xlu0 %v1392, 32
      %v1487 = vpop.permute.xlu0 %1486
      %1488 = vrot.lane.b32.xlu0 %v1393, 32
      %v1489 = vpop.permute.xlu0 %1488
      %vm1522 = vcmask 326912
      %1523 = vst.msk [vmem:[#allocation3] sm:$0xff] %vm1522, %v1427
      %1524 = vst.msk [vmem:[#allocation3 + $0x8] sm:$0xff] %vm1522, %v1429
      %1525 = vst.msk [vmem:[#allocation3 + $0x10] sm:$0xff] %vm1522, %v1431
      %1526 = vst.msk [vmem:[#allocation3 + $0x18] sm:$0xff] %vm1522, %v1433
      %1527 = vst.msk [vmem:[#allocation3 + $0x20] sm:$0xff] %vm1522, %v1435
      %1528 = vst.msk [vmem:[#allocation3 + $0x28] sm:$0xff] %vm1522, %v1437
      %1529 = vst.msk [vmem:[#allocation3 + $0x30] sm:$0xff] %vm1522, %v1439
      %1530 = vst.msk [vmem:[#allocation3 + $0x38] sm:$0xff] %vm1522, %v1441
      %1531 = vst.msk [vmem:[#allocation3 + $0x40] sm:$0xff] %vm1522, %v1443
      %1532 = vst.msk [vmem:[#allocation3 + $0x48] sm:$0xff] %vm1522, %v1445
      %1533 = vst.msk [vmem:[#allocation3 + $0x50] sm:$0xff] %vm1522, %v1447
      %1534 = vst.msk [vmem:[#allocation3 + $0x58] sm:$0xff] %vm1522, %v1449
      %1535 = vst.msk [vmem:[#allocation3 + $0x60] sm:$0xff] %vm1522, %v1451
      %1536 = vst.msk [vmem:[#allocation3 + $0x68] sm:$0xff] %vm1522, %v1453
      %1537 = vst.msk [vmem:[#allocation3 + $0x70] sm:$0xff] %vm1522, %v1455
      %1538 = vst.msk [vmem:[#allocation3 + $0x78] sm:$0xff] %vm1522, %v1457
      %1539 = vst.msk [vmem:[#allocation3 + $0x80] sm:$0xff] %vm1522, %v1459
      %1540 = vst.msk [vmem:[#allocation3 + $0x88] sm:$0xff] %vm1522, %v1461
      %1541 = vst.msk [vmem:[#allocation3 + $0x90] sm:$0xff] %vm1522, %v1463
      %1542 = vst.msk [vmem:[#allocation3 + $0x98] sm:$0xff] %vm1522, %v1465
      %1543 = vst.msk [vmem:[#allocation3 + $0xa0] sm:$0xff] %vm1522, %v1467
      %1544 = vst.msk [vmem:[#allocation3 + $0xa8] sm:$0xff] %vm1522, %v1469
      %1545 = vst.msk [vmem:[#allocation3 + $0xb0] sm:$0xff] %vm1522, %v1471
      %1546 = vst.msk [vmem:[#allocation3 + $0xb8] sm:$0xff] %vm1522, %v1473
      %1547 = vst.msk [vmem:[#allocation3 + $0xc0] sm:$0xff] %vm1522, %v1475
      %1548 = vst.msk [vmem:[#allocation3 + $0xc8] sm:$0xff] %vm1522, %v1477
      %1549 = vst.msk [vmem:[#allocation3 + $0xd0] sm:$0xff] %vm1522, %v1479
      %1550 = vst.msk [vmem:[#allocation3 + $0xd8] sm:$0xff] %vm1522, %v1481
      %1551 = vst.msk [vmem:[#allocation3 + $0xe0] sm:$0xff] %vm1522, %v1483
      %1552 = vst.msk [vmem:[#allocation3 + $0xe8] sm:$0xff] %vm1522, %v1485
      %1553 = vst.msk [vmem:[#allocation3 + $0xf0] sm:$0xff] %vm1522, %v1487
      %1554 = vst.msk [vmem:[#allocation3 + $0xf8] sm:$0xff] %vm1522, %v1489
      %v1555 = vld [vmem:[%s656 + $0x2] sm:$0xff]
      %v1556 = vld [vmem:[%s656 + $0xa] sm:$0xff]
      %v1557 = vld [vmem:[%s656 + $0x1a] sm:$0xff]
      %v1558 = vld [vmem:[%s656 + $0x22] sm:$0xff]
      %v1559 = vld [vmem:[%s656 + $0x32] sm:$0xff]
      %v1560 = vld [vmem:[%s656 + $0x3a] sm:$0xff]
      %v1561 = vld [vmem:[%s656 + $0x4a] sm:$0xff]
      %v1562 = vld [vmem:[%s656 + $0x52] sm:$0xff]
      %v1563 = vld [vmem:[%s656 + $0x62] sm:$0xff]
      %v1564 = vld [vmem:[%s656 + $0x6a] sm:$0xff]
      %v1565 = vld [vmem:[%s656 + $0x7a] sm:$0xff]
      %v1566 = vld [vmem:[%s656 + $0x82] sm:$0xff]
      %v1567 = vld [vmem:[%s656 + $0x92] sm:$0xff]
      %v1568 = vld [vmem:[%s656 + $0x9a] sm:$0xff]
      %v1569 = vld [vmem:[%s656 + $0xaa] sm:$0xff]
      %v1570 = vld [vmem:[%s656 + $0xb2] sm:$0xff]
      %v1571 = vld [vmem:[%s656 + $0xc2] sm:$0xff]
      %v1572 = vld [vmem:[%s656 + $0xca] sm:$0xff]
      %v1573 = vld [vmem:[%s656 + $0xda] sm:$0xff]
      %v1574 = vld [vmem:[%s656 + $0xe2] sm:$0xff]
      %v1575 = vld [vmem:[%s656 + $0xf2] sm:$0xff]
      %v1576 = vld [vmem:[%s656 + $0xfa] sm:$0xff]
      %v1577 = vld [vmem:[%s656 + $0x10a] sm:$0xff]
      %v1578 = vld [vmem:[%s656 + $0x112] sm:$0xff]
      %v1579 = vld [vmem:[%s656 + $0x122] sm:$0xff]
      %v1580 = vld [vmem:[%s656 + $0x12a] sm:$0xff]
      %v1581 = vld [vmem:[%s656 + $0x13a] sm:$0xff]
      %v1582 = vld [vmem:[%s656 + $0x142] sm:$0xff]
      %v1583 = vld [vmem:[%s656 + $0x152] sm:$0xff]
      %v1584 = vld [vmem:[%s656 + $0x15a] sm:$0xff]
      %v1585 = vld [vmem:[%s656 + $0x16a] sm:$0xff]
      %v1586 = vld [vmem:[%s656 + $0x172] sm:$0xff]
      %1619 = vrot.lane.b32.xlu0 %v1555, 40
      %v1620 = vpop.permute.xlu0 %1619
      %1621 = vrot.lane.b32.xlu0 %v1556, 40
      %v1622 = vpop.permute.xlu0 %1621
      %1623 = vrot.lane.b32.xlu0 %v1557, 40
      %v1624 = vpop.permute.xlu0 %1623
      %1625 = vrot.lane.b32.xlu0 %v1558, 40
      %v1626 = vpop.permute.xlu0 %1625
      %1627 = vrot.lane.b32.xlu0 %v1559, 40
      %v1628 = vpop.permute.xlu0 %1627
      %1629 = vrot.lane.b32.xlu0 %v1560, 40
      %v1630 = vpop.permute.xlu0 %1629
      %1631 = vrot.lane.b32.xlu0 %v1561, 40
      %v1632 = vpop.permute.xlu0 %1631
      %1633 = vrot.lane.b32.xlu0 %v1562, 40
      %v1634 = vpop.permute.xlu0 %1633
      %1635 = vrot.lane.b32.xlu0 %v1563, 40
      %v1636 = vpop.permute.xlu0 %1635
      %1637 = vrot.lane.b32.xlu0 %v1564, 40
      %v1638 = vpop.permute.xlu0 %1637
      %1639 = vrot.lane.b32.xlu0 %v1565, 40
      %v1640 = vpop.permute.xlu0 %1639
      %1641 = vrot.lane.b32.xlu0 %v1566, 40
      %v1642 = vpop.permute.xlu0 %1641
      %1643 = vrot.lane.b32.xlu0 %v1567, 40
      %v1644 = vpop.permute.xlu0 %1643
      %1645 = vrot.lane.b32.xlu0 %v1568, 40
      %v1646 = vpop.permute.xlu0 %1645
      %1647 = vrot.lane.b32.xlu0 %v1569, 40
      %v1648 = vpop.permute.xlu0 %1647
      %1649 = vrot.lane.b32.xlu0 %v1570, 40
      %v1650 = vpop.permute.xlu0 %1649
      %1651 = vrot.lane.b32.xlu0 %v1571, 40
      %v1652 = vpop.permute.xlu0 %1651
      %1653 = vrot.lane.b32.xlu0 %v1572, 40
      %v1654 = vpop.permute.xlu0 %1653
      %1655 = vrot.lane.b32.xlu0 %v1573, 40
      %v1656 = vpop.permute.xlu0 %1655
      %1657 = vrot.lane.b32.xlu0 %v1574, 40
      %v1658 = vpop.permute.xlu0 %1657
      %1659 = vrot.lane.b32.xlu0 %v1575, 40
      %v1660 = vpop.permute.xlu0 %1659
      %1661 = vrot.lane.b32.xlu0 %v1576, 40
      %v1662 = vpop.permute.xlu0 %1661
      %1663 = vrot.lane.b32.xlu0 %v1577, 40
      %v1664 = vpop.permute.xlu0 %1663
      %1665 = vrot.lane.b32.xlu0 %v1578, 40
      %v1666 = vpop.permute.xlu0 %1665
      %1667 = vrot.lane.b32.xlu0 %v1579, 40
      %v1668 = vpop.permute.xlu0 %1667
      %1669 = vrot.lane.b32.xlu0 %v1580, 40
      %v1670 = vpop.permute.xlu0 %1669
      %1671 = vrot.lane.b32.xlu0 %v1581, 40
      %v1672 = vpop.permute.xlu0 %1671
      %1673 = vrot.lane.b32.xlu0 %v1582, 40
      %v1674 = vpop.permute.xlu0 %1673
      %1675 = vrot.lane.b32.xlu0 %v1583, 40
      %v1676 = vpop.permute.xlu0 %1675
      %1677 = vrot.lane.b32.xlu0 %v1584, 40
      %v1678 = vpop.permute.xlu0 %1677
      %1679 = vrot.lane.b32.xlu0 %v1585, 40
      %v1680 = vpop.permute.xlu0 %1679
      %1681 = vrot.lane.b32.xlu0 %v1586, 40
      %v1682 = vpop.permute.xlu0 %1681
      %vm1715 = vcmask 392512
      %1716 = vst.msk [vmem:[#allocation3] sm:$0xff] %vm1715, %v1620
      %1717 = vst.msk [vmem:[#allocation3 + $0x8] sm:$0xff] %vm1715, %v1622
      %1718 = vst.msk [vmem:[#allocation3 + $0x10] sm:$0xff] %vm1715, %v1624
      %1719 = vst.msk [vmem:[#allocation3 + $0x18] sm:$0xff] %vm1715, %v1626
      %1720 = vst.msk [vmem:[#allocation3 + $0x20] sm:$0xff] %vm1715, %v1628
      %1721 = vst.msk [vmem:[#allocation3 + $0x28] sm:$0xff] %vm1715, %v1630
      %1722 = vst.msk [vmem:[#allocation3 + $0x30] sm:$0xff] %vm1715, %v1632
      %1723 = vst.msk [vmem:[#allocation3 + $0x38] sm:$0xff] %vm1715, %v1634
      %1724 = vst.msk [vmem:[#allocation3 + $0x40] sm:$0xff] %vm1715, %v1636
      %1725 = vst.msk [vmem:[#allocation3 + $0x48] sm:$0xff] %vm1715, %v1638
      %1726 = vst.msk [vmem:[#allocation3 + $0x50] sm:$0xff] %vm1715, %v1640
      %1727 = vst.msk [vmem:[#allocation3 + $0x58] sm:$0xff] %vm1715, %v1642
      %1728 = vst.msk [vmem:[#allocation3 + $0x60] sm:$0xff] %vm1715, %v1644
      %1729 = vst.msk [vmem:[#allocation3 + $0x68] sm:$0xff] %vm1715, %v1646
      %1730 = vst.msk [vmem:[#allocation3 + $0x70] sm:$0xff] %vm1715, %v1648
      %1731 = vst.msk [vmem:[#allocation3 + $0x78] sm:$0xff] %vm1715, %v1650
      %1732 = vst.msk [vmem:[#allocation3 + $0x80] sm:$0xff] %vm1715, %v1652
      %1733 = vst.msk [vmem:[#allocation3 + $0x88] sm:$0xff] %vm1715, %v1654
      %1734 = vst.msk [vmem:[#allocation3 + $0x90] sm:$0xff] %vm1715, %v1656
      %1735 = vst.msk [vmem:[#allocation3 + $0x98] sm:$0xff] %vm1715, %v1658
      %1736 = vst.msk [vmem:[#allocation3 + $0xa0] sm:$0xff] %vm1715, %v1660
      %1737 = vst.msk [vmem:[#allocation3 + $0xa8] sm:$0xff] %vm1715, %v1662
      %1738 = vst.msk [vmem:[#allocation3 + $0xb0] sm:$0xff] %vm1715, %v1664
      %1739 = vst.msk [vmem:[#allocation3 + $0xb8] sm:$0xff] %vm1715, %v1666
      %1740 = vst.msk [vmem:[#allocation3 + $0xc0] sm:$0xff] %vm1715, %v1668
      %1741 = vst.msk [vmem:[#allocation3 + $0xc8] sm:$0xff] %vm1715, %v1670
      %1742 = vst.msk [vmem:[#allocation3 + $0xd0] sm:$0xff] %vm1715, %v1672
      %1743 = vst.msk [vmem:[#allocation3 + $0xd8] sm:$0xff] %vm1715, %v1674
      %1744 = vst.msk [vmem:[#allocation3 + $0xe0] sm:$0xff] %vm1715, %v1676
      %1745 = vst.msk [vmem:[#allocation3 + $0xe8] sm:$0xff] %vm1715, %v1678
      %1746 = vst.msk [vmem:[#allocation3 + $0xf0] sm:$0xff] %vm1715, %v1680
      %1747 = vst.msk [vmem:[#allocation3 + $0xf8] sm:$0xff] %vm1715, %v1682
      %s1748 = scalar_lea.vmem [#allocation2], 48
      %v1749 = vld [vmem:[%s1748] sm:$0xff]
      %v1750 = vld [vmem:[%s1748 + $0x8] sm:$0xff]
      %v1751 = vld [vmem:[%s1748 + $0x18] sm:$0xff]
      %v1752 = vld [vmem:[%s1748 + $0x20] sm:$0xff]
      %v1753 = vld [vmem:[%s1748 + $0x30] sm:$0xff]
      %v1754 = vld [vmem:[%s1748 + $0x38] sm:$0xff]
      %v1755 = vld [vmem:[%s1748 + $0x48] sm:$0xff]
      %v1756 = vld [vmem:[%s1748 + $0x50] sm:$0xff]
      %v1757 = vld [vmem:[%s1748 + $0x60] sm:$0xff]
      %v1758 = vld [vmem:[%s1748 + $0x68] sm:$0xff]
      %v1759 = vld [vmem:[%s1748 + $0x78] sm:$0xff]
      %v1760 = vld [vmem:[%s1748 + $0x80] sm:$0xff]
      %v1761 = vld [vmem:[%s1748 + $0x90] sm:$0xff]
      %v1762 = vld [vmem:[%s1748 + $0x98] sm:$0xff]
      %v1763 = vld [vmem:[%s1748 + $0xa8] sm:$0xff]
      %v1764 = vld [vmem:[%s1748 + $0xb0] sm:$0xff]
      %v1765 = vld [vmem:[%s1748 + $0xc0] sm:$0xff]
      %v1766 = vld [vmem:[%s1748 + $0xc8] sm:$0xff]
      %v1767 = vld [vmem:[%s1748 + $0xd8] sm:$0xff]
      %v1768 = vld [vmem:[%s1748 + $0xe0] sm:$0xff]
      %v1769 = vld [vmem:[%s1748 + $0xf0] sm:$0xff]
      %v1770 = vld [vmem:[%s1748 + $0xf8] sm:$0xff]
      %v1771 = vld [vmem:[%s1748 + $0x108] sm:$0xff]
      %v1772 = vld [vmem:[%s1748 + $0x110] sm:$0xff]
      %v1773 = vld [vmem:[%s1748 + $0x120] sm:$0xff]
      %v1774 = vld [vmem:[%s1748 + $0x128] sm:$0xff]
      %v1775 = vld [vmem:[%s1748 + $0x138] sm:$0xff]
      %v1776 = vld [vmem:[%s1748 + $0x140] sm:$0xff]
      %v1777 = vld [vmem:[%s1748 + $0x150] sm:$0xff]
      %v1778 = vld [vmem:[%s1748 + $0x158] sm:$0xff]
      %v1779 = vld [vmem:[%s1748 + $0x168] sm:$0xff]
      %v1780 = vld [vmem:[%s1748 + $0x170] sm:$0xff]
      %1813 = vrot.lane.b32.xlu0 %v1749, 48
      %v1814 = vpop.permute.xlu0 %1813
      %1815 = vrot.lane.b32.xlu0 %v1750, 48
      %v1816 = vpop.permute.xlu0 %1815
      %1817 = vrot.lane.b32.xlu0 %v1751, 48
      %v1818 = vpop.permute.xlu0 %1817
      %1819 = vrot.lane.b32.xlu0 %v1752, 48
      %v1820 = vpop.permute.xlu0 %1819
      %1821 = vrot.lane.b32.xlu0 %v1753, 48
      %v1822 = vpop.permute.xlu0 %1821
      %1823 = vrot.lane.b32.xlu0 %v1754, 48
      %v1824 = vpop.permute.xlu0 %1823
      %1825 = vrot.lane.b32.xlu0 %v1755, 48
      %v1826 = vpop.permute.xlu0 %1825
      %1827 = vrot.lane.b32.xlu0 %v1756, 48
      %v1828 = vpop.permute.xlu0 %1827
      %1829 = vrot.lane.b32.xlu0 %v1757, 48
      %v1830 = vpop.permute.xlu0 %1829
      %1831 = vrot.lane.b32.xlu0 %v1758, 48
      %v1832 = vpop.permute.xlu0 %1831
      %1833 = vrot.lane.b32.xlu0 %v1759, 48
      %v1834 = vpop.permute.xlu0 %1833
      %1835 = vrot.lane.b32.xlu0 %v1760, 48
      %v1836 = vpop.permute.xlu0 %1835
      %1837 = vrot.lane.b32.xlu0 %v1761, 48
      %v1838 = vpop.permute.xlu0 %1837
      %1839 = vrot.lane.b32.xlu0 %v1762, 48
      %v1840 = vpop.permute.xlu0 %1839
      %1841 = vrot.lane.b32.xlu0 %v1763, 48
      %v1842 = vpop.permute.xlu0 %1841
      %1843 = vrot.lane.b32.xlu0 %v1764, 48
      %v1844 = vpop.permute.xlu0 %1843
      %1845 = vrot.lane.b32.xlu0 %v1765, 48
      %v1846 = vpop.permute.xlu0 %1845
      %1847 = vrot.lane.b32.xlu0 %v1766, 48
      %v1848 = vpop.permute.xlu0 %1847
      %1849 = vrot.lane.b32.xlu0 %v1767, 48
      %v1850 = vpop.permute.xlu0 %1849
      %1851 = vrot.lane.b32.xlu0 %v1768, 48
      %v1852 = vpop.permute.xlu0 %1851
      %1853 = vrot.lane.b32.xlu0 %v1769, 48
      %v1854 = vpop.permute.xlu0 %1853
      %1855 = vrot.lane.b32.xlu0 %v1770, 48
      %v1856 = vpop.permute.xlu0 %1855
      %1857 = vrot.lane.b32.xlu0 %v1771, 48
      %v1858 = vpop.permute.xlu0 %1857
      %1859 = vrot.lane.b32.xlu0 %v1772, 48
      %v1860 = vpop.permute.xlu0 %1859
      %1861 = vrot.lane.b32.xlu0 %v1773, 48
      %v1862 = vpop.permute.xlu0 %1861
      %1863 = vrot.lane.b32.xlu0 %v1774, 48
      %v1864 = vpop.permute.xlu0 %1863
      %1865 = vrot.lane.b32.xlu0 %v1775, 48
      %v1866 = vpop.permute.xlu0 %1865
      %1867 = vrot.lane.b32.xlu0 %v1776, 48
      %v1868 = vpop.permute.xlu0 %1867
      %1869 = vrot.lane.b32.xlu0 %v1777, 48
      %v1870 = vpop.permute.xlu0 %1869
      %1871 = vrot.lane.b32.xlu0 %v1778, 48
      %v1872 = vpop.permute.xlu0 %1871
      %1873 = vrot.lane.b32.xlu0 %v1779, 48
      %v1874 = vpop.permute.xlu0 %1873
      %1875 = vrot.lane.b32.xlu0 %v1780, 48
      %v1876 = vpop.permute.xlu0 %1875
      %vm1909 = vcmask 458112
      %1910 = vst.msk [vmem:[#allocation3] sm:$0xff] %vm1909, %v1814
      %1911 = vst.msk [vmem:[#allocation3 + $0x8] sm:$0xff] %vm1909, %v1816
      %1912 = vst.msk [vmem:[#allocation3 + $0x10] sm:$0xff] %vm1909, %v1818
      %1913 = vst.msk [vmem:[#allocation3 + $0x18] sm:$0xff] %vm1909, %v1820
      %1914 = vst.msk [vmem:[#allocation3 + $0x20] sm:$0xff] %vm1909, %v1822
      %1915 = vst.msk [vmem:[#allocation3 + $0x28] sm:$0xff] %vm1909, %v1824
      %1916 = vst.msk [vmem:[#allocation3 + $0x30] sm:$0xff] %vm1909, %v1826
      %1917 = vst.msk [vmem:[#allocation3 + $0x38] sm:$0xff] %vm1909, %v1828
      %1918 = vst.msk [vmem:[#allocation3 + $0x40] sm:$0xff] %vm1909, %v1830
      %1919 = vst.msk [vmem:[#allocation3 + $0x48] sm:$0xff] %vm1909, %v1832
      %1920 = vst.msk [vmem:[#allocation3 + $0x50] sm:$0xff] %vm1909, %v1834
      %1921 = vst.msk [vmem:[#allocation3 + $0x58] sm:$0xff] %vm1909, %v1836
      %1922 = vst.msk [vmem:[#allocation3 + $0x60] sm:$0xff] %vm1909, %v1838
      %1923 = vst.msk [vmem:[#allocation3 + $0x68] sm:$0xff] %vm1909, %v1840
      %1924 = vst.msk [vmem:[#allocation3 + $0x70] sm:$0xff] %vm1909, %v1842
      %1925 = vst.msk [vmem:[#allocation3 + $0x78] sm:$0xff] %vm1909, %v1844
      %1926 = vst.msk [vmem:[#allocation3 + $0x80] sm:$0xff] %vm1909, %v1846
      %1927 = vst.msk [vmem:[#allocation3 + $0x88] sm:$0xff] %vm1909, %v1848
      %1928 = vst.msk [vmem:[#allocation3 + $0x90] sm:$0xff] %vm1909, %v1850
      %1929 = vst.msk [vmem:[#allocation3 + $0x98] sm:$0xff] %vm1909, %v1852
      %1930 = vst.msk [vmem:[#allocation3 + $0xa0] sm:$0xff] %vm1909, %v1854
      %1931 = vst.msk [vmem:[#allocation3 + $0xa8] sm:$0xff] %vm1909, %v1856
      %1932 = vst.msk [vmem:[#allocation3 + $0xb0] sm:$0xff] %vm1909, %v1858
      %1933 = vst.msk [vmem:[#allocation3 + $0xb8] sm:$0xff] %vm1909, %v1860
      %1934 = vst.msk [vmem:[#allocation3 + $0xc0] sm:$0xff] %vm1909, %v1862
      %1935 = vst.msk [vmem:[#allocation3 + $0xc8] sm:$0xff] %vm1909, %v1864
      %1936 = vst.msk [vmem:[#allocation3 + $0xd0] sm:$0xff] %vm1909, %v1866
      %1937 = vst.msk [vmem:[#allocation3 + $0xd8] sm:$0xff] %vm1909, %v1868
      %1938 = vst.msk [vmem:[#allocation3 + $0xe0] sm:$0xff] %vm1909, %v1870
      %1939 = vst.msk [vmem:[#allocation3 + $0xe8] sm:$0xff] %vm1909, %v1872
      %1940 = vst.msk [vmem:[#allocation3 + $0xf0] sm:$0xff] %vm1909, %v1874
      %1941 = vst.msk [vmem:[#allocation3 + $0xf8] sm:$0xff] %vm1909, %v1876
      %v1942 = vld [vmem:[%s1748 + $0x1] sm:$0xff]
      %v1943 = vld [vmem:[%s1748 + $0x9] sm:$0xff]
      %v1944 = vld [vmem:[%s1748 + $0x19] sm:$0xff]
      %v1945 = vld [vmem:[%s1748 + $0x21] sm:$0xff]
      %v1946 = vld [vmem:[%s1748 + $0x31] sm:$0xff]
      %v1947 = vld [vmem:[%s1748 + $0x39] sm:$0xff]
      %v1948 = vld [vmem:[%s1748 + $0x49] sm:$0xff]
      %v1949 = vld [vmem:[%s1748 + $0x51] sm:$0xff]
      %v1950 = vld [vmem:[%s1748 + $0x61] sm:$0xff]
      %v1951 = vld [vmem:[%s1748 + $0x69] sm:$0xff]
      %v1952 = vld [vmem:[%s1748 + $0x79] sm:$0xff]
      %v1953 = vld [vmem:[%s1748 + $0x81] sm:$0xff]
      %v1954 = vld [vmem:[%s1748 + $0x91] sm:$0xff]
      %v1955 = vld [vmem:[%s1748 + $0x99] sm:$0xff]
      %v1956 = vld [vmem:[%s1748 + $0xa9] sm:$0xff]
      %v1957 = vld [vmem:[%s1748 + $0xb1] sm:$0xff]
      %v1958 = vld [vmem:[%s1748 + $0xc1] sm:$0xff]
      %v1959 = vld [vmem:[%s1748 + $0xc9] sm:$0xff]
      %v1960 = vld [vmem:[%s1748 + $0xd9] sm:$0xff]
      %v1961 = vld [vmem:[%s1748 + $0xe1] sm:$0xff]
      %v1962 = vld [vmem:[%s1748 + $0xf1] sm:$0xff]
      %v1963 = vld [vmem:[%s1748 + $0xf9] sm:$0xff]
      %v1964 = vld [vmem:[%s1748 + $0x109] sm:$0xff]
      %v1965 = vld [vmem:[%s1748 + $0x111] sm:$0xff]
      %v1966 = vld [vmem:[%s1748 + $0x121] sm:$0xff]
      %v1967 = vld [vmem:[%s1748 + $0x129] sm:$0xff]
      %v1968 = vld [vmem:[%s1748 + $0x139] sm:$0xff]
      %v1969 = vld [vmem:[%s1748 + $0x141] sm:$0xff]
      %v1970 = vld [vmem:[%s1748 + $0x151] sm:$0xff]
      %v1971 = vld [vmem:[%s1748 + $0x159] sm:$0xff]
      %v1972 = vld [vmem:[%s1748 + $0x169] sm:$0xff]
      %v1973 = vld [vmem:[%s1748 + $0x171] sm:$0xff]
      %2006 = vrot.lane.b32.xlu0 %v1942, 56
      %v2007 = vpop.permute.xlu0 %2006
      %2008 = vrot.lane.b32.xlu0 %v1943, 56
      %v2009 = vpop.permute.xlu0 %2008
      %2010 = vrot.lane.b32.xlu0 %v1944, 56
      %v2011 = vpop.permute.xlu0 %2010
      %2012 = vrot.lane.b32.xlu0 %v1945, 56
      %v2013 = vpop.permute.xlu0 %2012
      %2014 = vrot.lane.b32.xlu0 %v1946, 56
      %v2015 = vpop.permute.xlu0 %2014
      %2016 = vrot.lane.b32.xlu0 %v1947, 56
      %v2017 = vpop.permute.xlu0 %2016
      %2018 = vrot.lane.b32.xlu0 %v1948, 56
      %v2019 = vpop.permute.xlu0 %2018
      %2020 = vrot.lane.b32.xlu0 %v1949, 56
      %v2021 = vpop.permute.xlu0 %2020
      %2022 = vrot.lane.b32.xlu0 %v1950, 56
      %v2023 = vpop.permute.xlu0 %2022
      %2024 = vrot.lane.b32.xlu0 %v1951, 56
      %v2025 = vpop.permute.xlu0 %2024
      %2026 = vrot.lane.b32.xlu0 %v1952, 56
      %v2027 = vpop.permute.xlu0 %2026
      %2028 = vrot.lane.b32.xlu0 %v1953, 56
      %v2029 = vpop.permute.xlu0 %2028
      %2030 = vrot.lane.b32.xlu0 %v1954, 56
      %v2031 = vpop.permute.xlu0 %2030
      %2032 = vrot.lane.b32.xlu0 %v1955, 56
      %v2033 = vpop.permute.xlu0 %2032
      %2034 = vrot.lane.b32.xlu0 %v1956, 56
      %v2035 = vpop.permute.xlu0 %2034
      %2036 = vrot.lane.b32.xlu0 %v1957, 56
      %v2037 = vpop.permute.xlu0 %2036
      %2038 = vrot.lane.b32.xlu0 %v1958, 56
      %v2039 = vpop.permute.xlu0 %2038
      %2040 = vrot.lane.b32.xlu0 %v1959, 56
      %v2041 = vpop.permute.xlu0 %2040
      %2042 = vrot.lane.b32.xlu0 %v1960, 56
      %v2043 = vpop.permute.xlu0 %2042
      %2044 = vrot.lane.b32.xlu0 %v1961, 56
      %v2045 = vpop.permute.xlu0 %2044
      %2046 = vrot.lane.b32.xlu0 %v1962, 56
      %v2047 = vpop.permute.xlu0 %2046
      %2048 = vrot.lane.b32.xlu0 %v1963, 56
      %v2049 = vpop.permute.xlu0 %2048
      %2050 = vrot.lane.b32.xlu0 %v1964, 56
      %v2051 = vpop.permute.xlu0 %2050
      %2052 = vrot.lane.b32.xlu0 %v1965, 56
      %v2053 = vpop.permute.xlu0 %2052
      %2054 = vrot.lane.b32.xlu0 %v1966, 56
      %v2055 = vpop.permute.xlu0 %2054
      %2056 = vrot.lane.b32.xlu0 %v1967, 56
      %v2057 = vpop.permute.xlu0 %2056
      %2058 = vrot.lane.b32.xlu0 %v1968, 56
      %v2059 = vpop.permute.xlu0 %2058
      %2060 = vrot.lane.b32.xlu0 %v1969, 56
      %v2061 = vpop.permute.xlu0 %2060
      %2062 = vrot.lane.b32.xlu0 %v1970, 56
      %v2063 = vpop.permute.xlu0 %2062
      %2064 = vrot.lane.b32.xlu0 %v1971, 56
      %v2065 = vpop.permute.xlu0 %2064
      %2066 = vrot.lane.b32.xlu0 %v1972, 56
      %v2067 = vpop.permute.xlu0 %2066
      %2068 = vrot.lane.b32.xlu0 %v1973, 56
      %v2069 = vpop.permute.xlu0 %2068
      %vm2102 = vcmask 523712
      %2103 = vst.msk [vmem:[#allocation3] sm:$0xff] %vm2102, %v2007
      %2104 = vst.msk [vmem:[#allocation3 + $0x8] sm:$0xff] %vm2102, %v2009
      %2105 = vst.msk [vmem:[#allocation3 + $0x10] sm:$0xff] %vm2102, %v2011
      %2106 = vst.msk [vmem:[#allocation3 + $0x18] sm:$0xff] %vm2102, %v2013
      %2107 = vst.msk [vmem:[#allocation3 + $0x20] sm:$0xff] %vm2102, %v2015
      %2108 = vst.msk [vmem:[#allocation3 + $0x28] sm:$0xff] %vm2102, %v2017
      %2109 = vst.msk [vmem:[#allocation3 + $0x30] sm:$0xff] %vm2102, %v2019
      %2110 = vst.msk [vmem:[#allocation3 + $0x38] sm:$0xff] %vm2102, %v2021
      %2111 = vst.msk [vmem:[#allocation3 + $0x40] sm:$0xff] %vm2102, %v2023
      %2112 = vst.msk [vmem:[#allocation3 + $0x48] sm:$0xff] %vm2102, %v2025
      %2113 = vst.msk [vmem:[#allocation3 + $0x50] sm:$0xff] %vm2102, %v2027
      %2114 = vst.msk [vmem:[#allocation3 + $0x58] sm:$0xff] %vm2102, %v2029
      %2115 = vst.msk [vmem:[#allocation3 + $0x60] sm:$0xff] %vm2102, %v2031
      %2116 = vst.msk [vmem:[#allocation3 + $0x68] sm:$0xff] %vm2102, %v2033
      %2117 = vst.msk [vmem:[#allocation3 + $0x70] sm:$0xff] %vm2102, %v2035
      %2118 = vst.msk [vmem:[#allocation3 + $0x78] sm:$0xff] %vm2102, %v2037
      %2119 = vst.msk [vmem:[#allocation3 + $0x80] sm:$0xff] %vm2102, %v2039
      %2120 = vst.msk [vmem:[#allocation3 + $0x88] sm:$0xff] %vm2102, %v2041
      %2121 = vst.msk [vmem:[#allocation3 + $0x90] sm:$0xff] %vm2102, %v2043
      %2122 = vst.msk [vmem:[#allocation3 + $0x98] sm:$0xff] %vm2102, %v2045
      %2123 = vst.msk [vmem:[#allocation3 + $0xa0] sm:$0xff] %vm2102, %v2047
      %2124 = vst.msk [vmem:[#allocation3 + $0xa8] sm:$0xff] %vm2102, %v2049
      %2125 = vst.msk [vmem:[#allocation3 + $0xb0] sm:$0xff] %vm2102, %v2051
      %2126 = vst.msk [vmem:[#allocation3 + $0xb8] sm:$0xff] %vm2102, %v2053
      %2127 = vst.msk [vmem:[#allocation3 + $0xc0] sm:$0xff] %vm2102, %v2055
      %2128 = vst.msk [vmem:[#allocation3 + $0xc8] sm:$0xff] %vm2102, %v2057
      %2129 = vst.msk [vmem:[#allocation3 + $0xd0] sm:$0xff] %vm2102, %v2059
      %2130 = vst.msk [vmem:[#allocation3 + $0xd8] sm:$0xff] %vm2102, %v2061
      %2131 = vst.msk [vmem:[#allocation3 + $0xe0] sm:$0xff] %vm2102, %v2063
      %2132 = vst.msk [vmem:[#allocation3 + $0xe8] sm:$0xff] %vm2102, %v2065
      %2133 = vst.msk [vmem:[#allocation3 + $0xf0] sm:$0xff] %vm2102, %v2067
      %2134 = vst.msk [vmem:[#allocation3 + $0xf8] sm:$0xff] %vm2102, %v2069
      %v2135 = vld [vmem:[%s1748 + $0x2] sm:$0xff]
      %v2136 = vld [vmem:[%s1748 + $0xa] sm:$0xff]
      %v2137 = vld [vmem:[%s1748 + $0x1a] sm:$0xff]
      %v2138 = vld [vmem:[%s1748 + $0x22] sm:$0xff]
      %v2139 = vld [vmem:[%s1748 + $0x32] sm:$0xff]
      %v2140 = vld [vmem:[%s1748 + $0x3a] sm:$0xff]
      %v2141 = vld [vmem:[%s1748 + $0x4a] sm:$0xff]
      %v2142 = vld [vmem:[%s1748 + $0x52] sm:$0xff]
      %v2143 = vld [vmem:[%s1748 + $0x62] sm:$0xff]
      %v2144 = vld [vmem:[%s1748 + $0x6a] sm:$0xff]
      %v2145 = vld [vmem:[%s1748 + $0x7a] sm:$0xff]
      %v2146 = vld [vmem:[%s1748 + $0x82] sm:$0xff]
      %v2147 = vld [vmem:[%s1748 + $0x92] sm:$0xff]
      %v2148 = vld [vmem:[%s1748 + $0x9a] sm:$0xff]
      %v2149 = vld [vmem:[%s1748 + $0xaa] sm:$0xff]
      %v2150 = vld [vmem:[%s1748 + $0xb2] sm:$0xff]
      %v2151 = vld [vmem:[%s1748 + $0xc2] sm:$0xff]
      %v2152 = vld [vmem:[%s1748 + $0xca] sm:$0xff]
      %v2153 = vld [vmem:[%s1748 + $0xda] sm:$0xff]
      %v2154 = vld [vmem:[%s1748 + $0xe2] sm:$0xff]
      %v2155 = vld [vmem:[%s1748 + $0xf2] sm:$0xff]
      %v2156 = vld [vmem:[%s1748 + $0xfa] sm:$0xff]
      %v2157 = vld [vmem:[%s1748 + $0x10a] sm:$0xff]
      %v2158 = vld [vmem:[%s1748 + $0x112] sm:$0xff]
      %v2159 = vld [vmem:[%s1748 + $0x122] sm:$0xff]
      %v2160 = vld [vmem:[%s1748 + $0x12a] sm:$0xff]
      %v2161 = vld [vmem:[%s1748 + $0x13a] sm:$0xff]
      %v2162 = vld [vmem:[%s1748 + $0x142] sm:$0xff]
      %v2163 = vld [vmem:[%s1748 + $0x152] sm:$0xff]
      %v2164 = vld [vmem:[%s1748 + $0x15a] sm:$0xff]
      %v2165 = vld [vmem:[%s1748 + $0x16a] sm:$0xff]
      %v2166 = vld [vmem:[%s1748 + $0x172] sm:$0xff]
      %2199 = vrot.lane.b32.xlu0 %v2135, 64
      %v2200 = vpop.permute.xlu0 %2199
      %2201 = vrot.lane.b32.xlu0 %v2136, 64
      %v2202 = vpop.permute.xlu0 %2201
      %2203 = vrot.lane.b32.xlu0 %v2137, 64
      %v2204 = vpop.permute.xlu0 %2203
      %2205 = vrot.lane.b32.xlu0 %v2138, 64
      %v2206 = vpop.permute.xlu0 %2205
      %2207 = vrot.lane.b32.xlu0 %v2139, 64
      %v2208 = vpop.permute.xlu0 %2207
      %2209 = vrot.lane.b32.xlu0 %v2140, 64
      %v2210 = vpop.permute.xlu0 %2209
      %2211 = vrot.lane.b32.xlu0 %v2141, 64
      %v2212 = vpop.permute.xlu0 %2211
      %2213 = vrot.lane.b32.xlu0 %v2142, 64
      %v2214 = vpop.permute.xlu0 %2213
      %2215 = vrot.lane.b32.xlu0 %v2143, 64
      %v2216 = vpop.permute.xlu0 %2215
      %2217 = vrot.lane.b32.xlu0 %v2144, 64
      %v2218 = vpop.permute.xlu0 %2217
      %2219 = vrot.lane.b32.xlu0 %v2145, 64
      %v2220 = vpop.permute.xlu0 %2219
      %2221 = vrot.lane.b32.xlu0 %v2146, 64
      %v2222 = vpop.permute.xlu0 %2221
      %2223 = vrot.lane.b32.xlu0 %v2147, 64
      %v2224 = vpop.permute.xlu0 %2223
      %2225 = vrot.lane.b32.xlu0 %v2148, 64
      %v2226 = vpop.permute.xlu0 %2225
      %2227 = vrot.lane.b32.xlu0 %v2149, 64
      %v2228 = vpop.permute.xlu0 %2227
      %2229 = vrot.lane.b32.xlu0 %v2150, 64
      %v2230 = vpop.permute.xlu0 %2229
      %2231 = vrot.lane.b32.xlu0 %v2151, 64
      %v2232 = vpop.permute.xlu0 %2231
      %2233 = vrot.lane.b32.xlu0 %v2152, 64
      %v2234 = vpop.permute.xlu0 %2233
      %2235 = vrot.lane.b32.xlu0 %v2153, 64
      %v2236 = vpop.permute.xlu0 %2235
      %2237 = vrot.lane.b32.xlu0 %v2154, 64
      %v2238 = vpop.permute.xlu0 %2237
      %2239 = vrot.lane.b32.xlu0 %v2155, 64
      %v2240 = vpop.permute.xlu0 %2239
      %2241 = vrot.lane.b32.xlu0 %v2156, 64
      %v2242 = vpop.permute.xlu0 %2241
      %2243 = vrot.lane.b32.xlu0 %v2157, 64
      %v2244 = vpop.permute.xlu0 %2243
      %2245 = vrot.lane.b32.xlu0 %v2158, 64
      %v2246 = vpop.permute.xlu0 %2245
      %2247 = vrot.lane.b32.xlu0 %v2159, 64
      %v2248 = vpop.permute.xlu0 %2247
      %2249 = vrot.lane.b32.xlu0 %v2160, 64
      %v2250 = vpop.permute.xlu0 %2249
      %2251 = vrot.lane.b32.xlu0 %v2161, 64
      %v2252 = vpop.permute.xlu0 %2251
      %2253 = vrot.lane.b32.xlu0 %v2162, 64
      %v2254 = vpop.permute.xlu0 %2253
      %2255 = vrot.lane.b32.xlu0 %v2163, 64
      %v2256 = vpop.permute.xlu0 %2255
      %2257 = vrot.lane.b32.xlu0 %v2164, 64
      %v2258 = vpop.permute.xlu0 %2257
      %2259 = vrot.lane.b32.xlu0 %v2165, 64
      %v2260 = vpop.permute.xlu0 %2259
      %2261 = vrot.lane.b32.xlu0 %v2166, 64
      %v2262 = vpop.permute.xlu0 %2261
      %vm2295 = vcmask 589312
      %2296 = vst.msk [vmem:[#allocation3] sm:$0xff] %vm2295, %v2200
      %2297 = vst.msk [vmem:[#allocation3 + $0x8] sm:$0xff] %vm2295, %v2202
      %2298 = vst.msk [vmem:[#allocation3 + $0x10] sm:$0xff] %vm2295, %v2204
      %2299 = vst.msk [vmem:[#allocation3 + $0x18] sm:$0xff] %vm2295, %v2206
      %2300 = vst.msk [vmem:[#allocation3 + $0x20] sm:$0xff] %vm2295, %v2208
      %2301 = vst.msk [vmem:[#allocation3 + $0x28] sm:$0xff] %vm2295, %v2210
      %2302 = vst.msk [vmem:[#allocation3 + $0x30] sm:$0xff] %vm2295, %v2212
      %2303 = vst.msk [vmem:[#allocation3 + $0x38] sm:$0xff] %vm2295, %v2214
      %2304 = vst.msk [vmem:[#allocation3 + $0x40] sm:$0xff] %vm2295, %v2216
      %2305 = vst.msk [vmem:[#allocation3 + $0x48] sm:$0xff] %vm2295, %v2218
      %2306 = vst.msk [vmem:[#allocation3 + $0x50] sm:$0xff] %vm2295, %v2220
      %2307 = vst.msk [vmem:[#allocation3 + $0x58] sm:$0xff] %vm2295, %v2222
      %2308 = vst.msk [vmem:[#allocation3 + $0x60] sm:$0xff] %vm2295, %v2224
      %2309 = vst.msk [vmem:[#allocation3 + $0x68] sm:$0xff] %vm2295, %v2226
      %2310 = vst.msk [vmem:[#allocation3 + $0x70] sm:$0xff] %vm2295, %v2228
      %2311 = vst.msk [vmem:[#allocation3 + $0x78] sm:$0xff] %vm2295, %v2230
      %2312 = vst.msk [vmem:[#allocation3 + $0x80] sm:$0xff] %vm2295, %v2232
      %2313 = vst.msk [vmem:[#allocation3 + $0x88] sm:$0xff] %vm2295, %v2234
      %2314 = vst.msk [vmem:[#allocation3 + $0x90] sm:$0xff] %vm2295, %v2236
      %2315 = vst.msk [vmem:[#allocation3 + $0x98] sm:$0xff] %vm2295, %v2238
      %2316 = vst.msk [vmem:[#allocation3 + $0xa0] sm:$0xff] %vm2295, %v2240
      %2317 = vst.msk [vmem:[#allocation3 + $0xa8] sm:$0xff] %vm2295, %v2242
      %2318 = vst.msk [vmem:[#allocation3 + $0xb0] sm:$0xff] %vm2295, %v2244
      %2319 = vst.msk [vmem:[#allocation3 + $0xb8] sm:$0xff] %vm2295, %v2246
      %2320 = vst.msk [vmem:[#allocation3 + $0xc0] sm:$0xff] %vm2295, %v2248
      %2321 = vst.msk [vmem:[#allocation3 + $0xc8] sm:$0xff] %vm2295, %v2250
      %2322 = vst.msk [vmem:[#allocation3 + $0xd0] sm:$0xff] %vm2295, %v2252
      %2323 = vst.msk [vmem:[#allocation3 + $0xd8] sm:$0xff] %vm2295, %v2254
      %2324 = vst.msk [vmem:[#allocation3 + $0xe0] sm:$0xff] %vm2295, %v2256
      %2325 = vst.msk [vmem:[#allocation3 + $0xe8] sm:$0xff] %vm2295, %v2258
      %2326 = vst.msk [vmem:[#allocation3 + $0xf0] sm:$0xff] %vm2295, %v2260
      %2327 = vst.msk [vmem:[#allocation3 + $0xf8] sm:$0xff] %vm2295, %v2262
      %v2328 = vld [vmem:[#allocation3] sm:$0xff]
      %v2329 = vld [vmem:[#allocation3 + $0x8] sm:$0xff]
      %v2330 = vld [vmem:[#allocation3 + $0x10] sm:$0xff]
      %v2331 = vld [vmem:[#allocation3 + $0x18] sm:$0xff]
      %v2332 = vld [vmem:[#allocation3 + $0x20] sm:$0xff]
      %v2333 = vld [vmem:[#allocation3 + $0x28] sm:$0xff]
      %v2334 = vld [vmem:[#allocation3 + $0x30] sm:$0xff]
      %v2335 = vld [vmem:[#allocation3 + $0x38] sm:$0xff]
      %v2336 = vld [vmem:[#allocation3 + $0x40] sm:$0xff]
      %v2337 = vld [vmem:[#allocation3 + $0x48] sm:$0xff]
      %v2338 = vld [vmem:[#allocation3 + $0x50] sm:$0xff]
      %v2339 = vld [vmem:[#allocation3 + $0x58] sm:$0xff]
      %v2340 = vld [vmem:[#allocation3 + $0x60] sm:$0xff]
      %v2341 = vld [vmem:[#allocation3 + $0x68] sm:$0xff]
      %v2342 = vld [vmem:[#allocation3 + $0x70] sm:$0xff]
      %v2343 = vld [vmem:[#allocation3 + $0x78] sm:$0xff]
      %v2344 = vld [vmem:[#allocation3 + $0x80] sm:$0xff]
      %v2345 = vld [vmem:[#allocation3 + $0x88] sm:$0xff]
      %v2346 = vld [vmem:[#allocation3 + $0x90] sm:$0xff]
      %v2347 = vld [vmem:[#allocation3 + $0x98] sm:$0xff]
      %v2348 = vld [vmem:[#allocation3 + $0xa0] sm:$0xff]
      %v2349 = vld [vmem:[#allocation3 + $0xa8] sm:$0xff]
      %v2350 = vld [vmem:[#allocation3 + $0xb0] sm:$0xff]
      %v2351 = vld [vmem:[#allocation3 + $0xb8] sm:$0xff]
      %v2352 = vld [vmem:[#allocation3 + $0xc0] sm:$0xff]
      %v2353 = vld [vmem:[#allocation3 + $0xc8] sm:$0xff]
      %v2354 = vld [vmem:[#allocation3 + $0xd0] sm:$0xff]
      %v2355 = vld [vmem:[#allocation3 + $0xd8] sm:$0xff]
      %v2356 = vld [vmem:[#allocation3 + $0xe0] sm:$0xff]
      %v2357 = vld [vmem:[#allocation3 + $0xe8] sm:$0xff]
      %v2358 = vld [vmem:[#allocation3 + $0xf0] sm:$0xff]
      %v2359 = vld [vmem:[#allocation3 + $0xf8] sm:$0xff]
      %v2360 = vld [vmem:[%s5] sm:$0xff]
      %v2361 = vld [vmem:[%s5 + $0x8] sm:$0xff]
      %v2362 = vld [vmem:[%s5 + $0x10] sm:$0xff]
      %v2363 = vld [vmem:[%s5 + $0x18] sm:$0xff]
      %v2364 = vld [vmem:[%s5 + $0x20] sm:$0xff]
      %v2365 = vld [vmem:[%s5 + $0x28] sm:$0xff]
      %v2366 = vld [vmem:[%s5 + $0x30] sm:$0xff]
      %v2367 = vld [vmem:[%s5 + $0x38] sm:$0xff]
      %v2368 = vld [vmem:[%s5 + $0x40] sm:$0xff]
      %vm2369 = vcmask 588800
      %v2371 = vsel %vm2369, %v2328, 0
      %v2374 = vsel %vm2369, %v2329, 0
      %v2377 = vsel %vm2369, %v2330, 0
      %v2380 = vsel %vm2369, %v2331, 0
      %v2383 = vsel %vm2369, %v2332, 0
      %v2386 = vsel %vm2369, %v2333, 0
      %v2389 = vsel %vm2369, %v2334, 0
      %v2392 = vsel %vm2369, %v2335, 0
      %v2395 = vsel %vm2369, %v2336, 0
      %v2398 = vsel %vm2369, %v2337, 0
      %v2401 = vsel %vm2369, %v2338, 0
      %v2404 = vsel %vm2369, %v2339, 0
      %v2407 = vsel %vm2369, %v2340, 0
      %v2410 = vsel %vm2369, %v2341, 0
      %v2413 = vsel %vm2369, %v2342, 0
      %v2416 = vsel %vm2369, %v2343, 0
      %v2419 = vsel %vm2369, %v2344, 0
      %v2422 = vsel %vm2369, %v2345, 0
      %v2425 = vsel %vm2369, %v2346, 0
      %v2428 = vsel %vm2369, %v2347, 0
      %v2431 = vsel %vm2369, %v2348, 0
      %v2434 = vsel %vm2369, %v2349, 0
      %v2437 = vsel %vm2369, %v2350, 0
      %v2440 = vsel %vm2369, %v2351, 0
      %v2443 = vsel %vm2369, %v2352, 0
      %v2446 = vsel %vm2369, %v2353, 0
      %v2449 = vsel %vm2369, %v2354, 0
      %v2452 = vsel %vm2369, %v2355, 0
      %v2455 = vsel %vm2369, %v2356, 0
      %v2458 = vsel %vm2369, %v2357, 0
      %v2461 = vsel %vm2369, %v2358, 0
      %v2464 = vsel %vm2369, %v2359, 0
      %2466 = vmatpush.msra.mxu0 0.0
      %2467 = vmatpush.msra.mxu0 0.0
      %2468 = vmatpush.msra.mxu0 0.0
      %2469 = vmatpush.msra.mxu0 0.0
      %2470 = vmatpush.msra.mxu0 0.0
      %2471 = vmatpush.msra.mxu0 0.0
      %2472 = vmatpush.msra.mxu0 0.0
      %2473 = vmatpush.msra.mxu0 %v2368
      %2474 = vmatpush.msra.mxu0 %v2367
      %2475 = vmatpush.msra.mxu0 %v2366
      %2476 = vmatpush.msra.mxu0 %v2365
      %2477 = vmatpush.msra.mxu0 %v2364
      %2478 = vmatpush.msra.mxu0 %v2363
      %2479 = vmatpush.msra.mxu0 %v2362
      %2480 = vmatpush.msra.mxu0 %v2361
      %2481 = vmatpush.msra.mxu0 %v2360
      %2482 = vmatmul.f32.gmra.mxu0 %v2371
      %v2483 = vpop.f32.mrf.mxu0
      %v2484 = vadd.f32 0.0, %v2483
      %2485 = vmatmul.f32.gmra.mxu0 %v2374
      %v2486 = vpop.f32.mrf.mxu0
      %v2487 = vadd.f32 0.0, %v2486
      %2488 = vmatmul.f32.gmra.mxu0 %v2377
      %v2489 = vpop.f32.mrf.mxu0
      %v2490 = vadd.f32 0.0, %v2489
      %2491 = vmatmul.f32.gmra.mxu0 %v2380
      %v2492 = vpop.f32.mrf.mxu0
      %v2493 = vadd.f32 0.0, %v2492
      %2494 = vmatmul.f32.gmra.mxu0 %v2383
      %v2495 = vpop.f32.mrf.mxu0
      %v2496 = vadd.f32 0.0, %v2495
      %2497 = vmatmul.f32.gmra.mxu0 %v2386
      %v2498 = vpop.f32.mrf.mxu0
      %v2499 = vadd.f32 0.0, %v2498
      %2500 = vmatmul.f32.gmra.mxu0 %v2389
      %v2501 = vpop.f32.mrf.mxu0
      %v2502 = vadd.f32 0.0, %v2501
      %2503 = vmatmul.f32.gmra.mxu0 %v2392
      %v2504 = vpop.f32.mrf.mxu0
      %v2505 = vadd.f32 0.0, %v2504
      %2506 = vmatmul.f32.gmra.mxu0 %v2395
      %v2507 = vpop.f32.mrf.mxu0
      %v2508 = vadd.f32 0.0, %v2507
      %2509 = vmatmul.f32.gmra.mxu0 %v2398
      %v2510 = vpop.f32.mrf.mxu0
      %v2511 = vadd.f32 0.0, %v2510
      %2512 = vmatmul.f32.gmra.mxu0 %v2401
      %v2513 = vpop.f32.mrf.mxu0
      %v2514 = vadd.f32 0.0, %v2513
      %2515 = vmatmul.f32.gmra.mxu0 %v2404
      %v2516 = vpop.f32.mrf.mxu0
      %v2517 = vadd.f32 0.0, %v2516
      %2518 = vmatmul.f32.gmra.mxu0 %v2407
      %v2519 = vpop.f32.mrf.mxu0
      %v2520 = vadd.f32 0.0, %v2519
      %2521 = vmatmul.f32.gmra.mxu0 %v2410
      %v2522 = vpop.f32.mrf.mxu0
      %v2523 = vadd.f32 0.0, %v2522
      %2524 = vmatmul.f32.gmra.mxu0 %v2413
      %v2525 = vpop.f32.mrf.mxu0
      %v2526 = vadd.f32 0.0, %v2525
      %2527 = vmatmul.f32.gmra.mxu0 %v2416
      %v2528 = vpop.f32.mrf.mxu0
      %v2529 = vadd.f32 0.0, %v2528
      %2530 = vmatmul.f32.gmra.mxu0 %v2419
      %v2531 = vpop.f32.mrf.mxu0
      %v2532 = vadd.f32 0.0, %v2531
      %2533 = vmatmul.f32.gmra.mxu0 %v2422
      %v2534 = vpop.f32.mrf.mxu0
      %v2535 = vadd.f32 0.0, %v2534
      %2536 = vmatmul.f32.gmra.mxu0 %v2425
      %v2537 = vpop.f32.mrf.mxu0
      %v2538 = vadd.f32 0.0, %v2537
      %2539 = vmatmul.f32.gmra.mxu0 %v2428
      %v2540 = vpop.f32.mrf.mxu0
      %v2541 = vadd.f32 0.0, %v2540
      %2542 = vmatmul.f32.gmra.mxu0 %v2431
      %v2543 = vpop.f32.mrf.mxu0
      %v2544 = vadd.f32 0.0, %v2543
      %2545 = vmatmul.f32.gmra.mxu0 %v2434
      %v2546 = vpop.f32.mrf.mxu0
      %v2547 = vadd.f32 0.0, %v2546
      %2548 = vmatmul.f32.gmra.mxu0 %v2437
      %v2549 = vpop.f32.mrf.mxu0
      %v2550 = vadd.f32 0.0, %v2549
      %2551 = vmatmul.f32.gmra.mxu0 %v2440
      %v2552 = vpop.f32.mrf.mxu0
      %v2553 = vadd.f32 0.0, %v2552
      %2554 = vmatmul.f32.gmra.mxu0 %v2443
      %v2555 = vpop.f32.mrf.mxu0
      %v2556 = vadd.f32 0.0, %v2555
      %2557 = vmatmul.f32.gmra.mxu0 %v2446
      %v2558 = vpop.f32.mrf.mxu0
      %v2559 = vadd.f32 0.0, %v2558
      %2560 = vmatmul.f32.gmra.mxu0 %v2449
      %v2561 = vpop.f32.mrf.mxu0
      %v2562 = vadd.f32 0.0, %v2561
      %2563 = vmatmul.f32.gmra.mxu0 %v2452
      %v2564 = vpop.f32.mrf.mxu0
      %v2565 = vadd.f32 0.0, %v2564
      %2566 = vmatmul.f32.gmra.mxu0 %v2455
      %v2567 = vpop.f32.mrf.mxu0
      %v2568 = vadd.f32 0.0, %v2567
      %2569 = vmatmul.f32.gmra.mxu0 %v2458
      %v2570 = vpop.f32.mrf.mxu0
      %v2571 = vadd.f32 0.0, %v2570
      %2572 = vmatmul.f32.gmra.mxu0 %v2461
      %v2573 = vpop.f32.mrf.mxu0
      %v2574 = vadd.f32 0.0, %v2573
      %2575 = vmatmul.f32.gmra.mxu0 %v2464
      %v2576 = vpop.f32.mrf.mxu0
      %v2577 = vadd.f32 0.0, %v2576
      %2578 = vdwg.mxu0
      %2579 = vst.msk [vmem:[%s455] sm:$0xff] %vm517, %v2484
      %2580 = vst.msk [vmem:[%s455 + $0x8] sm:$0xff] %vm517, %v2487
      %2581 = vst.msk [vmem:[%s455 + $0x10] sm:$0xff] %vm517, %v2490
      %2582 = vst.msk [vmem:[%s455 + $0x18] sm:$0xff] %vm517, %v2493
      %2583 = vst.msk [vmem:[%s455 + $0x20] sm:$0xff] %vm517, %v2496
      %2584 = vst.msk [vmem:[%s455 + $0x28] sm:$0xff] %vm517, %v2499
      %2585 = vst.msk [vmem:[%s455 + $0x30] sm:$0xff] %vm517, %v2502
      %2586 = vst.msk [vmem:[%s455 + $0x38] sm:$0xff] %vm517, %v2505
      %2587 = vst.msk [vmem:[%s455 + $0x40] sm:$0xff] %vm517, %v2508
      %2588 = vst.msk [vmem:[%s455 + $0x48] sm:$0xff] %vm517, %v2511
      %2589 = vst.msk [vmem:[%s455 + $0x50] sm:$0xff] %vm517, %v2514
      %2590 = vst.msk [vmem:[%s455 + $0x58] sm:$0xff] %vm517, %v2517
      %2591 = vst.msk [vmem:[%s455 + $0x60] sm:$0xff] %vm517, %v2520
      %2592 = vst.msk [vmem:[%s455 + $0x68] sm:$0xff] %vm517, %v2523
      %2593 = vst.msk [vmem:[%s455 + $0x70] sm:$0xff] %vm517, %v2526
      %2594 = vst.msk [vmem:[%s455 + $0x78] sm:$0xff] %vm517, %v2529
      %2595 = vst.msk [vmem:[%s455 + $0x80] sm:$0xff] %vm517, %v2532
      %2596 = vst.msk [vmem:[%s455 + $0x88] sm:$0xff] %vm517, %v2535
      %2597 = vst.msk [vmem:[%s455 + $0x90] sm:$0xff] %vm517, %v2538
      %2598 = vst.msk [vmem:[%s455 + $0x98] sm:$0xff] %vm517, %v2541
      %2599 = vst.msk [vmem:[%s455 + $0xa0] sm:$0xff] %vm517, %v2544
      %2600 = vst.msk [vmem:[%s455 + $0xa8] sm:$0xff] %vm517, %v2547
      %2601 = vst.msk [vmem:[%s455 + $0xb0] sm:$0xff] %vm517, %v2550
      %2602 = vst.msk [vmem:[%s455 + $0xb8] sm:$0xff] %vm517, %v2553
      %2603 = vst.msk [vmem:[%s455 + $0xc0] sm:$0xff] %vm517, %v2556
      %2604 = vst.msk [vmem:[%s455 + $0xc8] sm:$0xff] %vm517, %v2559
      %2605 = vst.msk [vmem:[%s455 + $0xd0] sm:$0xff] %vm517, %v2562
      %2606 = vst.msk [vmem:[%s455 + $0xd8] sm:$0xff] %vm517, %v2565
      %2607 = vst.msk [vmem:[%s455 + $0xe0] sm:$0xff] %vm517, %v2568
      %2608 = vst.msk [vmem:[%s455 + $0xe8] sm:$0xff] %vm517, %v2571
      %2609 = vst.msk [vmem:[%s455 + $0xf0] sm:$0xff] %vm517, %v2574
      %2610 = vst.msk [vmem:[%s455 + $0xf8] sm:$0xff] %vm517, %v2577
      %v2611 = vsel %vm517, %v2484, 0.0
      %v2612 = vsel %vm517, %v2487, 0.0
      %v2613 = vadd.f32 %v2611, %v2612
      %v2614 = vsel %vm517, %v2490, 0.0
      %v2615 = vadd.f32 %v2613, %v2614
      %v2616 = vsel %vm517, %v2493, 0.0
      %v2617 = vadd.f32 %v2615, %v2616
      %v2618 = vsel %vm517, %v2496, 0.0
      %v2619 = vadd.f32 %v2617, %v2618
      %v2620 = vsel %vm517, %v2499, 0.0
      %v2621 = vadd.f32 %v2619, %v2620
      %v2622 = vsel %vm517, %v2502, 0.0
      %v2623 = vadd.f32 %v2621, %v2622
      %v2624 = vsel %vm517, %v2505, 0.0
      %v2625 = vadd.f32 %v2623, %v2624
      %v2626 = vsel %vm517, %v2508, 0.0
      %v2627 = vadd.f32 %v2625, %v2626
      %v2628 = vsel %vm517, %v2511, 0.0
      %v2629 = vadd.f32 %v2627, %v2628
      %v2630 = vsel %vm517, %v2514, 0.0
      %v2631 = vadd.f32 %v2629, %v2630
      %v2632 = vsel %vm517, %v2517, 0.0
      %v2633 = vadd.f32 %v2631, %v2632
      %v2634 = vsel %vm517, %v2520, 0.0
      %v2635 = vadd.f32 %v2633, %v2634
      %v2636 = vsel %vm517, %v2523, 0.0
      %v2637 = vadd.f32 %v2635, %v2636
      %v2638 = vsel %vm517, %v2526, 0.0
      %v2639 = vadd.f32 %v2637, %v2638
      %v2640 = vsel %vm517, %v2529, 0.0
      %v2641 = vadd.f32 %v2639, %v2640
      %v2642 = vsel %vm517, %v2532, 0.0
      %v2643 = vadd.f32 %v2641, %v2642
      %v2644 = vsel %vm517, %v2535, 0.0
      %v2645 = vadd.f32 %v2643, %v2644
      %v2646 = vsel %vm517, %v2538, 0.0
      %v2647 = vadd.f32 %v2645, %v2646
      %v2648 = vsel %vm517, %v2541, 0.0
      %v2649 = vadd.f32 %v2647, %v2648
      %v2650 = vsel %vm517, %v2544, 0.0
      %v2651 = vadd.f32 %v2649, %v2650
      %v2652 = vsel %vm517, %v2547, 0.0
      %v2653 = vadd.f32 %v2651, %v2652
      %v2654 = vsel %vm517, %v2550, 0.0
      %v2655 = vadd.f32 %v2653, %v2654
      %v2656 = vsel %vm517, %v2553, 0.0
      %v2657 = vadd.f32 %v2655, %v2656
      %v2658 = vsel %vm517, %v2556, 0.0
      %v2659 = vadd.f32 %v2657, %v2658
      %v2660 = vsel %vm517, %v2559, 0.0
      %v2661 = vadd.f32 %v2659, %v2660
      %v2662 = vsel %vm517, %v2562, 0.0
      %v2663 = vadd.f32 %v2661, %v2662
      %v2664 = vsel %vm517, %v2565, 0.0
      %v2665 = vadd.f32 %v2663, %v2664
      %v2666 = vsel %vm517, %v2568, 0.0
      %v2667 = vadd.f32 %v2665, %v2666
      %v2668 = vsel %vm517, %v2571, 0.0
      %v2669 = vadd.f32 %v2667, %v2668
      %v2670 = vsel %vm517, %v2574, 0.0
      %v2671 = vadd.f32 %v2669, %v2670
      %v2672 = vsel %vm517, %v2577, 0.0
      %v2673 = vadd.f32 %v2671, %v2672
      %v2674 = vrot.slane %v2673, 4
      %v2675 = vadd.f32 %v2673, %v2674
      %v2676 = vrot.slane %v2675, 2
      %v2677 = vadd.f32 %v2675, %v2676
      %v2678 = vrot.slane %v2677, 1
      %v2679 = vadd.f32 %v2677, %v2678
      %2680 = vst.msk [vmem:[%s463] sm:$0x1] %vm464, %v2679
      %v2681 = vmul.f32 %v2484, %v2484
      %v2682 = vmul.f32 %v2487, %v2487
      %v2683 = vmul.f32 %v2490, %v2490
      %v2684 = vmul.f32 %v2493, %v2493
      %v2685 = vmul.f32 %v2496, %v2496
      %v2686 = vmul.f32 %v2499, %v2499
      %v2687 = vmul.f32 %v2502, %v2502
      %v2688 = vmul.f32 %v2505, %v2505
      %v2689 = vmul.f32 %v2508, %v2508
      %v2690 = vmul.f32 %v2511, %v2511
      %v2691 = vmul.f32 %v2514, %v2514
      %v2692 = vmul.f32 %v2517, %v2517
      %v2693 = vmul.f32 %v2520, %v2520
      %v2694 = vmul.f32 %v2523, %v2523
      %v2695 = vmul.f32 %v2526, %v2526
      %v2696 = vmul.f32 %v2529, %v2529
      %v2697 = vmul.f32 %v2532, %v2532
      %v2698 = vmul.f32 %v2535, %v2535
      %v2699 = vmul.f32 %v2538, %v2538
      %v2700 = vmul.f32 %v2541, %v2541
      %v2701 = vmul.f32 %v2544, %v2544
      %v2702 = vmul.f32 %v2547, %v2547
      %v2703 = vmul.f32 %v2550, %v2550
      %v2704 = vmul.f32 %v2553, %v2553
      %v2705 = vmul.f32 %v2556, %v2556
      %v2706 = vmul.f32 %v2559, %v2559
      %v2707 = vmul.f32 %v2562, %v2562
      %v2708 = vmul.f32 %v2565, %v2565
      %v2709 = vmul.f32 %v2568, %v2568
      %v2710 = vmul.f32 %v2571, %v2571
      %v2711 = vmul.f32 %v2574, %v2574
      %v2712 = vmul.f32 %v2577, %v2577
      %v2713 = vsel %vm517, %v2681, 0.0
      %v2714 = vsel %vm517, %v2682, 0.0
      %v2715 = vadd.f32 %v2713, %v2714
      %v2716 = vsel %vm517, %v2683, 0.0
      %v2717 = vadd.f32 %v2715, %v2716
      %v2718 = vsel %vm517, %v2684, 0.0
      %v2719 = vadd.f32 %v2717, %v2718
      %v2720 = vsel %vm517, %v2685, 0.0
      %v2721 = vadd.f32 %v2719, %v2720
      %v2722 = vsel %vm517, %v2686, 0.0
      %v2723 = vadd.f32 %v2721, %v2722
      %v2724 = vsel %vm517, %v2687, 0.0
      %v2725 = vadd.f32 %v2723, %v2724
      %v2726 = vsel %vm517, %v2688, 0.0
      %v2727 = vadd.f32 %v2725, %v2726
      %v2728 = vsel %vm517, %v2689, 0.0
      %v2729 = vadd.f32 %v2727, %v2728
      %v2730 = vsel %vm517, %v2690, 0.0
      %v2731 = vadd.f32 %v2729, %v2730
      %v2732 = vsel %vm517, %v2691, 0.0
      %v2733 = vadd.f32 %v2731, %v2732
      %v2734 = vsel %vm517, %v2692, 0.0
      %v2735 = vadd.f32 %v2733, %v2734
      %v2736 = vsel %vm517, %v2693, 0.0
      %v2737 = vadd.f32 %v2735, %v2736
      %v2738 = vsel %vm517, %v2694, 0.0
      %v2739 = vadd.f32 %v2737, %v2738
      %v2740 = vsel %vm517, %v2695, 0.0
      %v2741 = vadd.f32 %v2739, %v2740
      %v2742 = vsel %vm517, %v2696, 0.0
      %v2743 = vadd.f32 %v2741, %v2742
      %v2744 = vsel %vm517, %v2697, 0.0
      %v2745 = vadd.f32 %v2743, %v2744
      %v2746 = vsel %vm517, %v2698, 0.0
      %v2747 = vadd.f32 %v2745, %v2746
      %v2748 = vsel %vm517, %v2699, 0.0
      %v2749 = vadd.f32 %v2747, %v2748
      %v2750 = vsel %vm517, %v2700, 0.0
      %v2751 = vadd.f32 %v2749, %v2750
      %v2752 = vsel %vm517, %v2701, 0.0
      %v2753 = vadd.f32 %v2751, %v2752
      %v2754 = vsel %vm517, %v2702, 0.0
      %v2755 = vadd.f32 %v2753, %v2754
      %v2756 = vsel %vm517, %v2703, 0.0
      %v2757 = vadd.f32 %v2755, %v2756
      %v2758 = vsel %vm517, %v2704, 0.0
      %v2759 = vadd.f32 %v2757, %v2758
      %v2760 = vsel %vm517, %v2705, 0.0
      %v2761 = vadd.f32 %v2759, %v2760
      %v2762 = vsel %vm517, %v2706, 0.0
      %v2763 = vadd.f32 %v2761, %v2762
      %v2764 = vsel %vm517, %v2707, 0.0
      %v2765 = vadd.f32 %v2763, %v2764
      %v2766 = vsel %vm517, %v2708, 0.0
      %v2767 = vadd.f32 %v2765, %v2766
      %v2768 = vsel %vm517, %v2709, 0.0
      %v2769 = vadd.f32 %v2767, %v2768
      %v2770 = vsel %vm517, %v2710, 0.0
      %v2771 = vadd.f32 %v2769, %v2770
      %v2772 = vsel %vm517, %v2711, 0.0
      %v2773 = vadd.f32 %v2771, %v2772
      %v2774 = vsel %vm517, %v2712, 0.0
      %v2775 = vadd.f32 %v2773, %v2774
      %v2776 = vrot.slane %v2775, 4
      %v2777 = vadd.f32 %v2775, %v2776
      %v2778 = vrot.slane %v2777, 2
      %v2779 = vadd.f32 %v2777, %v2778
      %v2780 = vrot.slane %v2779, 1
      %v2781 = vadd.f32 %v2779, %v2780
      %2782 = vst.msk [vmem:[%s463 + $0x1] sm:$0x1] %vm464, %v2781
      %s2783 = smul.u32 32, %s24
      %p2784 = scmp.lt.s32.totalorder %s23, 1
      %s2785 = scalar_select %p2784, %s23, 1
      %p2786 = scmp.lt.s32.totalorder %s2783, 31
      %s2787 = scalar_select %p2786, %s2783, 31
      %s2788 = smul.addr %s2785, 32
      %s2789 = sadd.s32 %s2787, %s2788
      %s2790 = smul.addr %s2789, 8
      %s2791 = scalar_lea.vmem %s6, %s2790
      %p2792 = scmp.lt.s32.totalorder %s23, 1
      %s2793 = scalar_select %p2792, %s23, 1
      %p2794 = scmp.lt.s32.totalorder %s24, 0
      %s2795 = scalar_select %p2794, %s24, 0
      %s2796 = sadd.s32 %s2795, %s2793
      %s2797 = smul.addr %s2796, 2
      %s2798 = scalar_lea.vmem %s7, %s2797
      // Predicated region
      $region49: #{basic_block_forward.4} parent=43 // pred_check
        %p2799 = pneg %p214
      $region50: #{basic_block_forward.4} parent=43 // pred_check_branch
        %2801 = sbr.rel (%p2799) target = $region52
      $region51: #{basic_block_forward.4} parent=43 // pred_region
        %s2802 = smul.u32 32, %s24
      $region52: #{basic_block_forward.4} parent=43 // pred_fallthru
        _
      // Predicated region
      $region53: #{basic_block_forward.4} parent=43 // pred_check
        %p2803 = pneg %p242
      $region54: #{basic_block_forward.4} parent=43 // pred_check_branch
        %2805 = sbr.rel (%p2803) target = $region56
      $region55: #{basic_block_forward.4} parent=43 // pred_region
        _
      $region56: #{basic_block_forward.4} parent=43 // pred_fallthru
        _
    $region44: #{basic_block_forward.4} parent=5 // pred_fallthru
      _
    %p2806 = scmp.le.s32.totalorder 2, %s14
    // Predicated region
    $region57: #{basic_block_forward.4} parent=5 // pred_check
      %p2807 = pneg %p2806
    $region58: #{basic_block_forward.4} parent=5 // pred_check_branch
      %2809 = sbr.rel (%p2807) target = $region60
    $region59: #{basic_block_forward.4} parent=5 // pred_region
      %s2810 = ssub.s32 %s14, 2
      // Predicated region
      $region61: #{basic_block_forward.4} parent=59 // pred_check
        %p2811 = pneg %p220
      $region62: #{basic_block_forward.4} parent=59 // pred_check_branch
        %2813 = sbr.rel (%p2811) target = $region64
      $region63: #{basic_block_forward.4} parent=59 // pred_region
        %s2814 = smul.u32 32, %s26
        %p2815 = scmp.lt.s32.totalorder %s25, 1
        %s2816 = scalar_select %p2815, %s25, 1
        %p2817 = scmp.lt.s32.totalorder %s2814, 31
        %s2818 = scalar_select %p2817, %s2814, 31
        %s2819 = smul.addr %s2816, 32
        %s2820 = sadd.s32 %s2818, %s2819
        %s2821 = smul.addr %s2820, 8
        %s2822 = scalar_lea.vmem %s6, %s2821
      $region64: #{basic_block_forward.4} parent=59 // pred_fallthru
        _
      // Predicated region
      $region65: #{basic_block_forward.4} parent=59 // pred_check
        %p2823 = pneg %p248
      $region66: #{basic_block_forward.4} parent=59 // pred_check_branch
        %2825 = sbr.rel (%p2823) target = $region68
      $region67: #{basic_block_forward.4} parent=59 // pred_region
        %p2826 = scmp.lt.s32.totalorder %s25, 1
        %s2827 = scalar_select %p2826, %s25, 1
        %p2828 = scmp.lt.s32.totalorder %s26, 0
        %s2829 = scalar_select %p2828, %s26, 0
        %s2830 = sadd.s32 %s2829, %s2827
        %s2831 = smul.addr %s2830, 2
        %s2832 = scalar_lea.vmem %s7, %s2831
      $region68: #{basic_block_forward.4} parent=59 // pred_fallthru
        _
    $region60: #{basic_block_forward.4} parent=5 // pred_fallthru
      _
  $region6: #{basic_block_forward.4} parent=0 // loop_footer
    %s18 = sadd.s32 1, %s14
  $region7: #{basic_block_forward.4} parent=0 // loop_footer_branch
    %13 = sbr.rel target = $region3
  $region8: #{basic_block_forward.4} parent=0 // loop_exit
    _

</llo_original>
